<compile_context>
chip_gen: v5e
topology: v5e:2x2
jax: 0.10.0
libtpu: 0.0.40
codegen_flags: <defaults>
</compile_context>

<pallas_src>
import functools
from itertools import product
from math import sqrt

import jax
import jax.numpy as jnp
from jax import lax
from jax.experimental import pallas as pl
from jax.experimental.pallas import tpu as pltpu

# ----------------------------- config (synthetic) -----------------------------
IN_CHANNELS = 4
OUT_CHANNELS = 32          # channels produced by extra_head_net (upfeature)
NUM_CLASSES = 5
MASK_DIM = 8
ASPECT_RATIOS = [[1, 0.5, 2]]
SCALES = [24]
NUM_PRIORS = sum(len(a) * len(SCALES) for a in ASPECT_RATIOS)   # = 3
MAX_SIZE = 550
PREAPPLY_SQRT = False
USE_PIXEL_SCALES = True
USE_SQUARE_ANCHORS = True

# fused head channel layout: [bbox | conf | mask | zero-pad]
BBOX_CH = NUM_PRIORS * 4                     # 12
CONF_CH = NUM_PRIORS * NUM_CLASSES           # 15
MASK_CH = NUM_PRIORS * MASK_DIM              # 24
HEAD_CH = BBOX_CH + CONF_CH + MASK_CH        # 51
HEAD_CH_PAD = 128                            # lane-dense output width
assert HEAD_CH <= HEAD_CH_PAD

ROW_TILE = 64                                # flattened pixels per matmul chunk


# ------------------------------- Pallas kernel --------------------------------
def _masked_tap(pad_ref, ky, kx, *, H, W, pad_off):
    """Conv-tap operand (ky, kx) as a contiguous row window of the flattened,
    virtually-padded activation scratch, with image-edge rows masked to zero.

    pad_ref holds the activation at rows [pad_off, pad_off + H*W); the border
    rows are never written (uninitialized VMEM) but every read that lands there
    corresponds to an out-of-image tap and is masked out below, so they never
    leak into the result.
    """
    HW = H * W
    d = (ky - 1) * W + (kx - 1)                      # flattened tap offset
    win = pad_ref[pad_off + d: pad_off + d + HW, :]  # (HW, C) contiguous load

    conds = []
    if ky != 1 or kx != 1:
        p = lax.broadcasted_iota(jnp.int32, (HW, 1), 0)  # flattened pixel index
        if ky == 0:
            conds.append(p >= W)                     # needs row y-1 >= 0
        if ky == 2:
            conds.append(p < (H - 1) * W)            # needs row y+1 <= H-1
        if kx == 0:
            conds.append(lax.rem(p, W) >= 1)         # needs col x-1 >= 0
        if kx == 2:
            conds.append(lax.rem(p, W) < W - 1)      # needs col x+1 <= W-1
    if not conds:
        return win
    valid = conds[0]
    for c in conds[1:]:
        valid = jnp.logical_and(valid, c)
    return jnp.where(valid, win, jnp.zeros_like(win))


def _prediction_kernel(x_ref, up_w_ref, up_b_ref, head_w_ref, head_b_ref,
                       o_ref, pad_x, pad_feat, col_up, col_head,
                       *, H, W, row_tile):
    """Fused upfeature(3x3 conv + ReLU) + concatenated bbox/conf/mask 3x3 head.

    x_ref      : (1, H*W, Cin)   bf16   flattened NHWC input tile
    up_w_ref   : (9*Cin, Cmid)   bf16   upfeature weights, tap-major rows
    up_b_ref   : (1, Cmid)       f32
    head_w_ref : (9*Cmid, 128)   bf16   fused+padded head weights, tap-major rows
    head_b_ref : (1, 128)        f32
    o_ref      : (1, H*W, 128)   f32    lane-dense fused head output
    pad_x      : VMEM (H*W+2W+2, Cin)  f32  flattened virtually-padded input
    pad_feat   : VMEM (H*W+2W+2, Cmid) f32  flattened virtually-padded feat
    col_up     : VMEM (H*W, 9*Cin)     bf16 upfeature im2col operand
    col_head   : VMEM (H*W, 9*Cmid)    bf16 head im2col operand
    """
    HW = H * W
    PADB = W + 1                        # one image row + one pixel of halo
    Cin = x_ref.shape[-1]
    Cmid = up_w_ref.shape[-1]
    Cout = o_ref.shape[-1]
    n_chunks = HW // row_tile
    taps = [(ky, kx) for ky in range(3) for kx in range(3)]

    # ---- stage the input rows into the flat pad scratch ---------------------
    pad_x[PADB:PADB + HW, :] = x_ref[0].astype(jnp.float32)

    # ---- im2col for the upfeature conv: col_up[:, t*Cin:(t+1)*Cin] ----------
    for t, (ky, kx) in enumerate(taps):
        col_up[:, t * Cin:(t + 1) * Cin] = _masked_tap(
            pad_x, ky, kx, H=H, W=W, pad_off=PADB).astype(jnp.bfloat16)

    # ---- upfeature: one K=9*Cin matmul per row chunk, + bias + ReLU ---------
    # feat stays resident in VMEM (pad_feat) for the fused head conv.
    up_w = up_w_ref[...]
    up_b = up_b_ref[...]

    def up_chunk(c, carry):
        r0 = pl.multiple_of(c * row_tile, row_tile)
        a = col_up[pl.ds(r0, row_tile), :]
        f = jnp.dot(a, up_w, preferred_element_type=jnp.float32)
        f = jnp.maximum(f + up_b, 0.0)
        pad_feat[pl.ds(PADB + r0, row_tile), :] = f
        return carry

    lax.fori_loop(0, n_chunks, up_chunk, 0, unroll=True)

    # ---- im2col for the fused bbox/conf/mask head conv -----------------------
    for t, (ky, kx) in enumerate(taps):
        col_head[:, t * Cmid:(t + 1) * Cmid] = _masked_tap(
            pad_feat, ky, kx, H=H, W=W, pad_off=PADB).astype(jnp.bfloat16)

    # ---- fused head: one K=9*Cmid matmul per row chunk, bias, tanh on the ----
    # mask-coefficient channels, lane-dense store straight into o_ref.
    head_w = head_w_ref[...]
    head_b = head_b_ref[...]
    ch = lax.broadcasted_iota(jnp.int32, (row_tile, Cout), 1)
    is_mask_coeff = (ch >= BBOX_CH + CONF_CH) & (ch < HEAD_CH)

    def head_chunk(c, carry):
        r0 = pl.multiple_of(c * row_tile, row_tile)
        a = col_head[pl.ds(r0, row_tile), :]
        h = jnp.dot(a, head_w, preferred_element_type=jnp.float32)
        h = h + head_b
        h = jnp.where(is_mask_coeff, jnp.tanh(h), h)   # EUP tanh, VPU select
        o_ref[0, pl.ds(r0, row_tile), :] = h.astype(o_ref.dtype)
        return carry

    lax.fori_loop(0, n_chunks, head_chunk, 0, unroll=True)


def fused_prediction_call(x_flat, up_w_flat, up_b, head_w_flat, head_b, H, W,
                          row_tile=ROW_TILE):
    """x_flat: [B, H*W, Cin] bf16 -> [B, H*W, HEAD_CH_PAD] f32 fused head output."""
    B, HW, Cin = x_flat.shape
    Cmid = up_w_flat.shape[-1]
    Cout = head_w_flat.shape[-1]
    assert HW == H * W and HW % row_tile == 0
    pad_rows = HW + 2 * (W + 1)
    kernel = functools.partial(_prediction_kernel, H=H, W=W, row_tile=row_tile)
    return pl.pallas_call(
        kernel,
        out_shape=jax.ShapeDtypeStruct((B, HW, Cout), jnp.float32),
        grid_spec=pltpu.PrefetchScalarGridSpec(
            num_scalar_prefetch=0,
            grid=(B,),
            in_specs=[
                pl.BlockSpec((1, HW, Cin), lambda b: (b, 0, 0)),
                pl.BlockSpec((9 * Cin, Cmid), lambda b: (0, 0)),
                pl.BlockSpec((1, Cmid), lambda b: (0, 0)),
                pl.BlockSpec((9 * Cmid, Cout), lambda b: (0, 0)),
                pl.BlockSpec((1, Cout), lambda b: (0, 0)),
            ],
            out_specs=pl.BlockSpec((1, HW, Cout), lambda b: (b, 0, 0)),
            scratch_shapes=[
                pltpu.VMEM((pad_rows, Cin), jnp.float32),
                pltpu.VMEM((pad_rows, Cmid), jnp.float32),
                pltpu.VMEM((HW, 9 * Cin), jnp.bfloat16),
                pltpu.VMEM((HW, 9 * Cmid), jnp.bfloat16),
            ],
        ),
        compiler_params=pltpu.CompilerParams(
            dimension_semantics=("parallel",)),   # batch across v7x's 2 TCs
    )(x_flat, up_w_flat, up_b, head_w_flat, head_b)


# ------------------------------ priors (host) ----------------------------------
def make_priors(conv_h, conv_w):
    # TODO(synk): pure index math / host-side loop as in PyTorch make_priors (incl.
    # its caching); no hot-path compute, so it stays in plain Python/JAX glue.
    prior_data = []
    for j, i in product(range(conv_h), range(conv_w)):
        x = (i + 0.5) / conv_w
        y = (j + 0.5) / conv_h
        for ars in ASPECT_RATIOS:
            for scale in SCALES:
                for ar in ars:
                    if not PREAPPLY_SQRT:
                        ar = sqrt(ar)
                    if USE_PIXEL_SCALES:
                        w = scale * ar / MAX_SIZE
                        h = scale / ar / MAX_SIZE
                    else:
                        w = scale * ar / conv_w
                        h = scale / ar / conv_h
                    if USE_SQUARE_ANCHORS:
                        h = w
                    prior_data += [x, y, w, h]
    return jnp.asarray(prior_data, dtype=jnp.float32).reshape(-1, 4)


# ----------------------------- parameter init ----------------------------------
def init_params(key):
    ks = jax.random.split(key, 8)

    def w_init(k, shape, scale=0.05):
        return (scale * jax.random.normal(k, shape)).astype(jnp.float32)

    # HWIO layout (kh, kw, Cin, Cout).  PyTorch OIHW checkpoints need a
    # transpose(2, 3, 1, 0) before being used here.
    return {
        "up_w": w_init(ks[0], (3, 3, IN_CHANNELS, OUT_CHANNELS)),
        "up_b": w_init(ks[1], (1, OUT_CHANNELS)),
        "bbox_w": w_init(ks[2], (3, 3, OUT_CHANNELS, BBOX_CH)),
        "bbox_b": w_init(ks[3], (1, BBOX_CH)),
        "conf_w": w_init(ks[4], (3, 3, OUT_CHANNELS, CONF_CH)),
        "conf_b": w_init(ks[5], (1, CONF_CH)),
        "mask_w": w_init(ks[6], (3, 3, OUT_CHANNELS, MASK_CH)),
        "mask_b": w_init(ks[7], (1, MASK_CH)),
    }


def fuse_head_params(params):
    """Concatenate bbox/conf/mask head weights along Cout, zero-pad to 128 lanes,
    flatten to tap-major (9*Cmid, 128) rows and cast to bf16."""
    head_w = jnp.concatenate(
        [params["bbox_w"], params["conf_w"], params["mask_w"]], axis=-1)
    head_b = jnp.concatenate(
        [params["bbox_b"], params["conf_b"], params["mask_b"]], axis=-1)
    pad = HEAD_CH_PAD - HEAD_CH
    head_w = jnp.pad(head_w, ((0, 0), (0, 0), (0, 0), (0, pad)))
    head_b = jnp.pad(head_b, ((0, 0), (0, pad)))
    head_w_flat = head_w.reshape(9 * OUT_CHANNELS, HEAD_CH_PAD).astype(jnp.bfloat16)
    return head_w_flat, head_b.astype(jnp.float32)


# ------------------------------ forward pass ------------------------------------
def prediction_module_forward(x_nchw, params):
    """x_nchw: [B, in_channels, H, W] (PyTorch layout)."""
    B, Cin, H, W = x_nchw.shape
    HW = H * W

    # TODO(synk): producers should hand the feature map over already in NHWC;
    # this small transpose is the only remaining wrapper-side relayout.
    x_flat = jnp.transpose(x_nchw, (0, 2, 3, 1)).reshape(B, HW, Cin)
    x_flat = x_flat.astype(jnp.bfloat16)

    up_w_flat = params["up_w"].reshape(9 * Cin, OUT_CHANNELS).astype(jnp.bfloat16)
    head_w_flat, head_b = fuse_head_params(params)

    # One fused kernel: upfeature + ReLU + concatenated bbox/conf/mask heads
    # (tanh already applied to the mask channels inside the kernel).
    out = fused_prediction_call(x_flat, up_w_flat, params["up_b"],
                                head_w_flat, head_b, H, W)

    # One slice of the lane-padded slab; reshape to PyTorch layout:
    # NHWC [B,H,W,P*C] == [B, H*W, P*C] -> [B, H*W*P, C]
    out = out[:, :, :HEAD_CH]
    bbox = out[:, :, :BBOX_CH].reshape(B, HW * NUM_PRIORS, 4)
    conf = out[:, :, BBOX_CH:BBOX_CH + CONF_CH].reshape(
        B, HW * NUM_PRIORS, NUM_CLASSES)
    mask = out[:, :, BBOX_CH + CONF_CH:HEAD_CH].reshape(
        B, HW * NUM_PRIORS, MASK_DIM)

    priors = make_priors(H, W)
    return {"loc": bbox, "conf": conf, "mask": mask, "priors": priors}


# --------------------------- pure-JAX reference ----------------------------------
def _reference_forward(x_nchw, params):
    """f32 lax.conv reference emulating the kernel's bf16 input/weight rounding."""
    dn = ("NHWC", "HWIO", "NHWC")

    def bf16(a):
        return a.astype(jnp.bfloat16).astype(jnp.float32)

    def conv(inp, w, b):
        y = lax.conv_general_dilated(inp, bf16(w), (1, 1), "SAME",
                                     dimension_numbers=dn,
                                     precision=lax.Precision.HIGHEST)
        return y + b.reshape(1, 1, 1, -1)

    x = bf16(jnp.transpose(x_nchw, (0, 2, 3, 1)))
    B = x.shape[0]
    feat = bf16(jax.nn.relu(conv(x, params["up_w"], params["up_b"])))
    bbox = conv(feat, params["bbox_w"], params["bbox_b"]).reshape(B, -1, 4)
    conf = conv(feat, params["conf_w"], params["conf_b"]).reshape(B, -1, NUM_CLASSES)
    mask = jnp.tanh(conv(feat, params["mask_w"], params["mask_b"])).reshape(
        B, -1, MASK_DIM)
    return {"loc": bbox, "conf": conf, "mask": mask}


# ----------------------------------- main ---------------------------------------
if __name__ == "__main__":
    key = jax.random.PRNGKey(0)
    k_x, k_p = jax.random.split(key)

    B, H, W = 2, 16, 16
    x = jax.random.normal(k_x, (B, IN_CHANNELS, H, W), dtype=jnp.float32)  # NCHW
    params = init_params(k_p)

    preds = jax.jit(prediction_module_forward)(x, params)
    jax.block_until_ready(preds)

    assert preds["loc"].shape == (B, H * W * NUM_PRIORS, 4)
    assert preds["conf"].shape == (B, H * W * NUM_PRIORS, NUM_CLASSES)
    assert preds["mask"].shape == (B, H * W * NUM_PRIORS, MASK_DIM)
    assert preds["priors"].shape == (H * W * NUM_PRIORS, 4)

    # Numerical check against a pure-JAX reference (same bf16 rounding points).
    ref = _reference_forward(x, params)
    for k in ("loc", "conf", "mask"):
        assert jnp.allclose(preds[k], ref[k], atol=3e-3, rtol=3e-3), k

    print("KERNEL_OK")
</pallas_src>

<mosaic_0001>
module attributes {stable_mosaic.version = 11 : i64} {
  func.func @_prediction_kernel(%arg0: i32, %arg1: memref<1x256x4xbf16, #tpu.memory_space<vmem>>, %arg2: memref<36x32xbf16, #tpu.memory_space<vmem>>, %arg3: memref<1x32xf32, #tpu.memory_space<vmem>>, %arg4: memref<288x128xbf16, #tpu.memory_space<vmem>>, %arg5: memref<1x128xf32, #tpu.memory_space<vmem>>, %arg6: memref<1x256x128xf32, #tpu.memory_space<vmem>>, %arg7: memref<290x4xf32, #tpu.memory_space<vmem>>, %arg8: memref<290x32xf32, #tpu.memory_space<vmem>>, %arg9: memref<256x36xbf16, #tpu.memory_space<vmem>>, %arg10: memref<256x288xbf16, #tpu.memory_space<vmem>>) attributes {dimension_semantics = [#tpu.dimension_semantics<parallel>], iteration_bounds = array<i64: 2>, scalar_prefetch = 0 : i64, scratch_operands = 4 : i64, tpu.core_type = #tpu.core_type<tc>, window_params = [{transform_indices = @transform_0, window_bounds = array<i64: 1, 256, 4>}, {pipeline_mode = #tpu.pipeline_mode<synchronous>, transform_indices = @transform_1, window_bounds = array<i64: 36, 32>}, {pipeline_mode = #tpu.pipeline_mode<synchronous>, transform_indices = @transform_2, window_bounds = array<i64: 1, 32>}, {pipeline_mode = #tpu.pipeline_mode<synchronous>, transform_indices = @transform_3, window_bounds = array<i64: 288, 128>}, {pipeline_mode = #tpu.pipeline_mode<synchronous>, transform_indices = @transform_4, window_bounds = array<i64: 1, 128>}, {transform_indices = @transform_5, window_bounds = array<i64: 1, 256, 128>}]} {
    %c0 = arith.constant 0 : index
    %c0_0 = arith.constant 0 : index
    %c0_1 = arith.constant 0 : index
    %0 = vector.load %arg1[%c0, %c0_0, %c0_1] : memref<1x256x4xbf16, #tpu.memory_space<vmem>>, vector<1x256x4xbf16>
    %1 = vector.shape_cast %0 : vector<1x256x4xbf16> to vector<256x4xbf16>
    %2 = arith.extf %1 : vector<256x4xbf16> to vector<256x4xf32>
    %c17 = arith.constant 17 : index
    %c0_2 = arith.constant 0 : index
    %3 = vector.load %arg7[%c17, %c0_2] : memref<290x4xf32, #tpu.memory_space<vmem>>, vector<256x4xf32>
    tpu.vector_store %arg7[%c17, %c0_2], %2 {strides = array<i32>} : memref<290x4xf32, #tpu.memory_space<vmem>>, vector<256x4xf32>,
    %c0_3 = arith.constant 0 : index
    %c0_4 = arith.constant 0 : index
    %4 = vector.load %arg7[%c0_3, %c0_4] : memref<290x4xf32, #tpu.memory_space<vmem>>, vector<256x4xf32>
    %5 = tpu.iota {dimensions = array<i32: 0>} : vector<256x1xi32>
    %c16_i32 = arith.constant 16 : i32
    %6 = vector.broadcast %c16_i32 : i32 to vector<256x1xi32>
    %7 = arith.cmpi sge, %5, %6 : vector<256x1xi32>
    %c16_i32_5 = arith.constant 16 : i32
    %8 = vector.broadcast %c16_i32_5 : i32 to vector<256x1xi32>
    %9 = arith.remsi %5, %8 : vector<256x1xi32>
    %c1_i32 = arith.constant 1 : i32
    %10 = vector.broadcast %c1_i32 : i32 to vector<256x1xi32>
    %11 = arith.cmpi sge, %9, %10 : vector<256x1xi32>
    %12 = arith.andi %7, %11 : vector<256x1xi1>
    %cst = arith.constant 0.000000e+00 : f32
    %13 = vector.broadcast %cst : f32 to vector<256x4xf32>
    %14 = vector.shape_cast %12 : vector<256x1xi1> to vector<256x1xi1>
    %15 = vector.broadcast %14 : vector<256x1xi1> to vector<256x4xi1>
    %16 = arith.select %15, %4, %13 : vector<256x4xi1>, vector<256x4xf32>
    %17 = arith.truncf %16 : vector<256x4xf32> to vector<256x4xbf16>
    %c0_6 = arith.constant 0 : index
    %c0_7 = arith.constant 0 : index
    %18 = vector.load %arg9[%c0_6, %c0_7] : memref<256x36xbf16, #tpu.memory_space<vmem>>, vector<256x4xbf16>
    tpu.vector_store %arg9[%c0_6, %c0_7], %17 {strides = array<i32>} : memref<256x36xbf16, #tpu.memory_space<vmem>>, vector<256x4xbf16>,
    %c1 = arith.constant 1 : index
    %c0_8 = arith.constant 0 : index
    %19 = vector.load %arg7[%c1, %c0_8] : memref<290x4xf32, #tpu.memory_space<vmem>>, vector<256x4xf32>
    %20 = tpu.iota {dimensions = array<i32: 0>} : vector<256x1xi32>
    %c16_i32_9 = arith.constant 16 : i32
    %21 = vector.broadcast %c16_i32_9 : i32 to vector<256x1xi32>
    %22 = arith.cmpi sge, %20, %21 : vector<256x1xi32>
    %cst_10 = arith.constant 0.000000e+00 : f32
    %23 = vector.broadcast %cst_10 : f32 to vector<256x4xf32>
    %24 = vector.shape_cast %22 : vector<256x1xi1> to vector<256x1xi1>
    %25 = vector.broadcast %24 : vector<256x1xi1> to vector<256x4xi1>
    %26 = arith.select %25, %19, %23 : vector<256x4xi1>, vector<256x4xf32>
    %27 = arith.truncf %26 : vector<256x4xf32> to vector<256x4xbf16>
    %c0_11 = arith.constant 0 : index
    %c4 = arith.constant 4 : index
    %28 = vector.load %arg9[%c0_11, %c4] : memref<256x36xbf16, #tpu.memory_space<vmem>>, vector<256x4xbf16>
    tpu.vector_store %arg9[%c0_11, %c4], %27 {strides = array<i32>} : memref<256x36xbf16, #tpu.memory_space<vmem>>, vector<256x4xbf16>,
    %c2 = arith.constant 2 : index
    %c0_12 = arith.constant 0 : index
    %29 = vector.load %arg7[%c2, %c0_12] : memref<290x4xf32, #tpu.memory_space<vmem>>, vector<256x4xf32>
    %30 = tpu.iota {dimensions = array<i32: 0>} : vector<256x1xi32>
    %c16_i32_13 = arith.constant 16 : i32
    %31 = vector.broadcast %c16_i32_13 : i32 to vector<256x1xi32>
    %32 = arith.cmpi sge, %30, %31 : vector<256x1xi32>
    %c16_i32_14 = arith.constant 16 : i32
    %33 = vector.broadcast %c16_i32_14 : i32 to vector<256x1xi32>
    %34 = arith.remsi %30, %33 : vector<256x1xi32>
    %c15_i32 = arith.constant 15 : i32
    %35 = vector.broadcast %c15_i32 : i32 to vector<256x1xi32>
    %36 = arith.cmpi slt, %34, %35 : vector<256x1xi32>
    %37 = arith.andi %32, %36 : vector<256x1xi1>
    %cst_15 = arith.constant 0.000000e+00 : f32
    %38 = vector.broadcast %cst_15 : f32 to vector<256x4xf32>
    %39 = vector.shape_cast %37 : vector<256x1xi1> to vector<256x1xi1>
    %40 = vector.broadcast %39 : vector<256x1xi1> to vector<256x4xi1>
    %41 = arith.select %40, %29, %38 : vector<256x4xi1>, vector<256x4xf32>
    %42 = arith.truncf %41 : vector<256x4xf32> to vector<256x4xbf16>
    %c0_16 = arith.constant 0 : index
    %c8 = arith.constant 8 : index
    %43 = vector.load %arg9[%c0_16, %c8] : memref<256x36xbf16, #tpu.memory_space<vmem>>, vector<256x4xbf16>
    tpu.vector_store %arg9[%c0_16, %c8], %42 {strides = array<i32>} : memref<256x36xbf16, #tpu.memory_space<vmem>>, vector<256x4xbf16>,
    %c16 = arith.constant 16 : index
    %c0_17 = arith.constant 0 : index
    %44 = vector.load %arg7[%c16, %c0_17] : memref<290x4xf32, #tpu.memory_space<vmem>>, vector<256x4xf32>
    %45 = tpu.iota {dimensions = array<i32: 0>} : vector<256x1xi32>
    %c16_i32_18 = arith.constant 16 : i32
    %46 = vector.broadcast %c16_i32_18 : i32 to vector<256x1xi32>
    %47 = arith.remsi %45, %46 : vector<256x1xi32>
    %c1_i32_19 = arith.constant 1 : i32
    %48 = vector.broadcast %c1_i32_19 : i32 to vector<256x1xi32>
    %49 = arith.cmpi sge, %47, %48 : vector<256x1xi32>
    %cst_20 = arith.constant 0.000000e+00 : f32
    %50 = vector.broadcast %cst_20 : f32 to vector<256x4xf32>
    %51 = vector.shape_cast %49 : vector<256x1xi1> to vector<256x1xi1>
    %52 = vector.broadcast %51 : vector<256x1xi1> to vector<256x4xi1>
    %53 = arith.select %52, %44, %50 : vector<256x4xi1>, vector<256x4xf32>
    %54 = arith.truncf %53 : vector<256x4xf32> to vector<256x4xbf16>
    %c0_21 = arith.constant 0 : index
    %c12 = arith.constant 12 : index
    %55 = vector.load %arg9[%c0_21, %c12] : memref<256x36xbf16, #tpu.memory_space<vmem>>, vector<256x4xbf16>
    tpu.vector_store %arg9[%c0_21, %c12], %54 {strides = array<i32>} : memref<256x36xbf16, #tpu.memory_space<vmem>>, vector<256x4xbf16>,
    %c17_22 = arith.constant 17 : index
    %c0_23 = arith.constant 0 : index
    %56 = vector.load %arg7[%c17_22, %c0_23] : memref<290x4xf32, #tpu.memory_space<vmem>>, vector<256x4xf32>
    %57 = arith.truncf %56 : vector<256x4xf32> to vector<256x4xbf16>
    %c0_24 = arith.constant 0 : index
    %c16_25 = arith.constant 16 : index
    %58 = vector.load %arg9[%c0_24, %c16_25] : memref<256x36xbf16, #tpu.memory_space<vmem>>, vector<256x4xbf16>
    tpu.vector_store %arg9[%c0_24, %c16_25], %57 {strides = array<i32>} : memref<256x36xbf16, #tpu.memory_space<vmem>>, vector<256x4xbf16>,
    %c18 = arith.constant 18 : index
    %c0_26 = arith.constant 0 : index
    %59 = vector.load %arg7[%c18, %c0_26] : memref<290x4xf32, #tpu.memory_space<vmem>>, vector<256x4xf32>
    %60 = tpu.iota {dimensions = array<i32: 0>} : vector<256x1xi32>
    %c16_i32_27 = arith.constant 16 : i32
    %61 = vector.broadcast %c16_i32_27 : i32 to vector<256x1xi32>
    %62 = arith.remsi %60, %61 : vector<256x1xi32>
    %c15_i32_28 = arith.constant 15 : i32
    %63 = vector.broadcast %c15_i32_28 : i32 to vector<256x1xi32>
    %64 = arith.cmpi slt, %62, %63 : vector<256x1xi32>
    %cst_29 = arith.constant 0.000000e+00 : f32
    %65 = vector.broadcast %cst_29 : f32 to vector<256x4xf32>
    %66 = vector.shape_cast %64 : vector<256x1xi1> to vector<256x1xi1>
    %67 = vector.broadcast %66 : vector<256x1xi1> to vector<256x4xi1>
    %68 = arith.select %67, %59, %65 : vector<256x4xi1>, vector<256x4xf32>
    %69 = arith.truncf %68 : vector<256x4xf32> to vector<256x4xbf16>
    %c0_30 = arith.constant 0 : index
    %c20 = arith.constant 20 : index
    %70 = vector.load %arg9[%c0_30, %c20] : memref<256x36xbf16, #tpu.memory_space<vmem>>, vector<256x4xbf16>
    tpu.vector_store %arg9[%c0_30, %c20], %69 {strides = array<i32>} : memref<256x36xbf16, #tpu.memory_space<vmem>>, vector<256x4xbf16>,
    %c32 = arith.constant 32 : index
    %c0_31 = arith.constant 0 : index
    %71 = vector.load %arg7[%c32, %c0_31] : memref<290x4xf32, #tpu.memory_space<vmem>>, vector<256x4xf32>
    %72 = tpu.iota {dimensions = array<i32: 0>} : vector<256x1xi32>
    %c240_i32 = arith.constant 240 : i32
    %73 = vector.broadcast %c240_i32 : i32 to vector<256x1xi32>
    %74 = arith.cmpi slt, %72, %73 : vector<256x1xi32>
    %c16_i32_32 = arith.constant 16 : i32
    %75 = vector.broadcast %c16_i32_32 : i32 to vector<256x1xi32>
    %76 = arith.remsi %72, %75 : vector<256x1xi32>
    %c1_i32_33 = arith.constant 1 : i32
    %77 = vector.broadcast %c1_i32_33 : i32 to vector<256x1xi32>
    %78 = arith.cmpi sge, %76, %77 : vector<256x1xi32>
    %79 = arith.andi %74, %78 : vector<256x1xi1>
    %cst_34 = arith.constant 0.000000e+00 : f32
    %80 = vector.broadcast %cst_34 : f32 to vector<256x4xf32>
    %81 = vector.shape_cast %79 : vector<256x1xi1> to vector<256x1xi1>
    %82 = vector.broadcast %81 : vector<256x1xi1> to vector<256x4xi1>
    %83 = arith.select %82, %71, %80 : vector<256x4xi1>, vector<256x4xf32>
    %84 = arith.truncf %83 : vector<256x4xf32> to vector<256x4xbf16>
    %c0_35 = arith.constant 0 : index
    %c24 = arith.constant 24 : index
    %85 = vector.load %arg9[%c0_35, %c24] : memref<256x36xbf16, #tpu.memory_space<vmem>>, vector<256x4xbf16>
    tpu.vector_store %arg9[%c0_35, %c24], %84 {strides = array<i32>} : memref<256x36xbf16, #tpu.memory_space<vmem>>, vector<256x4xbf16>,
    %c33 = arith.constant 33 : index
    %c0_36 = arith.constant 0 : index
    %86 = vector.load %arg7[%c33, %c0_36] : memref<290x4xf32, #tpu.memory_space<vmem>>, vector<256x4xf32>
    %87 = tpu.iota {dimensions = array<i32: 0>} : vector<256x1xi32>
    %c240_i32_37 = arith.constant 240 : i32
    %88 = vector.broadcast %c240_i32_37 : i32 to vector<256x1xi32>
    %89 = arith.cmpi slt, %87, %88 : vector<256x1xi32>
    %cst_38 = arith.constant 0.000000e+00 : f32
    %90 = vector.broadcast %cst_38 : f32 to vector<256x4xf32>
    %91 = vector.shape_cast %89 : vector<256x1xi1> to vector<256x1xi1>
    %92 = vector.broadcast %91 : vector<256x1xi1> to vector<256x4xi1>
    %93 = arith.select %92, %86, %90 : vector<256x4xi1>, vector<256x4xf32>
    %94 = arith.truncf %93 : vector<256x4xf32> to vector<256x4xbf16>
    %c0_39 = arith.constant 0 : index
    %c28 = arith.constant 28 : index
    %95 = vector.load %arg9[%c0_39, %c28] : memref<256x36xbf16, #tpu.memory_space<vmem>>, vector<256x4xbf16>
    tpu.vector_store %arg9[%c0_39, %c28], %94 {strides = array<i32>} : memref<256x36xbf16, #tpu.memory_space<vmem>>, vector<256x4xbf16>,
    %c34 = arith.constant 34 : index
    %c0_40 = arith.constant 0 : index
    %96 = vector.load %arg7[%c34, %c0_40] : memref<290x4xf32, #tpu.memory_space<vmem>>, vector<256x4xf32>
    %97 = tpu.iota {dimensions = array<i32: 0>} : vector<256x1xi32>
    %c240_i32_41 = arith.constant 240 : i32
    %98 = vector.broadcast %c240_i32_41 : i32 to vector<256x1xi32>
    %99 = arith.cmpi slt, %97, %98 : vector<256x1xi32>
    %c16_i32_42 = arith.constant 16 : i32
    %100 = vector.broadcast %c16_i32_42 : i32 to vector<256x1xi32>
    %101 = arith.remsi %97, %100 : vector<256x1xi32>
    %c15_i32_43 = arith.constant 15 : i32
    %102 = vector.broadcast %c15_i32_43 : i32 to vector<256x1xi32>
    %103 = arith.cmpi slt, %101, %102 : vector<256x1xi32>
    %104 = arith.andi %99, %103 : vector<256x1xi1>
    %cst_44 = arith.constant 0.000000e+00 : f32
    %105 = vector.broadcast %cst_44 : f32 to vector<256x4xf32>
    %106 = vector.shape_cast %104 : vector<256x1xi1> to vector<256x1xi1>
    %107 = vector.broadcast %106 : vector<256x1xi1> to vector<256x4xi1>
    %108 = arith.select %107, %96, %105 : vector<256x4xi1>, vector<256x4xf32>
    %109 = arith.truncf %108 : vector<256x4xf32> to vector<256x4xbf16>
    %c0_45 = arith.constant 0 : index
    %c32_46 = arith.constant 32 : index
    %110 = vector.load %arg9[%c0_45, %c32_46] : memref<256x36xbf16, #tpu.memory_space<vmem>>, vector<256x4xbf16>
    tpu.vector_store %arg9[%c0_45, %c32_46], %109 {strides = array<i32>} : memref<256x36xbf16, #tpu.memory_space<vmem>>, vector<256x4xbf16>,
    %c0_47 = arith.constant 0 : index
    %c0_48 = arith.constant 0 : index
    %111 = vector.load %arg2[%c0_47, %c0_48] : memref<36x32xbf16, #tpu.memory_space<vmem>>, vector<36x32xbf16>
    %c0_49 = arith.constant 0 : index
    %c0_50 = arith.constant 0 : index
    %112 = vector.load %arg3[%c0_49, %c0_50] : memref<1x32xf32, #tpu.memory_space<vmem>>, vector<1x32xf32>
    %c0_i32 = arith.constant 0 : i32
    %c64_i32 = arith.constant 64 : i32
    %113 = arith.muli %c0_i32, %c64_i32 : i32
    %114 = tpu.assume_multiple %113, 64 : i32
    %115 = arith.index_cast %114 : i32 to index
    %c0_51 = arith.constant 0 : index
    %116 = vector.load %arg9[%115, %c0_51] : memref<256x36xbf16, #tpu.memory_space<vmem>>, vector<64x36xbf16>
    %cst_52 = arith.constant dense<0.000000e+00> : vector<64x32xf32>
    %117 = tpu.matmul %116, %111, %cst_52 {dimension_numbers = #tpu.dot_dimension_numbers<[1], [0], [0], [1], [0, 0, 1, 1], [], []>} : vector<64x36xbf16>, vector<36x32xbf16>, vector<64x32xf32> -> vector<64x32xf32>
    %118 = vector.broadcast %112 : vector<1x32xf32> to vector<64x32xf32>
    %119 = arith.addf %117, %118 : vector<64x32xf32>
    %cst_53 = arith.constant 0.000000e+00 : f32
    %120 = vector.broadcast %cst_53 : f32 to vector<64x32xf32>
    %121 = arith.maximumf %119, %120 : vector<64x32xf32>
    %c17_i32 = arith.constant 17 : i32
    %122 = arith.addi %c17_i32, %114 : i32
    %123 = arith.index_cast %122 : i32 to index
    %c0_54 = arith.constant 0 : index
    %124 = vector.load %arg8[%123, %c0_54] : memref<290x32xf32, #tpu.memory_space<vmem>>, vector<64x32xf32>
    tpu.vector_store %arg8[%123, %c0_54], %121 {strides = array<i32>} : memref<290x32xf32, #tpu.memory_space<vmem>>, vector<64x32xf32>,
    %c1_i32_55 = arith.constant 1 : i32
    %c64_i32_56 = arith.constant 64 : i32
    %125 = arith.muli %c1_i32_55, %c64_i32_56 : i32
    %126 = tpu.assume_multiple %125, 64 : i32
    %127 = arith.index_cast %126 : i32 to index
    %c0_57 = arith.constant 0 : index
    %128 = vector.load %arg9[%127, %c0_57] : memref<256x36xbf16, #tpu.memory_space<vmem>>, vector<64x36xbf16>
    %cst_58 = arith.constant dense<0.000000e+00> : vector<64x32xf32>
    %129 = tpu.matmul %128, %111, %cst_58 {dimension_numbers = #tpu.dot_dimension_numbers<[1], [0], [0], [1], [0, 0, 1, 1], [], []>} : vector<64x36xbf16>, vector<36x32xbf16>, vector<64x32xf32> -> vector<64x32xf32>
    %130 = vector.broadcast %112 : vector<1x32xf32> to vector<64x32xf32>
    %131 = arith.addf %129, %130 : vector<64x32xf32>
    %cst_59 = arith.constant 0.000000e+00 : f32
    %132 = vector.broadcast %cst_59 : f32 to vector<64x32xf32>
    %133 = arith.maximumf %131, %132 : vector<64x32xf32>
    %c17_i32_60 = arith.constant 17 : i32
    %134 = arith.addi %c17_i32_60, %126 : i32
    %135 = arith.index_cast %134 : i32 to index
    %c0_61 = arith.constant 0 : index
    %136 = vector.load %arg8[%135, %c0_61] : memref<290x32xf32, #tpu.memory_space<vmem>>, vector<64x32xf32>
    tpu.vector_store %arg8[%135, %c0_61], %133 {strides = array<i32>} : memref<290x32xf32, #tpu.memory_space<vmem>>, vector<64x32xf32>,
    %c2_i32 = arith.constant 2 : i32
    %c64_i32_62 = arith.constant 64 : i32
    %137 = arith.muli %c2_i32, %c64_i32_62 : i32
    %138 = tpu.assume_multiple %137, 64 : i32
    %139 = arith.index_cast %138 : i32 to index
    %c0_63 = arith.constant 0 : index
    %140 = vector.load %arg9[%139, %c0_63] : memref<256x36xbf16, #tpu.memory_space<vmem>>, vector<64x36xbf16>
    %cst_64 = arith.constant dense<0.000000e+00> : vector<64x32xf32>
    %141 = tpu.matmul %140, %111, %cst_64 {dimension_numbers = #tpu.dot_dimension_numbers<[1], [0], [0], [1], [0, 0, 1, 1], [], []>} : vector<64x36xbf16>, vector<36x32xbf16>, vector<64x32xf32> -> vector<64x32xf32>
    %142 = vector.broadcast %112 : vector<1x32xf32> to vector<64x32xf32>
    %143 = arith.addf %141, %142 : vector<64x32xf32>
    %cst_65 = arith.constant 0.000000e+00 : f32
    %144 = vector.broadcast %cst_65 : f32 to vector<64x32xf32>
    %145 = arith.maximumf %143, %144 : vector<64x32xf32>
    %c17_i32_66 = arith.constant 17 : i32
    %146 = arith.addi %c17_i32_66, %138 : i32
    %147 = arith.index_cast %146 : i32 to index
    %c0_67 = arith.constant 0 : index
    %148 = vector.load %arg8[%147, %c0_67] : memref<290x32xf32, #tpu.memory_space<vmem>>, vector<64x32xf32>
    tpu.vector_store %arg8[%147, %c0_67], %145 {strides = array<i32>} : memref<290x32xf32, #tpu.memory_space<vmem>>, vector<64x32xf32>,
    %c3_i32 = arith.constant 3 : i32
    %c64_i32_68 = arith.constant 64 : i32
    %149 = arith.muli %c3_i32, %c64_i32_68 : i32
    %150 = tpu.assume_multiple %149, 64 : i32
    %151 = arith.index_cast %150 : i32 to index
    %c0_69 = arith.constant 0 : index
    %152 = vector.load %arg9[%151, %c0_69] : memref<256x36xbf16, #tpu.memory_space<vmem>>, vector<64x36xbf16>
    %cst_70 = arith.constant dense<0.000000e+00> : vector<64x32xf32>
    %153 = tpu.matmul %152, %111, %cst_70 {dimension_numbers = #tpu.dot_dimension_numbers<[1], [0], [0], [1], [0, 0, 1, 1], [], []>} : vector<64x36xbf16>, vector<36x32xbf16>, vector<64x32xf32> -> vector<64x32xf32>
    %154 = vector.broadcast %112 : vector<1x32xf32> to vector<64x32xf32>
    %155 = arith.addf %153, %154 : vector<64x32xf32>
    %cst_71 = arith.constant 0.000000e+00 : f32
    %156 = vector.broadcast %cst_71 : f32 to vector<64x32xf32>
    %157 = arith.maximumf %155, %156 : vector<64x32xf32>
    %c17_i32_72 = arith.constant 17 : i32
    %158 = arith.addi %c17_i32_72, %150 : i32
    %159 = arith.index_cast %158 : i32 to index
    %c0_73 = arith.constant 0 : index
    %160 = vector.load %arg8[%159, %c0_73] : memref<290x32xf32, #tpu.memory_space<vmem>>, vector<64x32xf32>
    tpu.vector_store %arg8[%159, %c0_73], %157 {strides = array<i32>} : memref<290x32xf32, #tpu.memory_space<vmem>>, vector<64x32xf32>,
    %c4_i32 = arith.constant 4 : i32
    %c0_74 = arith.constant 0 : index
    %c0_75 = arith.constant 0 : index
    %161 = vector.load %arg8[%c0_74, %c0_75] : memref<290x32xf32, #tpu.memory_space<vmem>>, vector<256x32xf32>
    %162 = tpu.iota {dimensions = array<i32: 0>} : vector<256x1xi32>
    %c16_i32_76 = arith.constant 16 : i32
    %163 = vector.broadcast %c16_i32_76 : i32 to vector<256x1xi32>
    %164 = arith.cmpi sge, %162, %163 : vector<256x1xi32>
    %c16_i32_77 = arith.constant 16 : i32
    %165 = vector.broadcast %c16_i32_77 : i32 to vector<256x1xi32>
    %166 = arith.remsi %162, %165 : vector<256x1xi32>
    %c1_i32_78 = arith.constant 1 : i32
    %167 = vector.broadcast %c1_i32_78 : i32 to vector<256x1xi32>
    %168 = arith.cmpi sge, %166, %167 : vector<256x1xi32>
    %169 = arith.andi %164, %168 : vector<256x1xi1>
    %cst_79 = arith.constant 0.000000e+00 : f32
    %170 = vector.broadcast %cst_79 : f32 to vector<256x32xf32>
    %171 = vector.shape_cast %169 : vector<256x1xi1> to vector<256x1xi1>
    %172 = vector.broadcast %171 : vector<256x1xi1> to vector<256x32xi1>
    %173 = arith.select %172, %161, %170 : vector<256x32xi1>, vector<256x32xf32>
    %174 = arith.truncf %173 : vector<256x32xf32> to vector<256x32xbf16>
    %c0_80 = arith.constant 0 : index
    %c0_81 = arith.constant 0 : index
    %175 = vector.load %arg10[%c0_80, %c0_81] : memref<256x288xbf16, #tpu.memory_space<vmem>>, vector<256x32xbf16>
    tpu.vector_store %arg10[%c0_80, %c0_81], %174 {strides = array<i32>} : memref<256x288xbf16, #tpu.memory_space<vmem>>, vector<256x32xbf16>,
    %c1_82 = arith.constant 1 : index
    %c0_83 = arith.constant 0 : index
    %176 = vector.load %arg8[%c1_82, %c0_83] : memref<290x32xf32, #tpu.memory_space<vmem>>, vector<256x32xf32>
    %177 = tpu.iota {dimensions = array<i32: 0>} : vector<256x1xi32>
    %c16_i32_84 = arith.constant 16 : i32
    %178 = vector.broadcast %c16_i32_84 : i32 to vector<256x1xi32>
    %179 = arith.cmpi sge, %177, %178 : vector<256x1xi32>
    %cst_85 = arith.constant 0.000000e+00 : f32
    %180 = vector.broadcast %cst_85 : f32 to vector<256x32xf32>
    %181 = vector.shape_cast %179 : vector<256x1xi1> to vector<256x1xi1>
    %182 = vector.broadcast %181 : vector<256x1xi1> to vector<256x32xi1>
    %183 = arith.select %182, %176, %180 : vector<256x32xi1>, vector<256x32xf32>
    %184 = arith.truncf %183 : vector<256x32xf32> to vector<256x32xbf16>
    %c0_86 = arith.constant 0 : index
    %c32_87 = arith.constant 32 : index
    %185 = vector.load %arg10[%c0_86, %c32_87] : memref<256x288xbf16, #tpu.memory_space<vmem>>, vector<256x32xbf16>
    tpu.vector_store %arg10[%c0_86, %c32_87], %184 {strides = array<i32>} : memref<256x288xbf16, #tpu.memory_space<vmem>>, vector<256x32xbf16>,
    %c2_88 = arith.constant 2 : index
    %c0_89 = arith.constant 0 : index
    %186 = vector.load %arg8[%c2_88, %c0_89] : memref<290x32xf32, #tpu.memory_space<vmem>>, vector<256x32xf32>
    %187 = tpu.iota {dimensions = array<i32: 0>} : vector<256x1xi32>
    %c16_i32_90 = arith.constant 16 : i32
    %188 = vector.broadcast %c16_i32_90 : i32 to vector<256x1xi32>
    %189 = arith.cmpi sge, %187, %188 : vector<256x1xi32>
    %c16_i32_91 = arith.constant 16 : i32
    %190 = vector.broadcast %c16_i32_91 : i32 to vector<256x1xi32>
    %191 = arith.remsi %187, %190 : vector<256x1xi32>
    %c15_i32_92 = arith.constant 15 : i32
    %192 = vector.broadcast %c15_i32_92 : i32 to vector<256x1xi32>
    %193 = arith.cmpi slt, %191, %192 : vector<256x1xi32>
    %194 = arith.andi %189, %193 : vector<256x1xi1>
    %cst_93 = arith.constant 0.000000e+00 : f32
    %195 = vector.broadcast %cst_93 : f32 to vector<256x32xf32>
    %196 = vector.shape_cast %194 : vector<256x1xi1> to vector<256x1xi1>
    %197 = vector.broadcast %196 : vector<256x1xi1> to vector<256x32xi1>
    %198 = arith.select %197, %186, %195 : vector<256x32xi1>, vector<256x32xf32>
    %199 = arith.truncf %198 : vector<256x32xf32> to vector<256x32xbf16>
    %c0_94 = arith.constant 0 : index
    %c64 = arith.constant 64 : index
    %200 = vector.load %arg10[%c0_94, %c64] : memref<256x288xbf16, #tpu.memory_space<vmem>>, vector<256x32xbf16>
    tpu.vector_store %arg10[%c0_94, %c64], %199 {strides = array<i32>} : memref<256x288xbf16, #tpu.memory_space<vmem>>, vector<256x32xbf16>,
    %c16_95 = arith.constant 16 : index
    %c0_96 = arith.constant 0 : index
    %201 = vector.load %arg8[%c16_95, %c0_96] : memref<290x32xf32, #tpu.memory_space<vmem>>, vector<256x32xf32>
    %202 = tpu.iota {dimensions = array<i32: 0>} : vector<256x1xi32>
    %c16_i32_97 = arith.constant 16 : i32
    %203 = vector.broadcast %c16_i32_97 : i32 to vector<256x1xi32>
    %204 = arith.remsi %202, %203 : vector<256x1xi32>
    %c1_i32_98 = arith.constant 1 : i32
    %205 = vector.broadcast %c1_i32_98 : i32 to vector<256x1xi32>
    %206 = arith.cmpi sge, %204, %205 : vector<256x1xi32>
    %cst_99 = arith.constant 0.000000e+00 : f32
    %207 = vector.broadcast %cst_99 : f32 to vector<256x32xf32>
    %208 = vector.shape_cast %206 : vector<256x1xi1> to vector<256x1xi1>
    %209 = vector.broadcast %208 : vector<256x1xi1> to vector<256x32xi1>
    %210 = arith.select %209, %201, %207 : vector<256x32xi1>, vector<256x32xf32>
    %211 = arith.truncf %210 : vector<256x32xf32> to vector<256x32xbf16>
    %c0_100 = arith.constant 0 : index
    %c96 = arith.constant 96 : index
    %212 = vector.load %arg10[%c0_100, %c96] : memref<256x288xbf16, #tpu.memory_space<vmem>>, vector<256x32xbf16>
    tpu.vector_store %arg10[%c0_100, %c96], %211 {strides = array<i32>} : memref<256x288xbf16, #tpu.memory_space<vmem>>, vector<256x32xbf16>,
    %c17_101 = arith.constant 17 : index
    %c0_102 = arith.constant 0 : index
    %213 = vector.load %arg8[%c17_101, %c0_102] : memref<290x32xf32, #tpu.memory_space<vmem>>, vector<256x32xf32>
    %214 = arith.truncf %213 : vector<256x32xf32> to vector<256x32xbf16>
    %c0_103 = arith.constant 0 : index
    %c128 = arith.constant 128 : index
    %215 = vector.load %arg10[%c0_103, %c128] : memref<256x288xbf16, #tpu.memory_space<vmem>>, vector<256x32xbf16>
    tpu.vector_store %arg10[%c0_103, %c128], %214 {strides = array<i32>} : memref<256x288xbf16, #tpu.memory_space<vmem>>, vector<256x32xbf16>,
    %c18_104 = arith.constant 18 : index
    %c0_105 = arith.constant 0 : index
    %216 = vector.load %arg8[%c18_104, %c0_105] : memref<290x32xf32, #tpu.memory_space<vmem>>, vector<256x32xf32>
    %217 = tpu.iota {dimensions = array<i32: 0>} : vector<256x1xi32>
    %c16_i32_106 = arith.constant 16 : i32
    %218 = vector.broadcast %c16_i32_106 : i32 to vector<256x1xi32>
    %219 = arith.remsi %217, %218 : vector<256x1xi32>
    %c15_i32_107 = arith.constant 15 : i32
    %220 = vector.broadcast %c15_i32_107 : i32 to vector<256x1xi32>
    %221 = arith.cmpi slt, %219, %220 : vector<256x1xi32>
    %cst_108 = arith.constant 0.000000e+00 : f32
    %222 = vector.broadcast %cst_108 : f32 to vector<256x32xf32>
    %223 = vector.shape_cast %221 : vector<256x1xi1> to vector<256x1xi1>
    %224 = vector.broadcast %223 : vector<256x1xi1> to vector<256x32xi1>
    %225 = arith.select %224, %216, %222 : vector<256x32xi1>, vector<256x32xf32>
    %226 = arith.truncf %225 : vector<256x32xf32> to vector<256x32xbf16>
    %c0_109 = arith.constant 0 : index
    %c160 = arith.constant 160 : index
    %227 = vector.load %arg10[%c0_109, %c160] : memref<256x288xbf16, #tpu.memory_space<vmem>>, vector<256x32xbf16>
    tpu.vector_store %arg10[%c0_109, %c160], %226 {strides = array<i32>} : memref<256x288xbf16, #tpu.memory_space<vmem>>, vector<256x32xbf16>,
    %c32_110 = arith.constant 32 : index
    %c0_111 = arith.constant 0 : index
    %228 = vector.load %arg8[%c32_110, %c0_111] : memref<290x32xf32, #tpu.memory_space<vmem>>, vector<256x32xf32>
    %229 = tpu.iota {dimensions = array<i32: 0>} : vector<256x1xi32>
    %c240_i32_112 = arith.constant 240 : i32
    %230 = vector.broadcast %c240_i32_112 : i32 to vector<256x1xi32>
    %231 = arith.cmpi slt, %229, %230 : vector<256x1xi32>
    %c16_i32_113 = arith.constant 16 : i32
    %232 = vector.broadcast %c16_i32_113 : i32 to vector<256x1xi32>
    %233 = arith.remsi %229, %232 : vector<256x1xi32>
    %c1_i32_114 = arith.constant 1 : i32
    %234 = vector.broadcast %c1_i32_114 : i32 to vector<256x1xi32>
    %235 = arith.cmpi sge, %233, %234 : vector<256x1xi32>
    %236 = arith.andi %231, %235 : vector<256x1xi1>
    %cst_115 = arith.constant 0.000000e+00 : f32
    %237 = vector.broadcast %cst_115 : f32 to vector<256x32xf32>
    %238 = vector.shape_cast %236 : vector<256x1xi1> to vector<256x1xi1>
    %239 = vector.broadcast %238 : vector<256x1xi1> to vector<256x32xi1>
    %240 = arith.select %239, %228, %237 : vector<256x32xi1>, vector<256x32xf32>
    %241 = arith.truncf %240 : vector<256x32xf32> to vector<256x32xbf16>
    %c0_116 = arith.constant 0 : index
    %c192 = arith.constant 192 : index
    %242 = vector.load %arg10[%c0_116, %c192] : memref<256x288xbf16, #tpu.memory_space<vmem>>, vector<256x32xbf16>
    tpu.vector_store %arg10[%c0_116, %c192], %241 {strides = array<i32>} : memref<256x288xbf16, #tpu.memory_space<vmem>>, vector<256x32xbf16>,
    %c33_117 = arith.constant 33 : index
    %c0_118 = arith.constant 0 : index
    %243 = vector.load %arg8[%c33_117, %c0_118] : memref<290x32xf32, #tpu.memory_space<vmem>>, vector<256x32xf32>
    %244 = tpu.iota {dimensions = array<i32: 0>} : vector<256x1xi32>
    %c240_i32_119 = arith.constant 240 : i32
    %245 = vector.broadcast %c240_i32_119 : i32 to vector<256x1xi32>
    %246 = arith.cmpi slt, %244, %245 : vector<256x1xi32>
    %cst_120 = arith.constant 0.000000e+00 : f32
    %247 = vector.broadcast %cst_120 : f32 to vector<256x32xf32>
    %248 = vector.shape_cast %246 : vector<256x1xi1> to vector<256x1xi1>
    %249 = vector.broadcast %248 : vector<256x1xi1> to vector<256x32xi1>
    %250 = arith.select %249, %243, %247 : vector<256x32xi1>, vector<256x32xf32>
    %251 = arith.truncf %250 : vector<256x32xf32> to vector<256x32xbf16>
    %c0_121 = arith.constant 0 : index
    %c224 = arith.constant 224 : index
    %252 = vector.load %arg10[%c0_121, %c224] : memref<256x288xbf16, #tpu.memory_space<vmem>>, vector<256x32xbf16>
    tpu.vector_store %arg10[%c0_121, %c224], %251 {strides = array<i32>} : memref<256x288xbf16, #tpu.memory_space<vmem>>, vector<256x32xbf16>,
    %c34_122 = arith.constant 34 : index
    %c0_123 = arith.constant 0 : index
    %253 = vector.load %arg8[%c34_122, %c0_123] : memref<290x32xf32, #tpu.memory_space<vmem>>, vector<256x32xf32>
    %254 = tpu.iota {dimensions = array<i32: 0>} : vector<256x1xi32>
    %c240_i32_124 = arith.constant 240 : i32
    %255 = vector.broadcast %c240_i32_124 : i32 to vector<256x1xi32>
    %256 = arith.cmpi slt, %254, %255 : vector<256x1xi32>
    %c16_i32_125 = arith.constant 16 : i32
    %257 = vector.broadcast %c16_i32_125 : i32 to vector<256x1xi32>
    %258 = arith.remsi %254, %257 : vector<256x1xi32>
    %c15_i32_126 = arith.constant 15 : i32
    %259 = vector.broadcast %c15_i32_126 : i32 to vector<256x1xi32>
    %260 = arith.cmpi slt, %258, %259 : vector<256x1xi32>
    %261 = arith.andi %256, %260 : vector<256x1xi1>
    %cst_127 = arith.constant 0.000000e+00 : f32
    %262 = vector.broadcast %cst_127 : f32 to vector<256x32xf32>
    %263 = vector.shape_cast %261 : vector<256x1xi1> to vector<256x1xi1>
    %264 = vector.broadcast %263 : vector<256x1xi1> to vector<256x32xi1>
    %265 = arith.select %264, %253, %262 : vector<256x32xi1>, vector<256x32xf32>
    %266 = arith.truncf %265 : vector<256x32xf32> to vector<256x32xbf16>
    %c0_128 = arith.constant 0 : index
    %c256 = arith.constant 256 : index
    %267 = vector.load %arg10[%c0_128, %c256] : memref<256x288xbf16, #tpu.memory_space<vmem>>, vector<256x32xbf16>
    tpu.vector_store %arg10[%c0_128, %c256], %266 {strides = array<i32>} : memref<256x288xbf16, #tpu.memory_space<vmem>>, vector<256x32xbf16>,
    %c0_129 = arith.constant 0 : index
    %c0_130 = arith.constant 0 : index
    %268 = vector.load %arg4[%c0_129, %c0_130] : memref<288x128xbf16, #tpu.memory_space<vmem>>, vector<288x128xbf16>
    %c0_131 = arith.constant 0 : index
    %c0_132 = arith.constant 0 : index
    %269 = vector.load %arg5[%c0_131, %c0_132] : memref<1x128xf32, #tpu.memory_space<vmem>>, vector<1x128xf32>
    %270 = tpu.iota {dimensions = array<i32: 1>} : vector<64x128xi32>
    %c27_i32 = arith.constant 27 : i32
    %271 = vector.broadcast %c27_i32 : i32 to vector<64x128xi32>
    %272 = arith.cmpi sge, %270, %271 : vector<64x128xi32>
    %c51_i32 = arith.constant 51 : i32
    %273 = vector.broadcast %c51_i32 : i32 to vector<64x128xi32>
    %274 = arith.cmpi slt, %270, %273 : vector<64x128xi32>
    %275 = arith.andi %272, %274 : vector<64x128xi1>
    %c0_i32_133 = arith.constant 0 : i32
    %c64_i32_134 = arith.constant 64 : i32
    %276 = arith.muli %c0_i32_133, %c64_i32_134 : i32
    %277 = tpu.assume_multiple %276, 64 : i32
    %278 = arith.index_cast %277 : i32 to index
    %c0_135 = arith.constant 0 : index
    %279 = vector.load %arg10[%278, %c0_135] : memref<256x288xbf16, #tpu.memory_space<vmem>>, vector<64x288xbf16>
    %cst_136 = arith.constant dense<0.000000e+00> : vector<64x128xf32>
    %280 = tpu.matmul %279, %268, %cst_136 {dimension_numbers = #tpu.dot_dimension_numbers<[1], [0], [0], [1], [0, 0, 1, 1], [], []>} : vector<64x288xbf16>, vector<288x128xbf16>, vector<64x128xf32> -> vector<64x128xf32>
    %281 = vector.broadcast %269 : vector<1x128xf32> to vector<64x128xf32>
    %282 = arith.addf %280, %281 : vector<64x128xf32>
    %283 = math.tanh %282 : vector<64x128xf32>
    %284 = arith.select %275, %283, %282 : vector<64x128xi1>, vector<64x128xf32>
    %c0_137 = arith.constant 0 : index
    %285 = arith.index_cast %277 : i32 to index
    %c0_138 = arith.constant 0 : index
    %286 = vector.load %arg6[%c0_137, %285, %c0_138] : memref<1x256x128xf32, #tpu.memory_space<vmem>>, vector<1x64x128xf32>
    %287 = vector.shape_cast %286 : vector<1x64x128xf32> to vector<64x128xf32>
    %288 = vector.shape_cast %284 : vector<64x128xf32> to vector<1x64x128xf32>
    tpu.vector_store %arg6[%c0_137, %285, %c0_138], %288 {strides = array<i32>} : memref<1x256x128xf32, #tpu.memory_space<vmem>>, vector<1x64x128xf32>,
    %c1_i32_139 = arith.constant 1 : i32
    %c64_i32_140 = arith.constant 64 : i32
    %289 = arith.muli %c1_i32_139, %c64_i32_140 : i32
    %290 = tpu.assume_multiple %289, 64 : i32
    %291 = arith.index_cast %290 : i32 to index
    %c0_141 = arith.constant 0 : index
    %292 = vector.load %arg10[%291, %c0_141] : memref<256x288xbf16, #tpu.memory_space<vmem>>, vector<64x288xbf16>
    %cst_142 = arith.constant dense<0.000000e+00> : vector<64x128xf32>
    %293 = tpu.matmul %292, %268, %cst_142 {dimension_numbers = #tpu.dot_dimension_numbers<[1], [0], [0], [1], [0, 0, 1, 1], [], []>} : vector<64x288xbf16>, vector<288x128xbf16>, vector<64x128xf32> -> vector<64x128xf32>
    %294 = vector.broadcast %269 : vector<1x128xf32> to vector<64x128xf32>
    %295 = arith.addf %293, %294 : vector<64x128xf32>
    %296 = math.tanh %295 : vector<64x128xf32>
    %297 = arith.select %275, %296, %295 : vector<64x128xi1>, vector<64x128xf32>
    %c0_143 = arith.constant 0 : index
    %298 = arith.index_cast %290 : i32 to index
    %c0_144 = arith.constant 0 : index
    %299 = vector.load %arg6[%c0_143, %298, %c0_144] : memref<1x256x128xf32, #tpu.memory_space<vmem>>, vector<1x64x128xf32>
    %300 = vector.shape_cast %299 : vector<1x64x128xf32> to vector<64x128xf32>
    %301 = vector.shape_cast %297 : vector<64x128xf32> to vector<1x64x128xf32>
    tpu.vector_store %arg6[%c0_143, %298, %c0_144], %301 {strides = array<i32>} : memref<1x256x128xf32, #tpu.memory_space<vmem>>, vector<1x64x128xf32>,
    %c2_i32_145 = arith.constant 2 : i32
    %c64_i32_146 = arith.constant 64 : i32
    %302 = arith.muli %c2_i32_145, %c64_i32_146 : i32
    %303 = tpu.assume_multiple %302, 64 : i32
    %304 = arith.index_cast %303 : i32 to index
    %c0_147 = arith.constant 0 : index
    %305 = vector.load %arg10[%304, %c0_147] : memref<256x288xbf16, #tpu.memory_space<vmem>>, vector<64x288xbf16>
    %cst_148 = arith.constant dense<0.000000e+00> : vector<64x128xf32>
    %306 = tpu.matmul %305, %268, %cst_148 {dimension_numbers = #tpu.dot_dimension_numbers<[1], [0], [0], [1], [0, 0, 1, 1], [], []>} : vector<64x288xbf16>, vector<288x128xbf16>, vector<64x128xf32> -> vector<64x128xf32>
    %307 = vector.broadcast %269 : vector<1x128xf32> to vector<64x128xf32>
    %308 = arith.addf %306, %307 : vector<64x128xf32>
    %309 = math.tanh %308 : vector<64x128xf32>
    %310 = arith.select %275, %309, %308 : vector<64x128xi1>, vector<64x128xf32>
    %c0_149 = arith.constant 0 : index
    %311 = arith.index_cast %303 : i32 to index
    %c0_150 = arith.constant 0 : index
    %312 = vector.load %arg6[%c0_149, %311, %c0_150] : memref<1x256x128xf32, #tpu.memory_space<vmem>>, vector<1x64x128xf32>
    %313 = vector.shape_cast %312 : vector<1x64x128xf32> to vector<64x128xf32>
    %314 = vector.shape_cast %310 : vector<64x128xf32> to vector<1x64x128xf32>
    tpu.vector_store %arg6[%c0_149, %311, %c0_150], %314 {strides = array<i32>} : memref<1x256x128xf32, #tpu.memory_space<vmem>>, vector<1x64x128xf32>,
    %c3_i32_151 = arith.constant 3 : i32
    %c64_i32_152 = arith.constant 64 : i32
    %315 = arith.muli %c3_i32_151, %c64_i32_152 : i32
    %316 = tpu.assume_multiple %315, 64 : i32
    %317 = arith.index_cast %316 : i32 to index
    %c0_153 = arith.constant 0 : index
    %318 = vector.load %arg10[%317, %c0_153] : memref<256x288xbf16, #tpu.memory_space<vmem>>, vector<64x288xbf16>
    %cst_154 = arith.constant dense<0.000000e+00> : vector<64x128xf32>
    %319 = tpu.matmul %318, %268, %cst_154 {dimension_numbers = #tpu.dot_dimension_numbers<[1], [0], [0], [1], [0, 0, 1, 1], [], []>} : vector<64x288xbf16>, vector<288x128xbf16>, vector<64x128xf32> -> vector<64x128xf32>
    %320 = vector.broadcast %269 : vector<1x128xf32> to vector<64x128xf32>
    %321 = arith.addf %319, %320 : vector<64x128xf32>
    %322 = math.tanh %321 : vector<64x128xf32>
    %323 = arith.select %275, %322, %321 : vector<64x128xi1>, vector<64x128xf32>
    %c0_155 = arith.constant 0 : index
    %324 = arith.index_cast %316 : i32 to index
    %c0_156 = arith.constant 0 : index
    %325 = vector.load %arg6[%c0_155, %324, %c0_156] : memref<1x256x128xf32, #tpu.memory_space<vmem>>, vector<1x64x128xf32>
    %326 = vector.shape_cast %325 : vector<1x64x128xf32> to vector<64x128xf32>
    %327 = vector.shape_cast %323 : vector<64x128xf32> to vector<1x64x128xf32>
    tpu.vector_store %arg6[%c0_155, %324, %c0_156], %327 {strides = array<i32>} : memref<1x256x128xf32, #tpu.memory_space<vmem>>, vector<1x64x128xf32>,
    %c4_i32_157 = arith.constant 4 : i32
    return
  }
  func.func @transform_0(%arg0: i32) -> (i32, i32, i32) {
    %c0_i32 = arith.constant 0 : i32
    %c0_i32_0 = arith.constant 0 : i32
    %c0_i32_1 = arith.constant 0 : i32
    return %arg0, %c0_i32, %c0_i32_0 : i32, i32, i32
  }
  func.func @transform_1(%arg0: i32) -> (i32, i32) {
    %c0_i32 = arith.constant 0 : i32
    %c0_i32_0 = arith.constant 0 : i32
    %c0_i32_1 = arith.constant 0 : i32
    return %c0_i32, %c0_i32_0 : i32, i32
  }
  func.func @transform_2(%arg0: i32) -> (i32, i32) {
    %c0_i32 = arith.constant 0 : i32
    %c0_i32_0 = arith.constant 0 : i32
    %c0_i32_1 = arith.constant 0 : i32
    return %c0_i32, %c0_i32_0 : i32, i32
  }
  func.func @transform_3(%arg0: i32) -> (i32, i32) {
    %c0_i32 = arith.constant 0 : i32
    %c0_i32_0 = arith.constant 0 : i32
    %c0_i32_1 = arith.constant 0 : i32
    return %c0_i32, %c0_i32_0 : i32, i32
  }
  func.func @transform_4(%arg0: i32) -> (i32, i32) {
    %c0_i32 = arith.constant 0 : i32
    %c0_i32_0 = arith.constant 0 : i32
    %c0_i32_1 = arith.constant 0 : i32
    return %c0_i32, %c0_i32_0 : i32, i32
  }
  func.func @transform_5(%arg0: i32) -> (i32, i32, i32) {
    %c0_i32 = arith.constant 0 : i32
    %c0_i32_0 = arith.constant 0 : i32
    %c0_i32_1 = arith.constant 0 : i32
    return %arg0, %c0_i32, %c0_i32_0 : i32, i32, i32
  }
}

</mosaic_0001>

<llo_original>
// kernel: prediction_module_forward.1
$region0: #{prediction_module_forward.1}
  #allocation0 [shape = 'u32[]', space=smem, size = 0x4, offset = 0x4, fixed_abs, tag = 'smem constant byte address 0x4 - core index']
  #allocation1 [shape = 'u32[72,128]{1,0:T(1,128)}', space=vmem, size = 0x9000, scoped, tag = 'internal scratch']
  #allocation2 [shape = 'f32[290,4]{1,0:T(8,128)}', space=vmem, size = 0x25000, scoped, tag = 'scratch operand']
  #allocation3 [shape = 'f32[290,32]{1,0:T(8,128)}', space=vmem, size = 0x25000, scoped, tag = 'scratch operand']
  #allocation4 [shape = 'bf16[256,36]{1,0:T(8,128)(2,1)}', space=vmem, size = 0x10000, scoped, tag = 'scratch operand']
  #allocation5 [shape = 'bf16[256,288]{1,0:T(8,128)(2,1)}', space=vmem, size = 0x30000, scoped, tag = 'scratch operand']
  %s0 = inlined_call_operand.vmem [shape: bf16[2,256,4], index: 0, kind: input, shape index: {}]
  %s1 = inlined_call_operand.vmem [shape: bf16[36,32], index: 1, kind: input, shape index: {}]
  %s2 = inlined_call_operand.vmem [shape: f32[1,32], index: 2, kind: input, shape index: {}]
  %s3 = inlined_call_operand.vmem [shape: bf16[288,128], index: 3, kind: input, shape index: {}]
  %s4 = inlined_call_operand.vmem [shape: f32[1,128], index: 4, kind: input, shape index: {}]
  %s5 = inlined_call_operand.vmem [shape: f32[2,256,128], index: 5, kind: output, shape index: {}]
  %s6 = sld [smem:[#allocation0]]
  $region53: #{prediction_module_forward.1} parent=0
    _
  %s8 = ssub.s32 1, %s6
  %s9 = scalar_select 0, %s8, %s6
  loop: start=0, step=1, limit=4
  $region2: #{prediction_module_forward.1} parent=0 // loop_pre_header
    _
  $region3: #{prediction_module_forward.1} parent=0 // loop_header
    %s11 = sphi 0, %s15
    %p12 = scmp.ge.s32.totalorder %s11, 4
    %s21 = sphi 0, %s23
    %s24 = sphi 0, %s21
    %s25 = sphi 0, %s24
    %s41 = sphi 0, %s25
    %s45 = sphi 0, %s45
    %s47 = sphi 0, %s45
    %s48 = sphi 0, %s47
    %s62 = sphi 0, %s48
    %s66 = sphi 0, %s66
    %s68 = sphi 0, %s66
    %s69 = sphi 0, %s68
    %s83 = sphi 0, %s69
    %s87 = sphi 0, %s87
    %s89 = sphi 0, %s87
    %s90 = sphi 0, %s89
    %s104 = sphi 0, %s90
    %s108 = sphi 0, %s108
    %s110 = sphi 0, %s108
    %s111 = sphi 0, %s110
    %s125 = sphi 0, %s111
    %s131 = sphi 0, %s133
    %s134 = sphi 0, %s131
    %s135 = sphi 0, %s134
    %s151 = sphi 0, %s135
  $region4: #{prediction_module_forward.1} parent=0 // loop_header_branch
    %14 = sbr.rel (%p12) target = $region8
  $region5: #{prediction_module_forward.1} parent=0 // loop_body
    %s16 = ssub.s32 %s11, 1
    %s17 = ssub.s32 %s11, 2
    %s18 = sadd.s32 %s11, 1
    %s19 = ssub.s32 %s11, %s18
    %p20 = scmp.eq.s32.totalorder %s19, 0
    %s22 = sadd.s32 %s21, 1
    %s23 = scalar_select %p20, %s21, %s22
    %p26 = pneg %p20
    %p27 = scmp.eq.s32.totalorder %s11, 1
    %p28 = por %p26, %p27
    %p29 = scmp.ne.s32.totalorder %s21, %s24
    %p30 = scmp.eq.s32.totalorder %s11, 0
    %p31 = por %p29, %p30
    %p32 = scmp.ne.s32.totalorder %s21, %s24
    %p33 = scmp.eq.s32.totalorder %s16, 1
    %p34 = por %p32, %p33
    %p35 = scmp.ne.s32.totalorder %s24, %s25
    %p36 = scmp.eq.s32.totalorder %s16, 0
    %p37 = por %p35, %p36
    %p38 = scmp.ne.s32.totalorder %s24, %s25
    %p39 = scmp.eq.s32.totalorder %s17, 1
    %p40 = por %p38, %p39
    %p42 = scmp.ne.s32.totalorder %s25, %s41
    %p43 = scmp.eq.s32.totalorder %s17, 0
    %p44 = por %p42, %p43
    %s46 = sadd.s32 %s45, 1
    %p49 = scmp.eq.s32.totalorder %s11, 1
    %p50 = scmp.ne.s32.totalorder %s45, %s47
    %p51 = scmp.eq.s32.totalorder %s11, 0
    %p52 = por %p50, %p51
    %p53 = scmp.ne.s32.totalorder %s45, %s47
    %p54 = scmp.eq.s32.totalorder %s16, 1
    %p55 = por %p53, %p54
    %p56 = scmp.ne.s32.totalorder %s47, %s48
    %p57 = scmp.eq.s32.totalorder %s16, 0
    %p58 = por %p56, %p57
    %p59 = scmp.ne.s32.totalorder %s47, %s48
    %p60 = scmp.eq.s32.totalorder %s17, 1
    %p61 = por %p59, %p60
    %p63 = scmp.ne.s32.totalorder %s48, %s62
    %p64 = scmp.eq.s32.totalorder %s17, 0
    %p65 = por %p63, %p64
    %s67 = sadd.s32 %s66, 1
    %p70 = scmp.eq.s32.totalorder %s11, 1
    %p71 = scmp.ne.s32.totalorder %s66, %s68
    %p72 = scmp.eq.s32.totalorder %s11, 0
    %p73 = por %p71, %p72
    %p74 = scmp.ne.s32.totalorder %s66, %s68
    %p75 = scmp.eq.s32.totalorder %s16, 1
    %p76 = por %p74, %p75
    %p77 = scmp.ne.s32.totalorder %s68, %s69
    %p78 = scmp.eq.s32.totalorder %s16, 0
    %p79 = por %p77, %p78
    %p80 = scmp.ne.s32.totalorder %s68, %s69
    %p81 = scmp.eq.s32.totalorder %s17, 1
    %p82 = por %p80, %p81
    %p84 = scmp.ne.s32.totalorder %s69, %s83
    %p85 = scmp.eq.s32.totalorder %s17, 0
    %p86 = por %p84, %p85
    %s88 = sadd.s32 %s87, 1
    %p91 = scmp.eq.s32.totalorder %s11, 1
    %p92 = scmp.ne.s32.totalorder %s87, %s89
    %p93 = scmp.eq.s32.totalorder %s11, 0
    %p94 = por %p92, %p93
    %p95 = scmp.ne.s32.totalorder %s87, %s89
    %p96 = scmp.eq.s32.totalorder %s16, 1
    %p97 = por %p95, %p96
    %p98 = scmp.ne.s32.totalorder %s89, %s90
    %p99 = scmp.eq.s32.totalorder %s16, 0
    %p100 = por %p98, %p99
    %p101 = scmp.ne.s32.totalorder %s89, %s90
    %p102 = scmp.eq.s32.totalorder %s17, 1
    %p103 = por %p101, %p102
    %p105 = scmp.ne.s32.totalorder %s90, %s104
    %p106 = scmp.eq.s32.totalorder %s17, 0
    %p107 = por %p105, %p106
    %s109 = sadd.s32 %s108, 1
    %p112 = scmp.eq.s32.totalorder %s11, 1
    %p113 = scmp.ne.s32.totalorder %s108, %s110
    %p114 = scmp.eq.s32.totalorder %s11, 0
    %p115 = por %p113, %p114
    %p116 = scmp.ne.s32.totalorder %s108, %s110
    %p117 = scmp.eq.s32.totalorder %s16, 1
    %p118 = por %p116, %p117
    %p119 = scmp.ne.s32.totalorder %s110, %s111
    %p120 = scmp.eq.s32.totalorder %s16, 0
    %p121 = por %p119, %p120
    %p122 = scmp.ne.s32.totalorder %s110, %s111
    %p123 = scmp.eq.s32.totalorder %s17, 1
    %p124 = por %p122, %p123
    %p126 = scmp.ne.s32.totalorder %s111, %s125
    %p127 = scmp.eq.s32.totalorder %s17, 0
    %p128 = por %p126, %p127
    %s129 = ssub.s32 %s11, %s18
    %p130 = scmp.eq.s32.totalorder %s129, 0
    %s132 = sadd.s32 %s131, 1
    %s133 = scalar_select %p130, %s131, %s132
    %p136 = pneg %p130
    %p137 = scmp.eq.s32.totalorder %s11, 1
    %p138 = por %p136, %p137
    %p139 = scmp.ne.s32.totalorder %s131, %s134
    %p140 = scmp.eq.s32.totalorder %s11, 0
    %p141 = por %p139, %p140
    %p142 = scmp.ne.s32.totalorder %s131, %s134
    %p143 = scmp.eq.s32.totalorder %s16, 1
    %p144 = por %p142, %p143
    %p145 = scmp.ne.s32.totalorder %s134, %s135
    %p146 = scmp.eq.s32.totalorder %s16, 0
    %p147 = por %p145, %p146
    %p148 = scmp.ne.s32.totalorder %s134, %s135
    %p149 = scmp.eq.s32.totalorder %s17, 1
    %p150 = por %p148, %p149
    %p152 = scmp.ne.s32.totalorder %s135, %s151
    %p153 = scmp.eq.s32.totalorder %s17, 0
    %p154 = por %p152, %p153
    %p155 = scmp.le.s32.totalorder 1, %s11
    %p156 = scmp.lt.s32.totalorder %s11, 3
    %p157 = pnand %p155, %p156
    %p158 = pneg %p157
    // Predicated region
    $region9: #{prediction_module_forward.1} parent=5 // pred_check
      _
    $region10: #{prediction_module_forward.1} parent=5 // pred_check_branch
      %160 = sbr.rel (%p157) target = $region12
    $region11: #{prediction_module_forward.1} parent=5 // pred_region
      %s161 = ssub.s32 %s11, 1
      // Predicated region
      $region13: #{prediction_module_forward.1} parent=11 // pred_check
        %p162 = pneg %p58
      $region14: #{prediction_module_forward.1} parent=11 // pred_check_branch
        %164 = sbr.rel (%p162) target = $region16
      $region15: #{prediction_module_forward.1} parent=11 // pred_region
        _
      $region16: #{prediction_module_forward.1} parent=11 // pred_fallthru
        _
      // Predicated region
      $region17: #{prediction_module_forward.1} parent=11 // pred_check
        %p165 = pneg %p79
      $region18: #{prediction_module_forward.1} parent=11 // pred_check_branch
        %167 = sbr.rel (%p165) target = $region20
      $region19: #{prediction_module_forward.1} parent=11 // pred_region
        _
      $region20: #{prediction_module_forward.1} parent=11 // pred_fallthru
        _
      // Predicated region
      $region21: #{prediction_module_forward.1} parent=11 // pred_check
        %p168 = pneg %p100
      $region22: #{prediction_module_forward.1} parent=11 // pred_check_branch
        %170 = sbr.rel (%p168) target = $region24
      $region23: #{prediction_module_forward.1} parent=11 // pred_region
        _
      $region24: #{prediction_module_forward.1} parent=11 // pred_fallthru
        _
      // Predicated region
      $region25: #{prediction_module_forward.1} parent=11 // pred_check
        %p171 = pneg %p121
      $region26: #{prediction_module_forward.1} parent=11 // pred_check_branch
        %173 = sbr.rel (%p171) target = $region28
      $region27: #{prediction_module_forward.1} parent=11 // pred_region
        _
      $region28: #{prediction_module_forward.1} parent=11 // pred_fallthru
        _
    $region12: #{prediction_module_forward.1} parent=5 // pred_fallthru
      _
    %p174 = scmp.lt.s32.totalorder %s11, 2
    // Predicated region
    $region29: #{prediction_module_forward.1} parent=5 // pred_check
      %p175 = pneg %p174
    $region30: #{prediction_module_forward.1} parent=5 // pred_check_branch
      %177 = sbr.rel (%p175) target = $region32
    $region31: #{prediction_module_forward.1} parent=5 // pred_region
      // Predicated region
      $region33: #{prediction_module_forward.1} parent=31 // pred_check
        %p178 = pneg %p31
      $region34: #{prediction_module_forward.1} parent=31 // pred_check_branch
        %180 = sbr.rel (%p178) target = $region36
      $region35: #{prediction_module_forward.1} parent=31 // pred_region
        %p181 = scmp.lt.s32.totalorder %s11, 1
        %s182 = scalar_select %p181, %s11, 1
        %s183 = smul.addr %s182, 32
        %s184 = smul.addr %s183, 4
        %s185 = scalar_lea.vmem %s0, %s184
      $region36: #{prediction_module_forward.1} parent=31 // pred_fallthru
        _
    $region32: #{prediction_module_forward.1} parent=5 // pred_fallthru
      _
    %p186 = scmp.le.s32.totalorder 1, %s11
    %p187 = scmp.lt.s32.totalorder %s11, 3
    %p188 = pnand %p186, %p187
    %p189 = pneg %p188
    // Predicated region
    $region37: #{prediction_module_forward.1} parent=5 // pred_check
      _
    $region38: #{prediction_module_forward.1} parent=5 // pred_check_branch
      %191 = sbr.rel (%p188) target = $region40
    $region39: #{prediction_module_forward.1} parent=5 // pred_region
      %s192 = ssub.s32 %s11, 1
      %p193 = scmp.lt.s32.totalorder %s16, 1
      %s194 = scalar_select %p193, %s16, 1
      %s195 = smul.addr %s194, 32
      %s196 = smul.addr %s195, 4
      %s197 = scalar_lea.vmem %s0, %s196
      %p198 = pneg %p37
      %p199 = pneg %p34
      %p200 = pneg %p58
      %p201 = pneg %p55
      %p202 = pneg %p79
      %p203 = pneg %p76
      %p204 = pneg %p100
      %p205 = pneg %p97
      %p206 = pneg %p121
      %p207 = pneg %p118
      %p208 = pneg %p147
      %p209 = pneg %p144
      %p210 = scmp.lt.s32.totalorder %s16, 1
      %s211 = scalar_select %p210, %s16, 1
      %s212 = smul.addr %s211, 32
      %s213 = smul.addr %s212, 8
      %s214 = scalar_lea.vmem %s5, %s213
      %p215 = scmp.lt.s32.totalorder %s16, 1
      %s216 = scalar_select %p215, %s16, 1
      %s217 = smul.addr %s216, 32
      %s218 = smul.addr %s217, 4
      %s219 = scalar_lea.vmem %s0, %s218
      %p220 = scmp.lt.s32.totalorder %s16, 1
      %s221 = scalar_select %p220, %s16, 1
      %s222 = smul.addr %s221, 32
      %s223 = smul.addr %s222, 8
      %s224 = scalar_lea.vmem %s5, %s223
      %v226 = vld [vmem:[%s219] sm:$0xf]
      %v227 = vld [vmem:[%s219 + $0x4] sm:$0xf]
      %v228 = vld [vmem:[%s219 + $0x8] sm:$0xf]
      %v229 = vld [vmem:[%s219 + $0xc] sm:$0xf]
      %v230 = vld [vmem:[%s219 + $0x10] sm:$0xf]
      %v231 = vld [vmem:[%s219 + $0x14] sm:$0xf]
      %v232 = vld [vmem:[%s219 + $0x18] sm:$0xf]
      %v233 = vld [vmem:[%s219 + $0x1c] sm:$0xf]
      %v234 = vld [vmem:[%s219 + $0x20] sm:$0xf]
      %v235 = vld [vmem:[%s219 + $0x24] sm:$0xf]
      %v236 = vld [vmem:[%s219 + $0x28] sm:$0xf]
      %v237 = vld [vmem:[%s219 + $0x2c] sm:$0xf]
      %v238 = vld [vmem:[%s219 + $0x30] sm:$0xf]
      %v239 = vld [vmem:[%s219 + $0x34] sm:$0xf]
      %v240 = vld [vmem:[%s219 + $0x38] sm:$0xf]
      %v241 = vld [vmem:[%s219 + $0x3c] sm:$0xf]
      %v242 = vld [vmem:[%s219 + $0x40] sm:$0xf]
      %v243 = vld [vmem:[%s219 + $0x44] sm:$0xf]
      %v244 = vld [vmem:[%s219 + $0x48] sm:$0xf]
      %v245 = vld [vmem:[%s219 + $0x4c] sm:$0xf]
      %v246 = vld [vmem:[%s219 + $0x50] sm:$0xf]
      %v247 = vld [vmem:[%s219 + $0x54] sm:$0xf]
      %v248 = vld [vmem:[%s219 + $0x58] sm:$0xf]
      %v249 = vld [vmem:[%s219 + $0x5c] sm:$0xf]
      %v250 = vld [vmem:[%s219 + $0x60] sm:$0xf]
      %v251 = vld [vmem:[%s219 + $0x64] sm:$0xf]
      %v252 = vld [vmem:[%s219 + $0x68] sm:$0xf]
      %v253 = vld [vmem:[%s219 + $0x6c] sm:$0xf]
      %v254 = vld [vmem:[%s219 + $0x70] sm:$0xf]
      %v255 = vld [vmem:[%s219 + $0x74] sm:$0xf]
      %v256 = vld [vmem:[%s219 + $0x78] sm:$0xf]
      %v257 = vld [vmem:[%s219 + $0x7c] sm:$0xf]
      %v258 = vunpack.c.l.bf16 %v226
      %v259 = vunpack.c.l.bf16 %v227
      %v260 = vunpack.c.l.bf16 %v228
      %v261 = vunpack.c.l.bf16 %v229
      %v262 = vunpack.c.l.bf16 %v230
      %v263 = vunpack.c.l.bf16 %v231
      %v264 = vunpack.c.l.bf16 %v232
      %v265 = vunpack.c.l.bf16 %v233
      %v266 = vunpack.c.l.bf16 %v234
      %v267 = vunpack.c.l.bf16 %v235
      %v268 = vunpack.c.l.bf16 %v236
      %v269 = vunpack.c.l.bf16 %v237
      %v270 = vunpack.c.l.bf16 %v238
      %v271 = vunpack.c.l.bf16 %v239
      %v272 = vunpack.c.l.bf16 %v240
      %v273 = vunpack.c.l.bf16 %v241
      %v274 = vunpack.c.l.bf16 %v242
      %v275 = vunpack.c.l.bf16 %v243
      %v276 = vunpack.c.l.bf16 %v244
      %v277 = vunpack.c.l.bf16 %v245
      %v278 = vunpack.c.l.bf16 %v246
      %v279 = vunpack.c.l.bf16 %v247
      %v280 = vunpack.c.l.bf16 %v248
      %v281 = vunpack.c.l.bf16 %v249
      %v282 = vunpack.c.l.bf16 %v250
      %v283 = vunpack.c.l.bf16 %v251
      %v284 = vunpack.c.l.bf16 %v252
      %v285 = vunpack.c.l.bf16 %v253
      %v286 = vunpack.c.l.bf16 %v254
      %v287 = vunpack.c.l.bf16 %v255
      %v288 = vunpack.c.l.bf16 %v256
      %v289 = vunpack.c.l.bf16 %v257
      %vm290 = vcmask 31744
      %291 = vst.msk [vmem:[#allocation2 + $0x11] sm:$0xff] %vm290, %v258
      %292 = vst.msk [vmem:[#allocation2 + $0x19] sm:$0xff] %vm290, %v259
      %293 = vst.msk [vmem:[#allocation2 + $0x21] sm:$0xff] %vm290, %v260
      %294 = vst.msk [vmem:[#allocation2 + $0x29] sm:$0xff] %vm290, %v261
      %295 = vst.msk [vmem:[#allocation2 + $0x31] sm:$0xff] %vm290, %v262
      %296 = vst.msk [vmem:[#allocation2 + $0x39] sm:$0xff] %vm290, %v263
      %297 = vst.msk [vmem:[#allocation2 + $0x41] sm:$0xff] %vm290, %v264
      %298 = vst.msk [vmem:[#allocation2 + $0x49] sm:$0xff] %vm290, %v265
      %299 = vst.msk [vmem:[#allocation2 + $0x51] sm:$0xff] %vm290, %v266
      %300 = vst.msk [vmem:[#allocation2 + $0x59] sm:$0xff] %vm290, %v267
      %301 = vst.msk [vmem:[#allocation2 + $0x61] sm:$0xff] %vm290, %v268
      %302 = vst.msk [vmem:[#allocation2 + $0x69] sm:$0xff] %vm290, %v269
      %303 = vst.msk [vmem:[#allocation2 + $0x71] sm:$0xff] %vm290, %v270
      %304 = vst.msk [vmem:[#allocation2 + $0x79] sm:$0xff] %vm290, %v271
      %305 = vst.msk [vmem:[#allocation2 + $0x81] sm:$0xff] %vm290, %v272
      %306 = vst.msk [vmem:[#allocation2 + $0x89] sm:$0xff] %vm290, %v273
      %307 = vst.msk [vmem:[#allocation2 + $0x91] sm:$0xff] %vm290, %v274
      %308 = vst.msk [vmem:[#allocation2 + $0x99] sm:$0xff] %vm290, %v275
      %309 = vst.msk [vmem:[#allocation2 + $0xa1] sm:$0xff] %vm290, %v276
      %310 = vst.msk [vmem:[#allocation2 + $0xa9] sm:$0xff] %vm290, %v277
      %311 = vst.msk [vmem:[#allocation2 + $0xb1] sm:$0xff] %vm290, %v278
      %312 = vst.msk [vmem:[#allocation2 + $0xb9] sm:$0xff] %vm290, %v279
      %313 = vst.msk [vmem:[#allocation2 + $0xc1] sm:$0xff] %vm290, %v280
      %314 = vst.msk [vmem:[#allocation2 + $0xc9] sm:$0xff] %vm290, %v281
      %315 = vst.msk [vmem:[#allocation2 + $0xd1] sm:$0xff] %vm290, %v282
      %316 = vst.msk [vmem:[#allocation2 + $0xd9] sm:$0xff] %vm290, %v283
      %317 = vst.msk [vmem:[#allocation2 + $0xe1] sm:$0xff] %vm290, %v284
      %318 = vst.msk [vmem:[#allocation2 + $0xe9] sm:$0xff] %vm290, %v285
      %319 = vst.msk [vmem:[#allocation2 + $0xf1] sm:$0xff] %vm290, %v286
      %320 = vst.msk [vmem:[#allocation2 + $0xf9] sm:$0xff] %vm290, %v287
      %321 = vst.msk [vmem:[#allocation2 + $0x101] sm:$0xff] %vm290, %v288
      %322 = vst.msk [vmem:[#allocation2 + $0x109] sm:$0xff] %vm290, %v289
      %v323 = vld [vmem:[#allocation2] sm:$0xff]
      %v324 = vld [vmem:[#allocation2 + $0x8] sm:$0xff]
      %v325 = vld [vmem:[#allocation2 + $0x10] sm:$0xff]
      %v326 = vld [vmem:[#allocation2 + $0x18] sm:$0xff]
      %v327 = vld [vmem:[#allocation2 + $0x20] sm:$0xff]
      %v328 = vld [vmem:[#allocation2 + $0x28] sm:$0xff]
      %v329 = vld [vmem:[#allocation2 + $0x30] sm:$0xff]
      %v330 = vld [vmem:[#allocation2 + $0x38] sm:$0xff]
      %v331 = vld [vmem:[#allocation2 + $0x40] sm:$0xff]
      %v332 = vld [vmem:[#allocation2 + $0x48] sm:$0xff]
      %v333 = vld [vmem:[#allocation2 + $0x50] sm:$0xff]
      %v334 = vld [vmem:[#allocation2 + $0x58] sm:$0xff]
      %v335 = vld [vmem:[#allocation2 + $0x60] sm:$0xff]
      %v336 = vld [vmem:[#allocation2 + $0x68] sm:$0xff]
      %v337 = vld [vmem:[#allocation2 + $0x70] sm:$0xff]
      %v338 = vld [vmem:[#allocation2 + $0x78] sm:$0xff]
      %v339 = vld [vmem:[#allocation2 + $0x80] sm:$0xff]
      %v340 = vld [vmem:[#allocation2 + $0x88] sm:$0xff]
      %v341 = vld [vmem:[#allocation2 + $0x90] sm:$0xff]
      %v342 = vld [vmem:[#allocation2 + $0x98] sm:$0xff]
      %v343 = vld [vmem:[#allocation2 + $0xa0] sm:$0xff]
      %v344 = vld [vmem:[#allocation2 + $0xa8] sm:$0xff]
      %v345 = vld [vmem:[#allocation2 + $0xb0] sm:$0xff]
      %v346 = vld [vmem:[#allocation2 + $0xb8] sm:$0xff]
      %v347 = vld [vmem:[#allocation2 + $0xc0] sm:$0xff]
      %v348 = vld [vmem:[#allocation2 + $0xc8] sm:$0xff]
      %v349 = vld [vmem:[#allocation2 + $0xd0] sm:$0xff]
      %v350 = vld [vmem:[#allocation2 + $0xd8] sm:$0xff]
      %v351 = vld [vmem:[#allocation2 + $0xe0] sm:$0xff]
      %v352 = vld [vmem:[#allocation2 + $0xe8] sm:$0xff]
      %v353 = vld [vmem:[#allocation2 + $0xf0] sm:$0xff]
      %v354 = vld [vmem:[#allocation2 + $0xf8] sm:$0xff]
      %v355 = vlaneseq
      %v356 = vshrl.u32 %v355, 7
      %v357 = vadd.s32 %v356, 8
      %v358 = vadd.s32 %v356, 16
      %v359 = vadd.s32 %v356, 24
      %v360 = vadd.s32 %v356, 32
      %v361 = vadd.s32 %v356, 40
      %v362 = vadd.s32 %v356, 48
      %v363 = vadd.s32 %v356, 56
      %v364 = vadd.s32 %v356, 64
      %v365 = vadd.s32 %v356, 72
      %v366 = vadd.s32 %v356, 80
      %v367 = vadd.s32 %v356, 88
      %v368 = vadd.s32 %v356, 96
      %v369 = vadd.s32 %v356, 104
      %v370 = vadd.s32 %v356, 112
      %v371 = vadd.s32 %v356, 120
      %v372 = vadd.s32 %v356, 128
      %v373 = vadd.s32 %v356, 136
      %v374 = vadd.s32 %v356, 144
      %v375 = vadd.s32 %v356, 152
      %v376 = vadd.s32 %v356, 160
      %v377 = vadd.s32 %v356, 168
      %v378 = vadd.s32 %v356, 176
      %v379 = vadd.s32 %v356, 184
      %v380 = vadd.s32 %v356, 192
      %v381 = vadd.s32 %v356, 200
      %v382 = vadd.s32 %v356, 208
      %v383 = vadd.s32 %v356, 216
      %v384 = vadd.s32 %v356, 224
      %v385 = vadd.s32 %v356, 232
      %v386 = vadd.s32 %v356, 240
      %v387 = vadd.s32 %v356, 248
      %vm388 = vcmp.ge.s32.totalorder %v356, 16
      %vm389 = vcmp.ge.s32.totalorder %v357, 16
      %vm390 = vcmp.ge.s32.totalorder %v358, 16
      %vm391 = vcmp.ge.s32.totalorder %v359, 16
      %vm392 = vcmp.ge.s32.totalorder %v360, 16
      %vm393 = vcmp.ge.s32.totalorder %v361, 16
      %vm394 = vcmp.ge.s32.totalorder %v362, 16
      %vm395 = vcmp.ge.s32.totalorder %v363, 16
      %vm396 = vcmp.ge.s32.totalorder %v364, 16
      %vm397 = vcmp.ge.s32.totalorder %v365, 16
      %vm398 = vcmp.ge.s32.totalorder %v366, 16
      %vm399 = vcmp.ge.s32.totalorder %v367, 16
      %vm400 = vcmp.ge.s32.totalorder %v368, 16
      %vm401 = vcmp.ge.s32.totalorder %v369, 16
      %vm402 = vcmp.ge.s32.totalorder %v370, 16
      %vm403 = vcmp.ge.s32.totalorder %v371, 16
      %vm404 = vcmp.ge.s32.totalorder %v372, 16
      %vm405 = vcmp.ge.s32.totalorder %v373, 16
      %vm406 = vcmp.ge.s32.totalorder %v374, 16
      %vm407 = vcmp.ge.s32.totalorder %v375, 16
      %vm408 = vcmp.ge.s32.totalorder %v376, 16
      %vm409 = vcmp.ge.s32.totalorder %v377, 16
      %vm410 = vcmp.ge.s32.totalorder %v378, 16
      %vm411 = vcmp.ge.s32.totalorder %v379, 16
      %vm412 = vcmp.ge.s32.totalorder %v380, 16
      %vm413 = vcmp.ge.s32.totalorder %v381, 16
      %vm414 = vcmp.ge.s32.totalorder %v382, 16
      %vm415 = vcmp.ge.s32.totalorder %v383, 16
      %vm416 = vcmp.ge.s32.totalorder %v384, 16
      %vm417 = vcmp.ge.s32.totalorder %v385, 16
      %vm418 = vcmp.ge.s32.totalorder %v386, 16
      %vm419 = vcmp.ge.s32.totalorder %v387, 16
      %vm420 = vcmp.lt.s32.totalorder %v356, 0
      %v421 = vsub.s32 0, %v356
      %v422 = vsel %vm420, %v421, %v356
      %v423 = vshrl.u32 %v422, 4
      %v424 = vand.u32 %v422, 15
      %v425 = vsub.s32 0, %v424
      %v426 = vsel %vm420, %v425, %v424
      %vm427 = vcmp.lt.s32.totalorder %v357, 0
      %v428 = vsub.s32 0, %v357
      %v429 = vsel %vm427, %v428, %v357
      %v430 = vshrl.u32 %v429, 4
      %v431 = vand.u32 %v429, 15
      %v432 = vsub.s32 0, %v431
      %v433 = vsel %vm427, %v432, %v431
      %vm434 = vcmp.lt.s32.totalorder %v358, 0
      %v435 = vsub.s32 0, %v358
      %v436 = vsel %vm434, %v435, %v358
      %v437 = vshrl.u32 %v436, 4
      %v438 = vand.u32 %v436, 15
      %v439 = vsub.s32 0, %v438
      %v440 = vsel %vm434, %v439, %v438
      %vm441 = vcmp.lt.s32.totalorder %v359, 0
      %v442 = vsub.s32 0, %v359
      %v443 = vsel %vm441, %v442, %v359
      %v444 = vshrl.u32 %v443, 4
      %v445 = vand.u32 %v443, 15
      %v446 = vsub.s32 0, %v445
      %v447 = vsel %vm441, %v446, %v445
      %vm448 = vcmp.lt.s32.totalorder %v360, 0
      %v449 = vsub.s32 0, %v360
      %v450 = vsel %vm448, %v449, %v360
      %v451 = vshrl.u32 %v450, 4
      %v452 = vand.u32 %v450, 15
      %v453 = vsub.s32 0, %v452
      %v454 = vsel %vm448, %v453, %v452
      %vm455 = vcmp.lt.s32.totalorder %v361, 0
      %v456 = vsub.s32 0, %v361
      %v457 = vsel %vm455, %v456, %v361
      %v458 = vshrl.u32 %v457, 4
      %v459 = vand.u32 %v457, 15
      %v460 = vsub.s32 0, %v459
      %v461 = vsel %vm455, %v460, %v459
      %vm462 = vcmp.lt.s32.totalorder %v362, 0
      %v463 = vsub.s32 0, %v362
      %v464 = vsel %vm462, %v463, %v362
      %v465 = vshrl.u32 %v464, 4
      %v466 = vand.u32 %v464, 15
      %v467 = vsub.s32 0, %v466
      %v468 = vsel %vm462, %v467, %v466
      %vm469 = vcmp.lt.s32.totalorder %v363, 0
      %v470 = vsub.s32 0, %v363
      %v471 = vsel %vm469, %v470, %v363
      %v472 = vshrl.u32 %v471, 4
      %v473 = vand.u32 %v471, 15
      %v474 = vsub.s32 0, %v473
      %v475 = vsel %vm469, %v474, %v473
      %vm476 = vcmp.lt.s32.totalorder %v364, 0
      %v477 = vsub.s32 0, %v364
      %v478 = vsel %vm476, %v477, %v364
      %v479 = vshrl.u32 %v478, 4
      %v480 = vand.u32 %v478, 15
      %v481 = vsub.s32 0, %v480
      %v482 = vsel %vm476, %v481, %v480
      %vm483 = vcmp.lt.s32.totalorder %v365, 0
      %v484 = vsub.s32 0, %v365
      %v485 = vsel %vm483, %v484, %v365
      %v486 = vshrl.u32 %v485, 4
      %v487 = vand.u32 %v485, 15
      %v488 = vsub.s32 0, %v487
      %v489 = vsel %vm483, %v488, %v487
      %vm490 = vcmp.lt.s32.totalorder %v366, 0
      %v491 = vsub.s32 0, %v366
      %v492 = vsel %vm490, %v491, %v366
      %v493 = vshrl.u32 %v492, 4
      %v494 = vand.u32 %v492, 15
      %v495 = vsub.s32 0, %v494
      %v496 = vsel %vm490, %v495, %v494
      %vm497 = vcmp.lt.s32.totalorder %v367, 0
      %v498 = vsub.s32 0, %v367
      %v499 = vsel %vm497, %v498, %v367
      %v500 = vshrl.u32 %v499, 4
      %v501 = vand.u32 %v499, 15
      %v502 = vsub.s32 0, %v501
      %v503 = vsel %vm497, %v502, %v501
      %vm504 = vcmp.lt.s32.totalorder %v368, 0
      %v505 = vsub.s32 0, %v368
      %v506 = vsel %vm504, %v505, %v368
      %v507 = vshrl.u32 %v506, 4
      %v508 = vand.u32 %v506, 15
      %v509 = vsub.s32 0, %v508
      %v510 = vsel %vm504, %v509, %v508
      %vm511 = vcmp.lt.s32.totalorder %v369, 0
      %v512 = vsub.s32 0, %v369
      %v513 = vsel %vm511, %v512, %v369
      %v514 = vshrl.u32 %v513, 4
      %v515 = vand.u32 %v513, 15
      %v516 = vsub.s32 0, %v515
      %v517 = vsel %vm511, %v516, %v515
      %vm518 = vcmp.lt.s32.totalorder %v370, 0
      %v519 = vsub.s32 0, %v370
      %v520 = vsel %vm518, %v519, %v370
      %v521 = vshrl.u32 %v520, 4
      %v522 = vand.u32 %v520, 15
      %v523 = vsub.s32 0, %v522
      %v524 = vsel %vm518, %v523, %v522
      %vm525 = vcmp.lt.s32.totalorder %v371, 0
      %v526 = vsub.s32 0, %v371
      %v527 = vsel %vm525, %v526, %v371
      %v528 = vshrl.u32 %v527, 4
      %v529 = vand.u32 %v527, 15
      %v530 = vsub.s32 0, %v529
      %v531 = vsel %vm525, %v530, %v529
      %vm532 = vcmp.lt.s32.totalorder %v372, 0
      %v533 = vsub.s32 0, %v372
      %v534 = vsel %vm532, %v533, %v372
      %v535 = vshrl.u32 %v534, 4
      %v536 = vand.u32 %v534, 15
      %v537 = vsub.s32 0, %v536
      %v538 = vsel %vm532, %v537, %v536
      %vm539 = vcmp.lt.s32.totalorder %v373, 0
      %v540 = vsub.s32 0, %v373
      %v541 = vsel %vm539, %v540, %v373
      %v542 = vshrl.u32 %v541, 4
      %v543 = vand.u32 %v541, 15
      %v544 = vsub.s32 0, %v543
      %v545 = vsel %vm539, %v544, %v543
      %vm546 = vcmp.lt.s32.totalorder %v374, 0
      %v547 = vsub.s32 0, %v374
      %v548 = vsel %vm546, %v547, %v374
      %v549 = vshrl.u32 %v548, 4
      %v550 = vand.u32 %v548, 15
      %v551 = vsub.s32 0, %v550
      %v552 = vsel %vm546, %v551, %v550
      %vm553 = vcmp.lt.s32.totalorder %v375, 0
      %v554 = vsub.s32 0, %v375
      %v555 = vsel %vm553, %v554, %v375
      %v556 = vshrl.u32 %v555, 4
      %v557 = vand.u32 %v555, 15
      %v558 = vsub.s32 0, %v557
      %v559 = vsel %vm553, %v558, %v557
      %vm560 = vcmp.lt.s32.totalorder %v376, 0
      %v561 = vsub.s32 0, %v376
      %v562 = vsel %vm560, %v561, %v376
      %v563 = vshrl.u32 %v562, 4
      %v564 = vand.u32 %v562, 15
      %v565 = vsub.s32 0, %v564
      %v566 = vsel %vm560, %v565, %v564
      %vm567 = vcmp.lt.s32.totalorder %v377, 0
      %v568 = vsub.s32 0, %v377
      %v569 = vsel %vm567, %v568, %v377
      %v570 = vshrl.u32 %v569, 4
      %v571 = vand.u32 %v569, 15
      %v572 = vsub.s32 0, %v571
      %v573 = vsel %vm567, %v572, %v571
      %vm574 = vcmp.lt.s32.totalorder %v378, 0
      %v575 = vsub.s32 0, %v378
      %v576 = vsel %vm574, %v575, %v378
      %v577 = vshrl.u32 %v576, 4
      %v578 = vand.u32 %v576, 15
      %v579 = vsub.s32 0, %v578
      %v580 = vsel %vm574, %v579, %v578
      %vm581 = vcmp.lt.s32.totalorder %v379, 0
      %v582 = vsub.s32 0, %v379
      %v583 = vsel %vm581, %v582, %v379
      %v584 = vshrl.u32 %v583, 4
      %v585 = vand.u32 %v583, 15
      %v586 = vsub.s32 0, %v585
      %v587 = vsel %vm581, %v586, %v585
      %vm588 = vcmp.lt.s32.totalorder %v380, 0
      %v589 = vsub.s32 0, %v380
      %v590 = vsel %vm588, %v589, %v380
      %v591 = vshrl.u32 %v590, 4
      %v592 = vand.u32 %v590, 15
      %v593 = vsub.s32 0, %v592
      %v594 = vsel %vm588, %v593, %v592
      %vm595 = vcmp.lt.s32.totalorder %v381, 0
      %v596 = vsub.s32 0, %v381
      %v597 = vsel %vm595, %v596, %v381
      %v598 = vshrl.u32 %v597, 4
      %v599 = vand.u32 %v597, 15
      %v600 = vsub.s32 0, %v599
      %v601 = vsel %vm595, %v600, %v599
      %vm602 = vcmp.lt.s32.totalorder %v382, 0
      %v603 = vsub.s32 0, %v382
      %v604 = vsel %vm602, %v603, %v382
      %v605 = vshrl.u32 %v604, 4
      %v606 = vand.u32 %v604, 15
      %v607 = vsub.s32 0, %v606
      %v608 = vsel %vm602, %v607, %v606
      %vm609 = vcmp.lt.s32.totalorder %v383, 0
      %v610 = vsub.s32 0, %v383
      %v611 = vsel %vm609, %v610, %v383
      %v612 = vshrl.u32 %v611, 4
      %v613 = vand.u32 %v611, 15
      %v614 = vsub.s32 0, %v613
      %v615 = vsel %vm609, %v614, %v613
      %vm616 = vcmp.lt.s32.totalorder %v384, 0
      %v617 = vsub.s32 0, %v384
      %v618 = vsel %vm616, %v617, %v384
      %v619 = vshrl.u32 %v618, 4
      %v620 = vand.u32 %v618, 15
      %v621 = vsub.s32 0, %v620
      %v622 = vsel %vm616, %v621, %v620
      %vm623 = vcmp.lt.s32.totalorder %v385, 0
      %v624 = vsub.s32 0, %v385
      %v625 = vsel %vm623, %v624, %v385
      %v626 = vshrl.u32 %v625, 4
      %v627 = vand.u32 %v625, 15
      %v628 = vsub.s32 0, %v627
      %v629 = vsel %vm623, %v628, %v627
      %vm630 = vcmp.lt.s32.totalorder %v386, 0
      %v631 = vsub.s32 0, %v386
      %v632 = vsel %vm630, %v631, %v386
      %v633 = vshrl.u32 %v632, 4
      %v634 = vand.u32 %v632, 15
      %v635 = vsub.s32 0, %v634
      %v636 = vsel %vm630, %v635, %v634
      %vm637 = vcmp.lt.s32.totalorder %v387, 0
      %v638 = vsub.s32 0, %v387
      %v639 = vsel %vm637, %v638, %v387
      %v640 = vshrl.u32 %v639, 4
      %v641 = vand.u32 %v639, 15
      %v642 = vsub.s32 0, %v641
      %v643 = vsel %vm637, %v642, %v641
      %vm644 = vcmp.ge.s32.totalorder %v426, 1
      %vm645 = vcmp.ge.s32.totalorder %v433, 1
      %vm646 = vcmp.ge.s32.totalorder %v440, 1
      %vm647 = vcmp.ge.s32.totalorder %v447, 1
      %vm648 = vcmp.ge.s32.totalorder %v454, 1
      %vm649 = vcmp.ge.s32.totalorder %v461, 1
      %vm650 = vcmp.ge.s32.totalorder %v468, 1
      %vm651 = vcmp.ge.s32.totalorder %v475, 1
      %vm652 = vcmp.ge.s32.totalorder %v482, 1
      %vm653 = vcmp.ge.s32.totalorder %v489, 1
      %vm654 = vcmp.ge.s32.totalorder %v496, 1
      %vm655 = vcmp.ge.s32.totalorder %v503, 1
      %vm656 = vcmp.ge.s32.totalorder %v510, 1
      %vm657 = vcmp.ge.s32.totalorder %v517, 1
      %vm658 = vcmp.ge.s32.totalorder %v524, 1
      %vm659 = vcmp.ge.s32.totalorder %v531, 1
      %vm660 = vcmp.ge.s32.totalorder %v538, 1
      %vm661 = vcmp.ge.s32.totalorder %v545, 1
      %vm662 = vcmp.ge.s32.totalorder %v552, 1
      %vm663 = vcmp.ge.s32.totalorder %v559, 1
      %vm664 = vcmp.ge.s32.totalorder %v566, 1
      %vm665 = vcmp.ge.s32.totalorder %v573, 1
      %vm666 = vcmp.ge.s32.totalorder %v580, 1
      %vm667 = vcmp.ge.s32.totalorder %v587, 1
      %vm668 = vcmp.ge.s32.totalorder %v594, 1
      %vm669 = vcmp.ge.s32.totalorder %v601, 1
      %vm670 = vcmp.ge.s32.totalorder %v608, 1
      %vm671 = vcmp.ge.s32.totalorder %v615, 1
      %vm672 = vcmp.ge.s32.totalorder %v622, 1
      %vm673 = vcmp.ge.s32.totalorder %v629, 1
      %vm674 = vcmp.ge.s32.totalorder %v636, 1
      %vm675 = vcmp.ge.s32.totalorder %v643, 1
      %vm676 = vmand %vm388, %vm644
      %vm677 = vmand %vm389, %vm645
      %vm678 = vmand %vm390, %vm646
      %vm679 = vmand %vm391, %vm647
      %vm680 = vmand %vm392, %vm648
      %vm681 = vmand %vm393, %vm649
      %vm682 = vmand %vm394, %vm650
      %vm683 = vmand %vm395, %vm651
      %vm684 = vmand %vm396, %vm652
      %vm685 = vmand %vm397, %vm653
      %vm686 = vmand %vm398, %vm654
      %vm687 = vmand %vm399, %vm655
      %vm688 = vmand %vm400, %vm656
      %vm689 = vmand %vm401, %vm657
      %vm690 = vmand %vm402, %vm658
      %vm691 = vmand %vm403, %vm659
      %vm692 = vmand %vm404, %vm660
      %vm693 = vmand %vm405, %vm661
      %vm694 = vmand %vm406, %vm662
      %vm695 = vmand %vm407, %vm663
      %vm696 = vmand %vm408, %vm664
      %vm697 = vmand %vm409, %vm665
      %vm698 = vmand %vm410, %vm666
      %vm699 = vmand %vm411, %vm667
      %vm700 = vmand %vm412, %vm668
      %vm701 = vmand %vm413, %vm669
      %vm702 = vmand %vm414, %vm670
      %vm703 = vmand %vm415, %vm671
      %vm704 = vmand %vm416, %vm672
      %vm705 = vmand %vm417, %vm673
      %vm706 = vmand %vm418, %vm674
      %vm707 = vmand %vm419, %vm675
      %v708 = vsel %vm676, 1, 0
      %v709 = vsel %vm677, 1, 0
      %v710 = vsel %vm678, 1, 0
      %v711 = vsel %vm679, 1, 0
      %v712 = vsel %vm680, 1, 0
      %v713 = vsel %vm681, 1, 0
      %v714 = vsel %vm682, 1, 0
      %v715 = vsel %vm683, 1, 0
      %v716 = vsel %vm684, 1, 0
      %v717 = vsel %vm685, 1, 0
      %v718 = vsel %vm686, 1, 0
      %v719 = vsel %vm687, 1, 0
      %v720 = vsel %vm688, 1, 0
      %v721 = vsel %vm689, 1, 0
      %v722 = vsel %vm690, 1, 0
      %v723 = vsel %vm691, 1, 0
      %v724 = vsel %vm692, 1, 0
      %v725 = vsel %vm693, 1, 0
      %v726 = vsel %vm694, 1, 0
      %v727 = vsel %vm695, 1, 0
      %v728 = vsel %vm696, 1, 0
      %v729 = vsel %vm697, 1, 0
      %v730 = vsel %vm698, 1, 0
      %v731 = vsel %vm699, 1, 0
      %v732 = vsel %vm700, 1, 0
      %v733 = vsel %vm701, 1, 0
      %v734 = vsel %vm702, 1, 0
      %v735 = vsel %vm703, 1, 0
      %v736 = vsel %vm704, 1, 0
      %v737 = vsel %vm705, 1, 0
      %v738 = vsel %vm706, 1, 0
      %v739 = vsel %vm707, 1, 0
      %vm740 = vcmp.eq.s32.totalorder %v708, 1
      %vm741 = vcmp.eq.s32.totalorder %v709, 1
      %vm742 = vcmp.eq.s32.totalorder %v710, 1
      %vm743 = vcmp.eq.s32.totalorder %v711, 1
      %vm744 = vcmp.eq.s32.totalorder %v712, 1
      %vm745 = vcmp.eq.s32.totalorder %v713, 1
      %vm746 = vcmp.eq.s32.totalorder %v714, 1
      %vm747 = vcmp.eq.s32.totalorder %v715, 1
      %vm748 = vcmp.eq.s32.totalorder %v716, 1
      %vm749 = vcmp.eq.s32.totalorder %v717, 1
      %vm750 = vcmp.eq.s32.totalorder %v718, 1
      %vm751 = vcmp.eq.s32.totalorder %v719, 1
      %vm752 = vcmp.eq.s32.totalorder %v720, 1
      %vm753 = vcmp.eq.s32.totalorder %v721, 1
      %vm754 = vcmp.eq.s32.totalorder %v722, 1
      %vm755 = vcmp.eq.s32.totalorder %v723, 1
      %vm756 = vcmp.eq.s32.totalorder %v724, 1
      %vm757 = vcmp.eq.s32.totalorder %v725, 1
      %vm758 = vcmp.eq.s32.totalorder %v726, 1
      %vm759 = vcmp.eq.s32.totalorder %v727, 1
      %vm760 = vcmp.eq.s32.totalorder %v728, 1
      %vm761 = vcmp.eq.s32.totalorder %v729, 1
      %vm762 = vcmp.eq.s32.totalorder %v730, 1
      %vm763 = vcmp.eq.s32.totalorder %v731, 1
      %vm764 = vcmp.eq.s32.totalorder %v732, 1
      %vm765 = vcmp.eq.s32.totalorder %v733, 1
      %vm766 = vcmp.eq.s32.totalorder %v734, 1
      %vm767 = vcmp.eq.s32.totalorder %v735, 1
      %vm768 = vcmp.eq.s32.totalorder %v736, 1
      %vm769 = vcmp.eq.s32.totalorder %v737, 1
      %vm770 = vcmp.eq.s32.totalorder %v738, 1
      %vm771 = vcmp.eq.s32.totalorder %v739, 1
      %v772 = vsel %vm740, %v323, 0.0
      %v773 = vsel %vm741, %v324, 0.0
      %v774 = vsel %vm742, %v325, 0.0
      %v775 = vsel %vm743, %v326, 0.0
      %v776 = vsel %vm744, %v327, 0.0
      %v777 = vsel %vm745, %v328, 0.0
      %v778 = vsel %vm746, %v329, 0.0
      %v779 = vsel %vm747, %v330, 0.0
      %v780 = vsel %vm748, %v331, 0.0
      %v781 = vsel %vm749, %v332, 0.0
      %v782 = vsel %vm750, %v333, 0.0
      %v783 = vsel %vm751, %v334, 0.0
      %v784 = vsel %vm752, %v335, 0.0
      %v785 = vsel %vm753, %v336, 0.0
      %v786 = vsel %vm754, %v337, 0.0
      %v787 = vsel %vm755, %v338, 0.0
      %v788 = vsel %vm756, %v339, 0.0
      %v789 = vsel %vm757, %v340, 0.0
      %v790 = vsel %vm758, %v341, 0.0
      %v791 = vsel %vm759, %v342, 0.0
      %v792 = vsel %vm760, %v343, 0.0
      %v793 = vsel %vm761, %v344, 0.0
      %v794 = vsel %vm762, %v345, 0.0
      %v795 = vsel %vm763, %v346, 0.0
      %v796 = vsel %vm764, %v347, 0.0
      %v797 = vsel %vm765, %v348, 0.0
      %v798 = vsel %vm766, %v349, 0.0
      %v799 = vsel %vm767, %v350, 0.0
      %v800 = vsel %vm768, %v351, 0.0
      %v801 = vsel %vm769, %v352, 0.0
      %v802 = vsel %vm770, %v353, 0.0
      %v803 = vsel %vm771, %v354, 0.0
      %v804 = vpack.c.bf16 %v772, %v772
      %v805 = vpack.c.bf16 %v773, %v773
      %v806 = vpack.c.bf16 %v774, %v774
      %v807 = vpack.c.bf16 %v775, %v775
      %v808 = vpack.c.bf16 %v776, %v776
      %v809 = vpack.c.bf16 %v777, %v777
      %v810 = vpack.c.bf16 %v778, %v778
      %v811 = vpack.c.bf16 %v779, %v779
      %v812 = vpack.c.bf16 %v780, %v780
      %v813 = vpack.c.bf16 %v781, %v781
      %v814 = vpack.c.bf16 %v782, %v782
      %v815 = vpack.c.bf16 %v783, %v783
      %v816 = vpack.c.bf16 %v784, %v784
      %v817 = vpack.c.bf16 %v785, %v785
      %v818 = vpack.c.bf16 %v786, %v786
      %v819 = vpack.c.bf16 %v787, %v787
      %v820 = vpack.c.bf16 %v788, %v788
      %v821 = vpack.c.bf16 %v789, %v789
      %v822 = vpack.c.bf16 %v790, %v790
      %v823 = vpack.c.bf16 %v791, %v791
      %v824 = vpack.c.bf16 %v792, %v792
      %v825 = vpack.c.bf16 %v793, %v793
      %v826 = vpack.c.bf16 %v794, %v794
      %v827 = vpack.c.bf16 %v795, %v795
      %v828 = vpack.c.bf16 %v796, %v796
      %v829 = vpack.c.bf16 %v797, %v797
      %v830 = vpack.c.bf16 %v798, %v798
      %v831 = vpack.c.bf16 %v799, %v799
      %v832 = vpack.c.bf16 %v800, %v800
      %v833 = vpack.c.bf16 %v801, %v801
      %v834 = vpack.c.bf16 %v802, %v802
      %v835 = vpack.c.bf16 %v803, %v803
      %vm836 = vcmask 27648
      %837 = vst.msk [vmem:[#allocation4] sm:$0xf] %vm836, %v804
      %838 = vst.msk [vmem:[#allocation4 + $0x4] sm:$0xf] %vm836, %v805
      %839 = vst.msk [vmem:[#allocation4 + $0x8] sm:$0xf] %vm836, %v806
      %840 = vst.msk [vmem:[#allocation4 + $0xc] sm:$0xf] %vm836, %v807
      %841 = vst.msk [vmem:[#allocation4 + $0x10] sm:$0xf] %vm836, %v808
      %842 = vst.msk [vmem:[#allocation4 + $0x14] sm:$0xf] %vm836, %v809
      %843 = vst.msk [vmem:[#allocation4 + $0x18] sm:$0xf] %vm836, %v810
      %844 = vst.msk [vmem:[#allocation4 + $0x1c] sm:$0xf] %vm836, %v811
      %845 = vst.msk [vmem:[#allocation4 + $0x20] sm:$0xf] %vm836, %v812
      %846 = vst.msk [vmem:[#allocation4 + $0x24] sm:$0xf] %vm836, %v813
      %847 = vst.msk [vmem:[#allocation4 + $0x28] sm:$0xf] %vm836, %v814
      %848 = vst.msk [vmem:[#allocation4 + $0x2c] sm:$0xf] %vm836, %v815
      %849 = vst.msk [vmem:[#allocation4 + $0x30] sm:$0xf] %vm836, %v816
      %850 = vst.msk [vmem:[#allocation4 + $0x34] sm:$0xf] %vm836, %v817
      %851 = vst.msk [vmem:[#allocation4 + $0x38] sm:$0xf] %vm836, %v818
      %852 = vst.msk [vmem:[#allocation4 + $0x3c] sm:$0xf] %vm836, %v819
      %853 = vst.msk [vmem:[#allocation4 + $0x40] sm:$0xf] %vm836, %v820
      %854 = vst.msk [vmem:[#allocation4 + $0x44] sm:$0xf] %vm836, %v821
      %855 = vst.msk [vmem:[#allocation4 + $0x48] sm:$0xf] %vm836, %v822
      %856 = vst.msk [vmem:[#allocation4 + $0x4c] sm:$0xf] %vm836, %v823
      %857 = vst.msk [vmem:[#allocation4 + $0x50] sm:$0xf] %vm836, %v824
      %858 = vst.msk [vmem:[#allocation4 + $0x54] sm:$0xf] %vm836, %v825
      %859 = vst.msk [vmem:[#allocation4 + $0x58] sm:$0xf] %vm836, %v826
      %860 = vst.msk [vmem:[#allocation4 + $0x5c] sm:$0xf] %vm836, %v827
      %861 = vst.msk [vmem:[#allocation4 + $0x60] sm:$0xf] %vm836, %v828
      %862 = vst.msk [vmem:[#allocation4 + $0x64] sm:$0xf] %vm836, %v829
      %863 = vst.msk [vmem:[#allocation4 + $0x68] sm:$0xf] %vm836, %v830
      %864 = vst.msk [vmem:[#allocation4 + $0x6c] sm:$0xf] %vm836, %v831
      %865 = vst.msk [vmem:[#allocation4 + $0x70] sm:$0xf] %vm836, %v832
      %866 = vst.msk [vmem:[#allocation4 + $0x74] sm:$0xf] %vm836, %v833
      %867 = vst.msk [vmem:[#allocation4 + $0x78] sm:$0xf] %vm836, %v834
      %868 = vst.msk [vmem:[#allocation4 + $0x7c] sm:$0xf] %vm836, %v835
      %v869 = vld [vmem:[#allocation2 + $0x1] sm:$0xff]
      %v870 = vld [vmem:[#allocation2 + $0x9] sm:$0xff]
      %v871 = vld [vmem:[#allocation2 + $0x11] sm:$0xff]
      %v872 = vld [vmem:[#allocation2 + $0x19] sm:$0xff]
      %v873 = vld [vmem:[#allocation2 + $0x21] sm:$0xff]
      %v874 = vld [vmem:[#allocation2 + $0x29] sm:$0xff]
      %v875 = vld [vmem:[#allocation2 + $0x31] sm:$0xff]
      %v876 = vld [vmem:[#allocation2 + $0x39] sm:$0xff]
      %v877 = vld [vmem:[#allocation2 + $0x41] sm:$0xff]
      %v878 = vld [vmem:[#allocation2 + $0x49] sm:$0xff]
      %v879 = vld [vmem:[#allocation2 + $0x51] sm:$0xff]
      %v880 = vld [vmem:[#allocation2 + $0x59] sm:$0xff]
      %v881 = vld [vmem:[#allocation2 + $0x61] sm:$0xff]
      %v882 = vld [vmem:[#allocation2 + $0x69] sm:$0xff]
      %v883 = vld [vmem:[#allocation2 + $0x71] sm:$0xff]
      %v884 = vld [vmem:[#allocation2 + $0x79] sm:$0xff]
      %v885 = vld [vmem:[#allocation2 + $0x81] sm:$0xff]
      %v886 = vld [vmem:[#allocation2 + $0x89] sm:$0xff]
      %v887 = vld [vmem:[#allocation2 + $0x91] sm:$0xff]
      %v888 = vld [vmem:[#allocation2 + $0x99] sm:$0xff]
      %v889 = vld [vmem:[#allocation2 + $0xa1] sm:$0xff]
      %v890 = vld [vmem:[#allocation2 + $0xa9] sm:$0xff]
      %v891 = vld [vmem:[#allocation2 + $0xb1] sm:$0xff]
      %v892 = vld [vmem:[#allocation2 + $0xb9] sm:$0xff]
      %v893 = vld [vmem:[#allocation2 + $0xc1] sm:$0xff]
      %v894 = vld [vmem:[#allocation2 + $0xc9] sm:$0xff]
      %v895 = vld [vmem:[#allocation2 + $0xd1] sm:$0xff]
      %v896 = vld [vmem:[#allocation2 + $0xd9] sm:$0xff]
      %v897 = vld [vmem:[#allocation2 + $0xe1] sm:$0xff]
      %v898 = vld [vmem:[#allocation2 + $0xe9] sm:$0xff]
      %v899 = vld [vmem:[#allocation2 + $0xf1] sm:$0xff]
      %v900 = vld [vmem:[#allocation2 + $0xf9] sm:$0xff]
      %v901 = vsel %vm388, 1, 0
      %v902 = vsel %vm389, 1, 0
      %v903 = vsel %vm390, 1, 0
      %v904 = vsel %vm391, 1, 0
      %v905 = vsel %vm392, 1, 0
      %v906 = vsel %vm393, 1, 0
      %v907 = vsel %vm394, 1, 0
      %v908 = vsel %vm395, 1, 0
      %v909 = vsel %vm396, 1, 0
      %v910 = vsel %vm397, 1, 0
      %v911 = vsel %vm398, 1, 0
      %v912 = vsel %vm399, 1, 0
      %v913 = vsel %vm400, 1, 0
      %v914 = vsel %vm401, 1, 0
      %v915 = vsel %vm402, 1, 0
      %v916 = vsel %vm403, 1, 0
      %v917 = vsel %vm404, 1, 0
      %v918 = vsel %vm405, 1, 0
      %v919 = vsel %vm406, 1, 0
      %v920 = vsel %vm407, 1, 0
      %v921 = vsel %vm408, 1, 0
      %v922 = vsel %vm409, 1, 0
      %v923 = vsel %vm410, 1, 0
      %v924 = vsel %vm411, 1, 0
      %v925 = vsel %vm412, 1, 0
      %v926 = vsel %vm413, 1, 0
      %v927 = vsel %vm414, 1, 0
      %v928 = vsel %vm415, 1, 0
      %v929 = vsel %vm416, 1, 0
      %v930 = vsel %vm417, 1, 0
      %v931 = vsel %vm418, 1, 0
      %v932 = vsel %vm419, 1, 0
      %vm933 = vcmp.eq.s32.totalorder %v901, 1
      %vm934 = vcmp.eq.s32.totalorder %v902, 1
      %vm935 = vcmp.eq.s32.totalorder %v903, 1
      %vm936 = vcmp.eq.s32.totalorder %v904, 1
      %vm937 = vcmp.eq.s32.totalorder %v905, 1
      %vm938 = vcmp.eq.s32.totalorder %v906, 1
      %vm939 = vcmp.eq.s32.totalorder %v907, 1
      %vm940 = vcmp.eq.s32.totalorder %v908, 1
      %vm941 = vcmp.eq.s32.totalorder %v909, 1
      %vm942 = vcmp.eq.s32.totalorder %v910, 1
      %vm943 = vcmp.eq.s32.totalorder %v911, 1
      %vm944 = vcmp.eq.s32.totalorder %v912, 1
      %vm945 = vcmp.eq.s32.totalorder %v913, 1
      %vm946 = vcmp.eq.s32.totalorder %v914, 1
      %vm947 = vcmp.eq.s32.totalorder %v915, 1
      %vm948 = vcmp.eq.s32.totalorder %v916, 1
      %vm949 = vcmp.eq.s32.totalorder %v917, 1
      %vm950 = vcmp.eq.s32.totalorder %v918, 1
      %vm951 = vcmp.eq.s32.totalorder %v919, 1
      %vm952 = vcmp.eq.s32.totalorder %v920, 1
      %vm953 = vcmp.eq.s32.totalorder %v921, 1
      %vm954 = vcmp.eq.s32.totalorder %v922, 1
      %vm955 = vcmp.eq.s32.totalorder %v923, 1
      %vm956 = vcmp.eq.s32.totalorder %v924, 1
      %vm957 = vcmp.eq.s32.totalorder %v925, 1
      %vm958 = vcmp.eq.s32.totalorder %v926, 1
      %vm959 = vcmp.eq.s32.totalorder %v927, 1
      %vm960 = vcmp.eq.s32.totalorder %v928, 1
      %vm961 = vcmp.eq.s32.totalorder %v929, 1
      %vm962 = vcmp.eq.s32.totalorder %v930, 1
      %vm963 = vcmp.eq.s32.totalorder %v931, 1
      %vm964 = vcmp.eq.s32.totalorder %v932, 1
      %v965 = vsel %vm933, %v869, 0.0
      %v966 = vsel %vm934, %v870, 0.0
      %v967 = vsel %vm935, %v871, 0.0
      %v968 = vsel %vm936, %v872, 0.0
      %v969 = vsel %vm937, %v873, 0.0
      %v970 = vsel %vm938, %v874, 0.0
      %v971 = vsel %vm939, %v875, 0.0
      %v972 = vsel %vm940, %v876, 0.0
      %v973 = vsel %vm941, %v877, 0.0
      %v974 = vsel %vm942, %v878, 0.0
      %v975 = vsel %vm943, %v879, 0.0
      %v976 = vsel %vm944, %v880, 0.0
      %v977 = vsel %vm945, %v881, 0.0
      %v978 = vsel %vm946, %v882, 0.0
      %v979 = vsel %vm947, %v883, 0.0
      %v980 = vsel %vm948, %v884, 0.0
      %v981 = vsel %vm949, %v885, 0.0
      %v982 = vsel %vm950, %v886, 0.0
      %v983 = vsel %vm951, %v887, 0.0
      %v984 = vsel %vm952, %v888, 0.0
      %v985 = vsel %vm953, %v889, 0.0
      %v986 = vsel %vm954, %v890, 0.0
      %v987 = vsel %vm955, %v891, 0.0
      %v988 = vsel %vm956, %v892, 0.0
      %v989 = vsel %vm957, %v893, 0.0
      %v990 = vsel %vm958, %v894, 0.0
      %v991 = vsel %vm959, %v895, 0.0
      %v992 = vsel %vm960, %v896, 0.0
      %v993 = vsel %vm961, %v897, 0.0
      %v994 = vsel %vm962, %v898, 0.0
      %v995 = vsel %vm963, %v899, 0.0
      %v996 = vsel %vm964, %v900, 0.0
      %v997 = vpack.c.bf16 %v965, %v965
      %v998 = vpack.c.bf16 %v966, %v966
      %v999 = vpack.c.bf16 %v967, %v967
      %v1000 = vpack.c.bf16 %v968, %v968
      %v1001 = vpack.c.bf16 %v969, %v969
      %v1002 = vpack.c.bf16 %v970, %v970
      %v1003 = vpack.c.bf16 %v971, %v971
      %v1004 = vpack.c.bf16 %v972, %v972
      %v1005 = vpack.c.bf16 %v973, %v973
      %v1006 = vpack.c.bf16 %v974, %v974
      %v1007 = vpack.c.bf16 %v975, %v975
      %v1008 = vpack.c.bf16 %v976, %v976
      %v1009 = vpack.c.bf16 %v977, %v977
      %v1010 = vpack.c.bf16 %v978, %v978
      %v1011 = vpack.c.bf16 %v979, %v979
      %v1012 = vpack.c.bf16 %v980, %v980
      %v1013 = vpack.c.bf16 %v981, %v981
      %v1014 = vpack.c.bf16 %v982, %v982
      %v1015 = vpack.c.bf16 %v983, %v983
      %v1016 = vpack.c.bf16 %v984, %v984
      %v1017 = vpack.c.bf16 %v985, %v985
      %v1018 = vpack.c.bf16 %v986, %v986
      %v1019 = vpack.c.bf16 %v987, %v987
      %v1020 = vpack.c.bf16 %v988, %v988
      %v1021 = vpack.c.bf16 %v989, %v989
      %v1022 = vpack.c.bf16 %v990, %v990
      %v1023 = vpack.c.bf16 %v991, %v991
      %v1024 = vpack.c.bf16 %v992, %v992
      %v1025 = vpack.c.bf16 %v993, %v993
      %v1026 = vpack.c.bf16 %v994, %v994
      %v1027 = vpack.c.bf16 %v995, %v995
      %v1028 = vpack.c.bf16 %v996, %v996
      %1061 = vrot.lane.b32.xlu0 %v997, 4
      %v1062 = vpop.permute.xlu0 %1061
      %1063 = vrot.lane.b32.xlu0 %v998, 4
      %v1064 = vpop.permute.xlu0 %1063
      %1065 = vrot.lane.b32.xlu0 %v999, 4
      %v1066 = vpop.permute.xlu0 %1065
      %1067 = vrot.lane.b32.xlu0 %v1000, 4
      %v1068 = vpop.permute.xlu0 %1067
      %1069 = vrot.lane.b32.xlu0 %v1001, 4
      %v1070 = vpop.permute.xlu0 %1069
      %1071 = vrot.lane.b32.xlu0 %v1002, 4
      %v1072 = vpop.permute.xlu0 %1071
      %1073 = vrot.lane.b32.xlu0 %v1003, 4
      %v1074 = vpop.permute.xlu0 %1073
      %1075 = vrot.lane.b32.xlu0 %v1004, 4
      %v1076 = vpop.permute.xlu0 %1075
      %1077 = vrot.lane.b32.xlu0 %v1005, 4
      %v1078 = vpop.permute.xlu0 %1077
      %1079 = vrot.lane.b32.xlu0 %v1006, 4
      %v1080 = vpop.permute.xlu0 %1079
      %1081 = vrot.lane.b32.xlu0 %v1007, 4
      %v1082 = vpop.permute.xlu0 %1081
      %1083 = vrot.lane.b32.xlu0 %v1008, 4
      %v1084 = vpop.permute.xlu0 %1083
      %1085 = vrot.lane.b32.xlu0 %v1009, 4
      %v1086 = vpop.permute.xlu0 %1085
      %1087 = vrot.lane.b32.xlu0 %v1010, 4
      %v1088 = vpop.permute.xlu0 %1087
      %1089 = vrot.lane.b32.xlu0 %v1011, 4
      %v1090 = vpop.permute.xlu0 %1089
      %1091 = vrot.lane.b32.xlu0 %v1012, 4
      %v1092 = vpop.permute.xlu0 %1091
      %1093 = vrot.lane.b32.xlu0 %v1013, 4
      %v1094 = vpop.permute.xlu0 %1093
      %1095 = vrot.lane.b32.xlu0 %v1014, 4
      %v1096 = vpop.permute.xlu0 %1095
      %1097 = vrot.lane.b32.xlu0 %v1015, 4
      %v1098 = vpop.permute.xlu0 %1097
      %1099 = vrot.lane.b32.xlu0 %v1016, 4
      %v1100 = vpop.permute.xlu0 %1099
      %1101 = vrot.lane.b32.xlu0 %v1017, 4
      %v1102 = vpop.permute.xlu0 %1101
      %1103 = vrot.lane.b32.xlu0 %v1018, 4
      %v1104 = vpop.permute.xlu0 %1103
      %1105 = vrot.lane.b32.xlu0 %v1019, 4
      %v1106 = vpop.permute.xlu0 %1105
      %1107 = vrot.lane.b32.xlu0 %v1020, 4
      %v1108 = vpop.permute.xlu0 %1107
      %1109 = vrot.lane.b32.xlu0 %v1021, 4
      %v1110 = vpop.permute.xlu0 %1109
      %1111 = vrot.lane.b32.xlu0 %v1022, 4
      %v1112 = vpop.permute.xlu0 %1111
      %1113 = vrot.lane.b32.xlu0 %v1023, 4
      %v1114 = vpop.permute.xlu0 %1113
      %1115 = vrot.lane.b32.xlu0 %v1024, 4
      %v1116 = vpop.permute.xlu0 %1115
      %1117 = vrot.lane.b32.xlu0 %v1025, 4
      %v1118 = vpop.permute.xlu0 %1117
      %1119 = vrot.lane.b32.xlu0 %v1026, 4
      %v1120 = vpop.permute.xlu0 %1119
      %1121 = vrot.lane.b32.xlu0 %v1027, 4
      %v1122 = vpop.permute.xlu0 %1121
      %1123 = vrot.lane.b32.xlu0 %v1028, 4
      %v1124 = vpop.permute.xlu0 %1123
      %vm1157 = vcmask 60448
      %1158 = vst.msk [vmem:[#allocation4] sm:$0xf] %vm1157, %v1062
      %1159 = vst.msk [vmem:[#allocation4 + $0x4] sm:$0xf] %vm1157, %v1064
      %1160 = vst.msk [vmem:[#allocation4 + $0x8] sm:$0xf] %vm1157, %v1066
      %1161 = vst.msk [vmem:[#allocation4 + $0xc] sm:$0xf] %vm1157, %v1068
      %1162 = vst.msk [vmem:[#allocation4 + $0x10] sm:$0xf] %vm1157, %v1070
      %1163 = vst.msk [vmem:[#allocation4 + $0x14] sm:$0xf] %vm1157, %v1072
      %1164 = vst.msk [vmem:[#allocation4 + $0x18] sm:$0xf] %vm1157, %v1074
      %1165 = vst.msk [vmem:[#allocation4 + $0x1c] sm:$0xf] %vm1157, %v1076
      %1166 = vst.msk [vmem:[#allocation4 + $0x20] sm:$0xf] %vm1157, %v1078
      %1167 = vst.msk [vmem:[#allocation4 + $0x24] sm:$0xf] %vm1157, %v1080
      %1168 = vst.msk [vmem:[#allocation4 + $0x28] sm:$0xf] %vm1157, %v1082
      %1169 = vst.msk [vmem:[#allocation4 + $0x2c] sm:$0xf] %vm1157, %v1084
      %1170 = vst.msk [vmem:[#allocation4 + $0x30] sm:$0xf] %vm1157, %v1086
      %1171 = vst.msk [vmem:[#allocation4 + $0x34] sm:$0xf] %vm1157, %v1088
      %1172 = vst.msk [vmem:[#allocation4 + $0x38] sm:$0xf] %vm1157, %v1090
      %1173 = vst.msk [vmem:[#allocation4 + $0x3c] sm:$0xf] %vm1157, %v1092
      %1174 = vst.msk [vmem:[#allocation4 + $0x40] sm:$0xf] %vm1157, %v1094
      %1175 = vst.msk [vmem:[#allocation4 + $0x44] sm:$0xf] %vm1157, %v1096
      %1176 = vst.msk [vmem:[#allocation4 + $0x48] sm:$0xf] %vm1157, %v1098
      %1177 = vst.msk [vmem:[#allocation4 + $0x4c] sm:$0xf] %vm1157, %v1100
      %1178 = vst.msk [vmem:[#allocation4 + $0x50] sm:$0xf] %vm1157, %v1102
      %1179 = vst.msk [vmem:[#allocation4 + $0x54] sm:$0xf] %vm1157, %v1104
      %1180 = vst.msk [vmem:[#allocation4 + $0x58] sm:$0xf] %vm1157, %v1106
      %1181 = vst.msk [vmem:[#allocation4 + $0x5c] sm:$0xf] %vm1157, %v1108
      %1182 = vst.msk [vmem:[#allocation4 + $0x60] sm:$0xf] %vm1157, %v1110
      %1183 = vst.msk [vmem:[#allocation4 + $0x64] sm:$0xf] %vm1157, %v1112
      %1184 = vst.msk [vmem:[#allocation4 + $0x68] sm:$0xf] %vm1157, %v1114
      %1185 = vst.msk [vmem:[#allocation4 + $0x6c] sm:$0xf] %vm1157, %v1116
      %1186 = vst.msk [vmem:[#allocation4 + $0x70] sm:$0xf] %vm1157, %v1118
      %1187 = vst.msk [vmem:[#allocation4 + $0x74] sm:$0xf] %vm1157, %v1120
      %1188 = vst.msk [vmem:[#allocation4 + $0x78] sm:$0xf] %vm1157, %v1122
      %1189 = vst.msk [vmem:[#allocation4 + $0x7c] sm:$0xf] %vm1157, %v1124
      %v1190 = vld [vmem:[#allocation2 + $0x2] sm:$0xff]
      %v1191 = vld [vmem:[#allocation2 + $0xa] sm:$0xff]
      %v1192 = vld [vmem:[#allocation2 + $0x12] sm:$0xff]
      %v1193 = vld [vmem:[#allocation2 + $0x1a] sm:$0xff]
      %v1194 = vld [vmem:[#allocation2 + $0x22] sm:$0xff]
      %v1195 = vld [vmem:[#allocation2 + $0x2a] sm:$0xff]
      %v1196 = vld [vmem:[#allocation2 + $0x32] sm:$0xff]
      %v1197 = vld [vmem:[#allocation2 + $0x3a] sm:$0xff]
      %v1198 = vld [vmem:[#allocation2 + $0x42] sm:$0xff]
      %v1199 = vld [vmem:[#allocation2 + $0x4a] sm:$0xff]
      %v1200 = vld [vmem:[#allocation2 + $0x52] sm:$0xff]
      %v1201 = vld [vmem:[#allocation2 + $0x5a] sm:$0xff]
      %v1202 = vld [vmem:[#allocation2 + $0x62] sm:$0xff]
      %v1203 = vld [vmem:[#allocation2 + $0x6a] sm:$0xff]
      %v1204 = vld [vmem:[#allocation2 + $0x72] sm:$0xff]
      %v1205 = vld [vmem:[#allocation2 + $0x7a] sm:$0xff]
      %v1206 = vld [vmem:[#allocation2 + $0x82] sm:$0xff]
      %v1207 = vld [vmem:[#allocation2 + $0x8a] sm:$0xff]
      %v1208 = vld [vmem:[#allocation2 + $0x92] sm:$0xff]
      %v1209 = vld [vmem:[#allocation2 + $0x9a] sm:$0xff]
      %v1210 = vld [vmem:[#allocation2 + $0xa2] sm:$0xff]
      %v1211 = vld [vmem:[#allocation2 + $0xaa] sm:$0xff]
      %v1212 = vld [vmem:[#allocation2 + $0xb2] sm:$0xff]
      %v1213 = vld [vmem:[#allocation2 + $0xba] sm:$0xff]
      %v1214 = vld [vmem:[#allocation2 + $0xc2] sm:$0xff]
      %v1215 = vld [vmem:[#allocation2 + $0xca] sm:$0xff]
      %v1216 = vld [vmem:[#allocation2 + $0xd2] sm:$0xff]
      %v1217 = vld [vmem:[#allocation2 + $0xda] sm:$0xff]
      %v1218 = vld [vmem:[#allocation2 + $0xe2] sm:$0xff]
      %v1219 = vld [vmem:[#allocation2 + $0xea] sm:$0xff]
      %v1220 = vld [vmem:[#allocation2 + $0xf2] sm:$0xff]
      %v1221 = vld [vmem:[#allocation2 + $0xfa] sm:$0xff]
      %vm1222 = vcmp.lt.s32.totalorder %v426, 15
      %vm1223 = vcmp.lt.s32.totalorder %v433, 15
      %vm1224 = vcmp.lt.s32.totalorder %v440, 15
      %vm1225 = vcmp.lt.s32.totalorder %v447, 15
      %vm1226 = vcmp.lt.s32.totalorder %v454, 15
      %vm1227 = vcmp.lt.s32.totalorder %v461, 15
      %vm1228 = vcmp.lt.s32.totalorder %v468, 15
      %vm1229 = vcmp.lt.s32.totalorder %v475, 15
      %vm1230 = vcmp.lt.s32.totalorder %v482, 15
      %vm1231 = vcmp.lt.s32.totalorder %v489, 15
      %vm1232 = vcmp.lt.s32.totalorder %v496, 15
      %vm1233 = vcmp.lt.s32.totalorder %v503, 15
      %vm1234 = vcmp.lt.s32.totalorder %v510, 15
      %vm1235 = vcmp.lt.s32.totalorder %v517, 15
      %vm1236 = vcmp.lt.s32.totalorder %v524, 15
      %vm1237 = vcmp.lt.s32.totalorder %v531, 15
      %vm1238 = vcmp.lt.s32.totalorder %v538, 15
      %vm1239 = vcmp.lt.s32.totalorder %v545, 15
      %vm1240 = vcmp.lt.s32.totalorder %v552, 15
      %vm1241 = vcmp.lt.s32.totalorder %v559, 15
      %vm1242 = vcmp.lt.s32.totalorder %v566, 15
      %vm1243 = vcmp.lt.s32.totalorder %v573, 15
      %vm1244 = vcmp.lt.s32.totalorder %v580, 15
      %vm1245 = vcmp.lt.s32.totalorder %v587, 15
      %vm1246 = vcmp.lt.s32.totalorder %v594, 15
      %vm1247 = vcmp.lt.s32.totalorder %v601, 15
      %vm1248 = vcmp.lt.s32.totalorder %v608, 15
      %vm1249 = vcmp.lt.s32.totalorder %v615, 15
      %vm1250 = vcmp.lt.s32.totalorder %v622, 15
      %vm1251 = vcmp.lt.s32.totalorder %v629, 15
      %vm1252 = vcmp.lt.s32.totalorder %v636, 15
      %vm1253 = vcmp.lt.s32.totalorder %v643, 15
      %vm1254 = vmand %vm388, %vm1222
      %vm1255 = vmand %vm389, %vm1223
      %vm1256 = vmand %vm390, %vm1224
      %vm1257 = vmand %vm391, %vm1225
      %vm1258 = vmand %vm392, %vm1226
      %vm1259 = vmand %vm393, %vm1227
      %vm1260 = vmand %vm394, %vm1228
      %vm1261 = vmand %vm395, %vm1229
      %vm1262 = vmand %vm396, %vm1230
      %vm1263 = vmand %vm397, %vm1231
      %vm1264 = vmand %vm398, %vm1232
      %vm1265 = vmand %vm399, %vm1233
      %vm1266 = vmand %vm400, %vm1234
      %vm1267 = vmand %vm401, %vm1235
      %vm1268 = vmand %vm402, %vm1236
      %vm1269 = vmand %vm403, %vm1237
      %vm1270 = vmand %vm404, %vm1238
      %vm1271 = vmand %vm405, %vm1239
      %vm1272 = vmand %vm406, %vm1240
      %vm1273 = vmand %vm407, %vm1241
      %vm1274 = vmand %vm408, %vm1242
      %vm1275 = vmand %vm409, %vm1243
      %vm1276 = vmand %vm410, %vm1244
      %vm1277 = vmand %vm411, %vm1245
      %vm1278 = vmand %vm412, %vm1246
      %vm1279 = vmand %vm413, %vm1247
      %vm1280 = vmand %vm414, %vm1248
      %vm1281 = vmand %vm415, %vm1249
      %vm1282 = vmand %vm416, %vm1250
      %vm1283 = vmand %vm417, %vm1251
      %vm1284 = vmand %vm418, %vm1252
      %vm1285 = vmand %vm419, %vm1253
      %v1286 = vsel %vm1254, 1, 0
      %v1287 = vsel %vm1255, 1, 0
      %v1288 = vsel %vm1256, 1, 0
      %v1289 = vsel %vm1257, 1, 0
      %v1290 = vsel %vm1258, 1, 0
      %v1291 = vsel %vm1259, 1, 0
      %v1292 = vsel %vm1260, 1, 0
      %v1293 = vsel %vm1261, 1, 0
      %v1294 = vsel %vm1262, 1, 0
      %v1295 = vsel %vm1263, 1, 0
      %v1296 = vsel %vm1264, 1, 0
      %v1297 = vsel %vm1265, 1, 0
      %v1298 = vsel %vm1266, 1, 0
      %v1299 = vsel %vm1267, 1, 0
      %v1300 = vsel %vm1268, 1, 0
      %v1301 = vsel %vm1269, 1, 0
      %v1302 = vsel %vm1270, 1, 0
      %v1303 = vsel %vm1271, 1, 0
      %v1304 = vsel %vm1272, 1, 0
      %v1305 = vsel %vm1273, 1, 0
      %v1306 = vsel %vm1274, 1, 0
      %v1307 = vsel %vm1275, 1, 0
      %v1308 = vsel %vm1276, 1, 0
      %v1309 = vsel %vm1277, 1, 0
      %v1310 = vsel %vm1278, 1, 0
      %v1311 = vsel %vm1279, 1, 0
      %v1312 = vsel %vm1280, 1, 0
      %v1313 = vsel %vm1281, 1, 0
      %v1314 = vsel %vm1282, 1, 0
      %v1315 = vsel %vm1283, 1, 0
      %v1316 = vsel %vm1284, 1, 0
      %v1317 = vsel %vm1285, 1, 0
      %vm1318 = vcmp.eq.s32.totalorder %v1286, 1
      %vm1319 = vcmp.eq.s32.totalorder %v1287, 1
      %vm1320 = vcmp.eq.s32.totalorder %v1288, 1
      %vm1321 = vcmp.eq.s32.totalorder %v1289, 1
      %vm1322 = vcmp.eq.s32.totalorder %v1290, 1
      %vm1323 = vcmp.eq.s32.totalorder %v1291, 1
      %vm1324 = vcmp.eq.s32.totalorder %v1292, 1
      %vm1325 = vcmp.eq.s32.totalorder %v1293, 1
      %vm1326 = vcmp.eq.s32.totalorder %v1294, 1
      %vm1327 = vcmp.eq.s32.totalorder %v1295, 1
      %vm1328 = vcmp.eq.s32.totalorder %v1296, 1
      %vm1329 = vcmp.eq.s32.totalorder %v1297, 1
      %vm1330 = vcmp.eq.s32.totalorder %v1298, 1
      %vm1331 = vcmp.eq.s32.totalorder %v1299, 1
      %vm1332 = vcmp.eq.s32.totalorder %v1300, 1
      %vm1333 = vcmp.eq.s32.totalorder %v1301, 1
      %vm1334 = vcmp.eq.s32.totalorder %v1302, 1
      %vm1335 = vcmp.eq.s32.totalorder %v1303, 1
      %vm1336 = vcmp.eq.s32.totalorder %v1304, 1
      %vm1337 = vcmp.eq.s32.totalorder %v1305, 1
      %vm1338 = vcmp.eq.s32.totalorder %v1306, 1
      %vm1339 = vcmp.eq.s32.totalorder %v1307, 1
      %vm1340 = vcmp.eq.s32.totalorder %v1308, 1
      %vm1341 = vcmp.eq.s32.totalorder %v1309, 1
      %vm1342 = vcmp.eq.s32.totalorder %v1310, 1
      %vm1343 = vcmp.eq.s32.totalorder %v1311, 1
      %vm1344 = vcmp.eq.s32.totalorder %v1312, 1
      %vm1345 = vcmp.eq.s32.totalorder %v1313, 1
      %vm1346 = vcmp.eq.s32.totalorder %v1314, 1
      %vm1347 = vcmp.eq.s32.totalorder %v1315, 1
      %vm1348 = vcmp.eq.s32.totalorder %v1316, 1
      %vm1349 = vcmp.eq.s32.totalorder %v1317, 1
      %v1350 = vsel %vm1318, %v1190, 0.0
      %v1351 = vsel %vm1319, %v1191, 0.0
      %v1352 = vsel %vm1320, %v1192, 0.0
      %v1353 = vsel %vm1321, %v1193, 0.0
      %v1354 = vsel %vm1322, %v1194, 0.0
      %v1355 = vsel %vm1323, %v1195, 0.0
      %v1356 = vsel %vm1324, %v1196, 0.0
      %v1357 = vsel %vm1325, %v1197, 0.0
      %v1358 = vsel %vm1326, %v1198, 0.0
      %v1359 = vsel %vm1327, %v1199, 0.0
      %v1360 = vsel %vm1328, %v1200, 0.0
      %v1361 = vsel %vm1329, %v1201, 0.0
      %v1362 = vsel %vm1330, %v1202, 0.0
      %v1363 = vsel %vm1331, %v1203, 0.0
      %v1364 = vsel %vm1332, %v1204, 0.0
      %v1365 = vsel %vm1333, %v1205, 0.0
      %v1366 = vsel %vm1334, %v1206, 0.0
      %v1367 = vsel %vm1335, %v1207, 0.0
      %v1368 = vsel %vm1336, %v1208, 0.0
      %v1369 = vsel %vm1337, %v1209, 0.0
      %v1370 = vsel %vm1338, %v1210, 0.0
      %v1371 = vsel %vm1339, %v1211, 0.0
      %v1372 = vsel %vm1340, %v1212, 0.0
      %v1373 = vsel %vm1341, %v1213, 0.0
      %v1374 = vsel %vm1342, %v1214, 0.0
      %v1375 = vsel %vm1343, %v1215, 0.0
      %v1376 = vsel %vm1344, %v1216, 0.0
      %v1377 = vsel %vm1345, %v1217, 0.0
      %v1378 = vsel %vm1346, %v1218, 0.0
      %v1379 = vsel %vm1347, %v1219, 0.0
      %v1380 = vsel %vm1348, %v1220, 0.0
      %v1381 = vsel %vm1349, %v1221, 0.0
      %v1382 = vpack.c.bf16 %v1350, %v1350
      %v1383 = vpack.c.bf16 %v1351, %v1351
      %v1384 = vpack.c.bf16 %v1352, %v1352
      %v1385 = vpack.c.bf16 %v1353, %v1353
      %v1386 = vpack.c.bf16 %v1354, %v1354
      %v1387 = vpack.c.bf16 %v1355, %v1355
      %v1388 = vpack.c.bf16 %v1356, %v1356
      %v1389 = vpack.c.bf16 %v1357, %v1357
      %v1390 = vpack.c.bf16 %v1358, %v1358
      %v1391 = vpack.c.bf16 %v1359, %v1359
      %v1392 = vpack.c.bf16 %v1360, %v1360
      %v1393 = vpack.c.bf16 %v1361, %v1361
      %v1394 = vpack.c.bf16 %v1362, %v1362
      %v1395 = vpack.c.bf16 %v1363, %v1363
      %v1396 = vpack.c.bf16 %v1364, %v1364
      %v1397 = vpack.c.bf16 %v1365, %v1365
      %v1398 = vpack.c.bf16 %v1366, %v1366
      %v1399 = vpack.c.bf16 %v1367, %v1367
      %v1400 = vpack.c.bf16 %v1368, %v1368
      %v1401 = vpack.c.bf16 %v1369, %v1369
      %v1402 = vpack.c.bf16 %v1370, %v1370
      %v1403 = vpack.c.bf16 %v1371, %v1371
      %v1404 = vpack.c.bf16 %v1372, %v1372
      %v1405 = vpack.c.bf16 %v1373, %v1373
      %v1406 = vpack.c.bf16 %v1374, %v1374
      %v1407 = vpack.c.bf16 %v1375, %v1375
      %v1408 = vpack.c.bf16 %v1376, %v1376
      %v1409 = vpack.c.bf16 %v1377, %v1377
      %v1410 = vpack.c.bf16 %v1378, %v1378
      %v1411 = vpack.c.bf16 %v1379, %v1379
      %v1412 = vpack.c.bf16 %v1380, %v1380
      %v1413 = vpack.c.bf16 %v1381, %v1381
      %1446 = vrot.lane.b32.xlu0 %v1382, 8
      %v1447 = vpop.permute.xlu0 %1446
      %1448 = vrot.lane.b32.xlu0 %v1383, 8
      %v1449 = vpop.permute.xlu0 %1448
      %1450 = vrot.lane.b32.xlu0 %v1384, 8
      %v1451 = vpop.permute.xlu0 %1450
      %1452 = vrot.lane.b32.xlu0 %v1385, 8
      %v1453 = vpop.permute.xlu0 %1452
      %1454 = vrot.lane.b32.xlu0 %v1386, 8
      %v1455 = vpop.permute.xlu0 %1454
      %1456 = vrot.lane.b32.xlu0 %v1387, 8
      %v1457 = vpop.permute.xlu0 %1456
      %1458 = vrot.lane.b32.xlu0 %v1388, 8
      %v1459 = vpop.permute.xlu0 %1458
      %1460 = vrot.lane.b32.xlu0 %v1389, 8
      %v1461 = vpop.permute.xlu0 %1460
      %1462 = vrot.lane.b32.xlu0 %v1390, 8
      %v1463 = vpop.permute.xlu0 %1462
      %1464 = vrot.lane.b32.xlu0 %v1391, 8
      %v1465 = vpop.permute.xlu0 %1464
      %1466 = vrot.lane.b32.xlu0 %v1392, 8
      %v1467 = vpop.permute.xlu0 %1466
      %1468 = vrot.lane.b32.xlu0 %v1393, 8
      %v1469 = vpop.permute.xlu0 %1468
      %1470 = vrot.lane.b32.xlu0 %v1394, 8
      %v1471 = vpop.permute.xlu0 %1470
      %1472 = vrot.lane.b32.xlu0 %v1395, 8
      %v1473 = vpop.permute.xlu0 %1472
      %1474 = vrot.lane.b32.xlu0 %v1396, 8
      %v1475 = vpop.permute.xlu0 %1474
      %1476 = vrot.lane.b32.xlu0 %v1397, 8
      %v1477 = vpop.permute.xlu0 %1476
      %1478 = vrot.lane.b32.xlu0 %v1398, 8
      %v1479 = vpop.permute.xlu0 %1478
      %1480 = vrot.lane.b32.xlu0 %v1399, 8
      %v1481 = vpop.permute.xlu0 %1480
      %1482 = vrot.lane.b32.xlu0 %v1400, 8
      %v1483 = vpop.permute.xlu0 %1482
      %1484 = vrot.lane.b32.xlu0 %v1401, 8
      %v1485 = vpop.permute.xlu0 %1484
      %1486 = vrot.lane.b32.xlu0 %v1402, 8
      %v1487 = vpop.permute.xlu0 %1486
      %1488 = vrot.lane.b32.xlu0 %v1403, 8
      %v1489 = vpop.permute.xlu0 %1488
      %1490 = vrot.lane.b32.xlu0 %v1404, 8
      %v1491 = vpop.permute.xlu0 %1490
      %1492 = vrot.lane.b32.xlu0 %v1405, 8
      %v1493 = vpop.permute.xlu0 %1492
      %1494 = vrot.lane.b32.xlu0 %v1406, 8
      %v1495 = vpop.permute.xlu0 %1494
      %1496 = vrot.lane.b32.xlu0 %v1407, 8
      %v1497 = vpop.permute.xlu0 %1496
      %1498 = vrot.lane.b32.xlu0 %v1408, 8
      %v1499 = vpop.permute.xlu0 %1498
      %1500 = vrot.lane.b32.xlu0 %v1409, 8
      %v1501 = vpop.permute.xlu0 %1500
      %1502 = vrot.lane.b32.xlu0 %v1410, 8
      %v1503 = vpop.permute.xlu0 %1502
      %1504 = vrot.lane.b32.xlu0 %v1411, 8
      %v1505 = vpop.permute.xlu0 %1504
      %1506 = vrot.lane.b32.xlu0 %v1412, 8
      %v1507 = vpop.permute.xlu0 %1506
      %1508 = vrot.lane.b32.xlu0 %v1413, 8
      %v1509 = vpop.permute.xlu0 %1508
      %vm1542 = vcmask 93248
      %1543 = vst.msk [vmem:[#allocation4] sm:$0xf] %vm1542, %v1447
      %1544 = vst.msk [vmem:[#allocation4 + $0x4] sm:$0xf] %vm1542, %v1449
      %1545 = vst.msk [vmem:[#allocation4 + $0x8] sm:$0xf] %vm1542, %v1451
      %1546 = vst.msk [vmem:[#allocation4 + $0xc] sm:$0xf] %vm1542, %v1453
      %1547 = vst.msk [vmem:[#allocation4 + $0x10] sm:$0xf] %vm1542, %v1455
      %1548 = vst.msk [vmem:[#allocation4 + $0x14] sm:$0xf] %vm1542, %v1457
      %1549 = vst.msk [vmem:[#allocation4 + $0x18] sm:$0xf] %vm1542, %v1459
      %1550 = vst.msk [vmem:[#allocation4 + $0x1c] sm:$0xf] %vm1542, %v1461
      %1551 = vst.msk [vmem:[#allocation4 + $0x20] sm:$0xf] %vm1542, %v1463
      %1552 = vst.msk [vmem:[#allocation4 + $0x24] sm:$0xf] %vm1542, %v1465
      %1553 = vst.msk [vmem:[#allocation4 + $0x28] sm:$0xf] %vm1542, %v1467
      %1554 = vst.msk [vmem:[#allocation4 + $0x2c] sm:$0xf] %vm1542, %v1469
      %1555 = vst.msk [vmem:[#allocation4 + $0x30] sm:$0xf] %vm1542, %v1471
      %1556 = vst.msk [vmem:[#allocation4 + $0x34] sm:$0xf] %vm1542, %v1473
      %1557 = vst.msk [vmem:[#allocation4 + $0x38] sm:$0xf] %vm1542, %v1475
      %1558 = vst.msk [vmem:[#allocation4 + $0x3c] sm:$0xf] %vm1542, %v1477
      %1559 = vst.msk [vmem:[#allocation4 + $0x40] sm:$0xf] %vm1542, %v1479
      %1560 = vst.msk [vmem:[#allocation4 + $0x44] sm:$0xf] %vm1542, %v1481
      %1561 = vst.msk [vmem:[#allocation4 + $0x48] sm:$0xf] %vm1542, %v1483
      %1562 = vst.msk [vmem:[#allocation4 + $0x4c] sm:$0xf] %vm1542, %v1485
      %1563 = vst.msk [vmem:[#allocation4 + $0x50] sm:$0xf] %vm1542, %v1487
      %1564 = vst.msk [vmem:[#allocation4 + $0x54] sm:$0xf] %vm1542, %v1489
      %1565 = vst.msk [vmem:[#allocation4 + $0x58] sm:$0xf] %vm1542, %v1491
      %1566 = vst.msk [vmem:[#allocation4 + $0x5c] sm:$0xf] %vm1542, %v1493
      %1567 = vst.msk [vmem:[#allocation4 + $0x60] sm:$0xf] %vm1542, %v1495
      %1568 = vst.msk [vmem:[#allocation4 + $0x64] sm:$0xf] %vm1542, %v1497
      %1569 = vst.msk [vmem:[#allocation4 + $0x68] sm:$0xf] %vm1542, %v1499
      %1570 = vst.msk [vmem:[#allocation4 + $0x6c] sm:$0xf] %vm1542, %v1501
      %1571 = vst.msk [vmem:[#allocation4 + $0x70] sm:$0xf] %vm1542, %v1503
      %1572 = vst.msk [vmem:[#allocation4 + $0x74] sm:$0xf] %vm1542, %v1505
      %1573 = vst.msk [vmem:[#allocation4 + $0x78] sm:$0xf] %vm1542, %v1507
      %1574 = vst.msk [vmem:[#allocation4 + $0x7c] sm:$0xf] %vm1542, %v1509
      %v1575 = vld [vmem:[#allocation2 + $0x10] sm:$0xff]
      %v1576 = vld [vmem:[#allocation2 + $0x18] sm:$0xff]
      %v1577 = vld [vmem:[#allocation2 + $0x20] sm:$0xff]
      %v1578 = vld [vmem:[#allocation2 + $0x28] sm:$0xff]
      %v1579 = vld [vmem:[#allocation2 + $0x30] sm:$0xff]
      %v1580 = vld [vmem:[#allocation2 + $0x38] sm:$0xff]
      %v1581 = vld [vmem:[#allocation2 + $0x40] sm:$0xff]
      %v1582 = vld [vmem:[#allocation2 + $0x48] sm:$0xff]
      %v1583 = vld [vmem:[#allocation2 + $0x50] sm:$0xff]
      %v1584 = vld [vmem:[#allocation2 + $0x58] sm:$0xff]
      %v1585 = vld [vmem:[#allocation2 + $0x60] sm:$0xff]
      %v1586 = vld [vmem:[#allocation2 + $0x68] sm:$0xff]
      %v1587 = vld [vmem:[#allocation2 + $0x70] sm:$0xff]
      %v1588 = vld [vmem:[#allocation2 + $0x78] sm:$0xff]
      %v1589 = vld [vmem:[#allocation2 + $0x80] sm:$0xff]
      %v1590 = vld [vmem:[#allocation2 + $0x88] sm:$0xff]
      %v1591 = vld [vmem:[#allocation2 + $0x90] sm:$0xff]
      %v1592 = vld [vmem:[#allocation2 + $0x98] sm:$0xff]
      %v1593 = vld [vmem:[#allocation2 + $0xa0] sm:$0xff]
      %v1594 = vld [vmem:[#allocation2 + $0xa8] sm:$0xff]
      %v1595 = vld [vmem:[#allocation2 + $0xb0] sm:$0xff]
      %v1596 = vld [vmem:[#allocation2 + $0xb8] sm:$0xff]
      %v1597 = vld [vmem:[#allocation2 + $0xc0] sm:$0xff]
      %v1598 = vld [vmem:[#allocation2 + $0xc8] sm:$0xff]
      %v1599 = vld [vmem:[#allocation2 + $0xd0] sm:$0xff]
      %v1600 = vld [vmem:[#allocation2 + $0xd8] sm:$0xff]
      %v1601 = vld [vmem:[#allocation2 + $0xe0] sm:$0xff]
      %v1602 = vld [vmem:[#allocation2 + $0xe8] sm:$0xff]
      %v1603 = vld [vmem:[#allocation2 + $0xf0] sm:$0xff]
      %v1604 = vld [vmem:[#allocation2 + $0xf8] sm:$0xff]
      %v1605 = vld [vmem:[#allocation2 + $0x100] sm:$0xff]
      %v1606 = vld [vmem:[#allocation2 + $0x108] sm:$0xff]
      %v1607 = vsel %vm644, 1, 0
      %v1608 = vsel %vm645, 1, 0
      %v1609 = vsel %vm646, 1, 0
      %v1610 = vsel %vm647, 1, 0
      %v1611 = vsel %vm648, 1, 0
      %v1612 = vsel %vm649, 1, 0
      %v1613 = vsel %vm650, 1, 0
      %v1614 = vsel %vm651, 1, 0
      %v1615 = vsel %vm652, 1, 0
      %v1616 = vsel %vm653, 1, 0
      %v1617 = vsel %vm654, 1, 0
      %v1618 = vsel %vm655, 1, 0
      %v1619 = vsel %vm656, 1, 0
      %v1620 = vsel %vm657, 1, 0
      %v1621 = vsel %vm658, 1, 0
      %v1622 = vsel %vm659, 1, 0
      %v1623 = vsel %vm660, 1, 0
      %v1624 = vsel %vm661, 1, 0
      %v1625 = vsel %vm662, 1, 0
      %v1626 = vsel %vm663, 1, 0
      %v1627 = vsel %vm664, 1, 0
      %v1628 = vsel %vm665, 1, 0
      %v1629 = vsel %vm666, 1, 0
      %v1630 = vsel %vm667, 1, 0
      %v1631 = vsel %vm668, 1, 0
      %v1632 = vsel %vm669, 1, 0
      %v1633 = vsel %vm670, 1, 0
      %v1634 = vsel %vm671, 1, 0
      %v1635 = vsel %vm672, 1, 0
      %v1636 = vsel %vm673, 1, 0
      %v1637 = vsel %vm674, 1, 0
      %v1638 = vsel %vm675, 1, 0
      %vm1639 = vcmp.eq.s32.totalorder %v1607, 1
      %vm1640 = vcmp.eq.s32.totalorder %v1608, 1
      %vm1641 = vcmp.eq.s32.totalorder %v1609, 1
      %vm1642 = vcmp.eq.s32.totalorder %v1610, 1
      %vm1643 = vcmp.eq.s32.totalorder %v1611, 1
      %vm1644 = vcmp.eq.s32.totalorder %v1612, 1
      %vm1645 = vcmp.eq.s32.totalorder %v1613, 1
      %vm1646 = vcmp.eq.s32.totalorder %v1614, 1
      %vm1647 = vcmp.eq.s32.totalorder %v1615, 1
      %vm1648 = vcmp.eq.s32.totalorder %v1616, 1
      %vm1649 = vcmp.eq.s32.totalorder %v1617, 1
      %vm1650 = vcmp.eq.s32.totalorder %v1618, 1
      %vm1651 = vcmp.eq.s32.totalorder %v1619, 1
      %vm1652 = vcmp.eq.s32.totalorder %v1620, 1
      %vm1653 = vcmp.eq.s32.totalorder %v1621, 1
      %vm1654 = vcmp.eq.s32.totalorder %v1622, 1
      %vm1655 = vcmp.eq.s32.totalorder %v1623, 1
      %vm1656 = vcmp.eq.s32.totalorder %v1624, 1
      %vm1657 = vcmp.eq.s32.totalorder %v1625, 1
      %vm1658 = vcmp.eq.s32.totalorder %v1626, 1
      %vm1659 = vcmp.eq.s32.totalorder %v1627, 1
      %vm1660 = vcmp.eq.s32.totalorder %v1628, 1
      %vm1661 = vcmp.eq.s32.totalorder %v1629, 1
      %vm1662 = vcmp.eq.s32.totalorder %v1630, 1
      %vm1663 = vcmp.eq.s32.totalorder %v1631, 1
      %vm1664 = vcmp.eq.s32.totalorder %v1632, 1
      %vm1665 = vcmp.eq.s32.totalorder %v1633, 1
      %vm1666 = vcmp.eq.s32.totalorder %v1634, 1
      %vm1667 = vcmp.eq.s32.totalorder %v1635, 1
      %vm1668 = vcmp.eq.s32.totalorder %v1636, 1
      %vm1669 = vcmp.eq.s32.totalorder %v1637, 1
      %vm1670 = vcmp.eq.s32.totalorder %v1638, 1
      %v1671 = vsel %vm1639, %v1575, 0.0
      %v1672 = vsel %vm1640, %v1576, 0.0
      %v1673 = vsel %vm1641, %v1577, 0.0
      %v1674 = vsel %vm1642, %v1578, 0.0
      %v1675 = vsel %vm1643, %v1579, 0.0
      %v1676 = vsel %vm1644, %v1580, 0.0
      %v1677 = vsel %vm1645, %v1581, 0.0
      %v1678 = vsel %vm1646, %v1582, 0.0
      %v1679 = vsel %vm1647, %v1583, 0.0
      %v1680 = vsel %vm1648, %v1584, 0.0
      %v1681 = vsel %vm1649, %v1585, 0.0
      %v1682 = vsel %vm1650, %v1586, 0.0
      %v1683 = vsel %vm1651, %v1587, 0.0
      %v1684 = vsel %vm1652, %v1588, 0.0
      %v1685 = vsel %vm1653, %v1589, 0.0
      %v1686 = vsel %vm1654, %v1590, 0.0
      %v1687 = vsel %vm1655, %v1591, 0.0
      %v1688 = vsel %vm1656, %v1592, 0.0
      %v1689 = vsel %vm1657, %v1593, 0.0
      %v1690 = vsel %vm1658, %v1594, 0.0
      %v1691 = vsel %vm1659, %v1595, 0.0
      %v1692 = vsel %vm1660, %v1596, 0.0
      %v1693 = vsel %vm1661, %v1597, 0.0
      %v1694 = vsel %vm1662, %v1598, 0.0
      %v1695 = vsel %vm1663, %v1599, 0.0
      %v1696 = vsel %vm1664, %v1600, 0.0
      %v1697 = vsel %vm1665, %v1601, 0.0
      %v1698 = vsel %vm1666, %v1602, 0.0
      %v1699 = vsel %vm1667, %v1603, 0.0
      %v1700 = vsel %vm1668, %v1604, 0.0
      %v1701 = vsel %vm1669, %v1605, 0.0
      %v1702 = vsel %vm1670, %v1606, 0.0
      %v1703 = vpack.c.bf16 %v1671, %v1671
      %v1704 = vpack.c.bf16 %v1672, %v1672
      %v1705 = vpack.c.bf16 %v1673, %v1673
      %v1706 = vpack.c.bf16 %v1674, %v1674
      %v1707 = vpack.c.bf16 %v1675, %v1675
      %v1708 = vpack.c.bf16 %v1676, %v1676
      %v1709 = vpack.c.bf16 %v1677, %v1677
      %v1710 = vpack.c.bf16 %v1678, %v1678
      %v1711 = vpack.c.bf16 %v1679, %v1679
      %v1712 = vpack.c.bf16 %v1680, %v1680
      %v1713 = vpack.c.bf16 %v1681, %v1681
      %v1714 = vpack.c.bf16 %v1682, %v1682
      %v1715 = vpack.c.bf16 %v1683, %v1683
      %v1716 = vpack.c.bf16 %v1684, %v1684
      %v1717 = vpack.c.bf16 %v1685, %v1685
      %v1718 = vpack.c.bf16 %v1686, %v1686
      %v1719 = vpack.c.bf16 %v1687, %v1687
      %v1720 = vpack.c.bf16 %v1688, %v1688
      %v1721 = vpack.c.bf16 %v1689, %v1689
      %v1722 = vpack.c.bf16 %v1690, %v1690
      %v1723 = vpack.c.bf16 %v1691, %v1691
      %v1724 = vpack.c.bf16 %v1692, %v1692
      %v1725 = vpack.c.bf16 %v1693, %v1693
      %v1726 = vpack.c.bf16 %v1694, %v1694
      %v1727 = vpack.c.bf16 %v1695, %v1695
      %v1728 = vpack.c.bf16 %v1696, %v1696
      %v1729 = vpack.c.bf16 %v1697, %v1697
      %v1730 = vpack.c.bf16 %v1698, %v1698
      %v1731 = vpack.c.bf16 %v1699, %v1699
      %v1732 = vpack.c.bf16 %v1700, %v1700
      %v1733 = vpack.c.bf16 %v1701, %v1701
      %v1734 = vpack.c.bf16 %v1702, %v1702
      %1767 = vrot.lane.b32.xlu0 %v1703, 12
      %v1768 = vpop.permute.xlu0 %1767
      %1769 = vrot.lane.b32.xlu0 %v1704, 12
      %v1770 = vpop.permute.xlu0 %1769
      %1771 = vrot.lane.b32.xlu0 %v1705, 12
      %v1772 = vpop.permute.xlu0 %1771
      %1773 = vrot.lane.b32.xlu0 %v1706, 12
      %v1774 = vpop.permute.xlu0 %1773
      %1775 = vrot.lane.b32.xlu0 %v1707, 12
      %v1776 = vpop.permute.xlu0 %1775
      %1777 = vrot.lane.b32.xlu0 %v1708, 12
      %v1778 = vpop.permute.xlu0 %1777
      %1779 = vrot.lane.b32.xlu0 %v1709, 12
      %v1780 = vpop.permute.xlu0 %1779
      %1781 = vrot.lane.b32.xlu0 %v1710, 12
      %v1782 = vpop.permute.xlu0 %1781
      %1783 = vrot.lane.b32.xlu0 %v1711, 12
      %v1784 = vpop.permute.xlu0 %1783
      %1785 = vrot.lane.b32.xlu0 %v1712, 12
      %v1786 = vpop.permute.xlu0 %1785
      %1787 = vrot.lane.b32.xlu0 %v1713, 12
      %v1788 = vpop.permute.xlu0 %1787
      %1789 = vrot.lane.b32.xlu0 %v1714, 12
      %v1790 = vpop.permute.xlu0 %1789
      %1791 = vrot.lane.b32.xlu0 %v1715, 12
      %v1792 = vpop.permute.xlu0 %1791
      %1793 = vrot.lane.b32.xlu0 %v1716, 12
      %v1794 = vpop.permute.xlu0 %1793
      %1795 = vrot.lane.b32.xlu0 %v1717, 12
      %v1796 = vpop.permute.xlu0 %1795
      %1797 = vrot.lane.b32.xlu0 %v1718, 12
      %v1798 = vpop.permute.xlu0 %1797
      %1799 = vrot.lane.b32.xlu0 %v1719, 12
      %v1800 = vpop.permute.xlu0 %1799
      %1801 = vrot.lane.b32.xlu0 %v1720, 12
      %v1802 = vpop.permute.xlu0 %1801
      %1803 = vrot.lane.b32.xlu0 %v1721, 12
      %v1804 = vpop.permute.xlu0 %1803
      %1805 = vrot.lane.b32.xlu0 %v1722, 12
      %v1806 = vpop.permute.xlu0 %1805
      %1807 = vrot.lane.b32.xlu0 %v1723, 12
      %v1808 = vpop.permute.xlu0 %1807
      %1809 = vrot.lane.b32.xlu0 %v1724, 12
      %v1810 = vpop.permute.xlu0 %1809
      %1811 = vrot.lane.b32.xlu0 %v1725, 12
      %v1812 = vpop.permute.xlu0 %1811
      %1813 = vrot.lane.b32.xlu0 %v1726, 12
      %v1814 = vpop.permute.xlu0 %1813
      %1815 = vrot.lane.b32.xlu0 %v1727, 12
      %v1816 = vpop.permute.xlu0 %1815
      %1817 = vrot.lane.b32.xlu0 %v1728, 12
      %v1818 = vpop.permute.xlu0 %1817
      %1819 = vrot.lane.b32.xlu0 %v1729, 12
      %v1820 = vpop.permute.xlu0 %1819
      %1821 = vrot.lane.b32.xlu0 %v1730, 12
      %v1822 = vpop.permute.xlu0 %1821
      %1823 = vrot.lane.b32.xlu0 %v1731, 12
      %v1824 = vpop.permute.xlu0 %1823
      %1825 = vrot.lane.b32.xlu0 %v1732, 12
      %v1826 = vpop.permute.xlu0 %1825
      %1827 = vrot.lane.b32.xlu0 %v1733, 12
      %v1828 = vpop.permute.xlu0 %1827
      %1829 = vrot.lane.b32.xlu0 %v1734, 12
      %v1830 = vpop.permute.xlu0 %1829
      %vm1863 = vcmask 126048
      %1864 = vst.msk [vmem:[#allocation4] sm:$0xf] %vm1863, %v1768
      %1865 = vst.msk [vmem:[#allocation4 + $0x4] sm:$0xf] %vm1863, %v1770
      %1866 = vst.msk [vmem:[#allocation4 + $0x8] sm:$0xf] %vm1863, %v1772
      %1867 = vst.msk [vmem:[#allocation4 + $0xc] sm:$0xf] %vm1863, %v1774
      %1868 = vst.msk [vmem:[#allocation4 + $0x10] sm:$0xf] %vm1863, %v1776
      %1869 = vst.msk [vmem:[#allocation4 + $0x14] sm:$0xf] %vm1863, %v1778
      %1870 = vst.msk [vmem:[#allocation4 + $0x18] sm:$0xf] %vm1863, %v1780
      %1871 = vst.msk [vmem:[#allocation4 + $0x1c] sm:$0xf] %vm1863, %v1782
      %1872 = vst.msk [vmem:[#allocation4 + $0x20] sm:$0xf] %vm1863, %v1784
      %1873 = vst.msk [vmem:[#allocation4 + $0x24] sm:$0xf] %vm1863, %v1786
      %1874 = vst.msk [vmem:[#allocation4 + $0x28] sm:$0xf] %vm1863, %v1788
      %1875 = vst.msk [vmem:[#allocation4 + $0x2c] sm:$0xf] %vm1863, %v1790
      %1876 = vst.msk [vmem:[#allocation4 + $0x30] sm:$0xf] %vm1863, %v1792
      %1877 = vst.msk [vmem:[#allocation4 + $0x34] sm:$0xf] %vm1863, %v1794
      %1878 = vst.msk [vmem:[#allocation4 + $0x38] sm:$0xf] %vm1863, %v1796
      %1879 = vst.msk [vmem:[#allocation4 + $0x3c] sm:$0xf] %vm1863, %v1798
      %1880 = vst.msk [vmem:[#allocation4 + $0x40] sm:$0xf] %vm1863, %v1800
      %1881 = vst.msk [vmem:[#allocation4 + $0x44] sm:$0xf] %vm1863, %v1802
      %1882 = vst.msk [vmem:[#allocation4 + $0x48] sm:$0xf] %vm1863, %v1804
      %1883 = vst.msk [vmem:[#allocation4 + $0x4c] sm:$0xf] %vm1863, %v1806
      %1884 = vst.msk [vmem:[#allocation4 + $0x50] sm:$0xf] %vm1863, %v1808
      %1885 = vst.msk [vmem:[#allocation4 + $0x54] sm:$0xf] %vm1863, %v1810
      %1886 = vst.msk [vmem:[#allocation4 + $0x58] sm:$0xf] %vm1863, %v1812
      %1887 = vst.msk [vmem:[#allocation4 + $0x5c] sm:$0xf] %vm1863, %v1814
      %1888 = vst.msk [vmem:[#allocation4 + $0x60] sm:$0xf] %vm1863, %v1816
      %1889 = vst.msk [vmem:[#allocation4 + $0x64] sm:$0xf] %vm1863, %v1818
      %1890 = vst.msk [vmem:[#allocation4 + $0x68] sm:$0xf] %vm1863, %v1820
      %1891 = vst.msk [vmem:[#allocation4 + $0x6c] sm:$0xf] %vm1863, %v1822
      %1892 = vst.msk [vmem:[#allocation4 + $0x70] sm:$0xf] %vm1863, %v1824
      %1893 = vst.msk [vmem:[#allocation4 + $0x74] sm:$0xf] %vm1863, %v1826
      %1894 = vst.msk [vmem:[#allocation4 + $0x78] sm:$0xf] %vm1863, %v1828
      %1895 = vst.msk [vmem:[#allocation4 + $0x7c] sm:$0xf] %vm1863, %v1830
      %v1896 = vld [vmem:[#allocation2 + $0x11] sm:$0xff]
      %v1897 = vld [vmem:[#allocation2 + $0x19] sm:$0xff]
      %v1898 = vld [vmem:[#allocation2 + $0x21] sm:$0xff]
      %v1899 = vld [vmem:[#allocation2 + $0x29] sm:$0xff]
      %v1900 = vld [vmem:[#allocation2 + $0x31] sm:$0xff]
      %v1901 = vld [vmem:[#allocation2 + $0x39] sm:$0xff]
      %v1902 = vld [vmem:[#allocation2 + $0x41] sm:$0xff]
      %v1903 = vld [vmem:[#allocation2 + $0x49] sm:$0xff]
      %v1904 = vld [vmem:[#allocation2 + $0x51] sm:$0xff]
      %v1905 = vld [vmem:[#allocation2 + $0x59] sm:$0xff]
      %v1906 = vld [vmem:[#allocation2 + $0x61] sm:$0xff]
      %v1907 = vld [vmem:[#allocation2 + $0x69] sm:$0xff]
      %v1908 = vld [vmem:[#allocation2 + $0x71] sm:$0xff]
      %v1909 = vld [vmem:[#allocation2 + $0x79] sm:$0xff]
      %v1910 = vld [vmem:[#allocation2 + $0x81] sm:$0xff]
      %v1911 = vld [vmem:[#allocation2 + $0x89] sm:$0xff]
      %v1912 = vld [vmem:[#allocation2 + $0x91] sm:$0xff]
      %v1913 = vld [vmem:[#allocation2 + $0x99] sm:$0xff]
      %v1914 = vld [vmem:[#allocation2 + $0xa1] sm:$0xff]
      %v1915 = vld [vmem:[#allocation2 + $0xa9] sm:$0xff]
      %v1916 = vld [vmem:[#allocation2 + $0xb1] sm:$0xff]
      %v1917 = vld [vmem:[#allocation2 + $0xb9] sm:$0xff]
      %v1918 = vld [vmem:[#allocation2 + $0xc1] sm:$0xff]
      %v1919 = vld [vmem:[#allocation2 + $0xc9] sm:$0xff]
      %v1920 = vld [vmem:[#allocation2 + $0xd1] sm:$0xff]
      %v1921 = vld [vmem:[#allocation2 + $0xd9] sm:$0xff]
      %v1922 = vld [vmem:[#allocation2 + $0xe1] sm:$0xff]
      %v1923 = vld [vmem:[#allocation2 + $0xe9] sm:$0xff]
      %v1924 = vld [vmem:[#allocation2 + $0xf1] sm:$0xff]
      %v1925 = vld [vmem:[#allocation2 + $0xf9] sm:$0xff]
      %v1926 = vld [vmem:[#allocation2 + $0x101] sm:$0xff]
      %v1927 = vld [vmem:[#allocation2 + $0x109] sm:$0xff]
      %v1928 = vpack.c.bf16 %v1896, %v1896
      %v1929 = vpack.c.bf16 %v1897, %v1897
      %v1930 = vpack.c.bf16 %v1898, %v1898
      %v1931 = vpack.c.bf16 %v1899, %v1899
      %v1932 = vpack.c.bf16 %v1900, %v1900
      %v1933 = vpack.c.bf16 %v1901, %v1901
      %v1934 = vpack.c.bf16 %v1902, %v1902
      %v1935 = vpack.c.bf16 %v1903, %v1903
      %v1936 = vpack.c.bf16 %v1904, %v1904
      %v1937 = vpack.c.bf16 %v1905, %v1905
      %v1938 = vpack.c.bf16 %v1906, %v1906
      %v1939 = vpack.c.bf16 %v1907, %v1907
      %v1940 = vpack.c.bf16 %v1908, %v1908
      %v1941 = vpack.c.bf16 %v1909, %v1909
      %v1942 = vpack.c.bf16 %v1910, %v1910
      %v1943 = vpack.c.bf16 %v1911, %v1911
      %v1944 = vpack.c.bf16 %v1912, %v1912
      %v1945 = vpack.c.bf16 %v1913, %v1913
      %v1946 = vpack.c.bf16 %v1914, %v1914
      %v1947 = vpack.c.bf16 %v1915, %v1915
      %v1948 = vpack.c.bf16 %v1916, %v1916
      %v1949 = vpack.c.bf16 %v1917, %v1917
      %v1950 = vpack.c.bf16 %v1918, %v1918
      %v1951 = vpack.c.bf16 %v1919, %v1919
      %v1952 = vpack.c.bf16 %v1920, %v1920
      %v1953 = vpack.c.bf16 %v1921, %v1921
      %v1954 = vpack.c.bf16 %v1922, %v1922
      %v1955 = vpack.c.bf16 %v1923, %v1923
      %v1956 = vpack.c.bf16 %v1924, %v1924
      %v1957 = vpack.c.bf16 %v1925, %v1925
      %v1958 = vpack.c.bf16 %v1926, %v1926
      %v1959 = vpack.c.bf16 %v1927, %v1927
      %1992 = vrot.lane.b32.xlu0 %v1928, 16
      %v1993 = vpop.permute.xlu0 %1992
      %1994 = vrot.lane.b32.xlu0 %v1929, 16
      %v1995 = vpop.permute.xlu0 %1994
      %1996 = vrot.lane.b32.xlu0 %v1930, 16
      %v1997 = vpop.permute.xlu0 %1996
      %1998 = vrot.lane.b32.xlu0 %v1931, 16
      %v1999 = vpop.permute.xlu0 %1998
      %2000 = vrot.lane.b32.xlu0 %v1932, 16
      %v2001 = vpop.permute.xlu0 %2000
      %2002 = vrot.lane.b32.xlu0 %v1933, 16
      %v2003 = vpop.permute.xlu0 %2002
      %2004 = vrot.lane.b32.xlu0 %v1934, 16
      %v2005 = vpop.permute.xlu0 %2004
      %2006 = vrot.lane.b32.xlu0 %v1935, 16
      %v2007 = vpop.permute.xlu0 %2006
      %2008 = vrot.lane.b32.xlu0 %v1936, 16
      %v2009 = vpop.permute.xlu0 %2008
      %2010 = vrot.lane.b32.xlu0 %v1937, 16
      %v2011 = vpop.permute.xlu0 %2010
      %2012 = vrot.lane.b32.xlu0 %v1938, 16
      %v2013 = vpop.permute.xlu0 %2012
      %2014 = vrot.lane.b32.xlu0 %v1939, 16
      %v2015 = vpop.permute.xlu0 %2014
      %2016 = vrot.lane.b32.xlu0 %v1940, 16
      %v2017 = vpop.permute.xlu0 %2016
      %2018 = vrot.lane.b32.xlu0 %v1941, 16
      %v2019 = vpop.permute.xlu0 %2018
      %2020 = vrot.lane.b32.xlu0 %v1942, 16
      %v2021 = vpop.permute.xlu0 %2020
      %2022 = vrot.lane.b32.xlu0 %v1943, 16
      %v2023 = vpop.permute.xlu0 %2022
      %2024 = vrot.lane.b32.xlu0 %v1944, 16
      %v2025 = vpop.permute.xlu0 %2024
      %2026 = vrot.lane.b32.xlu0 %v1945, 16
      %v2027 = vpop.permute.xlu0 %2026
      %2028 = vrot.lane.b32.xlu0 %v1946, 16
      %v2029 = vpop.permute.xlu0 %2028
      %2030 = vrot.lane.b32.xlu0 %v1947, 16
      %v2031 = vpop.permute.xlu0 %2030
      %2032 = vrot.lane.b32.xlu0 %v1948, 16
      %v2033 = vpop.permute.xlu0 %2032
      %2034 = vrot.lane.b32.xlu0 %v1949, 16
      %v2035 = vpop.permute.xlu0 %2034
      %2036 = vrot.lane.b32.xlu0 %v1950, 16
      %v2037 = vpop.permute.xlu0 %2036
      %2038 = vrot.lane.b32.xlu0 %v1951, 16
      %v2039 = vpop.permute.xlu0 %2038
      %2040 = vrot.lane.b32.xlu0 %v1952, 16
      %v2041 = vpop.permute.xlu0 %2040
      %2042 = vrot.lane.b32.xlu0 %v1953, 16
      %v2043 = vpop.permute.xlu0 %2042
      %2044 = vrot.lane.b32.xlu0 %v1954, 16
      %v2045 = vpop.permute.xlu0 %2044
      %2046 = vrot.lane.b32.xlu0 %v1955, 16
      %v2047 = vpop.permute.xlu0 %2046
      %2048 = vrot.lane.b32.xlu0 %v1956, 16
      %v2049 = vpop.permute.xlu0 %2048
      %2050 = vrot.lane.b32.xlu0 %v1957, 16
      %v2051 = vpop.permute.xlu0 %2050
      %2052 = vrot.lane.b32.xlu0 %v1958, 16
      %v2053 = vpop.permute.xlu0 %2052
      %2054 = vrot.lane.b32.xlu0 %v1959, 16
      %v2055 = vpop.permute.xlu0 %2054
      %vm2088 = vcmask 158848
      %2089 = vst.msk [vmem:[#allocation4] sm:$0xf] %vm2088, %v1993
      %2090 = vst.msk [vmem:[#allocation4 + $0x4] sm:$0xf] %vm2088, %v1995
      %2091 = vst.msk [vmem:[#allocation4 + $0x8] sm:$0xf] %vm2088, %v1997
      %2092 = vst.msk [vmem:[#allocation4 + $0xc] sm:$0xf] %vm2088, %v1999
      %2093 = vst.msk [vmem:[#allocation4 + $0x10] sm:$0xf] %vm2088, %v2001
      %2094 = vst.msk [vmem:[#allocation4 + $0x14] sm:$0xf] %vm2088, %v2003
      %2095 = vst.msk [vmem:[#allocation4 + $0x18] sm:$0xf] %vm2088, %v2005
      %2096 = vst.msk [vmem:[#allocation4 + $0x1c] sm:$0xf] %vm2088, %v2007
      %2097 = vst.msk [vmem:[#allocation4 + $0x20] sm:$0xf] %vm2088, %v2009
      %2098 = vst.msk [vmem:[#allocation4 + $0x24] sm:$0xf] %vm2088, %v2011
      %2099 = vst.msk [vmem:[#allocation4 + $0x28] sm:$0xf] %vm2088, %v2013
      %2100 = vst.msk [vmem:[#allocation4 + $0x2c] sm:$0xf] %vm2088, %v2015
      %2101 = vst.msk [vmem:[#allocation4 + $0x30] sm:$0xf] %vm2088, %v2017
      %2102 = vst.msk [vmem:[#allocation4 + $0x34] sm:$0xf] %vm2088, %v2019
      %2103 = vst.msk [vmem:[#allocation4 + $0x38] sm:$0xf] %vm2088, %v2021
      %2104 = vst.msk [vmem:[#allocation4 + $0x3c] sm:$0xf] %vm2088, %v2023
      %2105 = vst.msk [vmem:[#allocation4 + $0x40] sm:$0xf] %vm2088, %v2025
      %2106 = vst.msk [vmem:[#allocation4 + $0x44] sm:$0xf] %vm2088, %v2027
      %2107 = vst.msk [vmem:[#allocation4 + $0x48] sm:$0xf] %vm2088, %v2029
      %2108 = vst.msk [vmem:[#allocation4 + $0x4c] sm:$0xf] %vm2088, %v2031
      %2109 = vst.msk [vmem:[#allocation4 + $0x50] sm:$0xf] %vm2088, %v2033
      %2110 = vst.msk [vmem:[#allocation4 + $0x54] sm:$0xf] %vm2088, %v2035
      %2111 = vst.msk [vmem:[#allocation4 + $0x58] sm:$0xf] %vm2088, %v2037
      %2112 = vst.msk [vmem:[#allocation4 + $0x5c] sm:$0xf] %vm2088, %v2039
      %2113 = vst.msk [vmem:[#allocation4 + $0x60] sm:$0xf] %vm2088, %v2041
      %2114 = vst.msk [vmem:[#allocation4 + $0x64] sm:$0xf] %vm2088, %v2043
      %2115 = vst.msk [vmem:[#allocation4 + $0x68] sm:$0xf] %vm2088, %v2045
      %2116 = vst.msk [vmem:[#allocation4 + $0x6c] sm:$0xf] %vm2088, %v2047
      %2117 = vst.msk [vmem:[#allocation4 + $0x70] sm:$0xf] %vm2088, %v2049
      %2118 = vst.msk [vmem:[#allocation4 + $0x74] sm:$0xf] %vm2088, %v2051
      %2119 = vst.msk [vmem:[#allocation4 + $0x78] sm:$0xf] %vm2088, %v2053
      %2120 = vst.msk [vmem:[#allocation4 + $0x7c] sm:$0xf] %vm2088, %v2055
      %v2121 = vld [vmem:[#allocation2 + $0x12] sm:$0xff]
      %v2122 = vld [vmem:[#allocation2 + $0x1a] sm:$0xff]
      %v2123 = vld [vmem:[#allocation2 + $0x22] sm:$0xff]
      %v2124 = vld [vmem:[#allocation2 + $0x2a] sm:$0xff]
      %v2125 = vld [vmem:[#allocation2 + $0x32] sm:$0xff]
      %v2126 = vld [vmem:[#allocation2 + $0x3a] sm:$0xff]
      %v2127 = vld [vmem:[#allocation2 + $0x42] sm:$0xff]
      %v2128 = vld [vmem:[#allocation2 + $0x4a] sm:$0xff]
      %v2129 = vld [vmem:[#allocation2 + $0x52] sm:$0xff]
      %v2130 = vld [vmem:[#allocation2 + $0x5a] sm:$0xff]
      %v2131 = vld [vmem:[#allocation2 + $0x62] sm:$0xff]
      %v2132 = vld [vmem:[#allocation2 + $0x6a] sm:$0xff]
      %v2133 = vld [vmem:[#allocation2 + $0x72] sm:$0xff]
      %v2134 = vld [vmem:[#allocation2 + $0x7a] sm:$0xff]
      %v2135 = vld [vmem:[#allocation2 + $0x82] sm:$0xff]
      %v2136 = vld [vmem:[#allocation2 + $0x8a] sm:$0xff]
      %v2137 = vld [vmem:[#allocation2 + $0x92] sm:$0xff]
      %v2138 = vld [vmem:[#allocation2 + $0x9a] sm:$0xff]
      %v2139 = vld [vmem:[#allocation2 + $0xa2] sm:$0xff]
      %v2140 = vld [vmem:[#allocation2 + $0xaa] sm:$0xff]
      %v2141 = vld [vmem:[#allocation2 + $0xb2] sm:$0xff]
      %v2142 = vld [vmem:[#allocation2 + $0xba] sm:$0xff]
      %v2143 = vld [vmem:[#allocation2 + $0xc2] sm:$0xff]
      %v2144 = vld [vmem:[#allocation2 + $0xca] sm:$0xff]
      %v2145 = vld [vmem:[#allocation2 + $0xd2] sm:$0xff]
      %v2146 = vld [vmem:[#allocation2 + $0xda] sm:$0xff]
      %v2147 = vld [vmem:[#allocation2 + $0xe2] sm:$0xff]
      %v2148 = vld [vmem:[#allocation2 + $0xea] sm:$0xff]
      %v2149 = vld [vmem:[#allocation2 + $0xf2] sm:$0xff]
      %v2150 = vld [vmem:[#allocation2 + $0xfa] sm:$0xff]
      %v2151 = vld [vmem:[#allocation2 + $0x102] sm:$0xff]
      %v2152 = vld [vmem:[#allocation2 + $0x10a] sm:$0xff]
      %v2153 = vsel %vm1222, 1, 0
      %v2154 = vsel %vm1223, 1, 0
      %v2155 = vsel %vm1224, 1, 0
      %v2156 = vsel %vm1225, 1, 0
      %v2157 = vsel %vm1226, 1, 0
      %v2158 = vsel %vm1227, 1, 0
      %v2159 = vsel %vm1228, 1, 0
      %v2160 = vsel %vm1229, 1, 0
      %v2161 = vsel %vm1230, 1, 0
      %v2162 = vsel %vm1231, 1, 0
      %v2163 = vsel %vm1232, 1, 0
      %v2164 = vsel %vm1233, 1, 0
      %v2165 = vsel %vm1234, 1, 0
      %v2166 = vsel %vm1235, 1, 0
      %v2167 = vsel %vm1236, 1, 0
      %v2168 = vsel %vm1237, 1, 0
      %v2169 = vsel %vm1238, 1, 0
      %v2170 = vsel %vm1239, 1, 0
      %v2171 = vsel %vm1240, 1, 0
      %v2172 = vsel %vm1241, 1, 0
      %v2173 = vsel %vm1242, 1, 0
      %v2174 = vsel %vm1243, 1, 0
      %v2175 = vsel %vm1244, 1, 0
      %v2176 = vsel %vm1245, 1, 0
      %v2177 = vsel %vm1246, 1, 0
      %v2178 = vsel %vm1247, 1, 0
      %v2179 = vsel %vm1248, 1, 0
      %v2180 = vsel %vm1249, 1, 0
      %v2181 = vsel %vm1250, 1, 0
      %v2182 = vsel %vm1251, 1, 0
      %v2183 = vsel %vm1252, 1, 0
      %v2184 = vsel %vm1253, 1, 0
      %vm2185 = vcmp.eq.s32.totalorder %v2153, 1
      %vm2186 = vcmp.eq.s32.totalorder %v2154, 1
      %vm2187 = vcmp.eq.s32.totalorder %v2155, 1
      %vm2188 = vcmp.eq.s32.totalorder %v2156, 1
      %vm2189 = vcmp.eq.s32.totalorder %v2157, 1
      %vm2190 = vcmp.eq.s32.totalorder %v2158, 1
      %vm2191 = vcmp.eq.s32.totalorder %v2159, 1
      %vm2192 = vcmp.eq.s32.totalorder %v2160, 1
      %vm2193 = vcmp.eq.s32.totalorder %v2161, 1
      %vm2194 = vcmp.eq.s32.totalorder %v2162, 1
      %vm2195 = vcmp.eq.s32.totalorder %v2163, 1
      %vm2196 = vcmp.eq.s32.totalorder %v2164, 1
      %vm2197 = vcmp.eq.s32.totalorder %v2165, 1
      %vm2198 = vcmp.eq.s32.totalorder %v2166, 1
      %vm2199 = vcmp.eq.s32.totalorder %v2167, 1
      %vm2200 = vcmp.eq.s32.totalorder %v2168, 1
      %vm2201 = vcmp.eq.s32.totalorder %v2169, 1
      %vm2202 = vcmp.eq.s32.totalorder %v2170, 1
      %vm2203 = vcmp.eq.s32.totalorder %v2171, 1
      %vm2204 = vcmp.eq.s32.totalorder %v2172, 1
      %vm2205 = vcmp.eq.s32.totalorder %v2173, 1
      %vm2206 = vcmp.eq.s32.totalorder %v2174, 1
      %vm2207 = vcmp.eq.s32.totalorder %v2175, 1
      %vm2208 = vcmp.eq.s32.totalorder %v2176, 1
      %vm2209 = vcmp.eq.s32.totalorder %v2177, 1
      %vm2210 = vcmp.eq.s32.totalorder %v2178, 1
      %vm2211 = vcmp.eq.s32.totalorder %v2179, 1
      %vm2212 = vcmp.eq.s32.totalorder %v2180, 1
      %vm2213 = vcmp.eq.s32.totalorder %v2181, 1
      %vm2214 = vcmp.eq.s32.totalorder %v2182, 1
      %vm2215 = vcmp.eq.s32.totalorder %v2183, 1
      %vm2216 = vcmp.eq.s32.totalorder %v2184, 1
      %v2217 = vsel %vm2185, %v2121, 0.0
      %v2218 = vsel %vm2186, %v2122, 0.0
      %v2219 = vsel %vm2187, %v2123, 0.0
      %v2220 = vsel %vm2188, %v2124, 0.0
      %v2221 = vsel %vm2189, %v2125, 0.0
      %v2222 = vsel %vm2190, %v2126, 0.0
      %v2223 = vsel %vm2191, %v2127, 0.0
      %v2224 = vsel %vm2192, %v2128, 0.0
      %v2225 = vsel %vm2193, %v2129, 0.0
      %v2226 = vsel %vm2194, %v2130, 0.0
      %v2227 = vsel %vm2195, %v2131, 0.0
      %v2228 = vsel %vm2196, %v2132, 0.0
      %v2229 = vsel %vm2197, %v2133, 0.0
      %v2230 = vsel %vm2198, %v2134, 0.0
      %v2231 = vsel %vm2199, %v2135, 0.0
      %v2232 = vsel %vm2200, %v2136, 0.0
      %v2233 = vsel %vm2201, %v2137, 0.0
      %v2234 = vsel %vm2202, %v2138, 0.0
      %v2235 = vsel %vm2203, %v2139, 0.0
      %v2236 = vsel %vm2204, %v2140, 0.0
      %v2237 = vsel %vm2205, %v2141, 0.0
      %v2238 = vsel %vm2206, %v2142, 0.0
      %v2239 = vsel %vm2207, %v2143, 0.0
      %v2240 = vsel %vm2208, %v2144, 0.0
      %v2241 = vsel %vm2209, %v2145, 0.0
      %v2242 = vsel %vm2210, %v2146, 0.0
      %v2243 = vsel %vm2211, %v2147, 0.0
      %v2244 = vsel %vm2212, %v2148, 0.0
      %v2245 = vsel %vm2213, %v2149, 0.0
      %v2246 = vsel %vm2214, %v2150, 0.0
      %v2247 = vsel %vm2215, %v2151, 0.0
      %v2248 = vsel %vm2216, %v2152, 0.0
      %v2249 = vpack.c.bf16 %v2217, %v2217
      %v2250 = vpack.c.bf16 %v2218, %v2218
      %v2251 = vpack.c.bf16 %v2219, %v2219
      %v2252 = vpack.c.bf16 %v2220, %v2220
      %v2253 = vpack.c.bf16 %v2221, %v2221
      %v2254 = vpack.c.bf16 %v2222, %v2222
      %v2255 = vpack.c.bf16 %v2223, %v2223
      %v2256 = vpack.c.bf16 %v2224, %v2224
      %v2257 = vpack.c.bf16 %v2225, %v2225
      %v2258 = vpack.c.bf16 %v2226, %v2226
      %v2259 = vpack.c.bf16 %v2227, %v2227
      %v2260 = vpack.c.bf16 %v2228, %v2228
      %v2261 = vpack.c.bf16 %v2229, %v2229
      %v2262 = vpack.c.bf16 %v2230, %v2230
      %v2263 = vpack.c.bf16 %v2231, %v2231
      %v2264 = vpack.c.bf16 %v2232, %v2232
      %v2265 = vpack.c.bf16 %v2233, %v2233
      %v2266 = vpack.c.bf16 %v2234, %v2234
      %v2267 = vpack.c.bf16 %v2235, %v2235
      %v2268 = vpack.c.bf16 %v2236, %v2236
      %v2269 = vpack.c.bf16 %v2237, %v2237
      %v2270 = vpack.c.bf16 %v2238, %v2238
      %v2271 = vpack.c.bf16 %v2239, %v2239
      %v2272 = vpack.c.bf16 %v2240, %v2240
      %v2273 = vpack.c.bf16 %v2241, %v2241
      %v2274 = vpack.c.bf16 %v2242, %v2242
      %v2275 = vpack.c.bf16 %v2243, %v2243
      %v2276 = vpack.c.bf16 %v2244, %v2244
      %v2277 = vpack.c.bf16 %v2245, %v2245
      %v2278 = vpack.c.bf16 %v2246, %v2246
      %v2279 = vpack.c.bf16 %v2247, %v2247
      %v2280 = vpack.c.bf16 %v2248, %v2248
      %2313 = vrot.lane.b32.xlu0 %v2249, 20
      %v2314 = vpop.permute.xlu0 %2313
      %2315 = vrot.lane.b32.xlu0 %v2250, 20
      %v2316 = vpop.permute.xlu0 %2315
      %2317 = vrot.lane.b32.xlu0 %v2251, 20
      %v2318 = vpop.permute.xlu0 %2317
      %2319 = vrot.lane.b32.xlu0 %v2252, 20
      %v2320 = vpop.permute.xlu0 %2319
      %2321 = vrot.lane.b32.xlu0 %v2253, 20
      %v2322 = vpop.permute.xlu0 %2321
      %2323 = vrot.lane.b32.xlu0 %v2254, 20
      %v2324 = vpop.permute.xlu0 %2323
      %2325 = vrot.lane.b32.xlu0 %v2255, 20
      %v2326 = vpop.permute.xlu0 %2325
      %2327 = vrot.lane.b32.xlu0 %v2256, 20
      %v2328 = vpop.permute.xlu0 %2327
      %2329 = vrot.lane.b32.xlu0 %v2257, 20
      %v2330 = vpop.permute.xlu0 %2329
      %2331 = vrot.lane.b32.xlu0 %v2258, 20
      %v2332 = vpop.permute.xlu0 %2331
      %2333 = vrot.lane.b32.xlu0 %v2259, 20
      %v2334 = vpop.permute.xlu0 %2333
      %2335 = vrot.lane.b32.xlu0 %v2260, 20
      %v2336 = vpop.permute.xlu0 %2335
      %2337 = vrot.lane.b32.xlu0 %v2261, 20
      %v2338 = vpop.permute.xlu0 %2337
      %2339 = vrot.lane.b32.xlu0 %v2262, 20
      %v2340 = vpop.permute.xlu0 %2339
      %2341 = vrot.lane.b32.xlu0 %v2263, 20
      %v2342 = vpop.permute.xlu0 %2341
      %2343 = vrot.lane.b32.xlu0 %v2264, 20
      %v2344 = vpop.permute.xlu0 %2343
      %2345 = vrot.lane.b32.xlu0 %v2265, 20
      %v2346 = vpop.permute.xlu0 %2345
      %2347 = vrot.lane.b32.xlu0 %v2266, 20
      %v2348 = vpop.permute.xlu0 %2347
      %2349 = vrot.lane.b32.xlu0 %v2267, 20
      %v2350 = vpop.permute.xlu0 %2349
      %2351 = vrot.lane.b32.xlu0 %v2268, 20
      %v2352 = vpop.permute.xlu0 %2351
      %2353 = vrot.lane.b32.xlu0 %v2269, 20
      %v2354 = vpop.permute.xlu0 %2353
      %2355 = vrot.lane.b32.xlu0 %v2270, 20
      %v2356 = vpop.permute.xlu0 %2355
      %2357 = vrot.lane.b32.xlu0 %v2271, 20
      %v2358 = vpop.permute.xlu0 %2357
      %2359 = vrot.lane.b32.xlu0 %v2272, 20
      %v2360 = vpop.permute.xlu0 %2359
      %2361 = vrot.lane.b32.xlu0 %v2273, 20
      %v2362 = vpop.permute.xlu0 %2361
      %2363 = vrot.lane.b32.xlu0 %v2274, 20
      %v2364 = vpop.permute.xlu0 %2363
      %2365 = vrot.lane.b32.xlu0 %v2275, 20
      %v2366 = vpop.permute.xlu0 %2365
      %2367 = vrot.lane.b32.xlu0 %v2276, 20
      %v2368 = vpop.permute.xlu0 %2367
      %2369 = vrot.lane.b32.xlu0 %v2277, 20
      %v2370 = vpop.permute.xlu0 %2369
      %2371 = vrot.lane.b32.xlu0 %v2278, 20
      %v2372 = vpop.permute.xlu0 %2371
      %2373 = vrot.lane.b32.xlu0 %v2279, 20
      %v2374 = vpop.permute.xlu0 %2373
      %2375 = vrot.lane.b32.xlu0 %v2280, 20
      %v2376 = vpop.permute.xlu0 %2375
      %vm2409 = vcmask 191648
      %2410 = vst.msk [vmem:[#allocation4] sm:$0xf] %vm2409, %v2314
      %2411 = vst.msk [vmem:[#allocation4 + $0x4] sm:$0xf] %vm2409, %v2316
      %2412 = vst.msk [vmem:[#allocation4 + $0x8] sm:$0xf] %vm2409, %v2318
      %2413 = vst.msk [vmem:[#allocation4 + $0xc] sm:$0xf] %vm2409, %v2320
      %2414 = vst.msk [vmem:[#allocation4 + $0x10] sm:$0xf] %vm2409, %v2322
      %2415 = vst.msk [vmem:[#allocation4 + $0x14] sm:$0xf] %vm2409, %v2324
      %2416 = vst.msk [vmem:[#allocation4 + $0x18] sm:$0xf] %vm2409, %v2326
      %2417 = vst.msk [vmem:[#allocation4 + $0x1c] sm:$0xf] %vm2409, %v2328
      %2418 = vst.msk [vmem:[#allocation4 + $0x20] sm:$0xf] %vm2409, %v2330
      %2419 = vst.msk [vmem:[#allocation4 + $0x24] sm:$0xf] %vm2409, %v2332
      %2420 = vst.msk [vmem:[#allocation4 + $0x28] sm:$0xf] %vm2409, %v2334
      %2421 = vst.msk [vmem:[#allocation4 + $0x2c] sm:$0xf] %vm2409, %v2336
      %2422 = vst.msk [vmem:[#allocation4 + $0x30] sm:$0xf] %vm2409, %v2338
      %2423 = vst.msk [vmem:[#allocation4 + $0x34] sm:$0xf] %vm2409, %v2340
      %2424 = vst.msk [vmem:[#allocation4 + $0x38] sm:$0xf] %vm2409, %v2342
      %2425 = vst.msk [vmem:[#allocation4 + $0x3c] sm:$0xf] %vm2409, %v2344
      %2426 = vst.msk [vmem:[#allocation4 + $0x40] sm:$0xf] %vm2409, %v2346
      %2427 = vst.msk [vmem:[#allocation4 + $0x44] sm:$0xf] %vm2409, %v2348
      %2428 = vst.msk [vmem:[#allocation4 + $0x48] sm:$0xf] %vm2409, %v2350
      %2429 = vst.msk [vmem:[#allocation4 + $0x4c] sm:$0xf] %vm2409, %v2352
      %2430 = vst.msk [vmem:[#allocation4 + $0x50] sm:$0xf] %vm2409, %v2354
      %2431 = vst.msk [vmem:[#allocation4 + $0x54] sm:$0xf] %vm2409, %v2356
      %2432 = vst.msk [vmem:[#allocation4 + $0x58] sm:$0xf] %vm2409, %v2358
      %2433 = vst.msk [vmem:[#allocation4 + $0x5c] sm:$0xf] %vm2409, %v2360
      %2434 = vst.msk [vmem:[#allocation4 + $0x60] sm:$0xf] %vm2409, %v2362
      %2435 = vst.msk [vmem:[#allocation4 + $0x64] sm:$0xf] %vm2409, %v2364
      %2436 = vst.msk [vmem:[#allocation4 + $0x68] sm:$0xf] %vm2409, %v2366
      %2437 = vst.msk [vmem:[#allocation4 + $0x6c] sm:$0xf] %vm2409, %v2368
      %2438 = vst.msk [vmem:[#allocation4 + $0x70] sm:$0xf] %vm2409, %v2370
      %2439 = vst.msk [vmem:[#allocation4 + $0x74] sm:$0xf] %vm2409, %v2372
      %2440 = vst.msk [vmem:[#allocation4 + $0x78] sm:$0xf] %vm2409, %v2374
      %2441 = vst.msk [vmem:[#allocation4 + $0x7c] sm:$0xf] %vm2409, %v2376
      %v2442 = vld [vmem:[#allocation2 + $0x20] sm:$0xff]
      %v2443 = vld [vmem:[#allocation2 + $0x28] sm:$0xff]
      %v2444 = vld [vmem:[#allocation2 + $0x30] sm:$0xff]
      %v2445 = vld [vmem:[#allocation2 + $0x38] sm:$0xff]
      %v2446 = vld [vmem:[#allocation2 + $0x40] sm:$0xff]
      %v2447 = vld [vmem:[#allocation2 + $0x48] sm:$0xff]
      %v2448 = vld [vmem:[#allocation2 + $0x50] sm:$0xff]
      %v2449 = vld [vmem:[#allocation2 + $0x58] sm:$0xff]
      %v2450 = vld [vmem:[#allocation2 + $0x60] sm:$0xff]
      %v2451 = vld [vmem:[#allocation2 + $0x68] sm:$0xff]
      %v2452 = vld [vmem:[#allocation2 + $0x70] sm:$0xff]
      %v2453 = vld [vmem:[#allocation2 + $0x78] sm:$0xff]
      %v2454 = vld [vmem:[#allocation2 + $0x80] sm:$0xff]
      %v2455 = vld [vmem:[#allocation2 + $0x88] sm:$0xff]
      %v2456 = vld [vmem:[#allocation2 + $0x90] sm:$0xff]
      %v2457 = vld [vmem:[#allocation2 + $0x98] sm:$0xff]
      %v2458 = vld [vmem:[#allocation2 + $0xa0] sm:$0xff]
      %v2459 = vld [vmem:[#allocation2 + $0xa8] sm:$0xff]
      %v2460 = vld [vmem:[#allocation2 + $0xb0] sm:$0xff]
      %v2461 = vld [vmem:[#allocation2 + $0xb8] sm:$0xff]
      %v2462 = vld [vmem:[#allocation2 + $0xc0] sm:$0xff]
      %v2463 = vld [vmem:[#allocation2 + $0xc8] sm:$0xff]
      %v2464 = vld [vmem:[#allocation2 + $0xd0] sm:$0xff]
      %v2465 = vld [vmem:[#allocation2 + $0xd8] sm:$0xff]
      %v2466 = vld [vmem:[#allocation2 + $0xe0] sm:$0xff]
      %v2467 = vld [vmem:[#allocation2 + $0xe8] sm:$0xff]
      %v2468 = vld [vmem:[#allocation2 + $0xf0] sm:$0xff]
      %v2469 = vld [vmem:[#allocation2 + $0xf8] sm:$0xff]
      %v2470 = vld [vmem:[#allocation2 + $0x100] sm:$0xff]
      %v2471 = vld [vmem:[#allocation2 + $0x108] sm:$0xff]
      %v2472 = vld [vmem:[#allocation2 + $0x110] sm:$0xff]
      %v2473 = vld [vmem:[#allocation2 + $0x118] sm:$0xff]
      %vm2474 = vcmp.lt.s32.totalorder %v356, 240
      %vm2475 = vcmp.lt.s32.totalorder %v357, 240
      %vm2476 = vcmp.lt.s32.totalorder %v358, 240
      %vm2477 = vcmp.lt.s32.totalorder %v359, 240
      %vm2478 = vcmp.lt.s32.totalorder %v360, 240
      %vm2479 = vcmp.lt.s32.totalorder %v361, 240
      %vm2480 = vcmp.lt.s32.totalorder %v362, 240
      %vm2481 = vcmp.lt.s32.totalorder %v363, 240
      %vm2482 = vcmp.lt.s32.totalorder %v364, 240
      %vm2483 = vcmp.lt.s32.totalorder %v365, 240
      %vm2484 = vcmp.lt.s32.totalorder %v366, 240
      %vm2485 = vcmp.lt.s32.totalorder %v367, 240
      %vm2486 = vcmp.lt.s32.totalorder %v368, 240
      %vm2487 = vcmp.lt.s32.totalorder %v369, 240
      %vm2488 = vcmp.lt.s32.totalorder %v370, 240
      %vm2489 = vcmp.lt.s32.totalorder %v371, 240
      %vm2490 = vcmp.lt.s32.totalorder %v372, 240
      %vm2491 = vcmp.lt.s32.totalorder %v373, 240
      %vm2492 = vcmp.lt.s32.totalorder %v374, 240
      %vm2493 = vcmp.lt.s32.totalorder %v375, 240
      %vm2494 = vcmp.lt.s32.totalorder %v376, 240
      %vm2495 = vcmp.lt.s32.totalorder %v377, 240
      %vm2496 = vcmp.lt.s32.totalorder %v378, 240
      %vm2497 = vcmp.lt.s32.totalorder %v379, 240
      %vm2498 = vcmp.lt.s32.totalorder %v380, 240
      %vm2499 = vcmp.lt.s32.totalorder %v381, 240
      %vm2500 = vcmp.lt.s32.totalorder %v382, 240
      %vm2501 = vcmp.lt.s32.totalorder %v383, 240
      %vm2502 = vcmp.lt.s32.totalorder %v384, 240
      %vm2503 = vcmp.lt.s32.totalorder %v385, 240
      %vm2504 = vcmp.lt.s32.totalorder %v386, 240
      %vm2505 = vcmp.lt.s32.totalorder %v387, 240
      %vm2506 = vmand %vm2474, %vm644
      %vm2507 = vmand %vm2475, %vm645
      %vm2508 = vmand %vm2476, %vm646
      %vm2509 = vmand %vm2477, %vm647
      %vm2510 = vmand %vm2478, %vm648
      %vm2511 = vmand %vm2479, %vm649
      %vm2512 = vmand %vm2480, %vm650
      %vm2513 = vmand %vm2481, %vm651
      %vm2514 = vmand %vm2482, %vm652
      %vm2515 = vmand %vm2483, %vm653
      %vm2516 = vmand %vm2484, %vm654
      %vm2517 = vmand %vm2485, %vm655
      %vm2518 = vmand %vm2486, %vm656
      %vm2519 = vmand %vm2487, %vm657
      %vm2520 = vmand %vm2488, %vm658
      %vm2521 = vmand %vm2489, %vm659
      %vm2522 = vmand %vm2490, %vm660
      %vm2523 = vmand %vm2491, %vm661
      %vm2524 = vmand %vm2492, %vm662
      %vm2525 = vmand %vm2493, %vm663
      %vm2526 = vmand %vm2494, %vm664
      %vm2527 = vmand %vm2495, %vm665
      %vm2528 = vmand %vm2496, %vm666
      %vm2529 = vmand %vm2497, %vm667
      %vm2530 = vmand %vm2498, %vm668
      %vm2531 = vmand %vm2499, %vm669
      %vm2532 = vmand %vm2500, %vm670
      %vm2533 = vmand %vm2501, %vm671
      %vm2534 = vmand %vm2502, %vm672
      %vm2535 = vmand %vm2503, %vm673
      %vm2536 = vmand %vm2504, %vm674
      %vm2537 = vmand %vm2505, %vm675
      %v2538 = vsel %vm2506, 1, 0
      %v2539 = vsel %vm2507, 1, 0
      %v2540 = vsel %vm2508, 1, 0
      %v2541 = vsel %vm2509, 1, 0
      %v2542 = vsel %vm2510, 1, 0
      %v2543 = vsel %vm2511, 1, 0
      %v2544 = vsel %vm2512, 1, 0
      %v2545 = vsel %vm2513, 1, 0
      %v2546 = vsel %vm2514, 1, 0
      %v2547 = vsel %vm2515, 1, 0
      %v2548 = vsel %vm2516, 1, 0
      %v2549 = vsel %vm2517, 1, 0
      %v2550 = vsel %vm2518, 1, 0
      %v2551 = vsel %vm2519, 1, 0
      %v2552 = vsel %vm2520, 1, 0
      %v2553 = vsel %vm2521, 1, 0
      %v2554 = vsel %vm2522, 1, 0
      %v2555 = vsel %vm2523, 1, 0
      %v2556 = vsel %vm2524, 1, 0
      %v2557 = vsel %vm2525, 1, 0
      %v2558 = vsel %vm2526, 1, 0
      %v2559 = vsel %vm2527, 1, 0
      %v2560 = vsel %vm2528, 1, 0
      %v2561 = vsel %vm2529, 1, 0
      %v2562 = vsel %vm2530, 1, 0
      %v2563 = vsel %vm2531, 1, 0
      %v2564 = vsel %vm2532, 1, 0
      %v2565 = vsel %vm2533, 1, 0
      %v2566 = vsel %vm2534, 1, 0
      %v2567 = vsel %vm2535, 1, 0
      %v2568 = vsel %vm2536, 1, 0
      %v2569 = vsel %vm2537, 1, 0
      %vm2570 = vcmp.eq.s32.totalorder %v2538, 1
      %vm2571 = vcmp.eq.s32.totalorder %v2539, 1
      %vm2572 = vcmp.eq.s32.totalorder %v2540, 1
      %vm2573 = vcmp.eq.s32.totalorder %v2541, 1
      %vm2574 = vcmp.eq.s32.totalorder %v2542, 1
      %vm2575 = vcmp.eq.s32.totalorder %v2543, 1
      %vm2576 = vcmp.eq.s32.totalorder %v2544, 1
      %vm2577 = vcmp.eq.s32.totalorder %v2545, 1
      %vm2578 = vcmp.eq.s32.totalorder %v2546, 1
      %vm2579 = vcmp.eq.s32.totalorder %v2547, 1
      %vm2580 = vcmp.eq.s32.totalorder %v2548, 1
      %vm2581 = vcmp.eq.s32.totalorder %v2549, 1
      %vm2582 = vcmp.eq.s32.totalorder %v2550, 1
      %vm2583 = vcmp.eq.s32.totalorder %v2551, 1
      %vm2584 = vcmp.eq.s32.totalorder %v2552, 1
      %vm2585 = vcmp.eq.s32.totalorder %v2553, 1
      %vm2586 = vcmp.eq.s32.totalorder %v2554, 1
      %vm2587 = vcmp.eq.s32.totalorder %v2555, 1
      %vm2588 = vcmp.eq.s32.totalorder %v2556, 1
      %vm2589 = vcmp.eq.s32.totalorder %v2557, 1
      %vm2590 = vcmp.eq.s32.totalorder %v2558, 1
      %vm2591 = vcmp.eq.s32.totalorder %v2559, 1
      %vm2592 = vcmp.eq.s32.totalorder %v2560, 1
      %vm2593 = vcmp.eq.s32.totalorder %v2561, 1
      %vm2594 = vcmp.eq.s32.totalorder %v2562, 1
      %vm2595 = vcmp.eq.s32.totalorder %v2563, 1
      %vm2596 = vcmp.eq.s32.totalorder %v2564, 1
      %vm2597 = vcmp.eq.s32.totalorder %v2565, 1
      %vm2598 = vcmp.eq.s32.totalorder %v2566, 1
      %vm2599 = vcmp.eq.s32.totalorder %v2567, 1
      %vm2600 = vcmp.eq.s32.totalorder %v2568, 1
      %vm2601 = vcmp.eq.s32.totalorder %v2569, 1
      %v2602 = vsel %vm2570, %v2442, 0.0
      %v2603 = vsel %vm2571, %v2443, 0.0
      %v2604 = vsel %vm2572, %v2444, 0.0
      %v2605 = vsel %vm2573, %v2445, 0.0
      %v2606 = vsel %vm2574, %v2446, 0.0
      %v2607 = vsel %vm2575, %v2447, 0.0
      %v2608 = vsel %vm2576, %v2448, 0.0
      %v2609 = vsel %vm2577, %v2449, 0.0
      %v2610 = vsel %vm2578, %v2450, 0.0
      %v2611 = vsel %vm2579, %v2451, 0.0
      %v2612 = vsel %vm2580, %v2452, 0.0
      %v2613 = vsel %vm2581, %v2453, 0.0
      %v2614 = vsel %vm2582, %v2454, 0.0
      %v2615 = vsel %vm2583, %v2455, 0.0
      %v2616 = vsel %vm2584, %v2456, 0.0
      %v2617 = vsel %vm2585, %v2457, 0.0
      %v2618 = vsel %vm2586, %v2458, 0.0
      %v2619 = vsel %vm2587, %v2459, 0.0
      %v2620 = vsel %vm2588, %v2460, 0.0
      %v2621 = vsel %vm2589, %v2461, 0.0
      %v2622 = vsel %vm2590, %v2462, 0.0
      %v2623 = vsel %vm2591, %v2463, 0.0
      %v2624 = vsel %vm2592, %v2464, 0.0
      %v2625 = vsel %vm2593, %v2465, 0.0
      %v2626 = vsel %vm2594, %v2466, 0.0
      %v2627 = vsel %vm2595, %v2467, 0.0
      %v2628 = vsel %vm2596, %v2468, 0.0
      %v2629 = vsel %vm2597, %v2469, 0.0
      %v2630 = vsel %vm2598, %v2470, 0.0
      %v2631 = vsel %vm2599, %v2471, 0.0
      %v2632 = vsel %vm2600, %v2472, 0.0
      %v2633 = vsel %vm2601, %v2473, 0.0
      %v2634 = vpack.c.bf16 %v2602, %v2602
      %v2635 = vpack.c.bf16 %v2603, %v2603
      %v2636 = vpack.c.bf16 %v2604, %v2604
      %v2637 = vpack.c.bf16 %v2605, %v2605
      %v2638 = vpack.c.bf16 %v2606, %v2606
      %v2639 = vpack.c.bf16 %v2607, %v2607
      %v2640 = vpack.c.bf16 %v2608, %v2608
      %v2641 = vpack.c.bf16 %v2609, %v2609
      %v2642 = vpack.c.bf16 %v2610, %v2610
      %v2643 = vpack.c.bf16 %v2611, %v2611
      %v2644 = vpack.c.bf16 %v2612, %v2612
      %v2645 = vpack.c.bf16 %v2613, %v2613
      %v2646 = vpack.c.bf16 %v2614, %v2614
      %v2647 = vpack.c.bf16 %v2615, %v2615
      %v2648 = vpack.c.bf16 %v2616, %v2616
      %v2649 = vpack.c.bf16 %v2617, %v2617
      %v2650 = vpack.c.bf16 %v2618, %v2618
      %v2651 = vpack.c.bf16 %v2619, %v2619
      %v2652 = vpack.c.bf16 %v2620, %v2620
      %v2653 = vpack.c.bf16 %v2621, %v2621
      %v2654 = vpack.c.bf16 %v2622, %v2622
      %v2655 = vpack.c.bf16 %v2623, %v2623
      %v2656 = vpack.c.bf16 %v2624, %v2624
      %v2657 = vpack.c.bf16 %v2625, %v2625
      %v2658 = vpack.c.bf16 %v2626, %v2626
      %v2659 = vpack.c.bf16 %v2627, %v2627
      %v2660 = vpack.c.bf16 %v2628, %v2628
      %v2661 = vpack.c.bf16 %v2629, %v2629
      %v2662 = vpack.c.bf16 %v2630, %v2630
      %v2663 = vpack.c.bf16 %v2631, %v2631
      %v2664 = vpack.c.bf16 %v2632, %v2632
      %v2665 = vpack.c.bf16 %v2633, %v2633
      %2698 = vrot.lane.b32.xlu0 %v2634, 24
      %v2699 = vpop.permute.xlu0 %2698
      %2700 = vrot.lane.b32.xlu0 %v2635, 24
      %v2701 = vpop.permute.xlu0 %2700
      %2702 = vrot.lane.b32.xlu0 %v2636, 24
      %v2703 = vpop.permute.xlu0 %2702
      %2704 = vrot.lane.b32.xlu0 %v2637, 24
      %v2705 = vpop.permute.xlu0 %2704
      %2706 = vrot.lane.b32.xlu0 %v2638, 24
      %v2707 = vpop.permute.xlu0 %2706
      %2708 = vrot.lane.b32.xlu0 %v2639, 24
      %v2709 = vpop.permute.xlu0 %2708
      %2710 = vrot.lane.b32.xlu0 %v2640, 24
      %v2711 = vpop.permute.xlu0 %2710
      %2712 = vrot.lane.b32.xlu0 %v2641, 24
      %v2713 = vpop.permute.xlu0 %2712
      %2714 = vrot.lane.b32.xlu0 %v2642, 24
      %v2715 = vpop.permute.xlu0 %2714
      %2716 = vrot.lane.b32.xlu0 %v2643, 24
      %v2717 = vpop.permute.xlu0 %2716
      %2718 = vrot.lane.b32.xlu0 %v2644, 24
      %v2719 = vpop.permute.xlu0 %2718
      %2720 = vrot.lane.b32.xlu0 %v2645, 24
      %v2721 = vpop.permute.xlu0 %2720
      %2722 = vrot.lane.b32.xlu0 %v2646, 24
      %v2723 = vpop.permute.xlu0 %2722
      %2724 = vrot.lane.b32.xlu0 %v2647, 24
      %v2725 = vpop.permute.xlu0 %2724
      %2726 = vrot.lane.b32.xlu0 %v2648, 24
      %v2727 = vpop.permute.xlu0 %2726
      %2728 = vrot.lane.b32.xlu0 %v2649, 24
      %v2729 = vpop.permute.xlu0 %2728
      %2730 = vrot.lane.b32.xlu0 %v2650, 24
      %v2731 = vpop.permute.xlu0 %2730
      %2732 = vrot.lane.b32.xlu0 %v2651, 24
      %v2733 = vpop.permute.xlu0 %2732
      %2734 = vrot.lane.b32.xlu0 %v2652, 24
      %v2735 = vpop.permute.xlu0 %2734
      %2736 = vrot.lane.b32.xlu0 %v2653, 24
      %v2737 = vpop.permute.xlu0 %2736
      %2738 = vrot.lane.b32.xlu0 %v2654, 24
      %v2739 = vpop.permute.xlu0 %2738
      %2740 = vrot.lane.b32.xlu0 %v2655, 24
      %v2741 = vpop.permute.xlu0 %2740
      %2742 = vrot.lane.b32.xlu0 %v2656, 24
      %v2743 = vpop.permute.xlu0 %2742
      %2744 = vrot.lane.b32.xlu0 %v2657, 24
      %v2745 = vpop.permute.xlu0 %2744
      %2746 = vrot.lane.b32.xlu0 %v2658, 24
      %v2747 = vpop.permute.xlu0 %2746
      %2748 = vrot.lane.b32.xlu0 %v2659, 24
      %v2749 = vpop.permute.xlu0 %2748
      %2750 = vrot.lane.b32.xlu0 %v2660, 24
      %v2751 = vpop.permute.xlu0 %2750
      %2752 = vrot.lane.b32.xlu0 %v2661, 24
      %v2753 = vpop.permute.xlu0 %2752
      %2754 = vrot.lane.b32.xlu0 %v2662, 24
      %v2755 = vpop.permute.xlu0 %2754
      %2756 = vrot.lane.b32.xlu0 %v2663, 24
      %v2757 = vpop.permute.xlu0 %2756
      %2758 = vrot.lane.b32.xlu0 %v2664, 24
      %v2759 = vpop.permute.xlu0 %2758
      %2760 = vrot.lane.b32.xlu0 %v2665, 24
      %v2761 = vpop.permute.xlu0 %2760
      %vm2794 = vcmask 224448
      %2795 = vst.msk [vmem:[#allocation4] sm:$0xf] %vm2794, %v2699
      %2796 = vst.msk [vmem:[#allocation4 + $0x4] sm:$0xf] %vm2794, %v2701
      %2797 = vst.msk [vmem:[#allocation4 + $0x8] sm:$0xf] %vm2794, %v2703
      %2798 = vst.msk [vmem:[#allocation4 + $0xc] sm:$0xf] %vm2794, %v2705
      %2799 = vst.msk [vmem:[#allocation4 + $0x10] sm:$0xf] %vm2794, %v2707
      %2800 = vst.msk [vmem:[#allocation4 + $0x14] sm:$0xf] %vm2794, %v2709
      %2801 = vst.msk [vmem:[#allocation4 + $0x18] sm:$0xf] %vm2794, %v2711
      %2802 = vst.msk [vmem:[#allocation4 + $0x1c] sm:$0xf] %vm2794, %v2713
      %2803 = vst.msk [vmem:[#allocation4 + $0x20] sm:$0xf] %vm2794, %v2715
      %2804 = vst.msk [vmem:[#allocation4 + $0x24] sm:$0xf] %vm2794, %v2717
      %2805 = vst.msk [vmem:[#allocation4 + $0x28] sm:$0xf] %vm2794, %v2719
      %2806 = vst.msk [vmem:[#allocation4 + $0x2c] sm:$0xf] %vm2794, %v2721
      %2807 = vst.msk [vmem:[#allocation4 + $0x30] sm:$0xf] %vm2794, %v2723
      %2808 = vst.msk [vmem:[#allocation4 + $0x34] sm:$0xf] %vm2794, %v2725
      %2809 = vst.msk [vmem:[#allocation4 + $0x38] sm:$0xf] %vm2794, %v2727
      %2810 = vst.msk [vmem:[#allocation4 + $0x3c] sm:$0xf] %vm2794, %v2729
      %2811 = vst.msk [vmem:[#allocation4 + $0x40] sm:$0xf] %vm2794, %v2731
      %2812 = vst.msk [vmem:[#allocation4 + $0x44] sm:$0xf] %vm2794, %v2733
      %2813 = vst.msk [vmem:[#allocation4 + $0x48] sm:$0xf] %vm2794, %v2735
      %2814 = vst.msk [vmem:[#allocation4 + $0x4c] sm:$0xf] %vm2794, %v2737
      %2815 = vst.msk [vmem:[#allocation4 + $0x50] sm:$0xf] %vm2794, %v2739
      %2816 = vst.msk [vmem:[#allocation4 + $0x54] sm:$0xf] %vm2794, %v2741
      %2817 = vst.msk [vmem:[#allocation4 + $0x58] sm:$0xf] %vm2794, %v2743
      %2818 = vst.msk [vmem:[#allocation4 + $0x5c] sm:$0xf] %vm2794, %v2745
      %2819 = vst.msk [vmem:[#allocation4 + $0x60] sm:$0xf] %vm2794, %v2747
      %2820 = vst.msk [vmem:[#allocation4 + $0x64] sm:$0xf] %vm2794, %v2749
      %2821 = vst.msk [vmem:[#allocation4 + $0x68] sm:$0xf] %vm2794, %v2751
      %2822 = vst.msk [vmem:[#allocation4 + $0x6c] sm:$0xf] %vm2794, %v2753
      %2823 = vst.msk [vmem:[#allocation4 + $0x70] sm:$0xf] %vm2794, %v2755
      %2824 = vst.msk [vmem:[#allocation4 + $0x74] sm:$0xf] %vm2794, %v2757
      %2825 = vst.msk [vmem:[#allocation4 + $0x78] sm:$0xf] %vm2794, %v2759
      %2826 = vst.msk [vmem:[#allocation4 + $0x7c] sm:$0xf] %vm2794, %v2761
      %v2827 = vld [vmem:[#allocation2 + $0x21] sm:$0xff]
      %v2828 = vld [vmem:[#allocation2 + $0x29] sm:$0xff]
      %v2829 = vld [vmem:[#allocation2 + $0x31] sm:$0xff]
      %v2830 = vld [vmem:[#allocation2 + $0x39] sm:$0xff]
      %v2831 = vld [vmem:[#allocation2 + $0x41] sm:$0xff]
      %v2832 = vld [vmem:[#allocation2 + $0x49] sm:$0xff]
      %v2833 = vld [vmem:[#allocation2 + $0x51] sm:$0xff]
      %v2834 = vld [vmem:[#allocation2 + $0x59] sm:$0xff]
      %v2835 = vld [vmem:[#allocation2 + $0x61] sm:$0xff]
      %v2836 = vld [vmem:[#allocation2 + $0x69] sm:$0xff]
      %v2837 = vld [vmem:[#allocation2 + $0x71] sm:$0xff]
      %v2838 = vld [vmem:[#allocation2 + $0x79] sm:$0xff]
      %v2839 = vld [vmem:[#allocation2 + $0x81] sm:$0xff]
      %v2840 = vld [vmem:[#allocation2 + $0x89] sm:$0xff]
      %v2841 = vld [vmem:[#allocation2 + $0x91] sm:$0xff]
      %v2842 = vld [vmem:[#allocation2 + $0x99] sm:$0xff]
      %v2843 = vld [vmem:[#allocation2 + $0xa1] sm:$0xff]
      %v2844 = vld [vmem:[#allocation2 + $0xa9] sm:$0xff]
      %v2845 = vld [vmem:[#allocation2 + $0xb1] sm:$0xff]
      %v2846 = vld [vmem:[#allocation2 + $0xb9] sm:$0xff]
      %v2847 = vld [vmem:[#allocation2 + $0xc1] sm:$0xff]
      %v2848 = vld [vmem:[#allocation2 + $0xc9] sm:$0xff]
      %v2849 = vld [vmem:[#allocation2 + $0xd1] sm:$0xff]
      %v2850 = vld [vmem:[#allocation2 + $0xd9] sm:$0xff]
      %v2851 = vld [vmem:[#allocation2 + $0xe1] sm:$0xff]
      %v2852 = vld [vmem:[#allocation2 + $0xe9] sm:$0xff]
      %v2853 = vld [vmem:[#allocation2 + $0xf1] sm:$0xff]
      %v2854 = vld [vmem:[#allocation2 + $0xf9] sm:$0xff]
      %v2855 = vld [vmem:[#allocation2 + $0x101] sm:$0xff]
      %v2856 = vld [vmem:[#allocation2 + $0x109] sm:$0xff]
      %v2857 = vld [vmem:[#allocation2 + $0x111] sm:$0xff]
      %v2858 = vld [vmem:[#allocation2 + $0x119] sm:$0xff]
      %v2859 = vsel %vm2474, 1, 0
      %v2860 = vsel %vm2475, 1, 0
      %v2861 = vsel %vm2476, 1, 0
      %v2862 = vsel %vm2477, 1, 0
      %v2863 = vsel %vm2478, 1, 0
      %v2864 = vsel %vm2479, 1, 0
      %v2865 = vsel %vm2480, 1, 0
      %v2866 = vsel %vm2481, 1, 0
      %v2867 = vsel %vm2482, 1, 0
      %v2868 = vsel %vm2483, 1, 0
      %v2869 = vsel %vm2484, 1, 0
      %v2870 = vsel %vm2485, 1, 0
      %v2871 = vsel %vm2486, 1, 0
      %v2872 = vsel %vm2487, 1, 0
      %v2873 = vsel %vm2488, 1, 0
      %v2874 = vsel %vm2489, 1, 0
      %v2875 = vsel %vm2490, 1, 0
      %v2876 = vsel %vm2491, 1, 0
      %v2877 = vsel %vm2492, 1, 0
      %v2878 = vsel %vm2493, 1, 0
      %v2879 = vsel %vm2494, 1, 0
      %v2880 = vsel %vm2495, 1, 0
      %v2881 = vsel %vm2496, 1, 0
      %v2882 = vsel %vm2497, 1, 0
      %v2883 = vsel %vm2498, 1, 0
      %v2884 = vsel %vm2499, 1, 0
      %v2885 = vsel %vm2500, 1, 0
      %v2886 = vsel %vm2501, 1, 0
      %v2887 = vsel %vm2502, 1, 0
      %v2888 = vsel %vm2503, 1, 0
      %v2889 = vsel %vm2504, 1, 0
      %v2890 = vsel %vm2505, 1, 0
      %vm2891 = vcmp.eq.s32.totalorder %v2859, 1
      %vm2892 = vcmp.eq.s32.totalorder %v2860, 1
      %vm2893 = vcmp.eq.s32.totalorder %v2861, 1
      %vm2894 = vcmp.eq.s32.totalorder %v2862, 1
      %vm2895 = vcmp.eq.s32.totalorder %v2863, 1
      %vm2896 = vcmp.eq.s32.totalorder %v2864, 1
      %vm2897 = vcmp.eq.s32.totalorder %v2865, 1
      %vm2898 = vcmp.eq.s32.totalorder %v2866, 1
      %vm2899 = vcmp.eq.s32.totalorder %v2867, 1
      %vm2900 = vcmp.eq.s32.totalorder %v2868, 1
      %vm2901 = vcmp.eq.s32.totalorder %v2869, 1
      %vm2902 = vcmp.eq.s32.totalorder %v2870, 1
      %vm2903 = vcmp.eq.s32.totalorder %v2871, 1
      %vm2904 = vcmp.eq.s32.totalorder %v2872, 1
      %vm2905 = vcmp.eq.s32.totalorder %v2873, 1
      %vm2906 = vcmp.eq.s32.totalorder %v2874, 1
      %vm2907 = vcmp.eq.s32.totalorder %v2875, 1
      %vm2908 = vcmp.eq.s32.totalorder %v2876, 1
      %vm2909 = vcmp.eq.s32.totalorder %v2877, 1
      %vm2910 = vcmp.eq.s32.totalorder %v2878, 1
      %vm2911 = vcmp.eq.s32.totalorder %v2879, 1
      %vm2912 = vcmp.eq.s32.totalorder %v2880, 1
      %vm2913 = vcmp.eq.s32.totalorder %v2881, 1
      %vm2914 = vcmp.eq.s32.totalorder %v2882, 1
      %vm2915 = vcmp.eq.s32.totalorder %v2883, 1
      %vm2916 = vcmp.eq.s32.totalorder %v2884, 1
      %vm2917 = vcmp.eq.s32.totalorder %v2885, 1
      %vm2918 = vcmp.eq.s32.totalorder %v2886, 1
      %vm2919 = vcmp.eq.s32.totalorder %v2887, 1
      %vm2920 = vcmp.eq.s32.totalorder %v2888, 1
      %vm2921 = vcmp.eq.s32.totalorder %v2889, 1
      %vm2922 = vcmp.eq.s32.totalorder %v2890, 1
      %v2923 = vsel %vm2891, %v2827, 0.0
      %v2924 = vsel %vm2892, %v2828, 0.0
      %v2925 = vsel %vm2893, %v2829, 0.0
      %v2926 = vsel %vm2894, %v2830, 0.0
      %v2927 = vsel %vm2895, %v2831, 0.0
      %v2928 = vsel %vm2896, %v2832, 0.0
      %v2929 = vsel %vm2897, %v2833, 0.0
      %v2930 = vsel %vm2898, %v2834, 0.0
      %v2931 = vsel %vm2899, %v2835, 0.0
      %v2932 = vsel %vm2900, %v2836, 0.0
      %v2933 = vsel %vm2901, %v2837, 0.0
      %v2934 = vsel %vm2902, %v2838, 0.0
      %v2935 = vsel %vm2903, %v2839, 0.0
      %v2936 = vsel %vm2904, %v2840, 0.0
      %v2937 = vsel %vm2905, %v2841, 0.0
      %v2938 = vsel %vm2906, %v2842, 0.0
      %v2939 = vsel %vm2907, %v2843, 0.0
      %v2940 = vsel %vm2908, %v2844, 0.0
      %v2941 = vsel %vm2909, %v2845, 0.0
      %v2942 = vsel %vm2910, %v2846, 0.0
      %v2943 = vsel %vm2911, %v2847, 0.0
      %v2944 = vsel %vm2912, %v2848, 0.0
      %v2945 = vsel %vm2913, %v2849, 0.0
      %v2946 = vsel %vm2914, %v2850, 0.0
      %v2947 = vsel %vm2915, %v2851, 0.0
      %v2948 = vsel %vm2916, %v2852, 0.0
      %v2949 = vsel %vm2917, %v2853, 0.0
      %v2950 = vsel %vm2918, %v2854, 0.0
      %v2951 = vsel %vm2919, %v2855, 0.0
      %v2952 = vsel %vm2920, %v2856, 0.0
      %v2953 = vsel %vm2921, %v2857, 0.0
      %v2954 = vsel %vm2922, %v2858, 0.0
      %v2955 = vpack.c.bf16 %v2923, %v2923
      %v2956 = vpack.c.bf16 %v2924, %v2924
      %v2957 = vpack.c.bf16 %v2925, %v2925
      %v2958 = vpack.c.bf16 %v2926, %v2926
      %v2959 = vpack.c.bf16 %v2927, %v2927
      %v2960 = vpack.c.bf16 %v2928, %v2928
      %v2961 = vpack.c.bf16 %v2929, %v2929
      %v2962 = vpack.c.bf16 %v2930, %v2930
      %v2963 = vpack.c.bf16 %v2931, %v2931
      %v2964 = vpack.c.bf16 %v2932, %v2932
      %v2965 = vpack.c.bf16 %v2933, %v2933
      %v2966 = vpack.c.bf16 %v2934, %v2934
      %v2967 = vpack.c.bf16 %v2935, %v2935
      %v2968 = vpack.c.bf16 %v2936, %v2936
      %v2969 = vpack.c.bf16 %v2937, %v2937
      %v2970 = vpack.c.bf16 %v2938, %v2938
      %v2971 = vpack.c.bf16 %v2939, %v2939
      %v2972 = vpack.c.bf16 %v2940, %v2940
      %v2973 = vpack.c.bf16 %v2941, %v2941
      %v2974 = vpack.c.bf16 %v2942, %v2942
      %v2975 = vpack.c.bf16 %v2943, %v2943
      %v2976 = vpack.c.bf16 %v2944, %v2944
      %v2977 = vpack.c.bf16 %v2945, %v2945
      %v2978 = vpack.c.bf16 %v2946, %v2946
      %v2979 = vpack.c.bf16 %v2947, %v2947
      %v2980 = vpack.c.bf16 %v2948, %v2948
      %v2981 = vpack.c.bf16 %v2949, %v2949
      %v2982 = vpack.c.bf16 %v2950, %v2950
      %v2983 = vpack.c.bf16 %v2951, %v2951
      %v2984 = vpack.c.bf16 %v2952, %v2952
      %v2985 = vpack.c.bf16 %v2953, %v2953
      %v2986 = vpack.c.bf16 %v2954, %v2954
      %3019 = vrot.lane.b32.xlu0 %v2955, 28
      %v3020 = vpop.permute.xlu0 %3019
      %3021 = vrot.lane.b32.xlu0 %v2956, 28
      %v3022 = vpop.permute.xlu0 %3021
      %3023 = vrot.lane.b32.xlu0 %v2957, 28
      %v3024 = vpop.permute.xlu0 %3023
      %3025 = vrot.lane.b32.xlu0 %v2958, 28
      %v3026 = vpop.permute.xlu0 %3025
      %3027 = vrot.lane.b32.xlu0 %v2959, 28
      %v3028 = vpop.permute.xlu0 %3027
      %3029 = vrot.lane.b32.xlu0 %v2960, 28
      %v3030 = vpop.permute.xlu0 %3029
      %3031 = vrot.lane.b32.xlu0 %v2961, 28
      %v3032 = vpop.permute.xlu0 %3031
      %3033 = vrot.lane.b32.xlu0 %v2962, 28
      %v3034 = vpop.permute.xlu0 %3033
      %3035 = vrot.lane.b32.xlu0 %v2963, 28
      %v3036 = vpop.permute.xlu0 %3035
      %3037 = vrot.lane.b32.xlu0 %v2964, 28
      %v3038 = vpop.permute.xlu0 %3037
      %3039 = vrot.lane.b32.xlu0 %v2965, 28
      %v3040 = vpop.permute.xlu0 %3039
      %3041 = vrot.lane.b32.xlu0 %v2966, 28
      %v3042 = vpop.permute.xlu0 %3041
      %3043 = vrot.lane.b32.xlu0 %v2967, 28
      %v3044 = vpop.permute.xlu0 %3043
      %3045 = vrot.lane.b32.xlu0 %v2968, 28
      %v3046 = vpop.permute.xlu0 %3045
      %3047 = vrot.lane.b32.xlu0 %v2969, 28
      %v3048 = vpop.permute.xlu0 %3047
      %3049 = vrot.lane.b32.xlu0 %v2970, 28
      %v3050 = vpop.permute.xlu0 %3049
      %3051 = vrot.lane.b32.xlu0 %v2971, 28
      %v3052 = vpop.permute.xlu0 %3051
      %3053 = vrot.lane.b32.xlu0 %v2972, 28
      %v3054 = vpop.permute.xlu0 %3053
      %3055 = vrot.lane.b32.xlu0 %v2973, 28
      %v3056 = vpop.permute.xlu0 %3055
      %3057 = vrot.lane.b32.xlu0 %v2974, 28
      %v3058 = vpop.permute.xlu0 %3057
      %3059 = vrot.lane.b32.xlu0 %v2975, 28
      %v3060 = vpop.permute.xlu0 %3059
      %3061 = vrot.lane.b32.xlu0 %v2976, 28
      %v3062 = vpop.permute.xlu0 %3061
      %3063 = vrot.lane.b32.xlu0 %v2977, 28
      %v3064 = vpop.permute.xlu0 %3063
      %3065 = vrot.lane.b32.xlu0 %v2978, 28
      %v3066 = vpop.permute.xlu0 %3065
      %3067 = vrot.lane.b32.xlu0 %v2979, 28
      %v3068 = vpop.permute.xlu0 %3067
      %3069 = vrot.lane.b32.xlu0 %v2980, 28
      %v3070 = vpop.permute.xlu0 %3069
      %3071 = vrot.lane.b32.xlu0 %v2981, 28
      %v3072 = vpop.permute.xlu0 %3071
      %3073 = vrot.lane.b32.xlu0 %v2982, 28
      %v3074 = vpop.permute.xlu0 %3073
      %3075 = vrot.lane.b32.xlu0 %v2983, 28
      %v3076 = vpop.permute.xlu0 %3075
      %3077 = vrot.lane.b32.xlu0 %v2984, 28
      %v3078 = vpop.permute.xlu0 %3077
      %3079 = vrot.lane.b32.xlu0 %v2985, 28
      %v3080 = vpop.permute.xlu0 %3079
      %3081 = vrot.lane.b32.xlu0 %v2986, 28
      %v3082 = vpop.permute.xlu0 %3081
      %vm3115 = vcmask 257248
      %3116 = vst.msk [vmem:[#allocation4] sm:$0xf] %vm3115, %v3020
      %3117 = vst.msk [vmem:[#allocation4 + $0x4] sm:$0xf] %vm3115, %v3022
      %3118 = vst.msk [vmem:[#allocation4 + $0x8] sm:$0xf] %vm3115, %v3024
      %3119 = vst.msk [vmem:[#allocation4 + $0xc] sm:$0xf] %vm3115, %v3026
      %3120 = vst.msk [vmem:[#allocation4 + $0x10] sm:$0xf] %vm3115, %v3028
      %3121 = vst.msk [vmem:[#allocation4 + $0x14] sm:$0xf] %vm3115, %v3030
      %3122 = vst.msk [vmem:[#allocation4 + $0x18] sm:$0xf] %vm3115, %v3032
      %3123 = vst.msk [vmem:[#allocation4 + $0x1c] sm:$0xf] %vm3115, %v3034
      %3124 = vst.msk [vmem:[#allocation4 + $0x20] sm:$0xf] %vm3115, %v3036
      %3125 = vst.msk [vmem:[#allocation4 + $0x24] sm:$0xf] %vm3115, %v3038
      %3126 = vst.msk [vmem:[#allocation4 + $0x28] sm:$0xf] %vm3115, %v3040
      %3127 = vst.msk [vmem:[#allocation4 + $0x2c] sm:$0xf] %vm3115, %v3042
      %3128 = vst.msk [vmem:[#allocation4 + $0x30] sm:$0xf] %vm3115, %v3044
      %3129 = vst.msk [vmem:[#allocation4 + $0x34] sm:$0xf] %vm3115, %v3046
      %3130 = vst.msk [vmem:[#allocation4 + $0x38] sm:$0xf] %vm3115, %v3048
      %3131 = vst.msk [vmem:[#allocation4 + $0x3c] sm:$0xf] %vm3115, %v3050
      %3132 = vst.msk [vmem:[#allocation4 + $0x40] sm:$0xf] %vm3115, %v3052
      %3133 = vst.msk [vmem:[#allocation4 + $0x44] sm:$0xf] %vm3115, %v3054
      %3134 = vst.msk [vmem:[#allocation4 + $0x48] sm:$0xf] %vm3115, %v3056
      %3135 = vst.msk [vmem:[#allocation4 + $0x4c] sm:$0xf] %vm3115, %v3058
      %3136 = vst.msk [vmem:[#allocation4 + $0x50] sm:$0xf] %vm3115, %v3060
      %3137 = vst.msk [vmem:[#allocation4 + $0x54] sm:$0xf] %vm3115, %v3062
      %3138 = vst.msk [vmem:[#allocation4 + $0x58] sm:$0xf] %vm3115, %v3064
      %3139 = vst.msk [vmem:[#allocation4 + $0x5c] sm:$0xf] %vm3115, %v3066
      %3140 = vst.msk [vmem:[#allocation4 + $0x60] sm:$0xf] %vm3115, %v3068
      %3141 = vst.msk [vmem:[#allocation4 + $0x64] sm:$0xf] %vm3115, %v3070
      %3142 = vst.msk [vmem:[#allocation4 + $0x68] sm:$0xf] %vm3115, %v3072
      %3143 = vst.msk [vmem:[#allocation4 + $0x6c] sm:$0xf] %vm3115, %v3074
      %3144 = vst.msk [vmem:[#allocation4 + $0x70] sm:$0xf] %vm3115, %v3076
      %3145 = vst.msk [vmem:[#allocation4 + $0x74] sm:$0xf] %vm3115, %v3078
      %3146 = vst.msk [vmem:[#allocation4 + $0x78] sm:$0xf] %vm3115, %v3080
      %3147 = vst.msk [vmem:[#allocation4 + $0x7c] sm:$0xf] %vm3115, %v3082
      %v3148 = vld [vmem:[#allocation2 + $0x22] sm:$0xff]
      %v3149 = vld [vmem:[#allocation2 + $0x2a] sm:$0xff]
      %v3150 = vld [vmem:[#allocation2 + $0x32] sm:$0xff]
      %v3151 = vld [vmem:[#allocation2 + $0x3a] sm:$0xff]
      %v3152 = vld [vmem:[#allocation2 + $0x42] sm:$0xff]
      %v3153 = vld [vmem:[#allocation2 + $0x4a] sm:$0xff]
      %v3154 = vld [vmem:[#allocation2 + $0x52] sm:$0xff]
      %v3155 = vld [vmem:[#allocation2 + $0x5a] sm:$0xff]
      %v3156 = vld [vmem:[#allocation2 + $0x62] sm:$0xff]
      %v3157 = vld [vmem:[#allocation2 + $0x6a] sm:$0xff]
      %v3158 = vld [vmem:[#allocation2 + $0x72] sm:$0xff]
      %v3159 = vld [vmem:[#allocation2 + $0x7a] sm:$0xff]
      %v3160 = vld [vmem:[#allocation2 + $0x82] sm:$0xff]
      %v3161 = vld [vmem:[#allocation2 + $0x8a] sm:$0xff]
      %v3162 = vld [vmem:[#allocation2 + $0x92] sm:$0xff]
      %v3163 = vld [vmem:[#allocation2 + $0x9a] sm:$0xff]
      %v3164 = vld [vmem:[#allocation2 + $0xa2] sm:$0xff]
      %v3165 = vld [vmem:[#allocation2 + $0xaa] sm:$0xff]
      %v3166 = vld [vmem:[#allocation2 + $0xb2] sm:$0xff]
      %v3167 = vld [vmem:[#allocation2 + $0xba] sm:$0xff]
      %v3168 = vld [vmem:[#allocation2 + $0xc2] sm:$0xff]
      %v3169 = vld [vmem:[#allocation2 + $0xca] sm:$0xff]
      %v3170 = vld [vmem:[#allocation2 + $0xd2] sm:$0xff]
      %v3171 = vld [vmem:[#allocation2 + $0xda] sm:$0xff]
      %v3172 = vld [vmem:[#allocation2 + $0xe2] sm:$0xff]
      %v3173 = vld [vmem:[#allocation2 + $0xea] sm:$0xff]
      %v3174 = vld [vmem:[#allocation2 + $0xf2] sm:$0xff]
      %v3175 = vld [vmem:[#allocation2 + $0xfa] sm:$0xff]
      %v3176 = vld [vmem:[#allocation2 + $0x102] sm:$0xff]
      %v3177 = vld [vmem:[#allocation2 + $0x10a] sm:$0xff]
      %v3178 = vld [vmem:[#allocation2 + $0x112] sm:$0xff]
      %v3179 = vld [vmem:[#allocation2 + $0x11a] sm:$0xff]
      %vm3180 = vmand %vm2474, %vm1222
      %vm3181 = vmand %vm2475, %vm1223
      %vm3182 = vmand %vm2476, %vm1224
      %vm3183 = vmand %vm2477, %vm1225
      %vm3184 = vmand %vm2478, %vm1226
      %vm3185 = vmand %vm2479, %vm1227
      %vm3186 = vmand %vm2480, %vm1228
      %vm3187 = vmand %vm2481, %vm1229
      %vm3188 = vmand %vm2482, %vm1230
      %vm3189 = vmand %vm2483, %vm1231
      %vm3190 = vmand %vm2484, %vm1232
      %vm3191 = vmand %vm2485, %vm1233
      %vm3192 = vmand %vm2486, %vm1234
      %vm3193 = vmand %vm2487, %vm1235
      %vm3194 = vmand %vm2488, %vm1236
      %vm3195 = vmand %vm2489, %vm1237
      %vm3196 = vmand %vm2490, %vm1238
      %vm3197 = vmand %vm2491, %vm1239
      %vm3198 = vmand %vm2492, %vm1240
      %vm3199 = vmand %vm2493, %vm1241
      %vm3200 = vmand %vm2494, %vm1242
      %vm3201 = vmand %vm2495, %vm1243
      %vm3202 = vmand %vm2496, %vm1244
      %vm3203 = vmand %vm2497, %vm1245
      %vm3204 = vmand %vm2498, %vm1246
      %vm3205 = vmand %vm2499, %vm1247
      %vm3206 = vmand %vm2500, %vm1248
      %vm3207 = vmand %vm2501, %vm1249
      %vm3208 = vmand %vm2502, %vm1250
      %vm3209 = vmand %vm2503, %vm1251
      %vm3210 = vmand %vm2504, %vm1252
      %vm3211 = vmand %vm2505, %vm1253
      %v3212 = vsel %vm3180, 1, 0
      %v3213 = vsel %vm3181, 1, 0
      %v3214 = vsel %vm3182, 1, 0
      %v3215 = vsel %vm3183, 1, 0
      %v3216 = vsel %vm3184, 1, 0
      %v3217 = vsel %vm3185, 1, 0
      %v3218 = vsel %vm3186, 1, 0
      %v3219 = vsel %vm3187, 1, 0
      %v3220 = vsel %vm3188, 1, 0
      %v3221 = vsel %vm3189, 1, 0
      %v3222 = vsel %vm3190, 1, 0
      %v3223 = vsel %vm3191, 1, 0
      %v3224 = vsel %vm3192, 1, 0
      %v3225 = vsel %vm3193, 1, 0
      %v3226 = vsel %vm3194, 1, 0
      %v3227 = vsel %vm3195, 1, 0
      %v3228 = vsel %vm3196, 1, 0
      %v3229 = vsel %vm3197, 1, 0
      %v3230 = vsel %vm3198, 1, 0
      %v3231 = vsel %vm3199, 1, 0
      %v3232 = vsel %vm3200, 1, 0
      %v3233 = vsel %vm3201, 1, 0
      %v3234 = vsel %vm3202, 1, 0
      %v3235 = vsel %vm3203, 1, 0
      %v3236 = vsel %vm3204, 1, 0
      %v3237 = vsel %vm3205, 1, 0
      %v3238 = vsel %vm3206, 1, 0
      %v3239 = vsel %vm3207, 1, 0
      %v3240 = vsel %vm3208, 1, 0
      %v3241 = vsel %vm3209, 1, 0
      %v3242 = vsel %vm3210, 1, 0
      %v3243 = vsel %vm3211, 1, 0
      %vm3244 = vcmp.eq.s32.totalorder %v3212, 1
      %vm3245 = vcmp.eq.s32.totalorder %v3213, 1
      %vm3246 = vcmp.eq.s32.totalorder %v3214, 1
      %vm3247 = vcmp.eq.s32.totalorder %v3215, 1
      %vm3248 = vcmp.eq.s32.totalorder %v3216, 1
      %vm3249 = vcmp.eq.s32.totalorder %v3217, 1
      %vm3250 = vcmp.eq.s32.totalorder %v3218, 1
      %vm3251 = vcmp.eq.s32.totalorder %v3219, 1
      %vm3252 = vcmp.eq.s32.totalorder %v3220, 1
      %vm3253 = vcmp.eq.s32.totalorder %v3221, 1
      %vm3254 = vcmp.eq.s32.totalorder %v3222, 1
      %vm3255 = vcmp.eq.s32.totalorder %v3223, 1
      %vm3256 = vcmp.eq.s32.totalorder %v3224, 1
      %vm3257 = vcmp.eq.s32.totalorder %v3225, 1
      %vm3258 = vcmp.eq.s32.totalorder %v3226, 1
      %vm3259 = vcmp.eq.s32.totalorder %v3227, 1
      %vm3260 = vcmp.eq.s32.totalorder %v3228, 1
      %vm3261 = vcmp.eq.s32.totalorder %v3229, 1
      %vm3262 = vcmp.eq.s32.totalorder %v3230, 1
      %vm3263 = vcmp.eq.s32.totalorder %v3231, 1
      %vm3264 = vcmp.eq.s32.totalorder %v3232, 1
      %vm3265 = vcmp.eq.s32.totalorder %v3233, 1
      %vm3266 = vcmp.eq.s32.totalorder %v3234, 1
      %vm3267 = vcmp.eq.s32.totalorder %v3235, 1
      %vm3268 = vcmp.eq.s32.totalorder %v3236, 1
      %vm3269 = vcmp.eq.s32.totalorder %v3237, 1
      %vm3270 = vcmp.eq.s32.totalorder %v3238, 1
      %vm3271 = vcmp.eq.s32.totalorder %v3239, 1
      %vm3272 = vcmp.eq.s32.totalorder %v3240, 1
      %vm3273 = vcmp.eq.s32.totalorder %v3241, 1
      %vm3274 = vcmp.eq.s32.totalorder %v3242, 1
      %vm3275 = vcmp.eq.s32.totalorder %v3243, 1
      %v3276 = vsel %vm3244, %v3148, 0.0
      %v3277 = vsel %vm3245, %v3149, 0.0
      %v3278 = vsel %vm3246, %v3150, 0.0
      %v3279 = vsel %vm3247, %v3151, 0.0
      %v3280 = vsel %vm3248, %v3152, 0.0
      %v3281 = vsel %vm3249, %v3153, 0.0
      %v3282 = vsel %vm3250, %v3154, 0.0
      %v3283 = vsel %vm3251, %v3155, 0.0
      %v3284 = vsel %vm3252, %v3156, 0.0
      %v3285 = vsel %vm3253, %v3157, 0.0
      %v3286 = vsel %vm3254, %v3158, 0.0
      %v3287 = vsel %vm3255, %v3159, 0.0
      %v3288 = vsel %vm3256, %v3160, 0.0
      %v3289 = vsel %vm3257, %v3161, 0.0
      %v3290 = vsel %vm3258, %v3162, 0.0
      %v3291 = vsel %vm3259, %v3163, 0.0
      %v3292 = vsel %vm3260, %v3164, 0.0
      %v3293 = vsel %vm3261, %v3165, 0.0
      %v3294 = vsel %vm3262, %v3166, 0.0
      %v3295 = vsel %vm3263, %v3167, 0.0
      %v3296 = vsel %vm3264, %v3168, 0.0
      %v3297 = vsel %vm3265, %v3169, 0.0
      %v3298 = vsel %vm3266, %v3170, 0.0
      %v3299 = vsel %vm3267, %v3171, 0.0
      %v3300 = vsel %vm3268, %v3172, 0.0
      %v3301 = vsel %vm3269, %v3173, 0.0
      %v3302 = vsel %vm3270, %v3174, 0.0
      %v3303 = vsel %vm3271, %v3175, 0.0
      %v3304 = vsel %vm3272, %v3176, 0.0
      %v3305 = vsel %vm3273, %v3177, 0.0
      %v3306 = vsel %vm3274, %v3178, 0.0
      %v3307 = vsel %vm3275, %v3179, 0.0
      %v3308 = vpack.c.bf16 %v3276, %v3276
      %v3309 = vpack.c.bf16 %v3277, %v3277
      %v3310 = vpack.c.bf16 %v3278, %v3278
      %v3311 = vpack.c.bf16 %v3279, %v3279
      %v3312 = vpack.c.bf16 %v3280, %v3280
      %v3313 = vpack.c.bf16 %v3281, %v3281
      %v3314 = vpack.c.bf16 %v3282, %v3282
      %v3315 = vpack.c.bf16 %v3283, %v3283
      %v3316 = vpack.c.bf16 %v3284, %v3284
      %v3317 = vpack.c.bf16 %v3285, %v3285
      %v3318 = vpack.c.bf16 %v3286, %v3286
      %v3319 = vpack.c.bf16 %v3287, %v3287
      %v3320 = vpack.c.bf16 %v3288, %v3288
      %v3321 = vpack.c.bf16 %v3289, %v3289
      %v3322 = vpack.c.bf16 %v3290, %v3290
      %v3323 = vpack.c.bf16 %v3291, %v3291
      %v3324 = vpack.c.bf16 %v3292, %v3292
      %v3325 = vpack.c.bf16 %v3293, %v3293
      %v3326 = vpack.c.bf16 %v3294, %v3294
      %v3327 = vpack.c.bf16 %v3295, %v3295
      %v3328 = vpack.c.bf16 %v3296, %v3296
      %v3329 = vpack.c.bf16 %v3297, %v3297
      %v3330 = vpack.c.bf16 %v3298, %v3298
      %v3331 = vpack.c.bf16 %v3299, %v3299
      %v3332 = vpack.c.bf16 %v3300, %v3300
      %v3333 = vpack.c.bf16 %v3301, %v3301
      %v3334 = vpack.c.bf16 %v3302, %v3302
      %v3335 = vpack.c.bf16 %v3303, %v3303
      %v3336 = vpack.c.bf16 %v3304, %v3304
      %v3337 = vpack.c.bf16 %v3305, %v3305
      %v3338 = vpack.c.bf16 %v3306, %v3306
      %v3339 = vpack.c.bf16 %v3307, %v3307
      %3372 = vrot.lane.b32.xlu0 %v3308, 32
      %v3373 = vpop.permute.xlu0 %3372
      %3374 = vrot.lane.b32.xlu0 %v3309, 32
      %v3375 = vpop.permute.xlu0 %3374
      %3376 = vrot.lane.b32.xlu0 %v3310, 32
      %v3377 = vpop.permute.xlu0 %3376
      %3378 = vrot.lane.b32.xlu0 %v3311, 32
      %v3379 = vpop.permute.xlu0 %3378
      %3380 = vrot.lane.b32.xlu0 %v3312, 32
      %v3381 = vpop.permute.xlu0 %3380
      %3382 = vrot.lane.b32.xlu0 %v3313, 32
      %v3383 = vpop.permute.xlu0 %3382
      %3384 = vrot.lane.b32.xlu0 %v3314, 32
      %v3385 = vpop.permute.xlu0 %3384
      %3386 = vrot.lane.b32.xlu0 %v3315, 32
      %v3387 = vpop.permute.xlu0 %3386
      %3388 = vrot.lane.b32.xlu0 %v3316, 32
      %v3389 = vpop.permute.xlu0 %3388
      %3390 = vrot.lane.b32.xlu0 %v3317, 32
      %v3391 = vpop.permute.xlu0 %3390
      %3392 = vrot.lane.b32.xlu0 %v3318, 32
      %v3393 = vpop.permute.xlu0 %3392
      %3394 = vrot.lane.b32.xlu0 %v3319, 32
      %v3395 = vpop.permute.xlu0 %3394
      %3396 = vrot.lane.b32.xlu0 %v3320, 32
      %v3397 = vpop.permute.xlu0 %3396
      %3398 = vrot.lane.b32.xlu0 %v3321, 32
      %v3399 = vpop.permute.xlu0 %3398
      %3400 = vrot.lane.b32.xlu0 %v3322, 32
      %v3401 = vpop.permute.xlu0 %3400
      %3402 = vrot.lane.b32.xlu0 %v3323, 32
      %v3403 = vpop.permute.xlu0 %3402
      %3404 = vrot.lane.b32.xlu0 %v3324, 32
      %v3405 = vpop.permute.xlu0 %3404
      %3406 = vrot.lane.b32.xlu0 %v3325, 32
      %v3407 = vpop.permute.xlu0 %3406
      %3408 = vrot.lane.b32.xlu0 %v3326, 32
      %v3409 = vpop.permute.xlu0 %3408
      %3410 = vrot.lane.b32.xlu0 %v3327, 32
      %v3411 = vpop.permute.xlu0 %3410
      %3412 = vrot.lane.b32.xlu0 %v3328, 32
      %v3413 = vpop.permute.xlu0 %3412
      %3414 = vrot.lane.b32.xlu0 %v3329, 32
      %v3415 = vpop.permute.xlu0 %3414
      %3416 = vrot.lane.b32.xlu0 %v3330, 32
      %v3417 = vpop.permute.xlu0 %3416
      %3418 = vrot.lane.b32.xlu0 %v3331, 32
      %v3419 = vpop.permute.xlu0 %3418
      %3420 = vrot.lane.b32.xlu0 %v3332, 32
      %v3421 = vpop.permute.xlu0 %3420
      %3422 = vrot.lane.b32.xlu0 %v3333, 32
      %v3423 = vpop.permute.xlu0 %3422
      %3424 = vrot.lane.b32.xlu0 %v3334, 32
      %v3425 = vpop.permute.xlu0 %3424
      %3426 = vrot.lane.b32.xlu0 %v3335, 32
      %v3427 = vpop.permute.xlu0 %3426
      %3428 = vrot.lane.b32.xlu0 %v3336, 32
      %v3429 = vpop.permute.xlu0 %3428
      %3430 = vrot.lane.b32.xlu0 %v3337, 32
      %v3431 = vpop.permute.xlu0 %3430
      %3432 = vrot.lane.b32.xlu0 %v3338, 32
      %v3433 = vpop.permute.xlu0 %3432
      %3434 = vrot.lane.b32.xlu0 %v3339, 32
      %v3435 = vpop.permute.xlu0 %3434
      %vm3468 = vcmask 290048
      %3469 = vst.msk [vmem:[#allocation4] sm:$0xf] %vm3468, %v3373
      %3470 = vst.msk [vmem:[#allocation4 + $0x4] sm:$0xf] %vm3468, %v3375
      %3471 = vst.msk [vmem:[#allocation4 + $0x8] sm:$0xf] %vm3468, %v3377
      %3472 = vst.msk [vmem:[#allocation4 + $0xc] sm:$0xf] %vm3468, %v3379
      %3473 = vst.msk [vmem:[#allocation4 + $0x10] sm:$0xf] %vm3468, %v3381
      %3474 = vst.msk [vmem:[#allocation4 + $0x14] sm:$0xf] %vm3468, %v3383
      %3475 = vst.msk [vmem:[#allocation4 + $0x18] sm:$0xf] %vm3468, %v3385
      %3476 = vst.msk [vmem:[#allocation4 + $0x1c] sm:$0xf] %vm3468, %v3387
      %3477 = vst.msk [vmem:[#allocation4 + $0x20] sm:$0xf] %vm3468, %v3389
      %3478 = vst.msk [vmem:[#allocation4 + $0x24] sm:$0xf] %vm3468, %v3391
      %3479 = vst.msk [vmem:[#allocation4 + $0x28] sm:$0xf] %vm3468, %v3393
      %3480 = vst.msk [vmem:[#allocation4 + $0x2c] sm:$0xf] %vm3468, %v3395
      %3481 = vst.msk [vmem:[#allocation4 + $0x30] sm:$0xf] %vm3468, %v3397
      %3482 = vst.msk [vmem:[#allocation4 + $0x34] sm:$0xf] %vm3468, %v3399
      %3483 = vst.msk [vmem:[#allocation4 + $0x38] sm:$0xf] %vm3468, %v3401
      %3484 = vst.msk [vmem:[#allocation4 + $0x3c] sm:$0xf] %vm3468, %v3403
      %3485 = vst.msk [vmem:[#allocation4 + $0x40] sm:$0xf] %vm3468, %v3405
      %3486 = vst.msk [vmem:[#allocation4 + $0x44] sm:$0xf] %vm3468, %v3407
      %3487 = vst.msk [vmem:[#allocation4 + $0x48] sm:$0xf] %vm3468, %v3409
      %3488 = vst.msk [vmem:[#allocation4 + $0x4c] sm:$0xf] %vm3468, %v3411
      %3489 = vst.msk [vmem:[#allocation4 + $0x50] sm:$0xf] %vm3468, %v3413
      %3490 = vst.msk [vmem:[#allocation4 + $0x54] sm:$0xf] %vm3468, %v3415
      %3491 = vst.msk [vmem:[#allocation4 + $0x58] sm:$0xf] %vm3468, %v3417
      %3492 = vst.msk [vmem:[#allocation4 + $0x5c] sm:$0xf] %vm3468, %v3419
      %3493 = vst.msk [vmem:[#allocation4 + $0x60] sm:$0xf] %vm3468, %v3421
      %3494 = vst.msk [vmem:[#allocation4 + $0x64] sm:$0xf] %vm3468, %v3423
      %3495 = vst.msk [vmem:[#allocation4 + $0x68] sm:$0xf] %vm3468, %v3425
      %3496 = vst.msk [vmem:[#allocation4 + $0x6c] sm:$0xf] %vm3468, %v3427
      %3497 = vst.msk [vmem:[#allocation4 + $0x70] sm:$0xf] %vm3468, %v3429
      %3498 = vst.msk [vmem:[#allocation4 + $0x74] sm:$0xf] %vm3468, %v3431
      %3499 = vst.msk [vmem:[#allocation4 + $0x78] sm:$0xf] %vm3468, %v3433
      %3500 = vst.msk [vmem:[#allocation4 + $0x7c] sm:$0xf] %vm3468, %v3435
      %v3501 = vld [vmem:[%s1] sm:$0xf]
      %v3502 = vld [vmem:[%s1 + $0x4] sm:$0xf]
      %v3503 = vld [vmem:[%s1 + $0x8] sm:$0xf]
      %v3504 = vld [vmem:[%s1 + $0xc] sm:$0xf]
      %v3505 = vld [vmem:[%s1 + $0x10] sm:$0x3]
      %v3506 = vld [vmem:[%s2] sm:$0x1]
      %v3507 = vld [vmem:[#allocation4] sm:$0xf]
      %v3508 = vld [vmem:[#allocation4 + $0x4] sm:$0xf]
      %v3509 = vld [vmem:[#allocation4 + $0x8] sm:$0xf]
      %v3510 = vld [vmem:[#allocation4 + $0xc] sm:$0xf]
      %v3511 = vld [vmem:[#allocation4 + $0x10] sm:$0xf]
      %v3512 = vld [vmem:[#allocation4 + $0x14] sm:$0xf]
      %v3513 = vld [vmem:[#allocation4 + $0x18] sm:$0xf]
      %v3514 = vld [vmem:[#allocation4 + $0x1c] sm:$0xf]
      %v3516 = vperm.slane %v3506, 0
      %v3526 = vunpack.c.l.b16 %v3507
      %v3527 = vunpack.c.l.b16 %v3508
      %v3528 = vunpack.c.l.b16 %v3509
      %v3529 = vunpack.c.l.b16 %v3510
      %v3530 = vunpack.c.l.b16 %v3511
      %v3531 = vunpack.c.l.b16 %v3512
      %v3532 = vunpack.c.l.b16 %v3513
      %v3533 = vunpack.c.l.b16 %v3514
      %v3534 = vpack.c.b16 %v3527, %v3526
      %v3535 = vpack.c.b16 %v3529, %v3528
      %v3536 = vpack.c.b16 %v3531, %v3530
      %v3537 = vpack.c.b16 %v3533, %v3532
      %v3543 = vunpack.c.l.b16 %v3501
      %v3544 = vunpack.c.l.b16 %v3502
      %v3545 = vunpack.c.l.b16 %v3503
      %v3546 = vunpack.c.l.b16 %v3504
      %v3547 = vunpack.c.l.b16 %v3505
      %v3548 = vpack.c.b16 %v3544, %v3543
      %v3549 = vpack.c.b16 %v3546, %v3545
      %v3550 = vpack.c.b16 %v3547, %v3547
      %vm3553 = vcmask 293888
      %v3555 = vsel %vm3553, %v3534, 0
      %v3558 = vsel %vm3553, %v3535, 0
      %v3561 = vsel %vm3553, %v3536, 0
      %v3564 = vsel %vm3553, %v3537, 0
      %vm3566 = vcmask 1041408
      %v3568 = vsel %vm3566, %v3550, 0
      %3570 = vmatpush.bf16.msra.mxu0 0
      %3571 = vmatpush.bf16.msra.mxu0 0
      %3572 = vmatpush.bf16.msra.mxu0 0
      %3573 = vmatpush.bf16.msra.mxu0 0
      %3574 = vmatpush.bf16.msra.mxu0 0
      %3575 = vmatpush.bf16.msra.mxu0 %v3568
      %3576 = vmatpush.bf16.msra.mxu0 %v3549
      %3577 = vmatpush.bf16.msra.mxu0 %v3548
      %3578 = vmatmul.bf16.gmra.mxu0 %v3555
      %v3579 = vpop.f32.mrf.mxu0
      %v3580 = vadd.f32 %v3516, %v3579
      %v3581 = vpop.f32.mrf.mxu0
      %v3582 = vadd.f32 %v3516, %v3581
      %3583 = vmatmul.bf16.gmra.mxu0 %v3558
      %v3584 = vpop.f32.mrf.mxu0
      %v3585 = vadd.f32 %v3516, %v3584
      %v3586 = vpop.f32.mrf.mxu0
      %v3587 = vadd.f32 %v3516, %v3586
      %3588 = vmatmul.bf16.gmra.mxu0 %v3561
      %v3589 = vpop.f32.mrf.mxu0
      %v3590 = vadd.f32 %v3516, %v3589
      %v3591 = vpop.f32.mrf.mxu0
      %v3592 = vadd.f32 %v3516, %v3591
      %3593 = vmatmul.bf16.gmra.mxu0 %v3564
      %v3594 = vpop.f32.mrf.mxu0
      %v3595 = vadd.f32 %v3516, %v3594
      %v3596 = vpop.f32.mrf.mxu0
      %v3597 = vadd.f32 %v3516, %v3596
      %3598 = vdwg.mxu0
      %v3599 = vmax.f32 %v3580, 0.0
      %v3600 = vmax.f32 %v3582, 0.0
      %v3601 = vmax.f32 %v3585, 0.0
      %v3602 = vmax.f32 %v3587, 0.0
      %v3603 = vmax.f32 %v3590, 0.0
      %v3604 = vmax.f32 %v3592, 0.0
      %v3605 = vmax.f32 %v3595, 0.0
      %v3606 = vmax.f32 %v3597, 0.0
      %s3607 = sadd.s32 0, 17
      %s3608 = scalar_lea.vmem [#allocation3], %s3607
      %vm3609 = vcmask 261120
      %3610 = vst.msk [vmem:[%s3608] sm:$0xff] %vm3609, %v3599
      %3611 = vst.msk [vmem:[%s3608 + $0x8] sm:$0xff] %vm3609, %v3600
      %3612 = vst.msk [vmem:[%s3608 + $0x10] sm:$0xff] %vm3609, %v3601
      %3613 = vst.msk [vmem:[%s3608 + $0x18] sm:$0xff] %vm3609, %v3602
      %3614 = vst.msk [vmem:[%s3608 + $0x20] sm:$0xff] %vm3609, %v3603
      %3615 = vst.msk [vmem:[%s3608 + $0x28] sm:$0xff] %vm3609, %v3604
      %3616 = vst.msk [vmem:[%s3608 + $0x30] sm:$0xff] %vm3609, %v3605
      %3617 = vst.msk [vmem:[%s3608 + $0x38] sm:$0xff] %vm3609, %v3606
      %s3618 = scalar_lea.vmem [#allocation4], 32
      %v3619 = vld [vmem:[%s3618] sm:$0xf]
      %v3620 = vld [vmem:[%s3618 + $0x4] sm:$0xf]
      %v3621 = vld [vmem:[%s3618 + $0x8] sm:$0xf]
      %v3622 = vld [vmem:[%s3618 + $0xc] sm:$0xf]
      %v3623 = vld [vmem:[%s3618 + $0x10] sm:$0xf]
      %v3624 = vld [vmem:[%s3618 + $0x14] sm:$0xf]
      %v3625 = vld [vmem:[%s3618 + $0x18] sm:$0xf]
      %v3626 = vld [vmem:[%s3618 + $0x1c] sm:$0xf]
      %v3635 = vunpack.c.l.b16 %v3619
      %v3636 = vunpack.c.l.b16 %v3620
      %v3637 = vunpack.c.l.b16 %v3621
      %v3638 = vunpack.c.l.b16 %v3622
      %v3639 = vunpack.c.l.b16 %v3623
      %v3640 = vunpack.c.l.b16 %v3624
      %v3641 = vunpack.c.l.b16 %v3625
      %v3642 = vunpack.c.l.b16 %v3626
      %v3643 = vpack.c.b16 %v3636, %v3635
      %v3644 = vpack.c.b16 %v3638, %v3637
      %v3645 = vpack.c.b16 %v3640, %v3639
      %v3646 = vpack.c.b16 %v3642, %v3641
      %v3648 = vsel %vm3553, %v3643, 0
      %v3651 = vsel %vm3553, %v3644, 0
      %v3654 = vsel %vm3553, %v3645, 0
      %v3657 = vsel %vm3553, %v3646, 0
      %3659 = vmatpush.bf16.msra.mxu0 0
      %3660 = vmatpush.bf16.msra.mxu0 0
      %3661 = vmatpush.bf16.msra.mxu0 0
      %3662 = vmatpush.bf16.msra.mxu0 0
      %3663 = vmatpush.bf16.msra.mxu0 0
      %3664 = vmatpush.bf16.msra.mxu0 %v3568
      %3665 = vmatpush.bf16.msra.mxu0 %v3549
      %3666 = vmatpush.bf16.msra.mxu0 %v3548
      %3667 = vmatmul.bf16.gmra.mxu0 %v3648
      %v3668 = vpop.f32.mrf.mxu0
      %v3669 = vadd.f32 %v3516, %v3668
      %v3670 = vpop.f32.mrf.mxu0
      %v3671 = vadd.f32 %v3516, %v3670
      %3672 = vmatmul.bf16.gmra.mxu0 %v3651
      %v3673 = vpop.f32.mrf.mxu0
      %v3674 = vadd.f32 %v3516, %v3673
      %v3675 = vpop.f32.mrf.mxu0
      %v3676 = vadd.f32 %v3516, %v3675
      %3677 = vmatmul.bf16.gmra.mxu0 %v3654
      %v3678 = vpop.f32.mrf.mxu0
      %v3679 = vadd.f32 %v3516, %v3678
      %v3680 = vpop.f32.mrf.mxu0
      %v3681 = vadd.f32 %v3516, %v3680
      %3682 = vmatmul.bf16.gmra.mxu0 %v3657
      %v3683 = vpop.f32.mrf.mxu0
      %v3684 = vadd.f32 %v3516, %v3683
      %v3685 = vpop.f32.mrf.mxu0
      %v3686 = vadd.f32 %v3516, %v3685
      %3687 = vdwg.mxu0
      %v3688 = vmax.f32 %v3669, 0.0
      %v3689 = vmax.f32 %v3671, 0.0
      %v3690 = vmax.f32 %v3674, 0.0
      %v3691 = vmax.f32 %v3676, 0.0
      %v3692 = vmax.f32 %v3679, 0.0
      %v3693 = vmax.f32 %v3681, 0.0
      %v3694 = vmax.f32 %v3684, 0.0
      %v3695 = vmax.f32 %v3686, 0.0
      %s3696 = sadd.s32 64, 17
      %s3697 = scalar_lea.vmem [#allocation3], %s3696
      %3698 = vst.msk [vmem:[%s3697] sm:$0xff] %vm3609, %v3688
      %3699 = vst.msk [vmem:[%s3697 + $0x8] sm:$0xff] %vm3609, %v3689
      %3700 = vst.msk [vmem:[%s3697 + $0x10] sm:$0xff] %vm3609, %v3690
      %3701 = vst.msk [vmem:[%s3697 + $0x18] sm:$0xff] %vm3609, %v3691
      %3702 = vst.msk [vmem:[%s3697 + $0x20] sm:$0xff] %vm3609, %v3692
      %3703 = vst.msk [vmem:[%s3697 + $0x28] sm:$0xff] %vm3609, %v3693
      %3704 = vst.msk [vmem:[%s3697 + $0x30] sm:$0xff] %vm3609, %v3694
      %3705 = vst.msk [vmem:[%s3697 + $0x38] sm:$0xff] %vm3609, %v3695
      %s3706 = scalar_lea.vmem [#allocation4], 64
      %v3707 = vld [vmem:[%s3706] sm:$0xf]
      %v3708 = vld [vmem:[%s3706 + $0x4] sm:$0xf]
      %v3709 = vld [vmem:[%s3706 + $0x8] sm:$0xf]
      %v3710 = vld [vmem:[%s3706 + $0xc] sm:$0xf]
      %v3711 = vld [vmem:[%s3706 + $0x10] sm:$0xf]
      %v3712 = vld [vmem:[%s3706 + $0x14] sm:$0xf]
      %v3713 = vld [vmem:[%s3706 + $0x18] sm:$0xf]
      %v3714 = vld [vmem:[%s3706 + $0x1c] sm:$0xf]
      %v3723 = vunpack.c.l.b16 %v3707
      %v3724 = vunpack.c.l.b16 %v3708
      %v3725 = vunpack.c.l.b16 %v3709
      %v3726 = vunpack.c.l.b16 %v3710
      %v3727 = vunpack.c.l.b16 %v3711
      %v3728 = vunpack.c.l.b16 %v3712
      %v3729 = vunpack.c.l.b16 %v3713
      %v3730 = vunpack.c.l.b16 %v3714
      %v3731 = vpack.c.b16 %v3724, %v3723
      %v3732 = vpack.c.b16 %v3726, %v3725
      %v3733 = vpack.c.b16 %v3728, %v3727
      %v3734 = vpack.c.b16 %v3730, %v3729
      %v3736 = vsel %vm3553, %v3731, 0
      %v3739 = vsel %vm3553, %v3732, 0
      %v3742 = vsel %vm3553, %v3733, 0
      %v3745 = vsel %vm3553, %v3734, 0
      %3747 = vmatpush.bf16.msra.mxu0 0
      %3748 = vmatpush.bf16.msra.mxu0 0
      %3749 = vmatpush.bf16.msra.mxu0 0
      %3750 = vmatpush.bf16.msra.mxu0 0
      %3751 = vmatpush.bf16.msra.mxu0 0
      %3752 = vmatpush.bf16.msra.mxu0 %v3568
      %3753 = vmatpush.bf16.msra.mxu0 %v3549
      %3754 = vmatpush.bf16.msra.mxu0 %v3548
      %3755 = vmatmul.bf16.gmra.mxu0 %v3736
      %v3756 = vpop.f32.mrf.mxu0
      %v3757 = vadd.f32 %v3516, %v3756
      %v3758 = vpop.f32.mrf.mxu0
      %v3759 = vadd.f32 %v3516, %v3758
      %3760 = vmatmul.bf16.gmra.mxu0 %v3739
      %v3761 = vpop.f32.mrf.mxu0
      %v3762 = vadd.f32 %v3516, %v3761
      %v3763 = vpop.f32.mrf.mxu0
      %v3764 = vadd.f32 %v3516, %v3763
      %3765 = vmatmul.bf16.gmra.mxu0 %v3742
      %v3766 = vpop.f32.mrf.mxu0
      %v3767 = vadd.f32 %v3516, %v3766
      %v3768 = vpop.f32.mrf.mxu0
      %v3769 = vadd.f32 %v3516, %v3768
      %3770 = vmatmul.bf16.gmra.mxu0 %v3745
      %v3771 = vpop.f32.mrf.mxu0
      %v3772 = vadd.f32 %v3516, %v3771
      %v3773 = vpop.f32.mrf.mxu0
      %v3774 = vadd.f32 %v3516, %v3773
      %3775 = vdwg.mxu0
      %v3776 = vmax.f32 %v3757, 0.0
      %v3777 = vmax.f32 %v3759, 0.0
      %v3778 = vmax.f32 %v3762, 0.0
      %v3779 = vmax.f32 %v3764, 0.0
      %v3780 = vmax.f32 %v3767, 0.0
      %v3781 = vmax.f32 %v3769, 0.0
      %v3782 = vmax.f32 %v3772, 0.0
      %v3783 = vmax.f32 %v3774, 0.0
      %s3784 = sadd.s32 128, 17
      %s3785 = scalar_lea.vmem [#allocation3], %s3784
      %3786 = vst.msk [vmem:[%s3785] sm:$0xff] %vm3609, %v3776
      %3787 = vst.msk [vmem:[%s3785 + $0x8] sm:$0xff] %vm3609, %v3777
      %3788 = vst.msk [vmem:[%s3785 + $0x10] sm:$0xff] %vm3609, %v3778
      %3789 = vst.msk [vmem:[%s3785 + $0x18] sm:$0xff] %vm3609, %v3779
      %3790 = vst.msk [vmem:[%s3785 + $0x20] sm:$0xff] %vm3609, %v3780
      %3791 = vst.msk [vmem:[%s3785 + $0x28] sm:$0xff] %vm3609, %v3781
      %3792 = vst.msk [vmem:[%s3785 + $0x30] sm:$0xff] %vm3609, %v3782
      %3793 = vst.msk [vmem:[%s3785 + $0x38] sm:$0xff] %vm3609, %v3783
      %s3794 = scalar_lea.vmem [#allocation4], 96
      %v3795 = vld [vmem:[%s3794] sm:$0xf]
      %v3796 = vld [vmem:[%s3794 + $0x4] sm:$0xf]
      %v3797 = vld [vmem:[%s3794 + $0x8] sm:$0xf]
      %v3798 = vld [vmem:[%s3794 + $0xc] sm:$0xf]
      %v3799 = vld [vmem:[%s3794 + $0x10] sm:$0xf]
      %v3800 = vld [vmem:[%s3794 + $0x14] sm:$0xf]
      %v3801 = vld [vmem:[%s3794 + $0x18] sm:$0xf]
      %v3802 = vld [vmem:[%s3794 + $0x1c] sm:$0xf]
      %v3811 = vunpack.c.l.b16 %v3795
      %v3812 = vunpack.c.l.b16 %v3796
      %v3813 = vunpack.c.l.b16 %v3797
      %v3814 = vunpack.c.l.b16 %v3798
      %v3815 = vunpack.c.l.b16 %v3799
      %v3816 = vunpack.c.l.b16 %v3800
      %v3817 = vunpack.c.l.b16 %v3801
      %v3818 = vunpack.c.l.b16 %v3802
      %v3819 = vpack.c.b16 %v3812, %v3811
      %v3820 = vpack.c.b16 %v3814, %v3813
      %v3821 = vpack.c.b16 %v3816, %v3815
      %v3822 = vpack.c.b16 %v3818, %v3817
      %v3824 = vsel %vm3553, %v3819, 0
      %v3827 = vsel %vm3553, %v3820, 0
      %v3830 = vsel %vm3553, %v3821, 0
      %v3833 = vsel %vm3553, %v3822, 0
      %3835 = vmatpush.bf16.msra.mxu0 0
      %3836 = vmatpush.bf16.msra.mxu0 0
      %3837 = vmatpush.bf16.msra.mxu0 0
      %3838 = vmatpush.bf16.msra.mxu0 0
      %3839 = vmatpush.bf16.msra.mxu0 0
      %3840 = vmatpush.bf16.msra.mxu0 %v3568
      %3841 = vmatpush.bf16.msra.mxu0 %v3549
      %3842 = vmatpush.bf16.msra.mxu0 %v3548
      %3843 = vmatmul.bf16.gmra.mxu0 %v3824
      %v3844 = vpop.f32.mrf.mxu0
      %v3845 = vadd.f32 %v3516, %v3844
      %v3846 = vpop.f32.mrf.mxu0
      %v3847 = vadd.f32 %v3516, %v3846
      %3848 = vmatmul.bf16.gmra.mxu0 %v3827
      %v3849 = vpop.f32.mrf.mxu0
      %v3850 = vadd.f32 %v3516, %v3849
      %v3851 = vpop.f32.mrf.mxu0
      %v3852 = vadd.f32 %v3516, %v3851
      %3853 = vmatmul.bf16.gmra.mxu0 %v3830
      %v3854 = vpop.f32.mrf.mxu0
      %v3855 = vadd.f32 %v3516, %v3854
      %v3856 = vpop.f32.mrf.mxu0
      %v3857 = vadd.f32 %v3516, %v3856
      %3858 = vmatmul.bf16.gmra.mxu0 %v3833
      %v3859 = vpop.f32.mrf.mxu0
      %v3860 = vadd.f32 %v3516, %v3859
      %v3861 = vpop.f32.mrf.mxu0
      %v3862 = vadd.f32 %v3516, %v3861
      %3863 = vdwg.mxu0
      %v3864 = vmax.f32 %v3845, 0.0
      %v3865 = vmax.f32 %v3847, 0.0
      %v3866 = vmax.f32 %v3850, 0.0
      %v3867 = vmax.f32 %v3852, 0.0
      %v3868 = vmax.f32 %v3855, 0.0
      %v3869 = vmax.f32 %v3857, 0.0
      %v3870 = vmax.f32 %v3860, 0.0
      %v3871 = vmax.f32 %v3862, 0.0
      %s3872 = sadd.s32 192, 17
      %s3873 = scalar_lea.vmem [#allocation3], %s3872
      %3874 = vst.msk [vmem:[%s3873] sm:$0xff] %vm3609, %v3864
      %3875 = vst.msk [vmem:[%s3873 + $0x8] sm:$0xff] %vm3609, %v3865
      %3876 = vst.msk [vmem:[%s3873 + $0x10] sm:$0xff] %vm3609, %v3866
      %3877 = vst.msk [vmem:[%s3873 + $0x18] sm:$0xff] %vm3609, %v3867
      %3878 = vst.msk [vmem:[%s3873 + $0x20] sm:$0xff] %vm3609, %v3868
      %3879 = vst.msk [vmem:[%s3873 + $0x28] sm:$0xff] %vm3609, %v3869
      %3880 = vst.msk [vmem:[%s3873 + $0x30] sm:$0xff] %vm3609, %v3870
      %3881 = vst.msk [vmem:[%s3873 + $0x38] sm:$0xff] %vm3609, %v3871
      %v3882 = vld [vmem:[#allocation3] sm:$0xff]
      %v3883 = vld [vmem:[#allocation3 + $0x8] sm:$0xff]
      %v3884 = vld [vmem:[#allocation3 + $0x10] sm:$0xff]
      %v3885 = vld [vmem:[#allocation3 + $0x18] sm:$0xff]
      %v3886 = vld [vmem:[#allocation3 + $0x20] sm:$0xff]
      %v3887 = vld [vmem:[#allocation3 + $0x28] sm:$0xff]
      %v3888 = vld [vmem:[#allocation3 + $0x30] sm:$0xff]
      %v3889 = vld [vmem:[#allocation3 + $0x38] sm:$0xff]
      %v3890 = vld [vmem:[#allocation3 + $0x40] sm:$0xff]
      %v3891 = vld [vmem:[#allocation3 + $0x48] sm:$0xff]
      %v3892 = vld [vmem:[#allocation3 + $0x50] sm:$0xff]
      %v3893 = vld [vmem:[#allocation3 + $0x58] sm:$0xff]
      %v3894 = vld [vmem:[#allocation3 + $0x60] sm:$0xff]
      %v3895 = vld [vmem:[#allocation3 + $0x68] sm:$0xff]
      %v3896 = vld [vmem:[#allocation3 + $0x70] sm:$0xff]
      %v3897 = vld [vmem:[#allocation3 + $0x78] sm:$0xff]
      %v3898 = vld [vmem:[#allocation3 + $0x80] sm:$0xff]
      %v3899 = vld [vmem:[#allocation3 + $0x88] sm:$0xff]
      %v3900 = vld [vmem:[#allocation3 + $0x90] sm:$0xff]
      %v3901 = vld [vmem:[#allocation3 + $0x98] sm:$0xff]
      %v3902 = vld [vmem:[#allocation3 + $0xa0] sm:$0xff]
      %v3903 = vld [vmem:[#allocation3 + $0xa8] sm:$0xff]
      %v3904 = vld [vmem:[#allocation3 + $0xb0] sm:$0xff]
      %v3905 = vld [vmem:[#allocation3 + $0xb8] sm:$0xff]
      %v3906 = vld [vmem:[#allocation3 + $0xc0] sm:$0xff]
      %v3907 = vld [vmem:[#allocation3 + $0xc8] sm:$0xff]
      %v3908 = vld [vmem:[#allocation3 + $0xd0] sm:$0xff]
      %v3909 = vld [vmem:[#allocation3 + $0xd8] sm:$0xff]
      %v3910 = vld [vmem:[#allocation3 + $0xe0] sm:$0xff]
      %v3911 = vld [vmem:[#allocation3 + $0xe8] sm:$0xff]
      %v3912 = vld [vmem:[#allocation3 + $0xf0] sm:$0xff]
      %v3913 = vld [vmem:[#allocation3 + $0xf8] sm:$0xff]
      %v3914 = vsel %vm740, %v3882, 0.0
      %v3915 = vsel %vm741, %v3883, 0.0
      %v3916 = vsel %vm742, %v3884, 0.0
      %v3917 = vsel %vm743, %v3885, 0.0
      %v3918 = vsel %vm744, %v3886, 0.0
      %v3919 = vsel %vm745, %v3887, 0.0
      %v3920 = vsel %vm746, %v3888, 0.0
      %v3921 = vsel %vm747, %v3889, 0.0
      %v3922 = vsel %vm748, %v3890, 0.0
      %v3923 = vsel %vm749, %v3891, 0.0
      %v3924 = vsel %vm750, %v3892, 0.0
      %v3925 = vsel %vm751, %v3893, 0.0
      %v3926 = vsel %vm752, %v3894, 0.0
      %v3927 = vsel %vm753, %v3895, 0.0
      %v3928 = vsel %vm754, %v3896, 0.0
      %v3929 = vsel %vm755, %v3897, 0.0
      %v3930 = vsel %vm756, %v3898, 0.0
      %v3931 = vsel %vm757, %v3899, 0.0
      %v3932 = vsel %vm758, %v3900, 0.0
      %v3933 = vsel %vm759, %v3901, 0.0
      %v3934 = vsel %vm760, %v3902, 0.0
      %v3935 = vsel %vm761, %v3903, 0.0
      %v3936 = vsel %vm762, %v3904, 0.0
      %v3937 = vsel %vm763, %v3905, 0.0
      %v3938 = vsel %vm764, %v3906, 0.0
      %v3939 = vsel %vm765, %v3907, 0.0
      %v3940 = vsel %vm766, %v3908, 0.0
      %v3941 = vsel %vm767, %v3909, 0.0
      %v3942 = vsel %vm768, %v3910, 0.0
      %v3943 = vsel %vm769, %v3911, 0.0
      %v3944 = vsel %vm770, %v3912, 0.0
      %v3945 = vsel %vm771, %v3913, 0.0
      %v3946 = vpack.c.bf16 %v3914, %v3914
      %v3947 = vpack.c.bf16 %v3915, %v3915
      %v3948 = vpack.c.bf16 %v3916, %v3916
      %v3949 = vpack.c.bf16 %v3917, %v3917
      %v3950 = vpack.c.bf16 %v3918, %v3918
      %v3951 = vpack.c.bf16 %v3919, %v3919
      %v3952 = vpack.c.bf16 %v3920, %v3920
      %v3953 = vpack.c.bf16 %v3921, %v3921
      %v3954 = vpack.c.bf16 %v3922, %v3922
      %v3955 = vpack.c.bf16 %v3923, %v3923
      %v3956 = vpack.c.bf16 %v3924, %v3924
      %v3957 = vpack.c.bf16 %v3925, %v3925
      %v3958 = vpack.c.bf16 %v3926, %v3926
      %v3959 = vpack.c.bf16 %v3927, %v3927
      %v3960 = vpack.c.bf16 %v3928, %v3928
      %v3961 = vpack.c.bf16 %v3929, %v3929
      %v3962 = vpack.c.bf16 %v3930, %v3930
      %v3963 = vpack.c.bf16 %v3931, %v3931
      %v3964 = vpack.c.bf16 %v3932, %v3932
      %v3965 = vpack.c.bf16 %v3933, %v3933
      %v3966 = vpack.c.bf16 %v3934, %v3934
      %v3967 = vpack.c.bf16 %v3935, %v3935
      %v3968 = vpack.c.bf16 %v3936, %v3936
      %v3969 = vpack.c.bf16 %v3937, %v3937
      %v3970 = vpack.c.bf16 %v3938, %v3938
      %v3971 = vpack.c.bf16 %v3939, %v3939
      %v3972 = vpack.c.bf16 %v3940, %v3940
      %v3973 = vpack.c.bf16 %v3941, %v3941
      %v3974 = vpack.c.bf16 %v3942, %v3942
      %v3975 = vpack.c.bf16 %v3943, %v3943
      %v3976 = vpack.c.bf16 %v3944, %v3944
      %v3977 = vpack.c.bf16 %v3945, %v3945
      %vm3978 = vcmask 257024
      %3979 = vst.msk [vmem:[#allocation5] sm:$0xf] %vm3978, %v3946
      %3980 = vst.msk [vmem:[#allocation5 + $0xc] sm:$0xf] %vm3978, %v3947
      %3981 = vst.msk [vmem:[#allocation5 + $0x18] sm:$0xf] %vm3978, %v3948
      %3982 = vst.msk [vmem:[#allocation5 + $0x24] sm:$0xf] %vm3978, %v3949
      %3983 = vst.msk [vmem:[#allocation5 + $0x30] sm:$0xf] %vm3978, %v3950
      %3984 = vst.msk [vmem:[#allocation5 + $0x3c] sm:$0xf] %vm3978, %v3951
      %3985 = vst.msk [vmem:[#allocation5 + $0x48] sm:$0xf] %vm3978, %v3952
      %3986 = vst.msk [vmem:[#allocation5 + $0x54] sm:$0xf] %vm3978, %v3953
      %3987 = vst.msk [vmem:[#allocation5 + $0x60] sm:$0xf] %vm3978, %v3954
      %3988 = vst.msk [vmem:[#allocation5 + $0x6c] sm:$0xf] %vm3978, %v3955
      %3989 = vst.msk [vmem:[#allocation5 + $0x78] sm:$0xf] %vm3978, %v3956
      %3990 = vst.msk [vmem:[#allocation5 + $0x84] sm:$0xf] %vm3978, %v3957
      %3991 = vst.msk [vmem:[#allocation5 + $0x90] sm:$0xf] %vm3978, %v3958
      %3992 = vst.msk [vmem:[#allocation5 + $0x9c] sm:$0xf] %vm3978, %v3959
      %3993 = vst.msk [vmem:[#allocation5 + $0xa8] sm:$0xf] %vm3978, %v3960
      %3994 = vst.msk [vmem:[#allocation5 + $0xb4] sm:$0xf] %vm3978, %v3961
      %3995 = vst.msk [vmem:[#allocation5 + $0xc0] sm:$0xf] %vm3978, %v3962
      %3996 = vst.msk [vmem:[#allocation5 + $0xcc] sm:$0xf] %vm3978, %v3963
      %3997 = vst.msk [vmem:[#allocation5 + $0xd8] sm:$0xf] %vm3978, %v3964
      %3998 = vst.msk [vmem:[#allocation5 + $0xe4] sm:$0xf] %vm3978, %v3965
      %3999 = vst.msk [vmem:[#allocation5 + $0xf0] sm:$0xf] %vm3978, %v3966
      %4000 = vst.msk [vmem:[#allocation5 + $0xfc] sm:$0xf] %vm3978, %v3967
      %4001 = vst.msk [vmem:[#allocation5 + $0x108] sm:$0xf] %vm3978, %v3968
      %4002 = vst.msk [vmem:[#allocation5 + $0x114] sm:$0xf] %vm3978, %v3969
      %4003 = vst.msk [vmem:[#allocation5 + $0x120] sm:$0xf] %vm3978, %v3970
      %4004 = vst.msk [vmem:[#allocation5 + $0x12c] sm:$0xf] %vm3978, %v3971
      %4005 = vst.msk [vmem:[#allocation5 + $0x138] sm:$0xf] %vm3978, %v3972
      %4006 = vst.msk [vmem:[#allocation5 + $0x144] sm:$0xf] %vm3978, %v3973
      %4007 = vst.msk [vmem:[#allocation5 + $0x150] sm:$0xf] %vm3978, %v3974
      %4008 = vst.msk [vmem:[#allocation5 + $0x15c] sm:$0xf] %vm3978, %v3975
      %4009 = vst.msk [vmem:[#allocation5 + $0x168] sm:$0xf] %vm3978, %v3976
      %4010 = vst.msk [vmem:[#allocation5 + $0x174] sm:$0xf] %vm3978, %v3977
      %v4011 = vld [vmem:[#allocation3 + $0x1] sm:$0xff]
      %v4012 = vld [vmem:[#allocation3 + $0x9] sm:$0xff]
      %v4013 = vld [vmem:[#allocation3 + $0x11] sm:$0xff]
      %v4014 = vld [vmem:[#allocation3 + $0x19] sm:$0xff]
      %v4015 = vld [vmem:[#allocation3 + $0x21] sm:$0xff]
      %v4016 = vld [vmem:[#allocation3 + $0x29] sm:$0xff]
      %v4017 = vld [vmem:[#allocation3 + $0x31] sm:$0xff]
      %v4018 = vld [vmem:[#allocation3 + $0x39] sm:$0xff]
      %v4019 = vld [vmem:[#allocation3 + $0x41] sm:$0xff]
      %v4020 = vld [vmem:[#allocation3 + $0x49] sm:$0xff]
      %v4021 = vld [vmem:[#allocation3 + $0x51] sm:$0xff]
      %v4022 = vld [vmem:[#allocation3 + $0x59] sm:$0xff]
      %v4023 = vld [vmem:[#allocation3 + $0x61] sm:$0xff]
      %v4024 = vld [vmem:[#allocation3 + $0x69] sm:$0xff]
      %v4025 = vld [vmem:[#allocation3 + $0x71] sm:$0xff]
      %v4026 = vld [vmem:[#allocation3 + $0x79] sm:$0xff]
      %v4027 = vld [vmem:[#allocation3 + $0x81] sm:$0xff]
      %v4028 = vld [vmem:[#allocation3 + $0x89] sm:$0xff]
      %v4029 = vld [vmem:[#allocation3 + $0x91] sm:$0xff]
      %v4030 = vld [vmem:[#allocation3 + $0x99] sm:$0xff]
      %v4031 = vld [vmem:[#allocation3 + $0xa1] sm:$0xff]
      %v4032 = vld [vmem:[#allocation3 + $0xa9] sm:$0xff]
      %v4033 = vld [vmem:[#allocation3 + $0xb1] sm:$0xff]
      %v4034 = vld [vmem:[#allocation3 + $0xb9] sm:$0xff]
      %v4035 = vld [vmem:[#allocation3 + $0xc1] sm:$0xff]
      %v4036 = vld [vmem:[#allocation3 + $0xc9] sm:$0xff]
      %v4037 = vld [vmem:[#allocation3 + $0xd1] sm:$0xff]
      %v4038 = vld [vmem:[#allocation3 + $0xd9] sm:$0xff]
      %v4039 = vld [vmem:[#allocation3 + $0xe1] sm:$0xff]
      %v4040 = vld [vmem:[#allocation3 + $0xe9] sm:$0xff]
      %v4041 = vld [vmem:[#allocation3 + $0xf1] sm:$0xff]
      %v4042 = vld [vmem:[#allocation3 + $0xf9] sm:$0xff]
      %v4043 = vsel %vm933, %v4011, 0.0
      %v4044 = vsel %vm934, %v4012, 0.0
      %v4045 = vsel %vm935, %v4013, 0.0
      %v4046 = vsel %vm936, %v4014, 0.0
      %v4047 = vsel %vm937, %v4015, 0.0
      %v4048 = vsel %vm938, %v4016, 0.0
      %v4049 = vsel %vm939, %v4017, 0.0
      %v4050 = vsel %vm940, %v4018, 0.0
      %v4051 = vsel %vm941, %v4019, 0.0
      %v4052 = vsel %vm942, %v4020, 0.0
      %v4053 = vsel %vm943, %v4021, 0.0
      %v4054 = vsel %vm944, %v4022, 0.0
      %v4055 = vsel %vm945, %v4023, 0.0
      %v4056 = vsel %vm946, %v4024, 0.0
      %v4057 = vsel %vm947, %v4025, 0.0
      %v4058 = vsel %vm948, %v4026, 0.0
      %v4059 = vsel %vm949, %v4027, 0.0
      %v4060 = vsel %vm950, %v4028, 0.0
      %v4061 = vsel %vm951, %v4029, 0.0
      %v4062 = vsel %vm952, %v4030, 0.0
      %v4063 = vsel %vm953, %v4031, 0.0
      %v4064 = vsel %vm954, %v4032, 0.0
      %v4065 = vsel %vm955, %v4033, 0.0
      %v4066 = vsel %vm956, %v4034, 0.0
      %v4067 = vsel %vm957, %v4035, 0.0
      %v4068 = vsel %vm958, %v4036, 0.0
      %v4069 = vsel %vm959, %v4037, 0.0
      %v4070 = vsel %vm960, %v4038, 0.0
      %v4071 = vsel %vm961, %v4039, 0.0
      %v4072 = vsel %vm962, %v4040, 0.0
      %v4073 = vsel %vm963, %v4041, 0.0
      %v4074 = vsel %vm964, %v4042, 0.0
      %v4075 = vpack.c.bf16 %v4043, %v4043
      %v4076 = vpack.c.bf16 %v4044, %v4044
      %v4077 = vpack.c.bf16 %v4045, %v4045
      %v4078 = vpack.c.bf16 %v4046, %v4046
      %v4079 = vpack.c.bf16 %v4047, %v4047
      %v4080 = vpack.c.bf16 %v4048, %v4048
      %v4081 = vpack.c.bf16 %v4049, %v4049
      %v4082 = vpack.c.bf16 %v4050, %v4050
      %v4083 = vpack.c.bf16 %v4051, %v4051
      %v4084 = vpack.c.bf16 %v4052, %v4052
      %v4085 = vpack.c.bf16 %v4053, %v4053
      %v4086 = vpack.c.bf16 %v4054, %v4054
      %v4087 = vpack.c.bf16 %v4055, %v4055
      %v4088 = vpack.c.bf16 %v4056, %v4056
      %v4089 = vpack.c.bf16 %v4057, %v4057
      %v4090 = vpack.c.bf16 %v4058, %v4058
      %v4091 = vpack.c.bf16 %v4059, %v4059
      %v4092 = vpack.c.bf16 %v4060, %v4060
      %v4093 = vpack.c.bf16 %v4061, %v4061
      %v4094 = vpack.c.bf16 %v4062, %v4062
      %v4095 = vpack.c.bf16 %v4063, %v4063
      %v4096 = vpack.c.bf16 %v4064, %v4064
      %v4097 = vpack.c.bf16 %v4065, %v4065
      %v4098 = vpack.c.bf16 %v4066, %v4066
      %v4099 = vpack.c.bf16 %v4067, %v4067
      %v4100 = vpack.c.bf16 %v4068, %v4068
      %v4101 = vpack.c.bf16 %v4069, %v4069
      %v4102 = vpack.c.bf16 %v4070, %v4070
      %v4103 = vpack.c.bf16 %v4071, %v4071
      %v4104 = vpack.c.bf16 %v4072, %v4072
      %v4105 = vpack.c.bf16 %v4073, %v4073
      %v4106 = vpack.c.bf16 %v4074, %v4074
      %4139 = vrot.lane.b32.xlu0 %v4075, 32
      %v4140 = vpop.permute.xlu0 %4139
      %4141 = vrot.lane.b32.xlu0 %v4076, 32
      %v4142 = vpop.permute.xlu0 %4141
      %4143 = vrot.lane.b32.xlu0 %v4077, 32
      %v4144 = vpop.permute.xlu0 %4143
      %4145 = vrot.lane.b32.xlu0 %v4078, 32
      %v4146 = vpop.permute.xlu0 %4145
      %4147 = vrot.lane.b32.xlu0 %v4079, 32
      %v4148 = vpop.permute.xlu0 %4147
      %4149 = vrot.lane.b32.xlu0 %v4080, 32
      %v4150 = vpop.permute.xlu0 %4149
      %4151 = vrot.lane.b32.xlu0 %v4081, 32
      %v4152 = vpop.permute.xlu0 %4151
      %4153 = vrot.lane.b32.xlu0 %v4082, 32
      %v4154 = vpop.permute.xlu0 %4153
      %4155 = vrot.lane.b32.xlu0 %v4083, 32
      %v4156 = vpop.permute.xlu0 %4155
      %4157 = vrot.lane.b32.xlu0 %v4084, 32
      %v4158 = vpop.permute.xlu0 %4157
      %4159 = vrot.lane.b32.xlu0 %v4085, 32
      %v4160 = vpop.permute.xlu0 %4159
      %4161 = vrot.lane.b32.xlu0 %v4086, 32
      %v4162 = vpop.permute.xlu0 %4161
      %4163 = vrot.lane.b32.xlu0 %v4087, 32
      %v4164 = vpop.permute.xlu0 %4163
      %4165 = vrot.lane.b32.xlu0 %v4088, 32
      %v4166 = vpop.permute.xlu0 %4165
      %4167 = vrot.lane.b32.xlu0 %v4089, 32
      %v4168 = vpop.permute.xlu0 %4167
      %4169 = vrot.lane.b32.xlu0 %v4090, 32
      %v4170 = vpop.permute.xlu0 %4169
      %4171 = vrot.lane.b32.xlu0 %v4091, 32
      %v4172 = vpop.permute.xlu0 %4171
      %4173 = vrot.lane.b32.xlu0 %v4092, 32
      %v4174 = vpop.permute.xlu0 %4173
      %4175 = vrot.lane.b32.xlu0 %v4093, 32
      %v4176 = vpop.permute.xlu0 %4175
      %4177 = vrot.lane.b32.xlu0 %v4094, 32
      %v4178 = vpop.permute.xlu0 %4177
      %4179 = vrot.lane.b32.xlu0 %v4095, 32
      %v4180 = vpop.permute.xlu0 %4179
      %4181 = vrot.lane.b32.xlu0 %v4096, 32
      %v4182 = vpop.permute.xlu0 %4181
      %4183 = vrot.lane.b32.xlu0 %v4097, 32
      %v4184 = vpop.permute.xlu0 %4183
      %4185 = vrot.lane.b32.xlu0 %v4098, 32
      %v4186 = vpop.permute.xlu0 %4185
      %4187 = vrot.lane.b32.xlu0 %v4099, 32
      %v4188 = vpop.permute.xlu0 %4187
      %4189 = vrot.lane.b32.xlu0 %v4100, 32
      %v4190 = vpop.permute.xlu0 %4189
      %4191 = vrot.lane.b32.xlu0 %v4101, 32
      %v4192 = vpop.permute.xlu0 %4191
      %4193 = vrot.lane.b32.xlu0 %v4102, 32
      %v4194 = vpop.permute.xlu0 %4193
      %4195 = vrot.lane.b32.xlu0 %v4103, 32
      %v4196 = vpop.permute.xlu0 %4195
      %4197 = vrot.lane.b32.xlu0 %v4104, 32
      %v4198 = vpop.permute.xlu0 %4197
      %4199 = vrot.lane.b32.xlu0 %v4105, 32
      %v4200 = vpop.permute.xlu0 %4199
      %4201 = vrot.lane.b32.xlu0 %v4106, 32
      %v4202 = vpop.permute.xlu0 %4201
      %vm4235 = vcmask 519424
      %4236 = vst.msk [vmem:[#allocation5] sm:$0xf] %vm4235, %v4140
      %4237 = vst.msk [vmem:[#allocation5 + $0xc] sm:$0xf] %vm4235, %v4142
      %4238 = vst.msk [vmem:[#allocation5 + $0x18] sm:$0xf] %vm4235, %v4144
      %4239 = vst.msk [vmem:[#allocation5 + $0x24] sm:$0xf] %vm4235, %v4146
      %4240 = vst.msk [vmem:[#allocation5 + $0x30] sm:$0xf] %vm4235, %v4148
      %4241 = vst.msk [vmem:[#allocation5 + $0x3c] sm:$0xf] %vm4235, %v4150
      %4242 = vst.msk [vmem:[#allocation5 + $0x48] sm:$0xf] %vm4235, %v4152
      %4243 = vst.msk [vmem:[#allocation5 + $0x54] sm:$0xf] %vm4235, %v4154
      %4244 = vst.msk [vmem:[#allocation5 + $0x60] sm:$0xf] %vm4235, %v4156
      %4245 = vst.msk [vmem:[#allocation5 + $0x6c] sm:$0xf] %vm4235, %v4158
      %4246 = vst.msk [vmem:[#allocation5 + $0x78] sm:$0xf] %vm4235, %v4160
      %4247 = vst.msk [vmem:[#allocation5 + $0x84] sm:$0xf] %vm4235, %v4162
      %4248 = vst.msk [vmem:[#allocation5 + $0x90] sm:$0xf] %vm4235, %v4164
      %4249 = vst.msk [vmem:[#allocation5 + $0x9c] sm:$0xf] %vm4235, %v4166
      %4250 = vst.msk [vmem:[#allocation5 + $0xa8] sm:$0xf] %vm4235, %v4168
      %4251 = vst.msk [vmem:[#allocation5 + $0xb4] sm:$0xf] %vm4235, %v4170
      %4252 = vst.msk [vmem:[#allocation5 + $0xc0] sm:$0xf] %vm4235, %v4172
      %4253 = vst.msk [vmem:[#allocation5 + $0xcc] sm:$0xf] %vm4235, %v4174
      %4254 = vst.msk [vmem:[#allocation5 + $0xd8] sm:$0xf] %vm4235, %v4176
      %4255 = vst.msk [vmem:[#allocation5 + $0xe4] sm:$0xf] %vm4235, %v4178
      %4256 = vst.msk [vmem:[#allocation5 + $0xf0] sm:$0xf] %vm4235, %v4180
      %4257 = vst.msk [vmem:[#allocation5 + $0xfc] sm:$0xf] %vm4235, %v4182
      %4258 = vst.msk [vmem:[#allocation5 + $0x108] sm:$0xf] %vm4235, %v4184
      %4259 = vst.msk [vmem:[#allocation5 + $0x114] sm:$0xf] %vm4235, %v4186
      %4260 = vst.msk [vmem:[#allocation5 + $0x120] sm:$0xf] %vm4235, %v4188
      %4261 = vst.msk [vmem:[#allocation5 + $0x12c] sm:$0xf] %vm4235, %v4190
      %4262 = vst.msk [vmem:[#allocation5 + $0x138] sm:$0xf] %vm4235, %v4192
      %4263 = vst.msk [vmem:[#allocation5 + $0x144] sm:$0xf] %vm4235, %v4194
      %4264 = vst.msk [vmem:[#allocation5 + $0x150] sm:$0xf] %vm4235, %v4196
      %4265 = vst.msk [vmem:[#allocation5 + $0x15c] sm:$0xf] %vm4235, %v4198
      %4266 = vst.msk [vmem:[#allocation5 + $0x168] sm:$0xf] %vm4235, %v4200
      %4267 = vst.msk [vmem:[#allocation5 + $0x174] sm:$0xf] %vm4235, %v4202
      %v4268 = vld [vmem:[#allocation3 + $0x2] sm:$0xff]
      %v4269 = vld [vmem:[#allocation3 + $0xa] sm:$0xff]
      %v4270 = vld [vmem:[#allocation3 + $0x12] sm:$0xff]
      %v4271 = vld [vmem:[#allocation3 + $0x1a] sm:$0xff]
      %v4272 = vld [vmem:[#allocation3 + $0x22] sm:$0xff]
      %v4273 = vld [vmem:[#allocation3 + $0x2a] sm:$0xff]
      %v4274 = vld [vmem:[#allocation3 + $0x32] sm:$0xff]
      %v4275 = vld [vmem:[#allocation3 + $0x3a] sm:$0xff]
      %v4276 = vld [vmem:[#allocation3 + $0x42] sm:$0xff]
      %v4277 = vld [vmem:[#allocation3 + $0x4a] sm:$0xff]
      %v4278 = vld [vmem:[#allocation3 + $0x52] sm:$0xff]
      %v4279 = vld [vmem:[#allocation3 + $0x5a] sm:$0xff]
      %v4280 = vld [vmem:[#allocation3 + $0x62] sm:$0xff]
      %v4281 = vld [vmem:[#allocation3 + $0x6a] sm:$0xff]
      %v4282 = vld [vmem:[#allocation3 + $0x72] sm:$0xff]
      %v4283 = vld [vmem:[#allocation3 + $0x7a] sm:$0xff]
      %v4284 = vld [vmem:[#allocation3 + $0x82] sm:$0xff]
      %v4285 = vld [vmem:[#allocation3 + $0x8a] sm:$0xff]
      %v4286 = vld [vmem:[#allocation3 + $0x92] sm:$0xff]
      %v4287 = vld [vmem:[#allocation3 + $0x9a] sm:$0xff]
      %v4288 = vld [vmem:[#allocation3 + $0xa2] sm:$0xff]
      %v4289 = vld [vmem:[#allocation3 + $0xaa] sm:$0xff]
      %v4290 = vld [vmem:[#allocation3 + $0xb2] sm:$0xff]
      %v4291 = vld [vmem:[#allocation3 + $0xba] sm:$0xff]
      %v4292 = vld [vmem:[#allocation3 + $0xc2] sm:$0xff]
      %v4293 = vld [vmem:[#allocation3 + $0xca] sm:$0xff]
      %v4294 = vld [vmem:[#allocation3 + $0xd2] sm:$0xff]
      %v4295 = vld [vmem:[#allocation3 + $0xda] sm:$0xff]
      %v4296 = vld [vmem:[#allocation3 + $0xe2] sm:$0xff]
      %v4297 = vld [vmem:[#allocation3 + $0xea] sm:$0xff]
      %v4298 = vld [vmem:[#allocation3 + $0xf2] sm:$0xff]
      %v4299 = vld [vmem:[#allocation3 + $0xfa] sm:$0xff]
      %v4300 = vsel %vm1318, %v4268, 0.0
      %v4301 = vsel %vm1319, %v4269, 0.0
      %v4302 = vsel %vm1320, %v4270, 0.0
      %v4303 = vsel %vm1321, %v4271, 0.0
      %v4304 = vsel %vm1322, %v4272, 0.0
      %v4305 = vsel %vm1323, %v4273, 0.0
      %v4306 = vsel %vm1324, %v4274, 0.0
      %v4307 = vsel %vm1325, %v4275, 0.0
      %v4308 = vsel %vm1326, %v4276, 0.0
      %v4309 = vsel %vm1327, %v4277, 0.0
      %v4310 = vsel %vm1328, %v4278, 0.0
      %v4311 = vsel %vm1329, %v4279, 0.0
      %v4312 = vsel %vm1330, %v4280, 0.0
      %v4313 = vsel %vm1331, %v4281, 0.0
      %v4314 = vsel %vm1332, %v4282, 0.0
      %v4315 = vsel %vm1333, %v4283, 0.0
      %v4316 = vsel %vm1334, %v4284, 0.0
      %v4317 = vsel %vm1335, %v4285, 0.0
      %v4318 = vsel %vm1336, %v4286, 0.0
      %v4319 = vsel %vm1337, %v4287, 0.0
      %v4320 = vsel %vm1338, %v4288, 0.0
      %v4321 = vsel %vm1339, %v4289, 0.0
      %v4322 = vsel %vm1340, %v4290, 0.0
      %v4323 = vsel %vm1341, %v4291, 0.0
      %v4324 = vsel %vm1342, %v4292, 0.0
      %v4325 = vsel %vm1343, %v4293, 0.0
      %v4326 = vsel %vm1344, %v4294, 0.0
      %v4327 = vsel %vm1345, %v4295, 0.0
      %v4328 = vsel %vm1346, %v4296, 0.0
      %v4329 = vsel %vm1347, %v4297, 0.0
      %v4330 = vsel %vm1348, %v4298, 0.0
      %v4331 = vsel %vm1349, %v4299, 0.0
      %v4332 = vpack.c.bf16 %v4300, %v4300
      %v4333 = vpack.c.bf16 %v4301, %v4301
      %v4334 = vpack.c.bf16 %v4302, %v4302
      %v4335 = vpack.c.bf16 %v4303, %v4303
      %v4336 = vpack.c.bf16 %v4304, %v4304
      %v4337 = vpack.c.bf16 %v4305, %v4305
      %v4338 = vpack.c.bf16 %v4306, %v4306
      %v4339 = vpack.c.bf16 %v4307, %v4307
      %v4340 = vpack.c.bf16 %v4308, %v4308
      %v4341 = vpack.c.bf16 %v4309, %v4309
      %v4342 = vpack.c.bf16 %v4310, %v4310
      %v4343 = vpack.c.bf16 %v4311, %v4311
      %v4344 = vpack.c.bf16 %v4312, %v4312
      %v4345 = vpack.c.bf16 %v4313, %v4313
      %v4346 = vpack.c.bf16 %v4314, %v4314
      %v4347 = vpack.c.bf16 %v4315, %v4315
      %v4348 = vpack.c.bf16 %v4316, %v4316
      %v4349 = vpack.c.bf16 %v4317, %v4317
      %v4350 = vpack.c.bf16 %v4318, %v4318
      %v4351 = vpack.c.bf16 %v4319, %v4319
      %v4352 = vpack.c.bf16 %v4320, %v4320
      %v4353 = vpack.c.bf16 %v4321, %v4321
      %v4354 = vpack.c.bf16 %v4322, %v4322
      %v4355 = vpack.c.bf16 %v4323, %v4323
      %v4356 = vpack.c.bf16 %v4324, %v4324
      %v4357 = vpack.c.bf16 %v4325, %v4325
      %v4358 = vpack.c.bf16 %v4326, %v4326
      %v4359 = vpack.c.bf16 %v4327, %v4327
      %v4360 = vpack.c.bf16 %v4328, %v4328
      %v4361 = vpack.c.bf16 %v4329, %v4329
      %v4362 = vpack.c.bf16 %v4330, %v4330
      %v4363 = vpack.c.bf16 %v4331, %v4331
      %4396 = vrot.lane.b32.xlu0 %v4332, 64
      %v4397 = vpop.permute.xlu0 %4396
      %4398 = vrot.lane.b32.xlu0 %v4333, 64
      %v4399 = vpop.permute.xlu0 %4398
      %4400 = vrot.lane.b32.xlu0 %v4334, 64
      %v4401 = vpop.permute.xlu0 %4400
      %4402 = vrot.lane.b32.xlu0 %v4335, 64
      %v4403 = vpop.permute.xlu0 %4402
      %4404 = vrot.lane.b32.xlu0 %v4336, 64
      %v4405 = vpop.permute.xlu0 %4404
      %4406 = vrot.lane.b32.xlu0 %v4337, 64
      %v4407 = vpop.permute.xlu0 %4406
      %4408 = vrot.lane.b32.xlu0 %v4338, 64
      %v4409 = vpop.permute.xlu0 %4408
      %4410 = vrot.lane.b32.xlu0 %v4339, 64
      %v4411 = vpop.permute.xlu0 %4410
      %4412 = vrot.lane.b32.xlu0 %v4340, 64
      %v4413 = vpop.permute.xlu0 %4412
      %4414 = vrot.lane.b32.xlu0 %v4341, 64
      %v4415 = vpop.permute.xlu0 %4414
      %4416 = vrot.lane.b32.xlu0 %v4342, 64
      %v4417 = vpop.permute.xlu0 %4416
      %4418 = vrot.lane.b32.xlu0 %v4343, 64
      %v4419 = vpop.permute.xlu0 %4418
      %4420 = vrot.lane.b32.xlu0 %v4344, 64
      %v4421 = vpop.permute.xlu0 %4420
      %4422 = vrot.lane.b32.xlu0 %v4345, 64
      %v4423 = vpop.permute.xlu0 %4422
      %4424 = vrot.lane.b32.xlu0 %v4346, 64
      %v4425 = vpop.permute.xlu0 %4424
      %4426 = vrot.lane.b32.xlu0 %v4347, 64
      %v4427 = vpop.permute.xlu0 %4426
      %4428 = vrot.lane.b32.xlu0 %v4348, 64
      %v4429 = vpop.permute.xlu0 %4428
      %4430 = vrot.lane.b32.xlu0 %v4349, 64
      %v4431 = vpop.permute.xlu0 %4430
      %4432 = vrot.lane.b32.xlu0 %v4350, 64
      %v4433 = vpop.permute.xlu0 %4432
      %4434 = vrot.lane.b32.xlu0 %v4351, 64
      %v4435 = vpop.permute.xlu0 %4434
      %4436 = vrot.lane.b32.xlu0 %v4352, 64
      %v4437 = vpop.permute.xlu0 %4436
      %4438 = vrot.lane.b32.xlu0 %v4353, 64
      %v4439 = vpop.permute.xlu0 %4438
      %4440 = vrot.lane.b32.xlu0 %v4354, 64
      %v4441 = vpop.permute.xlu0 %4440
      %4442 = vrot.lane.b32.xlu0 %v4355, 64
      %v4443 = vpop.permute.xlu0 %4442
      %4444 = vrot.lane.b32.xlu0 %v4356, 64
      %v4445 = vpop.permute.xlu0 %4444
      %4446 = vrot.lane.b32.xlu0 %v4357, 64
      %v4447 = vpop.permute.xlu0 %4446
      %4448 = vrot.lane.b32.xlu0 %v4358, 64
      %v4449 = vpop.permute.xlu0 %4448
      %4450 = vrot.lane.b32.xlu0 %v4359, 64
      %v4451 = vpop.permute.xlu0 %4450
      %4452 = vrot.lane.b32.xlu0 %v4360, 64
      %v4453 = vpop.permute.xlu0 %4452
      %4454 = vrot.lane.b32.xlu0 %v4361, 64
      %v4455 = vpop.permute.xlu0 %4454
      %4456 = vrot.lane.b32.xlu0 %v4362, 64
      %v4457 = vpop.permute.xlu0 %4456
      %4458 = vrot.lane.b32.xlu0 %v4363, 64
      %v4459 = vpop.permute.xlu0 %4458
      %vm4492 = vcmask 781824
      %4493 = vst.msk [vmem:[#allocation5] sm:$0xf] %vm4492, %v4397
      %4494 = vst.msk [vmem:[#allocation5 + $0xc] sm:$0xf] %vm4492, %v4399
      %4495 = vst.msk [vmem:[#allocation5 + $0x18] sm:$0xf] %vm4492, %v4401
      %4496 = vst.msk [vmem:[#allocation5 + $0x24] sm:$0xf] %vm4492, %v4403
      %4497 = vst.msk [vmem:[#allocation5 + $0x30] sm:$0xf] %vm4492, %v4405
      %4498 = vst.msk [vmem:[#allocation5 + $0x3c] sm:$0xf] %vm4492, %v4407
      %4499 = vst.msk [vmem:[#allocation5 + $0x48] sm:$0xf] %vm4492, %v4409
      %4500 = vst.msk [vmem:[#allocation5 + $0x54] sm:$0xf] %vm4492, %v4411
      %4501 = vst.msk [vmem:[#allocation5 + $0x60] sm:$0xf] %vm4492, %v4413
      %4502 = vst.msk [vmem:[#allocation5 + $0x6c] sm:$0xf] %vm4492, %v4415
      %4503 = vst.msk [vmem:[#allocation5 + $0x78] sm:$0xf] %vm4492, %v4417
      %4504 = vst.msk [vmem:[#allocation5 + $0x84] sm:$0xf] %vm4492, %v4419
      %4505 = vst.msk [vmem:[#allocation5 + $0x90] sm:$0xf] %vm4492, %v4421
      %4506 = vst.msk [vmem:[#allocation5 + $0x9c] sm:$0xf] %vm4492, %v4423
      %4507 = vst.msk [vmem:[#allocation5 + $0xa8] sm:$0xf] %vm4492, %v4425
      %4508 = vst.msk [vmem:[#allocation5 + $0xb4] sm:$0xf] %vm4492, %v4427
      %4509 = vst.msk [vmem:[#allocation5 + $0xc0] sm:$0xf] %vm4492, %v4429
      %4510 = vst.msk [vmem:[#allocation5 + $0xcc] sm:$0xf] %vm4492, %v4431
      %4511 = vst.msk [vmem:[#allocation5 + $0xd8] sm:$0xf] %vm4492, %v4433
      %4512 = vst.msk [vmem:[#allocation5 + $0xe4] sm:$0xf] %vm4492, %v4435
      %4513 = vst.msk [vmem:[#allocation5 + $0xf0] sm:$0xf] %vm4492, %v4437
      %4514 = vst.msk [vmem:[#allocation5 + $0xfc] sm:$0xf] %vm4492, %v4439
      %4515 = vst.msk [vmem:[#allocation5 + $0x108] sm:$0xf] %vm4492, %v4441
      %4516 = vst.msk [vmem:[#allocation5 + $0x114] sm:$0xf] %vm4492, %v4443
      %4517 = vst.msk [vmem:[#allocation5 + $0x120] sm:$0xf] %vm4492, %v4445
      %4518 = vst.msk [vmem:[#allocation5 + $0x12c] sm:$0xf] %vm4492, %v4447
      %4519 = vst.msk [vmem:[#allocation5 + $0x138] sm:$0xf] %vm4492, %v4449
      %4520 = vst.msk [vmem:[#allocation5 + $0x144] sm:$0xf] %vm4492, %v4451
      %4521 = vst.msk [vmem:[#allocation5 + $0x150] sm:$0xf] %vm4492, %v4453
      %4522 = vst.msk [vmem:[#allocation5 + $0x15c] sm:$0xf] %vm4492, %v4455
      %4523 = vst.msk [vmem:[#allocation5 + $0x168] sm:$0xf] %vm4492, %v4457
      %4524 = vst.msk [vmem:[#allocation5 + $0x174] sm:$0xf] %vm4492, %v4459
      %v4525 = vld [vmem:[#allocation3 + $0x10] sm:$0xff]
      %v4526 = vld [vmem:[#allocation3 + $0x18] sm:$0xff]
      %v4527 = vld [vmem:[#allocation3 + $0x20] sm:$0xff]
      %v4528 = vld [vmem:[#allocation3 + $0x28] sm:$0xff]
      %v4529 = vld [vmem:[#allocation3 + $0x30] sm:$0xff]
      %v4530 = vld [vmem:[#allocation3 + $0x38] sm:$0xff]
      %v4531 = vld [vmem:[#allocation3 + $0x40] sm:$0xff]
      %v4532 = vld [vmem:[#allocation3 + $0x48] sm:$0xff]
      %v4533 = vld [vmem:[#allocation3 + $0x50] sm:$0xff]
      %v4534 = vld [vmem:[#allocation3 + $0x58] sm:$0xff]
      %v4535 = vld [vmem:[#allocation3 + $0x60] sm:$0xff]
      %v4536 = vld [vmem:[#allocation3 + $0x68] sm:$0xff]
      %v4537 = vld [vmem:[#allocation3 + $0x70] sm:$0xff]
      %v4538 = vld [vmem:[#allocation3 + $0x78] sm:$0xff]
      %v4539 = vld [vmem:[#allocation3 + $0x80] sm:$0xff]
      %v4540 = vld [vmem:[#allocation3 + $0x88] sm:$0xff]
      %v4541 = vld [vmem:[#allocation3 + $0x90] sm:$0xff]
      %v4542 = vld [vmem:[#allocation3 + $0x98] sm:$0xff]
      %v4543 = vld [vmem:[#allocation3 + $0xa0] sm:$0xff]
      %v4544 = vld [vmem:[#allocation3 + $0xa8] sm:$0xff]
      %v4545 = vld [vmem:[#allocation3 + $0xb0] sm:$0xff]
      %v4546 = vld [vmem:[#allocation3 + $0xb8] sm:$0xff]
      %v4547 = vld [vmem:[#allocation3 + $0xc0] sm:$0xff]
      %v4548 = vld [vmem:[#allocation3 + $0xc8] sm:$0xff]
      %v4549 = vld [vmem:[#allocation3 + $0xd0] sm:$0xff]
      %v4550 = vld [vmem:[#allocation3 + $0xd8] sm:$0xff]
      %v4551 = vld [vmem:[#allocation3 + $0xe0] sm:$0xff]
      %v4552 = vld [vmem:[#allocation3 + $0xe8] sm:$0xff]
      %v4553 = vld [vmem:[#allocation3 + $0xf0] sm:$0xff]
      %v4554 = vld [vmem:[#allocation3 + $0xf8] sm:$0xff]
      %v4555 = vld [vmem:[#allocation3 + $0x100] sm:$0xff]
      %v4556 = vld [vmem:[#allocation3 + $0x108] sm:$0xff]
      %v4557 = vsel %vm1639, %v4525, 0.0
      %v4558 = vsel %vm1640, %v4526, 0.0
      %v4559 = vsel %vm1641, %v4527, 0.0
      %v4560 = vsel %vm1642, %v4528, 0.0
      %v4561 = vsel %vm1643, %v4529, 0.0
      %v4562 = vsel %vm1644, %v4530, 0.0
      %v4563 = vsel %vm1645, %v4531, 0.0
      %v4564 = vsel %vm1646, %v4532, 0.0
      %v4565 = vsel %vm1647, %v4533, 0.0
      %v4566 = vsel %vm1648, %v4534, 0.0
      %v4567 = vsel %vm1649, %v4535, 0.0
      %v4568 = vsel %vm1650, %v4536, 0.0
      %v4569 = vsel %vm1651, %v4537, 0.0
      %v4570 = vsel %vm1652, %v4538, 0.0
      %v4571 = vsel %vm1653, %v4539, 0.0
      %v4572 = vsel %vm1654, %v4540, 0.0
      %v4573 = vsel %vm1655, %v4541, 0.0
      %v4574 = vsel %vm1656, %v4542, 0.0
      %v4575 = vsel %vm1657, %v4543, 0.0
      %v4576 = vsel %vm1658, %v4544, 0.0
      %v4577 = vsel %vm1659, %v4545, 0.0
      %v4578 = vsel %vm1660, %v4546, 0.0
      %v4579 = vsel %vm1661, %v4547, 0.0
      %v4580 = vsel %vm1662, %v4548, 0.0
      %v4581 = vsel %vm1663, %v4549, 0.0
      %v4582 = vsel %vm1664, %v4550, 0.0
      %v4583 = vsel %vm1665, %v4551, 0.0
      %v4584 = vsel %vm1666, %v4552, 0.0
      %v4585 = vsel %vm1667, %v4553, 0.0
      %v4586 = vsel %vm1668, %v4554, 0.0
      %v4587 = vsel %vm1669, %v4555, 0.0
      %v4588 = vsel %vm1670, %v4556, 0.0
      %v4589 = vpack.c.bf16 %v4557, %v4557
      %v4590 = vpack.c.bf16 %v4558, %v4558
      %v4591 = vpack.c.bf16 %v4559, %v4559
      %v4592 = vpack.c.bf16 %v4560, %v4560
      %v4593 = vpack.c.bf16 %v4561, %v4561
      %v4594 = vpack.c.bf16 %v4562, %v4562
      %v4595 = vpack.c.bf16 %v4563, %v4563
      %v4596 = vpack.c.bf16 %v4564, %v4564
      %v4597 = vpack.c.bf16 %v4565, %v4565
      %v4598 = vpack.c.bf16 %v4566, %v4566
      %v4599 = vpack.c.bf16 %v4567, %v4567
      %v4600 = vpack.c.bf16 %v4568, %v4568
      %v4601 = vpack.c.bf16 %v4569, %v4569
      %v4602 = vpack.c.bf16 %v4570, %v4570
      %v4603 = vpack.c.bf16 %v4571, %v4571
      %v4604 = vpack.c.bf16 %v4572, %v4572
      %v4605 = vpack.c.bf16 %v4573, %v4573
      %v4606 = vpack.c.bf16 %v4574, %v4574
      %v4607 = vpack.c.bf16 %v4575, %v4575
      %v4608 = vpack.c.bf16 %v4576, %v4576
      %v4609 = vpack.c.bf16 %v4577, %v4577
      %v4610 = vpack.c.bf16 %v4578, %v4578
      %v4611 = vpack.c.bf16 %v4579, %v4579
      %v4612 = vpack.c.bf16 %v4580, %v4580
      %v4613 = vpack.c.bf16 %v4581, %v4581
      %v4614 = vpack.c.bf16 %v4582, %v4582
      %v4615 = vpack.c.bf16 %v4583, %v4583
      %v4616 = vpack.c.bf16 %v4584, %v4584
      %v4617 = vpack.c.bf16 %v4585, %v4585
      %v4618 = vpack.c.bf16 %v4586, %v4586
      %v4619 = vpack.c.bf16 %v4587, %v4587
      %v4620 = vpack.c.bf16 %v4588, %v4588
      %4653 = vrot.lane.b32.xlu0 %v4589, 96
      %v4654 = vpop.permute.xlu0 %4653
      %4655 = vrot.lane.b32.xlu0 %v4590, 96
      %v4656 = vpop.permute.xlu0 %4655
      %4657 = vrot.lane.b32.xlu0 %v4591, 96
      %v4658 = vpop.permute.xlu0 %4657
      %4659 = vrot.lane.b32.xlu0 %v4592, 96
      %v4660 = vpop.permute.xlu0 %4659
      %4661 = vrot.lane.b32.xlu0 %v4593, 96
      %v4662 = vpop.permute.xlu0 %4661
      %4663 = vrot.lane.b32.xlu0 %v4594, 96
      %v4664 = vpop.permute.xlu0 %4663
      %4665 = vrot.lane.b32.xlu0 %v4595, 96
      %v4666 = vpop.permute.xlu0 %4665
      %4667 = vrot.lane.b32.xlu0 %v4596, 96
      %v4668 = vpop.permute.xlu0 %4667
      %4669 = vrot.lane.b32.xlu0 %v4597, 96
      %v4670 = vpop.permute.xlu0 %4669
      %4671 = vrot.lane.b32.xlu0 %v4598, 96
      %v4672 = vpop.permute.xlu0 %4671
      %4673 = vrot.lane.b32.xlu0 %v4599, 96
      %v4674 = vpop.permute.xlu0 %4673
      %4675 = vrot.lane.b32.xlu0 %v4600, 96
      %v4676 = vpop.permute.xlu0 %4675
      %4677 = vrot.lane.b32.xlu0 %v4601, 96
      %v4678 = vpop.permute.xlu0 %4677
      %4679 = vrot.lane.b32.xlu0 %v4602, 96
      %v4680 = vpop.permute.xlu0 %4679
      %4681 = vrot.lane.b32.xlu0 %v4603, 96
      %v4682 = vpop.permute.xlu0 %4681
      %4683 = vrot.lane.b32.xlu0 %v4604, 96
      %v4684 = vpop.permute.xlu0 %4683
      %4685 = vrot.lane.b32.xlu0 %v4605, 96
      %v4686 = vpop.permute.xlu0 %4685
      %4687 = vrot.lane.b32.xlu0 %v4606, 96
      %v4688 = vpop.permute.xlu0 %4687
      %4689 = vrot.lane.b32.xlu0 %v4607, 96
      %v4690 = vpop.permute.xlu0 %4689
      %4691 = vrot.lane.b32.xlu0 %v4608, 96
      %v4692 = vpop.permute.xlu0 %4691
      %4693 = vrot.lane.b32.xlu0 %v4609, 96
      %v4694 = vpop.permute.xlu0 %4693
      %4695 = vrot.lane.b32.xlu0 %v4610, 96
      %v4696 = vpop.permute.xlu0 %4695
      %4697 = vrot.lane.b32.xlu0 %v4611, 96
      %v4698 = vpop.permute.xlu0 %4697
      %4699 = vrot.lane.b32.xlu0 %v4612, 96
      %v4700 = vpop.permute.xlu0 %4699
      %4701 = vrot.lane.b32.xlu0 %v4613, 96
      %v4702 = vpop.permute.xlu0 %4701
      %4703 = vrot.lane.b32.xlu0 %v4614, 96
      %v4704 = vpop.permute.xlu0 %4703
      %4705 = vrot.lane.b32.xlu0 %v4615, 96
      %v4706 = vpop.permute.xlu0 %4705
      %4707 = vrot.lane.b32.xlu0 %v4616, 96
      %v4708 = vpop.permute.xlu0 %4707
      %4709 = vrot.lane.b32.xlu0 %v4617, 96
      %v4710 = vpop.permute.xlu0 %4709
      %4711 = vrot.lane.b32.xlu0 %v4618, 96
      %v4712 = vpop.permute.xlu0 %4711
      %4713 = vrot.lane.b32.xlu0 %v4619, 96
      %v4714 = vpop.permute.xlu0 %4713
      %4715 = vrot.lane.b32.xlu0 %v4620, 96
      %v4716 = vpop.permute.xlu0 %4715
      %vm4749 = vcmask 1044224
      %4750 = vst.msk [vmem:[#allocation5] sm:$0xf] %vm4749, %v4654
      %4751 = vst.msk [vmem:[#allocation5 + $0xc] sm:$0xf] %vm4749, %v4656
      %4752 = vst.msk [vmem:[#allocation5 + $0x18] sm:$0xf] %vm4749, %v4658
      %4753 = vst.msk [vmem:[#allocation5 + $0x24] sm:$0xf] %vm4749, %v4660
      %4754 = vst.msk [vmem:[#allocation5 + $0x30] sm:$0xf] %vm4749, %v4662
      %4755 = vst.msk [vmem:[#allocation5 + $0x3c] sm:$0xf] %vm4749, %v4664
      %4756 = vst.msk [vmem:[#allocation5 + $0x48] sm:$0xf] %vm4749, %v4666
      %4757 = vst.msk [vmem:[#allocation5 + $0x54] sm:$0xf] %vm4749, %v4668
      %4758 = vst.msk [vmem:[#allocation5 + $0x60] sm:$0xf] %vm4749, %v4670
      %4759 = vst.msk [vmem:[#allocation5 + $0x6c] sm:$0xf] %vm4749, %v4672
      %4760 = vst.msk [vmem:[#allocation5 + $0x78] sm:$0xf] %vm4749, %v4674
      %4761 = vst.msk [vmem:[#allocation5 + $0x84] sm:$0xf] %vm4749, %v4676
      %4762 = vst.msk [vmem:[#allocation5 + $0x90] sm:$0xf] %vm4749, %v4678
      %4763 = vst.msk [vmem:[#allocation5 + $0x9c] sm:$0xf] %vm4749, %v4680
      %4764 = vst.msk [vmem:[#allocation5 + $0xa8] sm:$0xf] %vm4749, %v4682
      %4765 = vst.msk [vmem:[#allocation5 + $0xb4] sm:$0xf] %vm4749, %v4684
      %4766 = vst.msk [vmem:[#allocation5 + $0xc0] sm:$0xf] %vm4749, %v4686
      %4767 = vst.msk [vmem:[#allocation5 + $0xcc] sm:$0xf] %vm4749, %v4688
      %4768 = vst.msk [vmem:[#allocation5 + $0xd8] sm:$0xf] %vm4749, %v4690
      %4769 = vst.msk [vmem:[#allocation5 + $0xe4] sm:$0xf] %vm4749, %v4692
      %4770 = vst.msk [vmem:[#allocation5 + $0xf0] sm:$0xf] %vm4749, %v4694
      %4771 = vst.msk [vmem:[#allocation5 + $0xfc] sm:$0xf] %vm4749, %v4696
      %4772 = vst.msk [vmem:[#allocation5 + $0x108] sm:$0xf] %vm4749, %v4698
      %4773 = vst.msk [vmem:[#allocation5 + $0x114] sm:$0xf] %vm4749, %v4700
      %4774 = vst.msk [vmem:[#allocation5 + $0x120] sm:$0xf] %vm4749, %v4702
      %4775 = vst.msk [vmem:[#allocation5 + $0x12c] sm:$0xf] %vm4749, %v4704
      %4776 = vst.msk [vmem:[#allocation5 + $0x138] sm:$0xf] %vm4749, %v4706
      %4777 = vst.msk [vmem:[#allocation5 + $0x144] sm:$0xf] %vm4749, %v4708
      %4778 = vst.msk [vmem:[#allocation5 + $0x150] sm:$0xf] %vm4749, %v4710
      %4779 = vst.msk [vmem:[#allocation5 + $0x15c] sm:$0xf] %vm4749, %v4712
      %4780 = vst.msk [vmem:[#allocation5 + $0x168] sm:$0xf] %vm4749, %v4714
      %4781 = vst.msk [vmem:[#allocation5 + $0x174] sm:$0xf] %vm4749, %v4716
      %v4782 = vld [vmem:[#allocation3 + $0x11] sm:$0xff]
      %v4783 = vld [vmem:[#allocation3 + $0x19] sm:$0xff]
      %v4784 = vld [vmem:[#allocation3 + $0x21] sm:$0xff]
      %v4785 = vld [vmem:[#allocation3 + $0x29] sm:$0xff]
      %v4786 = vld [vmem:[#allocation3 + $0x31] sm:$0xff]
      %v4787 = vld [vmem:[#allocation3 + $0x39] sm:$0xff]
      %v4788 = vld [vmem:[#allocation3 + $0x41] sm:$0xff]
      %v4789 = vld [vmem:[#allocation3 + $0x49] sm:$0xff]
      %v4790 = vld [vmem:[#allocation3 + $0x51] sm:$0xff]
      %v4791 = vld [vmem:[#allocation3 + $0x59] sm:$0xff]
      %v4792 = vld [vmem:[#allocation3 + $0x61] sm:$0xff]
      %v4793 = vld [vmem:[#allocation3 + $0x69] sm:$0xff]
      %v4794 = vld [vmem:[#allocation3 + $0x71] sm:$0xff]
      %v4795 = vld [vmem:[#allocation3 + $0x79] sm:$0xff]
      %v4796 = vld [vmem:[#allocation3 + $0x81] sm:$0xff]
      %v4797 = vld [vmem:[#allocation3 + $0x89] sm:$0xff]
      %v4798 = vld [vmem:[#allocation3 + $0x91] sm:$0xff]
      %v4799 = vld [vmem:[#allocation3 + $0x99] sm:$0xff]
      %v4800 = vld [vmem:[#allocation3 + $0xa1] sm:$0xff]
      %v4801 = vld [vmem:[#allocation3 + $0xa9] sm:$0xff]
      %v4802 = vld [vmem:[#allocation3 + $0xb1] sm:$0xff]
      %v4803 = vld [vmem:[#allocation3 + $0xb9] sm:$0xff]
      %v4804 = vld [vmem:[#allocation3 + $0xc1] sm:$0xff]
      %v4805 = vld [vmem:[#allocation3 + $0xc9] sm:$0xff]
      %v4806 = vld [vmem:[#allocation3 + $0xd1] sm:$0xff]
      %v4807 = vld [vmem:[#allocation3 + $0xd9] sm:$0xff]
      %v4808 = vld [vmem:[#allocation3 + $0xe1] sm:$0xff]
      %v4809 = vld [vmem:[#allocation3 + $0xe9] sm:$0xff]
      %v4810 = vld [vmem:[#allocation3 + $0xf1] sm:$0xff]
      %v4811 = vld [vmem:[#allocation3 + $0xf9] sm:$0xff]
      %v4812 = vld [vmem:[#allocation3 + $0x101] sm:$0xff]
      %v4813 = vld [vmem:[#allocation3 + $0x109] sm:$0xff]
      %v4814 = vpack.c.bf16 %v4782, %v4782
      %v4815 = vpack.c.bf16 %v4783, %v4783
      %v4816 = vpack.c.bf16 %v4784, %v4784
      %v4817 = vpack.c.bf16 %v4785, %v4785
      %v4818 = vpack.c.bf16 %v4786, %v4786
      %v4819 = vpack.c.bf16 %v4787, %v4787
      %v4820 = vpack.c.bf16 %v4788, %v4788
      %v4821 = vpack.c.bf16 %v4789, %v4789
      %v4822 = vpack.c.bf16 %v4790, %v4790
      %v4823 = vpack.c.bf16 %v4791, %v4791
      %v4824 = vpack.c.bf16 %v4792, %v4792
      %v4825 = vpack.c.bf16 %v4793, %v4793
      %v4826 = vpack.c.bf16 %v4794, %v4794
      %v4827 = vpack.c.bf16 %v4795, %v4795
      %v4828 = vpack.c.bf16 %v4796, %v4796
      %v4829 = vpack.c.bf16 %v4797, %v4797
      %v4830 = vpack.c.bf16 %v4798, %v4798
      %v4831 = vpack.c.bf16 %v4799, %v4799
      %v4832 = vpack.c.bf16 %v4800, %v4800
      %v4833 = vpack.c.bf16 %v4801, %v4801
      %v4834 = vpack.c.bf16 %v4802, %v4802
      %v4835 = vpack.c.bf16 %v4803, %v4803
      %v4836 = vpack.c.bf16 %v4804, %v4804
      %v4837 = vpack.c.bf16 %v4805, %v4805
      %v4838 = vpack.c.bf16 %v4806, %v4806
      %v4839 = vpack.c.bf16 %v4807, %v4807
      %v4840 = vpack.c.bf16 %v4808, %v4808
      %v4841 = vpack.c.bf16 %v4809, %v4809
      %v4842 = vpack.c.bf16 %v4810, %v4810
      %v4843 = vpack.c.bf16 %v4811, %v4811
      %v4844 = vpack.c.bf16 %v4812, %v4812
      %v4845 = vpack.c.bf16 %v4813, %v4813
      %4846 = vst.msk [vmem:[#allocation5 + $0x4] sm:$0xf] %vm3978, %v4814
      %4847 = vst.msk [vmem:[#allocation5 + $0x10] sm:$0xf] %vm3978, %v4815
      %4848 = vst.msk [vmem:[#allocation5 + $0x1c] sm:$0xf] %vm3978, %v4816
      %4849 = vst.msk [vmem:[#allocation5 + $0x28] sm:$0xf] %vm3978, %v4817
      %4850 = vst.msk [vmem:[#allocation5 + $0x34] sm:$0xf] %vm3978, %v4818
      %4851 = vst.msk [vmem:[#allocation5 + $0x40] sm:$0xf] %vm3978, %v4819
      %4852 = vst.msk [vmem:[#allocation5 + $0x4c] sm:$0xf] %vm3978, %v4820
      %4853 = vst.msk [vmem:[#allocation5 + $0x58] sm:$0xf] %vm3978, %v4821
      %4854 = vst.msk [vmem:[#allocation5 + $0x64] sm:$0xf] %vm3978, %v4822
      %4855 = vst.msk [vmem:[#allocation5 + $0x70] sm:$0xf] %vm3978, %v4823
      %4856 = vst.msk [vmem:[#allocation5 + $0x7c] sm:$0xf] %vm3978, %v4824
      %4857 = vst.msk [vmem:[#allocation5 + $0x88] sm:$0xf] %vm3978, %v4825
      %4858 = vst.msk [vmem:[#allocation5 + $0x94] sm:$0xf] %vm3978, %v4826
      %4859 = vst.msk [vmem:[#allocation5 + $0xa0] sm:$0xf] %vm3978, %v4827
      %4860 = vst.msk [vmem:[#allocation5 + $0xac] sm:$0xf] %vm3978, %v4828
      %4861 = vst.msk [vmem:[#allocation5 + $0xb8] sm:$0xf] %vm3978, %v4829
      %4862 = vst.msk [vmem:[#allocation5 + $0xc4] sm:$0xf] %vm3978, %v4830
      %4863 = vst.msk [vmem:[#allocation5 + $0xd0] sm:$0xf] %vm3978, %v4831
      %4864 = vst.msk [vmem:[#allocation5 + $0xdc] sm:$0xf] %vm3978, %v4832
      %4865 = vst.msk [vmem:[#allocation5 + $0xe8] sm:$0xf] %vm3978, %v4833
      %4866 = vst.msk [vmem:[#allocation5 + $0xf4] sm:$0xf] %vm3978, %v4834
      %4867 = vst.msk [vmem:[#allocation5 + $0x100] sm:$0xf] %vm3978, %v4835
      %4868 = vst.msk [vmem:[#allocation5 + $0x10c] sm:$0xf] %vm3978, %v4836
      %4869 = vst.msk [vmem:[#allocation5 + $0x118] sm:$0xf] %vm3978, %v4837
      %4870 = vst.msk [vmem:[#allocation5 + $0x124] sm:$0xf] %vm3978, %v4838
      %4871 = vst.msk [vmem:[#allocation5 + $0x130] sm:$0xf] %vm3978, %v4839
      %4872 = vst.msk [vmem:[#allocation5 + $0x13c] sm:$0xf] %vm3978, %v4840
      %4873 = vst.msk [vmem:[#allocation5 + $0x148] sm:$0xf] %vm3978, %v4841
      %4874 = vst.msk [vmem:[#allocation5 + $0x154] sm:$0xf] %vm3978, %v4842
      %4875 = vst.msk [vmem:[#allocation5 + $0x160] sm:$0xf] %vm3978, %v4843
      %4876 = vst.msk [vmem:[#allocation5 + $0x16c] sm:$0xf] %vm3978, %v4844
      %4877 = vst.msk [vmem:[#allocation5 + $0x178] sm:$0xf] %vm3978, %v4845
      %v4878 = vld [vmem:[#allocation3 + $0x12] sm:$0xff]
      %v4879 = vld [vmem:[#allocation3 + $0x1a] sm:$0xff]
      %v4880 = vld [vmem:[#allocation3 + $0x22] sm:$0xff]
      %v4881 = vld [vmem:[#allocation3 + $0x2a] sm:$0xff]
      %v4882 = vld [vmem:[#allocation3 + $0x32] sm:$0xff]
      %v4883 = vld [vmem:[#allocation3 + $0x3a] sm:$0xff]
      %v4884 = vld [vmem:[#allocation3 + $0x42] sm:$0xff]
      %v4885 = vld [vmem:[#allocation3 + $0x4a] sm:$0xff]
      %v4886 = vld [vmem:[#allocation3 + $0x52] sm:$0xff]
      %v4887 = vld [vmem:[#allocation3 + $0x5a] sm:$0xff]
      %v4888 = vld [vmem:[#allocation3 + $0x62] sm:$0xff]
      %v4889 = vld [vmem:[#allocation3 + $0x6a] sm:$0xff]
      %v4890 = vld [vmem:[#allocation3 + $0x72] sm:$0xff]
      %v4891 = vld [vmem:[#allocation3 + $0x7a] sm:$0xff]
      %v4892 = vld [vmem:[#allocation3 + $0x82] sm:$0xff]
      %v4893 = vld [vmem:[#allocation3 + $0x8a] sm:$0xff]
      %v4894 = vld [vmem:[#allocation3 + $0x92] sm:$0xff]
      %v4895 = vld [vmem:[#allocation3 + $0x9a] sm:$0xff]
      %v4896 = vld [vmem:[#allocation3 + $0xa2] sm:$0xff]
      %v4897 = vld [vmem:[#allocation3 + $0xaa] sm:$0xff]
      %v4898 = vld [vmem:[#allocation3 + $0xb2] sm:$0xff]
      %v4899 = vld [vmem:[#allocation3 + $0xba] sm:$0xff]
      %v4900 = vld [vmem:[#allocation3 + $0xc2] sm:$0xff]
      %v4901 = vld [vmem:[#allocation3 + $0xca] sm:$0xff]
      %v4902 = vld [vmem:[#allocation3 + $0xd2] sm:$0xff]
      %v4903 = vld [vmem:[#allocation3 + $0xda] sm:$0xff]
      %v4904 = vld [vmem:[#allocation3 + $0xe2] sm:$0xff]
      %v4905 = vld [vmem:[#allocation3 + $0xea] sm:$0xff]
      %v4906 = vld [vmem:[#allocation3 + $0xf2] sm:$0xff]
      %v4907 = vld [vmem:[#allocation3 + $0xfa] sm:$0xff]
      %v4908 = vld [vmem:[#allocation3 + $0x102] sm:$0xff]
      %v4909 = vld [vmem:[#allocation3 + $0x10a] sm:$0xff]
      %v4910 = vsel %vm2185, %v4878, 0.0
      %v4911 = vsel %vm2186, %v4879, 0.0
      %v4912 = vsel %vm2187, %v4880, 0.0
      %v4913 = vsel %vm2188, %v4881, 0.0
      %v4914 = vsel %vm2189, %v4882, 0.0
      %v4915 = vsel %vm2190, %v4883, 0.0
      %v4916 = vsel %vm2191, %v4884, 0.0
      %v4917 = vsel %vm2192, %v4885, 0.0
      %v4918 = vsel %vm2193, %v4886, 0.0
      %v4919 = vsel %vm2194, %v4887, 0.0
      %v4920 = vsel %vm2195, %v4888, 0.0
      %v4921 = vsel %vm2196, %v4889, 0.0
      %v4922 = vsel %vm2197, %v4890, 0.0
      %v4923 = vsel %vm2198, %v4891, 0.0
      %v4924 = vsel %vm2199, %v4892, 0.0
      %v4925 = vsel %vm2200, %v4893, 0.0
      %v4926 = vsel %vm2201, %v4894, 0.0
      %v4927 = vsel %vm2202, %v4895, 0.0
      %v4928 = vsel %vm2203, %v4896, 0.0
      %v4929 = vsel %vm2204, %v4897, 0.0
      %v4930 = vsel %vm2205, %v4898, 0.0
      %v4931 = vsel %vm2206, %v4899, 0.0
      %v4932 = vsel %vm2207, %v4900, 0.0
      %v4933 = vsel %vm2208, %v4901, 0.0
      %v4934 = vsel %vm2209, %v4902, 0.0
      %v4935 = vsel %vm2210, %v4903, 0.0
      %v4936 = vsel %vm2211, %v4904, 0.0
      %v4937 = vsel %vm2212, %v4905, 0.0
      %v4938 = vsel %vm2213, %v4906, 0.0
      %v4939 = vsel %vm2214, %v4907, 0.0
      %v4940 = vsel %vm2215, %v4908, 0.0
      %v4941 = vsel %vm2216, %v4909, 0.0
      %v4942 = vpack.c.bf16 %v4910, %v4910
      %v4943 = vpack.c.bf16 %v4911, %v4911
      %v4944 = vpack.c.bf16 %v4912, %v4912
      %v4945 = vpack.c.bf16 %v4913, %v4913
      %v4946 = vpack.c.bf16 %v4914, %v4914
      %v4947 = vpack.c.bf16 %v4915, %v4915
      %v4948 = vpack.c.bf16 %v4916, %v4916
      %v4949 = vpack.c.bf16 %v4917, %v4917
      %v4950 = vpack.c.bf16 %v4918, %v4918
      %v4951 = vpack.c.bf16 %v4919, %v4919
      %v4952 = vpack.c.bf16 %v4920, %v4920
      %v4953 = vpack.c.bf16 %v4921, %v4921
      %v4954 = vpack.c.bf16 %v4922, %v4922
      %v4955 = vpack.c.bf16 %v4923, %v4923
      %v4956 = vpack.c.bf16 %v4924, %v4924
      %v4957 = vpack.c.bf16 %v4925, %v4925
      %v4958 = vpack.c.bf16 %v4926, %v4926
      %v4959 = vpack.c.bf16 %v4927, %v4927
      %v4960 = vpack.c.bf16 %v4928, %v4928
      %v4961 = vpack.c.bf16 %v4929, %v4929
      %v4962 = vpack.c.bf16 %v4930, %v4930
      %v4963 = vpack.c.bf16 %v4931, %v4931
      %v4964 = vpack.c.bf16 %v4932, %v4932
      %v4965 = vpack.c.bf16 %v4933, %v4933
      %v4966 = vpack.c.bf16 %v4934, %v4934
      %v4967 = vpack.c.bf16 %v4935, %v4935
      %v4968 = vpack.c.bf16 %v4936, %v4936
      %v4969 = vpack.c.bf16 %v4937, %v4937
      %v4970 = vpack.c.bf16 %v4938, %v4938
      %v4971 = vpack.c.bf16 %v4939, %v4939
      %v4972 = vpack.c.bf16 %v4940, %v4940
      %v4973 = vpack.c.bf16 %v4941, %v4941
      %5006 = vrot.lane.b32.xlu0 %v4942, 32
      %v5007 = vpop.permute.xlu0 %5006
      %5008 = vrot.lane.b32.xlu0 %v4943, 32
      %v5009 = vpop.permute.xlu0 %5008
      %5010 = vrot.lane.b32.xlu0 %v4944, 32
      %v5011 = vpop.permute.xlu0 %5010
      %5012 = vrot.lane.b32.xlu0 %v4945, 32
      %v5013 = vpop.permute.xlu0 %5012
      %5014 = vrot.lane.b32.xlu0 %v4946, 32
      %v5015 = vpop.permute.xlu0 %5014
      %5016 = vrot.lane.b32.xlu0 %v4947, 32
      %v5017 = vpop.permute.xlu0 %5016
      %5018 = vrot.lane.b32.xlu0 %v4948, 32
      %v5019 = vpop.permute.xlu0 %5018
      %5020 = vrot.lane.b32.xlu0 %v4949, 32
      %v5021 = vpop.permute.xlu0 %5020
      %5022 = vrot.lane.b32.xlu0 %v4950, 32
      %v5023 = vpop.permute.xlu0 %5022
      %5024 = vrot.lane.b32.xlu0 %v4951, 32
      %v5025 = vpop.permute.xlu0 %5024
      %5026 = vrot.lane.b32.xlu0 %v4952, 32
      %v5027 = vpop.permute.xlu0 %5026
      %5028 = vrot.lane.b32.xlu0 %v4953, 32
      %v5029 = vpop.permute.xlu0 %5028
      %5030 = vrot.lane.b32.xlu0 %v4954, 32
      %v5031 = vpop.permute.xlu0 %5030
      %5032 = vrot.lane.b32.xlu0 %v4955, 32
      %v5033 = vpop.permute.xlu0 %5032
      %5034 = vrot.lane.b32.xlu0 %v4956, 32
      %v5035 = vpop.permute.xlu0 %5034
      %5036 = vrot.lane.b32.xlu0 %v4957, 32
      %v5037 = vpop.permute.xlu0 %5036
      %5038 = vrot.lane.b32.xlu0 %v4958, 32
      %v5039 = vpop.permute.xlu0 %5038
      %5040 = vrot.lane.b32.xlu0 %v4959, 32
      %v5041 = vpop.permute.xlu0 %5040
      %5042 = vrot.lane.b32.xlu0 %v4960, 32
      %v5043 = vpop.permute.xlu0 %5042
      %5044 = vrot.lane.b32.xlu0 %v4961, 32
      %v5045 = vpop.permute.xlu0 %5044
      %5046 = vrot.lane.b32.xlu0 %v4962, 32
      %v5047 = vpop.permute.xlu0 %5046
      %5048 = vrot.lane.b32.xlu0 %v4963, 32
      %v5049 = vpop.permute.xlu0 %5048
      %5050 = vrot.lane.b32.xlu0 %v4964, 32
      %v5051 = vpop.permute.xlu0 %5050
      %5052 = vrot.lane.b32.xlu0 %v4965, 32
      %v5053 = vpop.permute.xlu0 %5052
      %5054 = vrot.lane.b32.xlu0 %v4966, 32
      %v5055 = vpop.permute.xlu0 %5054
      %5056 = vrot.lane.b32.xlu0 %v4967, 32
      %v5057 = vpop.permute.xlu0 %5056
      %5058 = vrot.lane.b32.xlu0 %v4968, 32
      %v5059 = vpop.permute.xlu0 %5058
      %5060 = vrot.lane.b32.xlu0 %v4969, 32
      %v5061 = vpop.permute.xlu0 %5060
      %5062 = vrot.lane.b32.xlu0 %v4970, 32
      %v5063 = vpop.permute.xlu0 %5062
      %5064 = vrot.lane.b32.xlu0 %v4971, 32
      %v5065 = vpop.permute.xlu0 %5064
      %5066 = vrot.lane.b32.xlu0 %v4972, 32
      %v5067 = vpop.permute.xlu0 %5066
      %5068 = vrot.lane.b32.xlu0 %v4973, 32
      %v5069 = vpop.permute.xlu0 %5068
      %5102 = vst.msk [vmem:[#allocation5 + $0x4] sm:$0xf] %vm4235, %v5007
      %5103 = vst.msk [vmem:[#allocation5 + $0x10] sm:$0xf] %vm4235, %v5009
      %5104 = vst.msk [vmem:[#allocation5 + $0x1c] sm:$0xf] %vm4235, %v5011
      %5105 = vst.msk [vmem:[#allocation5 + $0x28] sm:$0xf] %vm4235, %v5013
      %5106 = vst.msk [vmem:[#allocation5 + $0x34] sm:$0xf] %vm4235, %v5015
      %5107 = vst.msk [vmem:[#allocation5 + $0x40] sm:$0xf] %vm4235, %v5017
      %5108 = vst.msk [vmem:[#allocation5 + $0x4c] sm:$0xf] %vm4235, %v5019
      %5109 = vst.msk [vmem:[#allocation5 + $0x58] sm:$0xf] %vm4235, %v5021
      %5110 = vst.msk [vmem:[#allocation5 + $0x64] sm:$0xf] %vm4235, %v5023
      %5111 = vst.msk [vmem:[#allocation5 + $0x70] sm:$0xf] %vm4235, %v5025
      %5112 = vst.msk [vmem:[#allocation5 + $0x7c] sm:$0xf] %vm4235, %v5027
      %5113 = vst.msk [vmem:[#allocation5 + $0x88] sm:$0xf] %vm4235, %v5029
      %5114 = vst.msk [vmem:[#allocation5 + $0x94] sm:$0xf] %vm4235, %v5031
      %5115 = vst.msk [vmem:[#allocation5 + $0xa0] sm:$0xf] %vm4235, %v5033
      %5116 = vst.msk [vmem:[#allocation5 + $0xac] sm:$0xf] %vm4235, %v5035
      %5117 = vst.msk [vmem:[#allocation5 + $0xb8] sm:$0xf] %vm4235, %v5037
      %5118 = vst.msk [vmem:[#allocation5 + $0xc4] sm:$0xf] %vm4235, %v5039
      %5119 = vst.msk [vmem:[#allocation5 + $0xd0] sm:$0xf] %vm4235, %v5041
      %5120 = vst.msk [vmem:[#allocation5 + $0xdc] sm:$0xf] %vm4235, %v5043
      %5121 = vst.msk [vmem:[#allocation5 + $0xe8] sm:$0xf] %vm4235, %v5045
      %5122 = vst.msk [vmem:[#allocation5 + $0xf4] sm:$0xf] %vm4235, %v5047
      %5123 = vst.msk [vmem:[#allocation5 + $0x100] sm:$0xf] %vm4235, %v5049
      %5124 = vst.msk [vmem:[#allocation5 + $0x10c] sm:$0xf] %vm4235, %v5051
      %5125 = vst.msk [vmem:[#allocation5 + $0x118] sm:$0xf] %vm4235, %v5053
      %5126 = vst.msk [vmem:[#allocation5 + $0x124] sm:$0xf] %vm4235, %v5055
      %5127 = vst.msk [vmem:[#allocation5 + $0x130] sm:$0xf] %vm4235, %v5057
      %5128 = vst.msk [vmem:[#allocation5 + $0x13c] sm:$0xf] %vm4235, %v5059
      %5129 = vst.msk [vmem:[#allocation5 + $0x148] sm:$0xf] %vm4235, %v5061
      %5130 = vst.msk [vmem:[#allocation5 + $0x154] sm:$0xf] %vm4235, %v5063
      %5131 = vst.msk [vmem:[#allocation5 + $0x160] sm:$0xf] %vm4235, %v5065
      %5132 = vst.msk [vmem:[#allocation5 + $0x16c] sm:$0xf] %vm4235, %v5067
      %5133 = vst.msk [vmem:[#allocation5 + $0x178] sm:$0xf] %vm4235, %v5069
      %v5134 = vld [vmem:[#allocation3 + $0x20] sm:$0xff]
      %v5135 = vld [vmem:[#allocation3 + $0x28] sm:$0xff]
      %v5136 = vld [vmem:[#allocation3 + $0x30] sm:$0xff]
      %v5137 = vld [vmem:[#allocation3 + $0x38] sm:$0xff]
      %v5138 = vld [vmem:[#allocation3 + $0x40] sm:$0xff]
      %v5139 = vld [vmem:[#allocation3 + $0x48] sm:$0xff]
      %v5140 = vld [vmem:[#allocation3 + $0x50] sm:$0xff]
      %v5141 = vld [vmem:[#allocation3 + $0x58] sm:$0xff]
      %v5142 = vld [vmem:[#allocation3 + $0x60] sm:$0xff]
      %v5143 = vld [vmem:[#allocation3 + $0x68] sm:$0xff]
      %v5144 = vld [vmem:[#allocation3 + $0x70] sm:$0xff]
      %v5145 = vld [vmem:[#allocation3 + $0x78] sm:$0xff]
      %v5146 = vld [vmem:[#allocation3 + $0x80] sm:$0xff]
      %v5147 = vld [vmem:[#allocation3 + $0x88] sm:$0xff]
      %v5148 = vld [vmem:[#allocation3 + $0x90] sm:$0xff]
      %v5149 = vld [vmem:[#allocation3 + $0x98] sm:$0xff]
      %v5150 = vld [vmem:[#allocation3 + $0xa0] sm:$0xff]
      %v5151 = vld [vmem:[#allocation3 + $0xa8] sm:$0xff]
      %v5152 = vld [vmem:[#allocation3 + $0xb0] sm:$0xff]
      %v5153 = vld [vmem:[#allocation3 + $0xb8] sm:$0xff]
      %v5154 = vld [vmem:[#allocation3 + $0xc0] sm:$0xff]
      %v5155 = vld [vmem:[#allocation3 + $0xc8] sm:$0xff]
      %v5156 = vld [vmem:[#allocation3 + $0xd0] sm:$0xff]
      %v5157 = vld [vmem:[#allocation3 + $0xd8] sm:$0xff]
      %v5158 = vld [vmem:[#allocation3 + $0xe0] sm:$0xff]
      %v5159 = vld [vmem:[#allocation3 + $0xe8] sm:$0xff]
      %v5160 = vld [vmem:[#allocation3 + $0xf0] sm:$0xff]
      %v5161 = vld [vmem:[#allocation3 + $0xf8] sm:$0xff]
      %v5162 = vld [vmem:[#allocation3 + $0x100] sm:$0xff]
      %v5163 = vld [vmem:[#allocation3 + $0x108] sm:$0xff]
      %v5164 = vld [vmem:[#allocation3 + $0x110] sm:$0xff]
      %v5165 = vld [vmem:[#allocation3 + $0x118] sm:$0xff]
      %v5166 = vsel %vm2570, %v5134, 0.0
      %v5167 = vsel %vm2571, %v5135, 0.0
      %v5168 = vsel %vm2572, %v5136, 0.0
      %v5169 = vsel %vm2573, %v5137, 0.0
      %v5170 = vsel %vm2574, %v5138, 0.0
      %v5171 = vsel %vm2575, %v5139, 0.0
      %v5172 = vsel %vm2576, %v5140, 0.0
      %v5173 = vsel %vm2577, %v5141, 0.0
      %v5174 = vsel %vm2578, %v5142, 0.0
      %v5175 = vsel %vm2579, %v5143, 0.0
      %v5176 = vsel %vm2580, %v5144, 0.0
      %v5177 = vsel %vm2581, %v5145, 0.0
      %v5178 = vsel %vm2582, %v5146, 0.0
      %v5179 = vsel %vm2583, %v5147, 0.0
      %v5180 = vsel %vm2584, %v5148, 0.0
      %v5181 = vsel %vm2585, %v5149, 0.0
      %v5182 = vsel %vm2586, %v5150, 0.0
      %v5183 = vsel %vm2587, %v5151, 0.0
      %v5184 = vsel %vm2588, %v5152, 0.0
      %v5185 = vsel %vm2589, %v5153, 0.0
      %v5186 = vsel %vm2590, %v5154, 0.0
      %v5187 = vsel %vm2591, %v5155, 0.0
      %v5188 = vsel %vm2592, %v5156, 0.0
      %v5189 = vsel %vm2593, %v5157, 0.0
      %v5190 = vsel %vm2594, %v5158, 0.0
      %v5191 = vsel %vm2595, %v5159, 0.0
      %v5192 = vsel %vm2596, %v5160, 0.0
      %v5193 = vsel %vm2597, %v5161, 0.0
      %v5194 = vsel %vm2598, %v5162, 0.0
      %v5195 = vsel %vm2599, %v5163, 0.0
      %v5196 = vsel %vm2600, %v5164, 0.0
      %v5197 = vsel %vm2601, %v5165, 0.0
      %v5198 = vpack.c.bf16 %v5166, %v5166
      %v5199 = vpack.c.bf16 %v5167, %v5167
      %v5200 = vpack.c.bf16 %v5168, %v5168
      %v5201 = vpack.c.bf16 %v5169, %v5169
      %v5202 = vpack.c.bf16 %v5170, %v5170
      %v5203 = vpack.c.bf16 %v5171, %v5171
      %v5204 = vpack.c.bf16 %v5172, %v5172
      %v5205 = vpack.c.bf16 %v5173, %v5173
      %v5206 = vpack.c.bf16 %v5174, %v5174
      %v5207 = vpack.c.bf16 %v5175, %v5175
      %v5208 = vpack.c.bf16 %v5176, %v5176
      %v5209 = vpack.c.bf16 %v5177, %v5177
      %v5210 = vpack.c.bf16 %v5178, %v5178
      %v5211 = vpack.c.bf16 %v5179, %v5179
      %v5212 = vpack.c.bf16 %v5180, %v5180
      %v5213 = vpack.c.bf16 %v5181, %v5181
      %v5214 = vpack.c.bf16 %v5182, %v5182
      %v5215 = vpack.c.bf16 %v5183, %v5183
      %v5216 = vpack.c.bf16 %v5184, %v5184
      %v5217 = vpack.c.bf16 %v5185, %v5185
      %v5218 = vpack.c.bf16 %v5186, %v5186
      %v5219 = vpack.c.bf16 %v5187, %v5187
      %v5220 = vpack.c.bf16 %v5188, %v5188
      %v5221 = vpack.c.bf16 %v5189, %v5189
      %v5222 = vpack.c.bf16 %v5190, %v5190
      %v5223 = vpack.c.bf16 %v5191, %v5191
      %v5224 = vpack.c.bf16 %v5192, %v5192
      %v5225 = vpack.c.bf16 %v5193, %v5193
      %v5226 = vpack.c.bf16 %v5194, %v5194
      %v5227 = vpack.c.bf16 %v5195, %v5195
      %v5228 = vpack.c.bf16 %v5196, %v5196
      %v5229 = vpack.c.bf16 %v5197, %v5197
      %5262 = vrot.lane.b32.xlu0 %v5198, 64
      %v5263 = vpop.permute.xlu0 %5262
      %5264 = vrot.lane.b32.xlu0 %v5199, 64
      %v5265 = vpop.permute.xlu0 %5264
      %5266 = vrot.lane.b32.xlu0 %v5200, 64
      %v5267 = vpop.permute.xlu0 %5266
      %5268 = vrot.lane.b32.xlu0 %v5201, 64
      %v5269 = vpop.permute.xlu0 %5268
      %5270 = vrot.lane.b32.xlu0 %v5202, 64
      %v5271 = vpop.permute.xlu0 %5270
      %5272 = vrot.lane.b32.xlu0 %v5203, 64
      %v5273 = vpop.permute.xlu0 %5272
      %5274 = vrot.lane.b32.xlu0 %v5204, 64
      %v5275 = vpop.permute.xlu0 %5274
      %5276 = vrot.lane.b32.xlu0 %v5205, 64
      %v5277 = vpop.permute.xlu0 %5276
      %5278 = vrot.lane.b32.xlu0 %v5206, 64
      %v5279 = vpop.permute.xlu0 %5278
      %5280 = vrot.lane.b32.xlu0 %v5207, 64
      %v5281 = vpop.permute.xlu0 %5280
      %5282 = vrot.lane.b32.xlu0 %v5208, 64
      %v5283 = vpop.permute.xlu0 %5282
      %5284 = vrot.lane.b32.xlu0 %v5209, 64
      %v5285 = vpop.permute.xlu0 %5284
      %5286 = vrot.lane.b32.xlu0 %v5210, 64
      %v5287 = vpop.permute.xlu0 %5286
      %5288 = vrot.lane.b32.xlu0 %v5211, 64
      %v5289 = vpop.permute.xlu0 %5288
      %5290 = vrot.lane.b32.xlu0 %v5212, 64
      %v5291 = vpop.permute.xlu0 %5290
      %5292 = vrot.lane.b32.xlu0 %v5213, 64
      %v5293 = vpop.permute.xlu0 %5292
      %5294 = vrot.lane.b32.xlu0 %v5214, 64
      %v5295 = vpop.permute.xlu0 %5294
      %5296 = vrot.lane.b32.xlu0 %v5215, 64
      %v5297 = vpop.permute.xlu0 %5296
      %5298 = vrot.lane.b32.xlu0 %v5216, 64
      %v5299 = vpop.permute.xlu0 %5298
      %5300 = vrot.lane.b32.xlu0 %v5217, 64
      %v5301 = vpop.permute.xlu0 %5300
      %5302 = vrot.lane.b32.xlu0 %v5218, 64
      %v5303 = vpop.permute.xlu0 %5302
      %5304 = vrot.lane.b32.xlu0 %v5219, 64
      %v5305 = vpop.permute.xlu0 %5304
      %5306 = vrot.lane.b32.xlu0 %v5220, 64
      %v5307 = vpop.permute.xlu0 %5306
      %5308 = vrot.lane.b32.xlu0 %v5221, 64
      %v5309 = vpop.permute.xlu0 %5308
      %5310 = vrot.lane.b32.xlu0 %v5222, 64
      %v5311 = vpop.permute.xlu0 %5310
      %5312 = vrot.lane.b32.xlu0 %v5223, 64
      %v5313 = vpop.permute.xlu0 %5312
      %5314 = vrot.lane.b32.xlu0 %v5224, 64
      %v5315 = vpop.permute.xlu0 %5314
      %5316 = vrot.lane.b32.xlu0 %v5225, 64
      %v5317 = vpop.permute.xlu0 %5316
      %5318 = vrot.lane.b32.xlu0 %v5226, 64
      %v5319 = vpop.permute.xlu0 %5318
      %5320 = vrot.lane.b32.xlu0 %v5227, 64
      %v5321 = vpop.permute.xlu0 %5320
      %5322 = vrot.lane.b32.xlu0 %v5228, 64
      %v5323 = vpop.permute.xlu0 %5322
      %5324 = vrot.lane.b32.xlu0 %v5229, 64
      %v5325 = vpop.permute.xlu0 %5324
      %5358 = vst.msk [vmem:[#allocation5 + $0x4] sm:$0xf] %vm4492, %v5263
      %5359 = vst.msk [vmem:[#allocation5 + $0x10] sm:$0xf] %vm4492, %v5265
      %5360 = vst.msk [vmem:[#allocation5 + $0x1c] sm:$0xf] %vm4492, %v5267
      %5361 = vst.msk [vmem:[#allocation5 + $0x28] sm:$0xf] %vm4492, %v5269
      %5362 = vst.msk [vmem:[#allocation5 + $0x34] sm:$0xf] %vm4492, %v5271
      %5363 = vst.msk [vmem:[#allocation5 + $0x40] sm:$0xf] %vm4492, %v5273
      %5364 = vst.msk [vmem:[#allocation5 + $0x4c] sm:$0xf] %vm4492, %v5275
      %5365 = vst.msk [vmem:[#allocation5 + $0x58] sm:$0xf] %vm4492, %v5277
      %5366 = vst.msk [vmem:[#allocation5 + $0x64] sm:$0xf] %vm4492, %v5279
      %5367 = vst.msk [vmem:[#allocation5 + $0x70] sm:$0xf] %vm4492, %v5281
      %5368 = vst.msk [vmem:[#allocation5 + $0x7c] sm:$0xf] %vm4492, %v5283
      %5369 = vst.msk [vmem:[#allocation5 + $0x88] sm:$0xf] %vm4492, %v5285
      %5370 = vst.msk [vmem:[#allocation5 + $0x94] sm:$0xf] %vm4492, %v5287
      %5371 = vst.msk [vmem:[#allocation5 + $0xa0] sm:$0xf] %vm4492, %v5289
      %5372 = vst.msk [vmem:[#allocation5 + $0xac] sm:$0xf] %vm4492, %v5291
      %5373 = vst.msk [vmem:[#allocation5 + $0xb8] sm:$0xf] %vm4492, %v5293
      %5374 = vst.msk [vmem:[#allocation5 + $0xc4] sm:$0xf] %vm4492, %v5295
      %5375 = vst.msk [vmem:[#allocation5 + $0xd0] sm:$0xf] %vm4492, %v5297
      %5376 = vst.msk [vmem:[#allocation5 + $0xdc] sm:$0xf] %vm4492, %v5299
      %5377 = vst.msk [vmem:[#allocation5 + $0xe8] sm:$0xf] %vm4492, %v5301
      %5378 = vst.msk [vmem:[#allocation5 + $0xf4] sm:$0xf] %vm4492, %v5303
      %5379 = vst.msk [vmem:[#allocation5 + $0x100] sm:$0xf] %vm4492, %v5305
      %5380 = vst.msk [vmem:[#allocation5 + $0x10c] sm:$0xf] %vm4492, %v5307
      %5381 = vst.msk [vmem:[#allocation5 + $0x118] sm:$0xf] %vm4492, %v5309
      %5382 = vst.msk [vmem:[#allocation5 + $0x124] sm:$0xf] %vm4492, %v5311
      %5383 = vst.msk [vmem:[#allocation5 + $0x130] sm:$0xf] %vm4492, %v5313
      %5384 = vst.msk [vmem:[#allocation5 + $0x13c] sm:$0xf] %vm4492, %v5315
      %5385 = vst.msk [vmem:[#allocation5 + $0x148] sm:$0xf] %vm4492, %v5317
      %5386 = vst.msk [vmem:[#allocation5 + $0x154] sm:$0xf] %vm4492, %v5319
      %5387 = vst.msk [vmem:[#allocation5 + $0x160] sm:$0xf] %vm4492, %v5321
      %5388 = vst.msk [vmem:[#allocation5 + $0x16c] sm:$0xf] %vm4492, %v5323
      %5389 = vst.msk [vmem:[#allocation5 + $0x178] sm:$0xf] %vm4492, %v5325
      %v5390 = vld [vmem:[#allocation3 + $0x21] sm:$0xff]
      %v5391 = vld [vmem:[#allocation3 + $0x29] sm:$0xff]
      %v5392 = vld [vmem:[#allocation3 + $0x31] sm:$0xff]
      %v5393 = vld [vmem:[#allocation3 + $0x39] sm:$0xff]
      %v5394 = vld [vmem:[#allocation3 + $0x41] sm:$0xff]
      %v5395 = vld [vmem:[#allocation3 + $0x49] sm:$0xff]
      %v5396 = vld [vmem:[#allocation3 + $0x51] sm:$0xff]
      %v5397 = vld [vmem:[#allocation3 + $0x59] sm:$0xff]
      %v5398 = vld [vmem:[#allocation3 + $0x61] sm:$0xff]
      %v5399 = vld [vmem:[#allocation3 + $0x69] sm:$0xff]
      %v5400 = vld [vmem:[#allocation3 + $0x71] sm:$0xff]
      %v5401 = vld [vmem:[#allocation3 + $0x79] sm:$0xff]
      %v5402 = vld [vmem:[#allocation3 + $0x81] sm:$0xff]
      %v5403 = vld [vmem:[#allocation3 + $0x89] sm:$0xff]
      %v5404 = vld [vmem:[#allocation3 + $0x91] sm:$0xff]
      %v5405 = vld [vmem:[#allocation3 + $0x99] sm:$0xff]
      %v5406 = vld [vmem:[#allocation3 + $0xa1] sm:$0xff]
      %v5407 = vld [vmem:[#allocation3 + $0xa9] sm:$0xff]
      %v5408 = vld [vmem:[#allocation3 + $0xb1] sm:$0xff]
      %v5409 = vld [vmem:[#allocation3 + $0xb9] sm:$0xff]
      %v5410 = vld [vmem:[#allocation3 + $0xc1] sm:$0xff]
      %v5411 = vld [vmem:[#allocation3 + $0xc9] sm:$0xff]
      %v5412 = vld [vmem:[#allocation3 + $0xd1] sm:$0xff]
      %v5413 = vld [vmem:[#allocation3 + $0xd9] sm:$0xff]
      %v5414 = vld [vmem:[#allocation3 + $0xe1] sm:$0xff]
      %v5415 = vld [vmem:[#allocation3 + $0xe9] sm:$0xff]
      %v5416 = vld [vmem:[#allocation3 + $0xf1] sm:$0xff]
      %v5417 = vld [vmem:[#allocation3 + $0xf9] sm:$0xff]
      %v5418 = vld [vmem:[#allocation3 + $0x101] sm:$0xff]
      %v5419 = vld [vmem:[#allocation3 + $0x109] sm:$0xff]
      %v5420 = vld [vmem:[#allocation3 + $0x111] sm:$0xff]
      %v5421 = vld [vmem:[#allocation3 + $0x119] sm:$0xff]
      %v5422 = vsel %vm2891, %v5390, 0.0
      %v5423 = vsel %vm2892, %v5391, 0.0
      %v5424 = vsel %vm2893, %v5392, 0.0
      %v5425 = vsel %vm2894, %v5393, 0.0
      %v5426 = vsel %vm2895, %v5394, 0.0
      %v5427 = vsel %vm2896, %v5395, 0.0
      %v5428 = vsel %vm2897, %v5396, 0.0
      %v5429 = vsel %vm2898, %v5397, 0.0
      %v5430 = vsel %vm2899, %v5398, 0.0
      %v5431 = vsel %vm2900, %v5399, 0.0
      %v5432 = vsel %vm2901, %v5400, 0.0
      %v5433 = vsel %vm2902, %v5401, 0.0
      %v5434 = vsel %vm2903, %v5402, 0.0
      %v5435 = vsel %vm2904, %v5403, 0.0
      %v5436 = vsel %vm2905, %v5404, 0.0
      %v5437 = vsel %vm2906, %v5405, 0.0
      %v5438 = vsel %vm2907, %v5406, 0.0
      %v5439 = vsel %vm2908, %v5407, 0.0
      %v5440 = vsel %vm2909, %v5408, 0.0
      %v5441 = vsel %vm2910, %v5409, 0.0
      %v5442 = vsel %vm2911, %v5410, 0.0
      %v5443 = vsel %vm2912, %v5411, 0.0
      %v5444 = vsel %vm2913, %v5412, 0.0
      %v5445 = vsel %vm2914, %v5413, 0.0
      %v5446 = vsel %vm2915, %v5414, 0.0
      %v5447 = vsel %vm2916, %v5415, 0.0
      %v5448 = vsel %vm2917, %v5416, 0.0
      %v5449 = vsel %vm2918, %v5417, 0.0
      %v5450 = vsel %vm2919, %v5418, 0.0
      %v5451 = vsel %vm2920, %v5419, 0.0
      %v5452 = vsel %vm2921, %v5420, 0.0
      %v5453 = vsel %vm2922, %v5421, 0.0
      %v5454 = vpack.c.bf16 %v5422, %v5422
      %v5455 = vpack.c.bf16 %v5423, %v5423
      %v5456 = vpack.c.bf16 %v5424, %v5424
      %v5457 = vpack.c.bf16 %v5425, %v5425
      %v5458 = vpack.c.bf16 %v5426, %v5426
      %v5459 = vpack.c.bf16 %v5427, %v5427
      %v5460 = vpack.c.bf16 %v5428, %v5428
      %v5461 = vpack.c.bf16 %v5429, %v5429
      %v5462 = vpack.c.bf16 %v5430, %v5430
      %v5463 = vpack.c.bf16 %v5431, %v5431
      %v5464 = vpack.c.bf16 %v5432, %v5432
      %v5465 = vpack.c.bf16 %v5433, %v5433
      %v5466 = vpack.c.bf16 %v5434, %v5434
      %v5467 = vpack.c.bf16 %v5435, %v5435
      %v5468 = vpack.c.bf16 %v5436, %v5436
      %v5469 = vpack.c.bf16 %v5437, %v5437
      %v5470 = vpack.c.bf16 %v5438, %v5438
      %v5471 = vpack.c.bf16 %v5439, %v5439
      %v5472 = vpack.c.bf16 %v5440, %v5440
      %v5473 = vpack.c.bf16 %v5441, %v5441
      %v5474 = vpack.c.bf16 %v5442, %v5442
      %v5475 = vpack.c.bf16 %v5443, %v5443
      %v5476 = vpack.c.bf16 %v5444, %v5444
      %v5477 = vpack.c.bf16 %v5445, %v5445
      %v5478 = vpack.c.bf16 %v5446, %v5446
      %v5479 = vpack.c.bf16 %v5447, %v5447
      %v5480 = vpack.c.bf16 %v5448, %v5448
      %v5481 = vpack.c.bf16 %v5449, %v5449
      %v5482 = vpack.c.bf16 %v5450, %v5450
      %v5483 = vpack.c.bf16 %v5451, %v5451
      %v5484 = vpack.c.bf16 %v5452, %v5452
      %v5485 = vpack.c.bf16 %v5453, %v5453
      %5518 = vrot.lane.b32.xlu0 %v5454, 96
      %v5519 = vpop.permute.xlu0 %5518
      %5520 = vrot.lane.b32.xlu0 %v5455, 96
      %v5521 = vpop.permute.xlu0 %5520
      %5522 = vrot.lane.b32.xlu0 %v5456, 96
      %v5523 = vpop.permute.xlu0 %5522
      %5524 = vrot.lane.b32.xlu0 %v5457, 96
      %v5525 = vpop.permute.xlu0 %5524
      %5526 = vrot.lane.b32.xlu0 %v5458, 96
      %v5527 = vpop.permute.xlu0 %5526
      %5528 = vrot.lane.b32.xlu0 %v5459, 96
      %v5529 = vpop.permute.xlu0 %5528
      %5530 = vrot.lane.b32.xlu0 %v5460, 96
      %v5531 = vpop.permute.xlu0 %5530
      %5532 = vrot.lane.b32.xlu0 %v5461, 96
      %v5533 = vpop.permute.xlu0 %5532
      %5534 = vrot.lane.b32.xlu0 %v5462, 96
      %v5535 = vpop.permute.xlu0 %5534
      %5536 = vrot.lane.b32.xlu0 %v5463, 96
      %v5537 = vpop.permute.xlu0 %5536
      %5538 = vrot.lane.b32.xlu0 %v5464, 96
      %v5539 = vpop.permute.xlu0 %5538
      %5540 = vrot.lane.b32.xlu0 %v5465, 96
      %v5541 = vpop.permute.xlu0 %5540
      %5542 = vrot.lane.b32.xlu0 %v5466, 96
      %v5543 = vpop.permute.xlu0 %5542
      %5544 = vrot.lane.b32.xlu0 %v5467, 96
      %v5545 = vpop.permute.xlu0 %5544
      %5546 = vrot.lane.b32.xlu0 %v5468, 96
      %v5547 = vpop.permute.xlu0 %5546
      %5548 = vrot.lane.b32.xlu0 %v5469, 96
      %v5549 = vpop.permute.xlu0 %5548
      %5550 = vrot.lane.b32.xlu0 %v5470, 96
      %v5551 = vpop.permute.xlu0 %5550
      %5552 = vrot.lane.b32.xlu0 %v5471, 96
      %v5553 = vpop.permute.xlu0 %5552
      %5554 = vrot.lane.b32.xlu0 %v5472, 96
      %v5555 = vpop.permute.xlu0 %5554
      %5556 = vrot.lane.b32.xlu0 %v5473, 96
      %v5557 = vpop.permute.xlu0 %5556
      %5558 = vrot.lane.b32.xlu0 %v5474, 96
      %v5559 = vpop.permute.xlu0 %5558
      %5560 = vrot.lane.b32.xlu0 %v5475, 96
      %v5561 = vpop.permute.xlu0 %5560
      %5562 = vrot.lane.b32.xlu0 %v5476, 96
      %v5563 = vpop.permute.xlu0 %5562
      %5564 = vrot.lane.b32.xlu0 %v5477, 96
      %v5565 = vpop.permute.xlu0 %5564
      %5566 = vrot.lane.b32.xlu0 %v5478, 96
      %v5567 = vpop.permute.xlu0 %5566
      %5568 = vrot.lane.b32.xlu0 %v5479, 96
      %v5569 = vpop.permute.xlu0 %5568
      %5570 = vrot.lane.b32.xlu0 %v5480, 96
      %v5571 = vpop.permute.xlu0 %5570
      %5572 = vrot.lane.b32.xlu0 %v5481, 96
      %v5573 = vpop.permute.xlu0 %5572
      %5574 = vrot.lane.b32.xlu0 %v5482, 96
      %v5575 = vpop.permute.xlu0 %5574
      %5576 = vrot.lane.b32.xlu0 %v5483, 96
      %v5577 = vpop.permute.xlu0 %5576
      %5578 = vrot.lane.b32.xlu0 %v5484, 96
      %v5579 = vpop.permute.xlu0 %5578
      %5580 = vrot.lane.b32.xlu0 %v5485, 96
      %v5581 = vpop.permute.xlu0 %5580
      %5614 = vst.msk [vmem:[#allocation5 + $0x4] sm:$0xf] %vm4749, %v5519
      %5615 = vst.msk [vmem:[#allocation5 + $0x10] sm:$0xf] %vm4749, %v5521
      %5616 = vst.msk [vmem:[#allocation5 + $0x1c] sm:$0xf] %vm4749, %v5523
      %5617 = vst.msk [vmem:[#allocation5 + $0x28] sm:$0xf] %vm4749, %v5525
      %5618 = vst.msk [vmem:[#allocation5 + $0x34] sm:$0xf] %vm4749, %v5527
      %5619 = vst.msk [vmem:[#allocation5 + $0x40] sm:$0xf] %vm4749, %v5529
      %5620 = vst.msk [vmem:[#allocation5 + $0x4c] sm:$0xf] %vm4749, %v5531
      %5621 = vst.msk [vmem:[#allocation5 + $0x58] sm:$0xf] %vm4749, %v5533
      %5622 = vst.msk [vmem:[#allocation5 + $0x64] sm:$0xf] %vm4749, %v5535
      %5623 = vst.msk [vmem:[#allocation5 + $0x70] sm:$0xf] %vm4749, %v5537
      %5624 = vst.msk [vmem:[#allocation5 + $0x7c] sm:$0xf] %vm4749, %v5539
      %5625 = vst.msk [vmem:[#allocation5 + $0x88] sm:$0xf] %vm4749, %v5541
      %5626 = vst.msk [vmem:[#allocation5 + $0x94] sm:$0xf] %vm4749, %v5543
      %5627 = vst.msk [vmem:[#allocation5 + $0xa0] sm:$0xf] %vm4749, %v5545
      %5628 = vst.msk [vmem:[#allocation5 + $0xac] sm:$0xf] %vm4749, %v5547
      %5629 = vst.msk [vmem:[#allocation5 + $0xb8] sm:$0xf] %vm4749, %v5549
      %5630 = vst.msk [vmem:[#allocation5 + $0xc4] sm:$0xf] %vm4749, %v5551
      %5631 = vst.msk [vmem:[#allocation5 + $0xd0] sm:$0xf] %vm4749, %v5553
      %5632 = vst.msk [vmem:[#allocation5 + $0xdc] sm:$0xf] %vm4749, %v5555
      %5633 = vst.msk [vmem:[#allocation5 + $0xe8] sm:$0xf] %vm4749, %v5557
      %5634 = vst.msk [vmem:[#allocation5 + $0xf4] sm:$0xf] %vm4749, %v5559
      %5635 = vst.msk [vmem:[#allocation5 + $0x100] sm:$0xf] %vm4749, %v5561
      %5636 = vst.msk [vmem:[#allocation5 + $0x10c] sm:$0xf] %vm4749, %v5563
      %5637 = vst.msk [vmem:[#allocation5 + $0x118] sm:$0xf] %vm4749, %v5565
      %5638 = vst.msk [vmem:[#allocation5 + $0x124] sm:$0xf] %vm4749, %v5567
      %5639 = vst.msk [vmem:[#allocation5 + $0x130] sm:$0xf] %vm4749, %v5569
      %5640 = vst.msk [vmem:[#allocation5 + $0x13c] sm:$0xf] %vm4749, %v5571
      %5641 = vst.msk [vmem:[#allocation5 + $0x148] sm:$0xf] %vm4749, %v5573
      %5642 = vst.msk [vmem:[#allocation5 + $0x154] sm:$0xf] %vm4749, %v5575
      %5643 = vst.msk [vmem:[#allocation5 + $0x160] sm:$0xf] %vm4749, %v5577
      %5644 = vst.msk [vmem:[#allocation5 + $0x16c] sm:$0xf] %vm4749, %v5579
      %5645 = vst.msk [vmem:[#allocation5 + $0x178] sm:$0xf] %vm4749, %v5581
      %v5646 = vld [vmem:[#allocation3 + $0x22] sm:$0xff]
      %v5647 = vld [vmem:[#allocation3 + $0x2a] sm:$0xff]
      %v5648 = vld [vmem:[#allocation3 + $0x32] sm:$0xff]
      %v5649 = vld [vmem:[#allocation3 + $0x3a] sm:$0xff]
      %v5650 = vld [vmem:[#allocation3 + $0x42] sm:$0xff]
      %v5651 = vld [vmem:[#allocation3 + $0x4a] sm:$0xff]
      %v5652 = vld [vmem:[#allocation3 + $0x52] sm:$0xff]
      %v5653 = vld [vmem:[#allocation3 + $0x5a] sm:$0xff]
      %v5654 = vld [vmem:[#allocation3 + $0x62] sm:$0xff]
      %v5655 = vld [vmem:[#allocation3 + $0x6a] sm:$0xff]
      %v5656 = vld [vmem:[#allocation3 + $0x72] sm:$0xff]
      %v5657 = vld [vmem:[#allocation3 + $0x7a] sm:$0xff]
      %v5658 = vld [vmem:[#allocation3 + $0x82] sm:$0xff]
      %v5659 = vld [vmem:[#allocation3 + $0x8a] sm:$0xff]
      %v5660 = vld [vmem:[#allocation3 + $0x92] sm:$0xff]
      %v5661 = vld [vmem:[#allocation3 + $0x9a] sm:$0xff]
      %v5662 = vld [vmem:[#allocation3 + $0xa2] sm:$0xff]
      %v5663 = vld [vmem:[#allocation3 + $0xaa] sm:$0xff]
      %v5664 = vld [vmem:[#allocation3 + $0xb2] sm:$0xff]
      %v5665 = vld [vmem:[#allocation3 + $0xba] sm:$0xff]
      %v5666 = vld [vmem:[#allocation3 + $0xc2] sm:$0xff]
      %v5667 = vld [vmem:[#allocation3 + $0xca] sm:$0xff]
      %v5668 = vld [vmem:[#allocation3 + $0xd2] sm:$0xff]
      %v5669 = vld [vmem:[#allocation3 + $0xda] sm:$0xff]
      %v5670 = vld [vmem:[#allocation3 + $0xe2] sm:$0xff]
      %v5671 = vld [vmem:[#allocation3 + $0xea] sm:$0xff]
      %v5672 = vld [vmem:[#allocation3 + $0xf2] sm:$0xff]
      %v5673 = vld [vmem:[#allocation3 + $0xfa] sm:$0xff]
      %v5674 = vld [vmem:[#allocation3 + $0x102] sm:$0xff]
      %v5675 = vld [vmem:[#allocation3 + $0x10a] sm:$0xff]
      %v5676 = vld [vmem:[#allocation3 + $0x112] sm:$0xff]
      %v5677 = vld [vmem:[#allocation3 + $0x11a] sm:$0xff]
      %v5678 = vsel %vm3244, %v5646, 0.0
      %v5679 = vsel %vm3245, %v5647, 0.0
      %v5680 = vsel %vm3246, %v5648, 0.0
      %v5681 = vsel %vm3247, %v5649, 0.0
      %v5682 = vsel %vm3248, %v5650, 0.0
      %v5683 = vsel %vm3249, %v5651, 0.0
      %v5684 = vsel %vm3250, %v5652, 0.0
      %v5685 = vsel %vm3251, %v5653, 0.0
      %v5686 = vsel %vm3252, %v5654, 0.0
      %v5687 = vsel %vm3253, %v5655, 0.0
      %v5688 = vsel %vm3254, %v5656, 0.0
      %v5689 = vsel %vm3255, %v5657, 0.0
      %v5690 = vsel %vm3256, %v5658, 0.0
      %v5691 = vsel %vm3257, %v5659, 0.0
      %v5692 = vsel %vm3258, %v5660, 0.0
      %v5693 = vsel %vm3259, %v5661, 0.0
      %v5694 = vsel %vm3260, %v5662, 0.0
      %v5695 = vsel %vm3261, %v5663, 0.0
      %v5696 = vsel %vm3262, %v5664, 0.0
      %v5697 = vsel %vm3263, %v5665, 0.0
      %v5698 = vsel %vm3264, %v5666, 0.0
      %v5699 = vsel %vm3265, %v5667, 0.0
      %v5700 = vsel %vm3266, %v5668, 0.0
      %v5701 = vsel %vm3267, %v5669, 0.0
      %v5702 = vsel %vm3268, %v5670, 0.0
      %v5703 = vsel %vm3269, %v5671, 0.0
      %v5704 = vsel %vm3270, %v5672, 0.0
      %v5705 = vsel %vm3271, %v5673, 0.0
      %v5706 = vsel %vm3272, %v5674, 0.0
      %v5707 = vsel %vm3273, %v5675, 0.0
      %v5708 = vsel %vm3274, %v5676, 0.0
      %v5709 = vsel %vm3275, %v5677, 0.0
      %v5710 = vpack.c.bf16 %v5678, %v5678
      %v5711 = vpack.c.bf16 %v5679, %v5679
      %v5712 = vpack.c.bf16 %v5680, %v5680
      %v5713 = vpack.c.bf16 %v5681, %v5681
      %v5714 = vpack.c.bf16 %v5682, %v5682
      %v5715 = vpack.c.bf16 %v5683, %v5683
      %v5716 = vpack.c.bf16 %v5684, %v5684
      %v5717 = vpack.c.bf16 %v5685, %v5685
      %v5718 = vpack.c.bf16 %v5686, %v5686
      %v5719 = vpack.c.bf16 %v5687, %v5687
      %v5720 = vpack.c.bf16 %v5688, %v5688
      %v5721 = vpack.c.bf16 %v5689, %v5689
      %v5722 = vpack.c.bf16 %v5690, %v5690
      %v5723 = vpack.c.bf16 %v5691, %v5691
      %v5724 = vpack.c.bf16 %v5692, %v5692
      %v5725 = vpack.c.bf16 %v5693, %v5693
      %v5726 = vpack.c.bf16 %v5694, %v5694
      %v5727 = vpack.c.bf16 %v5695, %v5695
      %v5728 = vpack.c.bf16 %v5696, %v5696
      %v5729 = vpack.c.bf16 %v5697, %v5697
      %v5730 = vpack.c.bf16 %v5698, %v5698
      %v5731 = vpack.c.bf16 %v5699, %v5699
      %v5732 = vpack.c.bf16 %v5700, %v5700
      %v5733 = vpack.c.bf16 %v5701, %v5701
      %v5734 = vpack.c.bf16 %v5702, %v5702
      %v5735 = vpack.c.bf16 %v5703, %v5703
      %v5736 = vpack.c.bf16 %v5704, %v5704
      %v5737 = vpack.c.bf16 %v5705, %v5705
      %v5738 = vpack.c.bf16 %v5706, %v5706
      %v5739 = vpack.c.bf16 %v5707, %v5707
      %v5740 = vpack.c.bf16 %v5708, %v5708
      %v5741 = vpack.c.bf16 %v5709, %v5709
      %5742 = vst.msk [vmem:[#allocation5 + $0x8] sm:$0xf] %vm3978, %v5710
      %5743 = vst.msk [vmem:[#allocation5 + $0x14] sm:$0xf] %vm3978, %v5711
      %5744 = vst.msk [vmem:[#allocation5 + $0x20] sm:$0xf] %vm3978, %v5712
      %5745 = vst.msk [vmem:[#allocation5 + $0x2c] sm:$0xf] %vm3978, %v5713
      %5746 = vst.msk [vmem:[#allocation5 + $0x38] sm:$0xf] %vm3978, %v5714
      %5747 = vst.msk [vmem:[#allocation5 + $0x44] sm:$0xf] %vm3978, %v5715
      %5748 = vst.msk [vmem:[#allocation5 + $0x50] sm:$0xf] %vm3978, %v5716
      %5749 = vst.msk [vmem:[#allocation5 + $0x5c] sm:$0xf] %vm3978, %v5717
      %5750 = vst.msk [vmem:[#allocation5 + $0x68] sm:$0xf] %vm3978, %v5718
      %5751 = vst.msk [vmem:[#allocation5 + $0x74] sm:$0xf] %vm3978, %v5719
      %5752 = vst.msk [vmem:[#allocation5 + $0x80] sm:$0xf] %vm3978, %v5720
      %5753 = vst.msk [vmem:[#allocation5 + $0x8c] sm:$0xf] %vm3978, %v5721
      %5754 = vst.msk [vmem:[#allocation5 + $0x98] sm:$0xf] %vm3978, %v5722
      %5755 = vst.msk [vmem:[#allocation5 + $0xa4] sm:$0xf] %vm3978, %v5723
      %5756 = vst.msk [vmem:[#allocation5 + $0xb0] sm:$0xf] %vm3978, %v5724
      %5757 = vst.msk [vmem:[#allocation5 + $0xbc] sm:$0xf] %vm3978, %v5725
      %5758 = vst.msk [vmem:[#allocation5 + $0xc8] sm:$0xf] %vm3978, %v5726
      %5759 = vst.msk [vmem:[#allocation5 + $0xd4] sm:$0xf] %vm3978, %v5727
      %5760 = vst.msk [vmem:[#allocation5 + $0xe0] sm:$0xf] %vm3978, %v5728
      %5761 = vst.msk [vmem:[#allocation5 + $0xec] sm:$0xf] %vm3978, %v5729
      %5762 = vst.msk [vmem:[#allocation5 + $0xf8] sm:$0xf] %vm3978, %v5730
      %5763 = vst.msk [vmem:[#allocation5 + $0x104] sm:$0xf] %vm3978, %v5731
      %5764 = vst.msk [vmem:[#allocation5 + $0x110] sm:$0xf] %vm3978, %v5732
      %5765 = vst.msk [vmem:[#allocation5 + $0x11c] sm:$0xf] %vm3978, %v5733
      %5766 = vst.msk [vmem:[#allocation5 + $0x128] sm:$0xf] %vm3978, %v5734
      %5767 = vst.msk [vmem:[#allocation5 + $0x134] sm:$0xf] %vm3978, %v5735
      %5768 = vst.msk [vmem:[#allocation5 + $0x140] sm:$0xf] %vm3978, %v5736
      %5769 = vst.msk [vmem:[#allocation5 + $0x14c] sm:$0xf] %vm3978, %v5737
      %5770 = vst.msk [vmem:[#allocation5 + $0x158] sm:$0xf] %vm3978, %v5738
      %5771 = vst.msk [vmem:[#allocation5 + $0x164] sm:$0xf] %vm3978, %v5739
      %5772 = vst.msk [vmem:[#allocation5 + $0x170] sm:$0xf] %vm3978, %v5740
      %5773 = vst.msk [vmem:[#allocation5 + $0x17c] sm:$0xf] %vm3978, %v5741
      %v5774 = vld [vmem:[%s3] sm:$0xf]
      %v5775 = vld [vmem:[%s3 + $0x4] sm:$0xf]
      %v5776 = vld [vmem:[%s3 + $0x8] sm:$0xf]
      %v5777 = vld [vmem:[%s3 + $0xc] sm:$0xf]
      %v5778 = vld [vmem:[%s3 + $0x10] sm:$0xf]
      %v5779 = vld [vmem:[%s3 + $0x14] sm:$0xf]
      %v5780 = vld [vmem:[%s3 + $0x18] sm:$0xf]
      %v5781 = vld [vmem:[%s3 + $0x1c] sm:$0xf]
      %v5782 = vld [vmem:[%s3 + $0x20] sm:$0xf]
      %v5783 = vld [vmem:[%s3 + $0x24] sm:$0xf]
      %v5784 = vld [vmem:[%s3 + $0x28] sm:$0xf]
      %v5785 = vld [vmem:[%s3 + $0x2c] sm:$0xf]
      %v5786 = vld [vmem:[%s3 + $0x30] sm:$0xf]
      %v5787 = vld [vmem:[%s3 + $0x34] sm:$0xf]
      %v5788 = vld [vmem:[%s3 + $0x38] sm:$0xf]
      %v5789 = vld [vmem:[%s3 + $0x3c] sm:$0xf]
      %v5790 = vld [vmem:[%s3 + $0x40] sm:$0xf]
      %v5791 = vld [vmem:[%s3 + $0x44] sm:$0xf]
      %v5792 = vld [vmem:[%s3 + $0x48] sm:$0xf]
      %v5793 = vld [vmem:[%s3 + $0x4c] sm:$0xf]
      %v5794 = vld [vmem:[%s3 + $0x50] sm:$0xf]
      %v5795 = vld [vmem:[%s3 + $0x54] sm:$0xf]
      %v5796 = vld [vmem:[%s3 + $0x58] sm:$0xf]
      %v5797 = vld [vmem:[%s3 + $0x5c] sm:$0xf]
      %v5798 = vld [vmem:[%s3 + $0x60] sm:$0xf]
      %v5799 = vld [vmem:[%s3 + $0x64] sm:$0xf]
      %v5800 = vld [vmem:[%s3 + $0x68] sm:$0xf]
      %v5801 = vld [vmem:[%s3 + $0x6c] sm:$0xf]
      %v5802 = vld [vmem:[%s3 + $0x70] sm:$0xf]
      %v5803 = vld [vmem:[%s3 + $0x74] sm:$0xf]
      %v5804 = vld [vmem:[%s3 + $0x78] sm:$0xf]
      %v5805 = vld [vmem:[%s3 + $0x7c] sm:$0xf]
      %v5806 = vld [vmem:[%s3 + $0x80] sm:$0xf]
      %v5807 = vld [vmem:[%s3 + $0x84] sm:$0xf]
      %v5808 = vld [vmem:[%s3 + $0x88] sm:$0xf]
      %v5809 = vld [vmem:[%s3 + $0x8c] sm:$0xf]
      %v5810 = vld [vmem:[%s4] sm:$0x1]
      %v5811 = vlaneseq
      %v5812 = vand.u32 %v5811, 127
      %vm5813 = vcmp.ge.s32.totalorder %v5812, 27
      %vm5814 = vcmp.lt.s32.totalorder %v5812, 51
      %vm5815 = vmand %vm5813, %vm5814
      %s5816 = smul.u32 0, 3
      %s5817 = smul.addr %s5816, 4
      %s5818 = scalar_lea.vmem [#allocation5], %s5817
      %v5819 = vld [vmem:[%s5818] sm:$0xff]
      %v5820 = vld [vmem:[%s5818 + $0x8] sm:$0xf]
      %v5821 = vld [vmem:[%s5818 + $0xc] sm:$0xff]
      %v5822 = vld [vmem:[%s5818 + $0x14] sm:$0xf]
      %v5823 = vld [vmem:[%s5818 + $0x18] sm:$0xff]
      %v5824 = vld [vmem:[%s5818 + $0x20] sm:$0xf]
      %v5825 = vld [vmem:[%s5818 + $0x24] sm:$0xff]
      %v5826 = vld [vmem:[%s5818 + $0x2c] sm:$0xf]
      %v5827 = vld [vmem:[%s5818 + $0x30] sm:$0xff]
      %v5828 = vld [vmem:[%s5818 + $0x38] sm:$0xf]
      %v5829 = vld [vmem:[%s5818 + $0x3c] sm:$0xff]
      %v5830 = vld [vmem:[%s5818 + $0x44] sm:$0xf]
      %v5831 = vld [vmem:[%s5818 + $0x48] sm:$0xff]
      %v5832 = vld [vmem:[%s5818 + $0x50] sm:$0xf]
      %v5833 = vld [vmem:[%s5818 + $0x54] sm:$0xff]
      %v5834 = vld [vmem:[%s5818 + $0x5c] sm:$0xf]
      %v5836 = vperm.slane %v5810, 0
      %v5854 = vunpack.c.l.b16 %v5819
      %v5855 = vunpack.c.h.b16 %v5819
      %v5856 = vunpack.c.l.b16 %v5820
      %v5857 = vunpack.c.l.b16 %v5821
      %v5858 = vunpack.c.h.b16 %v5821
      %v5859 = vunpack.c.l.b16 %v5822
      %v5860 = vunpack.c.l.b16 %v5823
      %v5861 = vunpack.c.h.b16 %v5823
      %v5862 = vunpack.c.l.b16 %v5824
      %v5863 = vunpack.c.l.b16 %v5825
      %v5864 = vunpack.c.h.b16 %v5825
      %v5865 = vunpack.c.l.b16 %v5826
      %v5866 = vunpack.c.l.b16 %v5827
      %v5867 = vunpack.c.h.b16 %v5827
      %v5868 = vunpack.c.l.b16 %v5828
      %v5869 = vunpack.c.l.b16 %v5829
      %v5870 = vunpack.c.h.b16 %v5829
      %v5871 = vunpack.c.l.b16 %v5830
      %v5872 = vunpack.c.l.b16 %v5831
      %v5873 = vunpack.c.h.b16 %v5831
      %v5874 = vunpack.c.l.b16 %v5832
      %v5875 = vunpack.c.l.b16 %v5833
      %v5876 = vunpack.c.h.b16 %v5833
      %v5877 = vunpack.c.l.b16 %v5834
      %v5878 = vpack.c.b16 %v5857, %v5854
      %v5879 = vpack.c.b16 %v5858, %v5855
      %v5880 = vpack.c.b16 %v5859, %v5856
      %v5881 = vpack.c.b16 %v5863, %v5860
      %v5882 = vpack.c.b16 %v5864, %v5861
      %v5883 = vpack.c.b16 %v5865, %v5862
      %v5884 = vpack.c.b16 %v5869, %v5866
      %v5885 = vpack.c.b16 %v5870, %v5867
      %v5886 = vpack.c.b16 %v5871, %v5868
      %v5887 = vpack.c.b16 %v5875, %v5872
      %v5888 = vpack.c.b16 %v5876, %v5873
      %v5889 = vpack.c.b16 %v5877, %v5874
      %v5934 = vunpack.c.l.b16 %v5774
      %v5935 = vunpack.c.l.b16 %v5775
      %v5936 = vunpack.c.l.b16 %v5776
      %v5937 = vunpack.c.l.b16 %v5777
      %v5938 = vunpack.c.l.b16 %v5778
      %v5939 = vunpack.c.l.b16 %v5779
      %v5940 = vunpack.c.l.b16 %v5780
      %v5941 = vunpack.c.l.b16 %v5781
      %v5942 = vunpack.c.l.b16 %v5782
      %v5943 = vunpack.c.l.b16 %v5783
      %v5944 = vunpack.c.l.b16 %v5784
      %v5945 = vunpack.c.l.b16 %v5785
      %v5946 = vunpack.c.l.b16 %v5786
      %v5947 = vunpack.c.l.b16 %v5787
      %v5948 = vunpack.c.l.b16 %v5788
      %v5949 = vunpack.c.l.b16 %v5789
      %v5950 = vunpack.c.l.b16 %v5790
      %v5951 = vunpack.c.l.b16 %v5791
      %v5952 = vunpack.c.l.b16 %v5792
      %v5953 = vunpack.c.l.b16 %v5793
      %v5954 = vunpack.c.l.b16 %v5794
      %v5955 = vunpack.c.l.b16 %v5795
      %v5956 = vunpack.c.l.b16 %v5796
      %v5957 = vunpack.c.l.b16 %v5797
      %v5958 = vunpack.c.l.b16 %v5798
      %v5959 = vunpack.c.l.b16 %v5799
      %v5960 = vunpack.c.l.b16 %v5800
      %v5961 = vunpack.c.l.b16 %v5801
      %v5962 = vunpack.c.l.b16 %v5802
      %v5963 = vunpack.c.l.b16 %v5803
      %v5964 = vunpack.c.l.b16 %v5804
      %v5965 = vunpack.c.l.b16 %v5805
      %v5966 = vunpack.c.l.b16 %v5806
      %v5967 = vunpack.c.l.b16 %v5807
      %v5968 = vunpack.c.l.b16 %v5808
      %v5969 = vunpack.c.l.b16 %v5809
      %v5970 = vpack.c.b16 %v5935, %v5934
      %v5971 = vpack.c.b16 %v5937, %v5936
      %v5972 = vpack.c.b16 %v5939, %v5938
      %v5973 = vpack.c.b16 %v5941, %v5940
      %v5974 = vpack.c.b16 %v5943, %v5942
      %v5975 = vpack.c.b16 %v5945, %v5944
      %v5976 = vpack.c.b16 %v5947, %v5946
      %v5977 = vpack.c.b16 %v5949, %v5948
      %v5978 = vpack.c.b16 %v5951, %v5950
      %v5979 = vpack.c.b16 %v5953, %v5952
      %v5980 = vpack.c.b16 %v5955, %v5954
      %v5981 = vpack.c.b16 %v5957, %v5956
      %v5982 = vpack.c.b16 %v5959, %v5958
      %v5983 = vpack.c.b16 %v5961, %v5960
      %v5984 = vpack.c.b16 %v5963, %v5962
      %v5985 = vpack.c.b16 %v5965, %v5964
      %v5986 = vpack.c.b16 %v5967, %v5966
      %v5987 = vpack.c.b16 %v5969, %v5968
      %v6007 = vsel %vm3609, %v5880, 0
      %v6010 = vsel %vm3609, %v5883, 0
      %v6013 = vsel %vm3609, %v5886, 0
      %v6016 = vsel %vm3609, %v5889, 0
      %6018 = vmatpush.bf16.msra.mxu0 %v5977
      %6019 = vmatpush.bf16.msra.mxu0 %v5976
      %6020 = vmatpush.bf16.msra.mxu0 %v5975
      %6021 = vmatpush.bf16.msra.mxu0 %v5974
      %6022 = vmatpush.bf16.msra.mxu0 %v5973
      %6023 = vmatpush.bf16.msra.mxu0 %v5972
      %6024 = vmatpush.bf16.msra.mxu0 %v5971
      %6025 = vmatpush.bf16.msra.mxu0 %v5970
      %6026 = vmatmul.bf16.gmra.mxu0 %v5878
      %v6027 = vpop.f32.mrf.mxu0
      %v6028 = vadd.f32 %v5836, %v6027
      %v6029 = vpop.f32.mrf.mxu0
      %v6030 = vadd.f32 %v5836, %v6029
      %6031 = vmatmul.bf16.gmra.mxu0 %v5881
      %v6032 = vpop.f32.mrf.mxu0
      %v6033 = vadd.f32 %v5836, %v6032
      %v6034 = vpop.f32.mrf.mxu0
      %v6035 = vadd.f32 %v5836, %v6034
      %6036 = vmatmul.bf16.gmra.mxu0 %v5884
      %v6037 = vpop.f32.mrf.mxu0
      %v6038 = vadd.f32 %v5836, %v6037
      %v6039 = vpop.f32.mrf.mxu0
      %v6040 = vadd.f32 %v5836, %v6039
      %6041 = vmatmul.bf16.gmra.mxu0 %v5887
      %v6042 = vpop.f32.mrf.mxu0
      %v6043 = vadd.f32 %v5836, %v6042
      %v6044 = vpop.f32.mrf.mxu0
      %v6045 = vadd.f32 %v5836, %v6044
      %6046 = vdwg.mxu0
      %6047 = vmatpush.bf16.msra.mxu0 %v5985
      %6048 = vmatpush.bf16.msra.mxu0 %v5984
      %6049 = vmatpush.bf16.msra.mxu0 %v5983
      %6050 = vmatpush.bf16.msra.mxu0 %v5982
      %6051 = vmatpush.bf16.msra.mxu0 %v5981
      %6052 = vmatpush.bf16.msra.mxu0 %v5980
      %6053 = vmatpush.bf16.msra.mxu0 %v5979
      %6054 = vmatpush.bf16.msra.mxu0 %v5978
      %6055 = vmatmul.bf16.gmra.mxu0 %v5879
      %v6056 = vpop.f32.mrf.mxu0
      %v6057 = vadd.f32 %v6028, %v6056
      %v6058 = vpop.f32.mrf.mxu0
      %v6059 = vadd.f32 %v6030, %v6058
      %6060 = vmatmul.bf16.gmra.mxu0 %v5882
      %v6061 = vpop.f32.mrf.mxu0
      %v6062 = vadd.f32 %v6033, %v6061
      %v6063 = vpop.f32.mrf.mxu0
      %v6064 = vadd.f32 %v6035, %v6063
      %6065 = vmatmul.bf16.gmra.mxu0 %v5885
      %v6066 = vpop.f32.mrf.mxu0
      %v6067 = vadd.f32 %v6038, %v6066
      %v6068 = vpop.f32.mrf.mxu0
      %v6069 = vadd.f32 %v6040, %v6068
      %6070 = vmatmul.bf16.gmra.mxu0 %v5888
      %v6071 = vpop.f32.mrf.mxu0
      %v6072 = vadd.f32 %v6043, %v6071
      %v6073 = vpop.f32.mrf.mxu0
      %v6074 = vadd.f32 %v6045, %v6073
      %6075 = vdwg.mxu0
      %6076 = vmatpush.bf16.msra.mxu0 0
      %6077 = vmatpush.bf16.msra.mxu0 0
      %6078 = vmatpush.bf16.msra.mxu0 0
      %6079 = vmatpush.bf16.msra.mxu0 0
      %6080 = vmatpush.bf16.msra.mxu0 0
      %6081 = vmatpush.bf16.msra.mxu0 0
      %6082 = vmatpush.bf16.msra.mxu0 %v5987
      %6083 = vmatpush.bf16.msra.mxu0 %v5986
      %6084 = vmatmul.bf16.gmra.mxu0 %v6007
      %v6085 = vpop.f32.mrf.mxu0
      %v6086 = vadd.f32 %v6057, %v6085
      %v6087 = vpop.f32.mrf.mxu0
      %v6088 = vadd.f32 %v6059, %v6087
      %6089 = vmatmul.bf16.gmra.mxu0 %v6010
      %v6090 = vpop.f32.mrf.mxu0
      %v6091 = vadd.f32 %v6062, %v6090
      %v6092 = vpop.f32.mrf.mxu0
      %v6093 = vadd.f32 %v6064, %v6092
      %6094 = vmatmul.bf16.gmra.mxu0 %v6013
      %v6095 = vpop.f32.mrf.mxu0
      %v6096 = vadd.f32 %v6067, %v6095
      %v6097 = vpop.f32.mrf.mxu0
      %v6098 = vadd.f32 %v6069, %v6097
      %6099 = vmatmul.bf16.gmra.mxu0 %v6016
      %v6100 = vpop.f32.mrf.mxu0
      %v6101 = vadd.f32 %v6072, %v6100
      %v6102 = vpop.f32.mrf.mxu0
      %v6103 = vadd.f32 %v6074, %v6102
      %6104 = vdwg.mxu0
      %v6105 = vtanh.pop %v6086
      %v6106 = vtanh.pop %v6088
      %v6107 = vtanh.pop %v6091
      %v6108 = vtanh.pop %v6093
      %v6109 = vtanh.pop %v6096
      %v6110 = vtanh.pop %v6098
      %v6111 = vtanh.pop %v6101
      %v6112 = vtanh.pop %v6103
      %v6113 = vsel %vm5815, %v6105, %v6086
      %v6114 = vsel %vm5815, %v6106, %v6088
      %v6115 = vsel %vm5815, %v6107, %v6091
      %v6116 = vsel %vm5815, %v6108, %v6093
      %v6117 = vsel %vm5815, %v6109, %v6096
      %v6118 = vsel %vm5815, %v6110, %v6098
      %v6119 = vsel %vm5815, %v6111, %v6101
      %v6120 = vsel %vm5815, %v6112, %v6103
      %6121 = vst [vmem:[%s224] sm:$0xff] %v6113
      %6122 = vst [vmem:[%s224 + $0x8] sm:$0xff] %v6114
      %6123 = vst [vmem:[%s224 + $0x10] sm:$0xff] %v6115
      %6124 = vst [vmem:[%s224 + $0x18] sm:$0xff] %v6116
      %6125 = vst [vmem:[%s224 + $0x20] sm:$0xff] %v6117
      %6126 = vst [vmem:[%s224 + $0x28] sm:$0xff] %v6118
      %6127 = vst [vmem:[%s224 + $0x30] sm:$0xff] %v6119
      %6128 = vst [vmem:[%s224 + $0x38] sm:$0xff] %v6120
      %s6129 = smul.u32 8, 3
      %s6130 = smul.addr %s6129, 4
      %s6131 = scalar_lea.vmem [#allocation5], %s6130
      %v6132 = vld [vmem:[%s6131] sm:$0xff]
      %v6133 = vld [vmem:[%s6131 + $0x8] sm:$0xf]
      %v6134 = vld [vmem:[%s6131 + $0xc] sm:$0xff]
      %v6135 = vld [vmem:[%s6131 + $0x14] sm:$0xf]
      %v6136 = vld [vmem:[%s6131 + $0x18] sm:$0xff]
      %v6137 = vld [vmem:[%s6131 + $0x20] sm:$0xf]
      %v6138 = vld [vmem:[%s6131 + $0x24] sm:$0xff]
      %v6139 = vld [vmem:[%s6131 + $0x2c] sm:$0xf]
      %v6140 = vld [vmem:[%s6131 + $0x30] sm:$0xff]
      %v6141 = vld [vmem:[%s6131 + $0x38] sm:$0xf]
      %v6142 = vld [vmem:[%s6131 + $0x3c] sm:$0xff]
      %v6143 = vld [vmem:[%s6131 + $0x44] sm:$0xf]
      %v6144 = vld [vmem:[%s6131 + $0x48] sm:$0xff]
      %v6145 = vld [vmem:[%s6131 + $0x50] sm:$0xf]
      %v6146 = vld [vmem:[%s6131 + $0x54] sm:$0xff]
      %v6147 = vld [vmem:[%s6131 + $0x5c] sm:$0xf]
      %v6164 = vunpack.c.l.b16 %v6132
      %v6165 = vunpack.c.h.b16 %v6132
      %v6166 = vunpack.c.l.b16 %v6133
      %v6167 = vunpack.c.l.b16 %v6134
      %v6168 = vunpack.c.h.b16 %v6134
      %v6169 = vunpack.c.l.b16 %v6135
      %v6170 = vunpack.c.l.b16 %v6136
      %v6171 = vunpack.c.h.b16 %v6136
      %v6172 = vunpack.c.l.b16 %v6137
      %v6173 = vunpack.c.l.b16 %v6138
      %v6174 = vunpack.c.h.b16 %v6138
      %v6175 = vunpack.c.l.b16 %v6139
      %v6176 = vunpack.c.l.b16 %v6140
      %v6177 = vunpack.c.h.b16 %v6140
      %v6178 = vunpack.c.l.b16 %v6141
      %v6179 = vunpack.c.l.b16 %v6142
      %v6180 = vunpack.c.h.b16 %v6142
      %v6181 = vunpack.c.l.b16 %v6143
      %v6182 = vunpack.c.l.b16 %v6144
      %v6183 = vunpack.c.h.b16 %v6144
      %v6184 = vunpack.c.l.b16 %v6145
      %v6185 = vunpack.c.l.b16 %v6146
      %v6186 = vunpack.c.h.b16 %v6146
      %v6187 = vunpack.c.l.b16 %v6147
      %v6188 = vpack.c.b16 %v6167, %v6164
      %v6189 = vpack.c.b16 %v6168, %v6165
      %v6190 = vpack.c.b16 %v6169, %v6166
      %v6191 = vpack.c.b16 %v6173, %v6170
      %v6192 = vpack.c.b16 %v6174, %v6171
      %v6193 = vpack.c.b16 %v6175, %v6172
      %v6194 = vpack.c.b16 %v6179, %v6176
      %v6195 = vpack.c.b16 %v6180, %v6177
      %v6196 = vpack.c.b16 %v6181, %v6178
      %v6197 = vpack.c.b16 %v6185, %v6182
      %v6198 = vpack.c.b16 %v6186, %v6183
      %v6199 = vpack.c.b16 %v6187, %v6184
      %v6209 = vsel %vm3609, %v6190, 0
      %v6212 = vsel %vm3609, %v6193, 0
      %v6215 = vsel %vm3609, %v6196, 0
      %v6218 = vsel %vm3609, %v6199, 0
      %6220 = vmatpush.bf16.msra.mxu0 %v5977
      %6221 = vmatpush.bf16.msra.mxu0 %v5976
      %6222 = vmatpush.bf16.msra.mxu0 %v5975
      %6223 = vmatpush.bf16.msra.mxu0 %v5974
      %6224 = vmatpush.bf16.msra.mxu0 %v5973
      %6225 = vmatpush.bf16.msra.mxu0 %v5972
      %6226 = vmatpush.bf16.msra.mxu0 %v5971
      %6227 = vmatpush.bf16.msra.mxu0 %v5970
      %6228 = vmatmul.bf16.gmra.mxu0 %v6188
      %v6229 = vpop.f32.mrf.mxu0
      %v6230 = vadd.f32 %v5836, %v6229
      %v6231 = vpop.f32.mrf.mxu0
      %v6232 = vadd.f32 %v5836, %v6231
      %6233 = vmatmul.bf16.gmra.mxu0 %v6191
      %v6234 = vpop.f32.mrf.mxu0
      %v6235 = vadd.f32 %v5836, %v6234
      %v6236 = vpop.f32.mrf.mxu0
      %v6237 = vadd.f32 %v5836, %v6236
      %6238 = vmatmul.bf16.gmra.mxu0 %v6194
      %v6239 = vpop.f32.mrf.mxu0
      %v6240 = vadd.f32 %v5836, %v6239
      %v6241 = vpop.f32.mrf.mxu0
      %v6242 = vadd.f32 %v5836, %v6241
      %6243 = vmatmul.bf16.gmra.mxu0 %v6197
      %v6244 = vpop.f32.mrf.mxu0
      %v6245 = vadd.f32 %v5836, %v6244
      %v6246 = vpop.f32.mrf.mxu0
      %v6247 = vadd.f32 %v5836, %v6246
      %6248 = vdwg.mxu0
      %6249 = vmatpush.bf16.msra.mxu0 %v5985
      %6250 = vmatpush.bf16.msra.mxu0 %v5984
      %6251 = vmatpush.bf16.msra.mxu0 %v5983
      %6252 = vmatpush.bf16.msra.mxu0 %v5982
      %6253 = vmatpush.bf16.msra.mxu0 %v5981
      %6254 = vmatpush.bf16.msra.mxu0 %v5980
      %6255 = vmatpush.bf16.msra.mxu0 %v5979
      %6256 = vmatpush.bf16.msra.mxu0 %v5978
      %6257 = vmatmul.bf16.gmra.mxu0 %v6189
      %v6258 = vpop.f32.mrf.mxu0
      %v6259 = vadd.f32 %v6230, %v6258
      %v6260 = vpop.f32.mrf.mxu0
      %v6261 = vadd.f32 %v6232, %v6260
      %6262 = vmatmul.bf16.gmra.mxu0 %v6192
      %v6263 = vpop.f32.mrf.mxu0
      %v6264 = vadd.f32 %v6235, %v6263
      %v6265 = vpop.f32.mrf.mxu0
      %v6266 = vadd.f32 %v6237, %v6265
      %6267 = vmatmul.bf16.gmra.mxu0 %v6195
      %v6268 = vpop.f32.mrf.mxu0
      %v6269 = vadd.f32 %v6240, %v6268
      %v6270 = vpop.f32.mrf.mxu0
      %v6271 = vadd.f32 %v6242, %v6270
      %6272 = vmatmul.bf16.gmra.mxu0 %v6198
      %v6273 = vpop.f32.mrf.mxu0
      %v6274 = vadd.f32 %v6245, %v6273
      %v6275 = vpop.f32.mrf.mxu0
      %v6276 = vadd.f32 %v6247, %v6275
      %6277 = vdwg.mxu0
      %6278 = vmatpush.bf16.msra.mxu0 0
      %6279 = vmatpush.bf16.msra.mxu0 0
      %6280 = vmatpush.bf16.msra.mxu0 0
      %6281 = vmatpush.bf16.msra.mxu0 0
      %6282 = vmatpush.bf16.msra.mxu0 0
      %6283 = vmatpush.bf16.msra.mxu0 0
      %6284 = vmatpush.bf16.msra.mxu0 %v5987
      %6285 = vmatpush.bf16.msra.mxu0 %v5986
      %6286 = vmatmul.bf16.gmra.mxu0 %v6209
      %v6287 = vpop.f32.mrf.mxu0
      %v6288 = vadd.f32 %v6259, %v6287
      %v6289 = vpop.f32.mrf.mxu0
      %v6290 = vadd.f32 %v6261, %v6289
      %6291 = vmatmul.bf16.gmra.mxu0 %v6212
      %v6292 = vpop.f32.mrf.mxu0
      %v6293 = vadd.f32 %v6264, %v6292
      %v6294 = vpop.f32.mrf.mxu0
      %v6295 = vadd.f32 %v6266, %v6294
      %6296 = vmatmul.bf16.gmra.mxu0 %v6215
      %v6297 = vpop.f32.mrf.mxu0
      %v6298 = vadd.f32 %v6269, %v6297
      %v6299 = vpop.f32.mrf.mxu0
      %v6300 = vadd.f32 %v6271, %v6299
      %6301 = vmatmul.bf16.gmra.mxu0 %v6218
      %v6302 = vpop.f32.mrf.mxu0
      %v6303 = vadd.f32 %v6274, %v6302
      %v6304 = vpop.f32.mrf.mxu0
      %v6305 = vadd.f32 %v6276, %v6304
      %6306 = vdwg.mxu0
      %v6307 = vtanh.pop %v6288
      %v6308 = vtanh.pop %v6290
      %v6309 = vtanh.pop %v6293
      %v6310 = vtanh.pop %v6295
      %v6311 = vtanh.pop %v6298
      %v6312 = vtanh.pop %v6300
      %v6313 = vtanh.pop %v6303
      %v6314 = vtanh.pop %v6305
      %v6315 = vsel %vm5815, %v6307, %v6288
      %v6316 = vsel %vm5815, %v6308, %v6290
      %v6317 = vsel %vm5815, %v6309, %v6293
      %v6318 = vsel %vm5815, %v6310, %v6295
      %v6319 = vsel %vm5815, %v6311, %v6298
      %v6320 = vsel %vm5815, %v6312, %v6300
      %v6321 = vsel %vm5815, %v6313, %v6303
      %v6322 = vsel %vm5815, %v6314, %v6305
      %s6323 = scalar_lea.vmem %s224, 64
      %6324 = vst [vmem:[%s6323] sm:$0xff] %v6315
      %6325 = vst [vmem:[%s6323 + $0x8] sm:$0xff] %v6316
      %6326 = vst [vmem:[%s6323 + $0x10] sm:$0xff] %v6317
      %6327 = vst [vmem:[%s6323 + $0x18] sm:$0xff] %v6318
      %6328 = vst [vmem:[%s6323 + $0x20] sm:$0xff] %v6319
      %6329 = vst [vmem:[%s6323 + $0x28] sm:$0xff] %v6320
      %6330 = vst [vmem:[%s6323 + $0x30] sm:$0xff] %v6321
      %6331 = vst [vmem:[%s6323 + $0x38] sm:$0xff] %v6322
      %s6332 = smul.u32 16, 3
      %s6333 = smul.addr %s6332, 4
      %s6334 = scalar_lea.vmem [#allocation5], %s6333
      %v6335 = vld [vmem:[%s6334] sm:$0xff]
      %v6336 = vld [vmem:[%s6334 + $0x8] sm:$0xf]
      %v6337 = vld [vmem:[%s6334 + $0xc] sm:$0xff]
      %v6338 = vld [vmem:[%s6334 + $0x14] sm:$0xf]
      %v6339 = vld [vmem:[%s6334 + $0x18] sm:$0xff]
      %v6340 = vld [vmem:[%s6334 + $0x20] sm:$0xf]
      %v6341 = vld [vmem:[%s6334 + $0x24] sm:$0xff]
      %v6342 = vld [vmem:[%s6334 + $0x2c] sm:$0xf]
      %v6343 = vld [vmem:[%s6334 + $0x30] sm:$0xff]
      %v6344 = vld [vmem:[%s6334 + $0x38] sm:$0xf]
      %v6345 = vld [vmem:[%s6334 + $0x3c] sm:$0xff]
      %v6346 = vld [vmem:[%s6334 + $0x44] sm:$0xf]
      %v6347 = vld [vmem:[%s6334 + $0x48] sm:$0xff]
      %v6348 = vld [vmem:[%s6334 + $0x50] sm:$0xf]
      %v6349 = vld [vmem:[%s6334 + $0x54] sm:$0xff]
      %v6350 = vld [vmem:[%s6334 + $0x5c] sm:$0xf]
      %v6367 = vunpack.c.l.b16 %v6335
      %v6368 = vunpack.c.h.b16 %v6335
      %v6369 = vunpack.c.l.b16 %v6336
      %v6370 = vunpack.c.l.b16 %v6337
      %v6371 = vunpack.c.h.b16 %v6337
      %v6372 = vunpack.c.l.b16 %v6338
      %v6373 = vunpack.c.l.b16 %v6339
      %v6374 = vunpack.c.h.b16 %v6339
      %v6375 = vunpack.c.l.b16 %v6340
      %v6376 = vunpack.c.l.b16 %v6341
      %v6377 = vunpack.c.h.b16 %v6341
      %v6378 = vunpack.c.l.b16 %v6342
      %v6379 = vunpack.c.l.b16 %v6343
      %v6380 = vunpack.c.h.b16 %v6343
      %v6381 = vunpack.c.l.b16 %v6344
      %v6382 = vunpack.c.l.b16 %v6345
      %v6383 = vunpack.c.h.b16 %v6345
      %v6384 = vunpack.c.l.b16 %v6346
      %v6385 = vunpack.c.l.b16 %v6347
      %v6386 = vunpack.c.h.b16 %v6347
      %v6387 = vunpack.c.l.b16 %v6348
      %v6388 = vunpack.c.l.b16 %v6349
      %v6389 = vunpack.c.h.b16 %v6349
      %v6390 = vunpack.c.l.b16 %v6350
      %v6391 = vpack.c.b16 %v6370, %v6367
      %v6392 = vpack.c.b16 %v6371, %v6368
      %v6393 = vpack.c.b16 %v6372, %v6369
      %v6394 = vpack.c.b16 %v6376, %v6373
      %v6395 = vpack.c.b16 %v6377, %v6374
      %v6396 = vpack.c.b16 %v6378, %v6375
      %v6397 = vpack.c.b16 %v6382, %v6379
      %v6398 = vpack.c.b16 %v6383, %v6380
      %v6399 = vpack.c.b16 %v6384, %v6381
      %v6400 = vpack.c.b16 %v6388, %v6385
      %v6401 = vpack.c.b16 %v6389, %v6386
      %v6402 = vpack.c.b16 %v6390, %v6387
      %v6412 = vsel %vm3609, %v6393, 0
      %v6415 = vsel %vm3609, %v6396, 0
      %v6418 = vsel %vm3609, %v6399, 0
      %v6421 = vsel %vm3609, %v6402, 0
      %6423 = vmatpush.bf16.msra.mxu0 %v5977
      %6424 = vmatpush.bf16.msra.mxu0 %v5976
      %6425 = vmatpush.bf16.msra.mxu0 %v5975
      %6426 = vmatpush.bf16.msra.mxu0 %v5974
      %6427 = vmatpush.bf16.msra.mxu0 %v5973
      %6428 = vmatpush.bf16.msra.mxu0 %v5972
      %6429 = vmatpush.bf16.msra.mxu0 %v5971
      %6430 = vmatpush.bf16.msra.mxu0 %v5970
      %6431 = vmatmul.bf16.gmra.mxu0 %v6391
      %v6432 = vpop.f32.mrf.mxu0
      %v6433 = vadd.f32 %v5836, %v6432
      %v6434 = vpop.f32.mrf.mxu0
      %v6435 = vadd.f32 %v5836, %v6434
      %6436 = vmatmul.bf16.gmra.mxu0 %v6394
      %v6437 = vpop.f32.mrf.mxu0
      %v6438 = vadd.f32 %v5836, %v6437
      %v6439 = vpop.f32.mrf.mxu0
      %v6440 = vadd.f32 %v5836, %v6439
      %6441 = vmatmul.bf16.gmra.mxu0 %v6397
      %v6442 = vpop.f32.mrf.mxu0
      %v6443 = vadd.f32 %v5836, %v6442
      %v6444 = vpop.f32.mrf.mxu0
      %v6445 = vadd.f32 %v5836, %v6444
      %6446 = vmatmul.bf16.gmra.mxu0 %v6400
      %v6447 = vpop.f32.mrf.mxu0
      %v6448 = vadd.f32 %v5836, %v6447
      %v6449 = vpop.f32.mrf.mxu0
      %v6450 = vadd.f32 %v5836, %v6449
      %6451 = vdwg.mxu0
      %6452 = vmatpush.bf16.msra.mxu0 %v5985
      %6453 = vmatpush.bf16.msra.mxu0 %v5984
      %6454 = vmatpush.bf16.msra.mxu0 %v5983
      %6455 = vmatpush.bf16.msra.mxu0 %v5982
      %6456 = vmatpush.bf16.msra.mxu0 %v5981
      %6457 = vmatpush.bf16.msra.mxu0 %v5980
      %6458 = vmatpush.bf16.msra.mxu0 %v5979
      %6459 = vmatpush.bf16.msra.mxu0 %v5978
      %6460 = vmatmul.bf16.gmra.mxu0 %v6392
      %v6461 = vpop.f32.mrf.mxu0
      %v6462 = vadd.f32 %v6433, %v6461
      %v6463 = vpop.f32.mrf.mxu0
      %v6464 = vadd.f32 %v6435, %v6463
      %6465 = vmatmul.bf16.gmra.mxu0 %v6395
      %v6466 = vpop.f32.mrf.mxu0
      %v6467 = vadd.f32 %v6438, %v6466
      %v6468 = vpop.f32.mrf.mxu0
      %v6469 = vadd.f32 %v6440, %v6468
      %6470 = vmatmul.bf16.gmra.mxu0 %v6398
      %v6471 = vpop.f32.mrf.mxu0
      %v6472 = vadd.f32 %v6443, %v6471
      %v6473 = vpop.f32.mrf.mxu0
      %v6474 = vadd.f32 %v6445, %v6473
      %6475 = vmatmul.bf16.gmra.mxu0 %v6401
      %v6476 = vpop.f32.mrf.mxu0
      %v6477 = vadd.f32 %v6448, %v6476
      %v6478 = vpop.f32.mrf.mxu0
      %v6479 = vadd.f32 %v6450, %v6478
      %6480 = vdwg.mxu0
      %6481 = vmatpush.bf16.msra.mxu0 0
      %6482 = vmatpush.bf16.msra.mxu0 0
      %6483 = vmatpush.bf16.msra.mxu0 0
      %6484 = vmatpush.bf16.msra.mxu0 0
      %6485 = vmatpush.bf16.msra.mxu0 0
      %6486 = vmatpush.bf16.msra.mxu0 0
      %6487 = vmatpush.bf16.msra.mxu0 %v5987
      %6488 = vmatpush.bf16.msra.mxu0 %v5986
      %6489 = vmatmul.bf16.gmra.mxu0 %v6412
      %v6490 = vpop.f32.mrf.mxu0
      %v6491 = vadd.f32 %v6462, %v6490
      %v6492 = vpop.f32.mrf.mxu0
      %v6493 = vadd.f32 %v6464, %v6492
      %6494 = vmatmul.bf16.gmra.mxu0 %v6415
      %v6495 = vpop.f32.mrf.mxu0
      %v6496 = vadd.f32 %v6467, %v6495
      %v6497 = vpop.f32.mrf.mxu0
      %v6498 = vadd.f32 %v6469, %v6497
      %6499 = vmatmul.bf16.gmra.mxu0 %v6418
      %v6500 = vpop.f32.mrf.mxu0
      %v6501 = vadd.f32 %v6472, %v6500
      %v6502 = vpop.f32.mrf.mxu0
      %v6503 = vadd.f32 %v6474, %v6502
      %6504 = vmatmul.bf16.gmra.mxu0 %v6421
      %v6505 = vpop.f32.mrf.mxu0
      %v6506 = vadd.f32 %v6477, %v6505
      %v6507 = vpop.f32.mrf.mxu0
      %v6508 = vadd.f32 %v6479, %v6507
      %6509 = vdwg.mxu0
      %v6510 = vtanh.pop %v6491
      %v6511 = vtanh.pop %v6493
      %v6512 = vtanh.pop %v6496
      %v6513 = vtanh.pop %v6498
      %v6514 = vtanh.pop %v6501
      %v6515 = vtanh.pop %v6503
      %v6516 = vtanh.pop %v6506
      %v6517 = vtanh.pop %v6508
      %v6518 = vsel %vm5815, %v6510, %v6491
      %v6519 = vsel %vm5815, %v6511, %v6493
      %v6520 = vsel %vm5815, %v6512, %v6496
      %v6521 = vsel %vm5815, %v6513, %v6498
      %v6522 = vsel %vm5815, %v6514, %v6501
      %v6523 = vsel %vm5815, %v6515, %v6503
      %v6524 = vsel %vm5815, %v6516, %v6506
      %v6525 = vsel %vm5815, %v6517, %v6508
      %s6526 = scalar_lea.vmem %s224, 128
      %6527 = vst [vmem:[%s6526] sm:$0xff] %v6518
      %6528 = vst [vmem:[%s6526 + $0x8] sm:$0xff] %v6519
      %6529 = vst [vmem:[%s6526 + $0x10] sm:$0xff] %v6520
      %6530 = vst [vmem:[%s6526 + $0x18] sm:$0xff] %v6521
      %6531 = vst [vmem:[%s6526 + $0x20] sm:$0xff] %v6522
      %6532 = vst [vmem:[%s6526 + $0x28] sm:$0xff] %v6523
      %6533 = vst [vmem:[%s6526 + $0x30] sm:$0xff] %v6524
      %6534 = vst [vmem:[%s6526 + $0x38] sm:$0xff] %v6525
      %s6535 = smul.u32 24, 3
      %s6536 = smul.addr %s6535, 4
      %s6537 = scalar_lea.vmem [#allocation5], %s6536
      %v6538 = vld [vmem:[%s6537] sm:$0xff]
      %v6539 = vld [vmem:[%s6537 + $0x8] sm:$0xf]
      %v6540 = vld [vmem:[%s6537 + $0xc] sm:$0xff]
      %v6541 = vld [vmem:[%s6537 + $0x14] sm:$0xf]
      %v6542 = vld [vmem:[%s6537 + $0x18] sm:$0xff]
      %v6543 = vld [vmem:[%s6537 + $0x20] sm:$0xf]
      %v6544 = vld [vmem:[%s6537 + $0x24] sm:$0xff]
      %v6545 = vld [vmem:[%s6537 + $0x2c] sm:$0xf]
      %v6546 = vld [vmem:[%s6537 + $0x30] sm:$0xff]
      %v6547 = vld [vmem:[%s6537 + $0x38] sm:$0xf]
      %v6548 = vld [vmem:[%s6537 + $0x3c] sm:$0xff]
      %v6549 = vld [vmem:[%s6537 + $0x44] sm:$0xf]
      %v6550 = vld [vmem:[%s6537 + $0x48] sm:$0xff]
      %v6551 = vld [vmem:[%s6537 + $0x50] sm:$0xf]
      %v6552 = vld [vmem:[%s6537 + $0x54] sm:$0xff]
      %v6553 = vld [vmem:[%s6537 + $0x5c] sm:$0xf]
      %v6570 = vunpack.c.l.b16 %v6538
      %v6571 = vunpack.c.h.b16 %v6538
      %v6572 = vunpack.c.l.b16 %v6539
      %v6573 = vunpack.c.l.b16 %v6540
      %v6574 = vunpack.c.h.b16 %v6540
      %v6575 = vunpack.c.l.b16 %v6541
      %v6576 = vunpack.c.l.b16 %v6542
      %v6577 = vunpack.c.h.b16 %v6542
      %v6578 = vunpack.c.l.b16 %v6543
      %v6579 = vunpack.c.l.b16 %v6544
      %v6580 = vunpack.c.h.b16 %v6544
      %v6581 = vunpack.c.l.b16 %v6545
      %v6582 = vunpack.c.l.b16 %v6546
      %v6583 = vunpack.c.h.b16 %v6546
      %v6584 = vunpack.c.l.b16 %v6547
      %v6585 = vunpack.c.l.b16 %v6548
      %v6586 = vunpack.c.h.b16 %v6548
      %v6587 = vunpack.c.l.b16 %v6549
      %v6588 = vunpack.c.l.b16 %v6550
      %v6589 = vunpack.c.h.b16 %v6550
      %v6590 = vunpack.c.l.b16 %v6551
      %v6591 = vunpack.c.l.b16 %v6552
      %v6592 = vunpack.c.h.b16 %v6552
      %v6593 = vunpack.c.l.b16 %v6553
      %v6594 = vpack.c.b16 %v6573, %v6570
      %v6595 = vpack.c.b16 %v6574, %v6571
      %v6596 = vpack.c.b16 %v6575, %v6572
      %v6597 = vpack.c.b16 %v6579, %v6576
      %v6598 = vpack.c.b16 %v6580, %v6577
      %v6599 = vpack.c.b16 %v6581, %v6578
      %v6600 = vpack.c.b16 %v6585, %v6582
      %v6601 = vpack.c.b16 %v6586, %v6583
      %v6602 = vpack.c.b16 %v6587, %v6584
      %v6603 = vpack.c.b16 %v6591, %v6588
      %v6604 = vpack.c.b16 %v6592, %v6589
      %v6605 = vpack.c.b16 %v6593, %v6590
      %v6615 = vsel %vm3609, %v6596, 0
      %v6618 = vsel %vm3609, %v6599, 0
      %v6621 = vsel %vm3609, %v6602, 0
      %v6624 = vsel %vm3609, %v6605, 0
      %6626 = vmatpush.bf16.msra.mxu0 %v5977
      %6627 = vmatpush.bf16.msra.mxu0 %v5976
      %6628 = vmatpush.bf16.msra.mxu0 %v5975
      %6629 = vmatpush.bf16.msra.mxu0 %v5974
      %6630 = vmatpush.bf16.msra.mxu0 %v5973
      %6631 = vmatpush.bf16.msra.mxu0 %v5972
      %6632 = vmatpush.bf16.msra.mxu0 %v5971
      %6633 = vmatpush.bf16.msra.mxu0 %v5970
      %6634 = vmatmul.bf16.gmra.mxu0 %v6594
      %v6635 = vpop.f32.mrf.mxu0
      %v6636 = vadd.f32 %v5836, %v6635
      %v6637 = vpop.f32.mrf.mxu0
      %v6638 = vadd.f32 %v5836, %v6637
      %6639 = vmatmul.bf16.gmra.mxu0 %v6597
      %v6640 = vpop.f32.mrf.mxu0
      %v6641 = vadd.f32 %v5836, %v6640
      %v6642 = vpop.f32.mrf.mxu0
      %v6643 = vadd.f32 %v5836, %v6642
      %6644 = vmatmul.bf16.gmra.mxu0 %v6600
      %v6645 = vpop.f32.mrf.mxu0
      %v6646 = vadd.f32 %v5836, %v6645
      %v6647 = vpop.f32.mrf.mxu0
      %v6648 = vadd.f32 %v5836, %v6647
      %6649 = vmatmul.bf16.gmra.mxu0 %v6603
      %v6650 = vpop.f32.mrf.mxu0
      %v6651 = vadd.f32 %v5836, %v6650
      %v6652 = vpop.f32.mrf.mxu0
      %v6653 = vadd.f32 %v5836, %v6652
      %6654 = vdwg.mxu0
      %6655 = vmatpush.bf16.msra.mxu0 %v5985
      %6656 = vmatpush.bf16.msra.mxu0 %v5984
      %6657 = vmatpush.bf16.msra.mxu0 %v5983
      %6658 = vmatpush.bf16.msra.mxu0 %v5982
      %6659 = vmatpush.bf16.msra.mxu0 %v5981
      %6660 = vmatpush.bf16.msra.mxu0 %v5980
      %6661 = vmatpush.bf16.msra.mxu0 %v5979
      %6662 = vmatpush.bf16.msra.mxu0 %v5978
      %6663 = vmatmul.bf16.gmra.mxu0 %v6595
      %v6664 = vpop.f32.mrf.mxu0
      %v6665 = vadd.f32 %v6636, %v6664
      %v6666 = vpop.f32.mrf.mxu0
      %v6667 = vadd.f32 %v6638, %v6666
      %6668 = vmatmul.bf16.gmra.mxu0 %v6598
      %v6669 = vpop.f32.mrf.mxu0
      %v6670 = vadd.f32 %v6641, %v6669
      %v6671 = vpop.f32.mrf.mxu0
      %v6672 = vadd.f32 %v6643, %v6671
      %6673 = vmatmul.bf16.gmra.mxu0 %v6601
      %v6674 = vpop.f32.mrf.mxu0
      %v6675 = vadd.f32 %v6646, %v6674
      %v6676 = vpop.f32.mrf.mxu0
      %v6677 = vadd.f32 %v6648, %v6676
      %6678 = vmatmul.bf16.gmra.mxu0 %v6604
      %v6679 = vpop.f32.mrf.mxu0
      %v6680 = vadd.f32 %v6651, %v6679
      %v6681 = vpop.f32.mrf.mxu0
      %v6682 = vadd.f32 %v6653, %v6681
      %6683 = vdwg.mxu0
      %6684 = vmatpush.bf16.msra.mxu0 0
      %6685 = vmatpush.bf16.msra.mxu0 0
      %6686 = vmatpush.bf16.msra.mxu0 0
      %6687 = vmatpush.bf16.msra.mxu0 0
      %6688 = vmatpush.bf16.msra.mxu0 0
      %6689 = vmatpush.bf16.msra.mxu0 0
      %6690 = vmatpush.bf16.msra.mxu0 %v5987
      %6691 = vmatpush.bf16.msra.mxu0 %v5986
      %6692 = vmatmul.bf16.gmra.mxu0 %v6615
      %v6693 = vpop.f32.mrf.mxu0
      %v6694 = vadd.f32 %v6665, %v6693
      %v6695 = vpop.f32.mrf.mxu0
      %v6696 = vadd.f32 %v6667, %v6695
      %6697 = vmatmul.bf16.gmra.mxu0 %v6618
      %v6698 = vpop.f32.mrf.mxu0
      %v6699 = vadd.f32 %v6670, %v6698
      %v6700 = vpop.f32.mrf.mxu0
      %v6701 = vadd.f32 %v6672, %v6700
      %6702 = vmatmul.bf16.gmra.mxu0 %v6621
      %v6703 = vpop.f32.mrf.mxu0
      %v6704 = vadd.f32 %v6675, %v6703
      %v6705 = vpop.f32.mrf.mxu0
      %v6706 = vadd.f32 %v6677, %v6705
      %6707 = vmatmul.bf16.gmra.mxu0 %v6624
      %v6708 = vpop.f32.mrf.mxu0
      %v6709 = vadd.f32 %v6680, %v6708
      %v6710 = vpop.f32.mrf.mxu0
      %v6711 = vadd.f32 %v6682, %v6710
      %6712 = vdwg.mxu0
      %v6713 = vtanh.pop %v6694
      %v6714 = vtanh.pop %v6696
      %v6715 = vtanh.pop %v6699
      %v6716 = vtanh.pop %v6701
      %v6717 = vtanh.pop %v6704
      %v6718 = vtanh.pop %v6706
      %v6719 = vtanh.pop %v6709
      %v6720 = vtanh.pop %v6711
      %v6721 = vsel %vm5815, %v6713, %v6694
      %v6722 = vsel %vm5815, %v6714, %v6696
      %v6723 = vsel %vm5815, %v6715, %v6699
      %v6724 = vsel %vm5815, %v6716, %v6701
      %v6725 = vsel %vm5815, %v6717, %v6704
      %v6726 = vsel %vm5815, %v6718, %v6706
      %v6727 = vsel %vm5815, %v6719, %v6709
      %v6728 = vsel %vm5815, %v6720, %v6711
      %s6729 = scalar_lea.vmem %s224, 192
      %6730 = vst [vmem:[%s6729] sm:$0xff] %v6721
      %6731 = vst [vmem:[%s6729 + $0x8] sm:$0xff] %v6722
      %6732 = vst [vmem:[%s6729 + $0x10] sm:$0xff] %v6723
      %6733 = vst [vmem:[%s6729 + $0x18] sm:$0xff] %v6724
      %6734 = vst [vmem:[%s6729 + $0x20] sm:$0xff] %v6725
      %6735 = vst [vmem:[%s6729 + $0x28] sm:$0xff] %v6726
      %6736 = vst [vmem:[%s6729 + $0x30] sm:$0xff] %v6727
      %6737 = vst [vmem:[%s6729 + $0x38] sm:$0xff] %v6728
      %p6738 = scmp.lt.s32.totalorder %s16, 1
      %s6739 = scalar_select %p6738, %s16, 1
      %s6740 = smul.addr %s6739, 32
      %s6741 = smul.addr %s6740, 8
      %s6742 = scalar_lea.vmem %s5, %s6741
      // Predicated region
      $region41: #{prediction_module_forward.1} parent=39 // pred_check
        %p6743 = pneg %p144
      $region42: #{prediction_module_forward.1} parent=39 // pred_check_branch
        %6745 = sbr.rel (%p6743) target = $region44
      $region43: #{prediction_module_forward.1} parent=39 // pred_region
        _
      $region44: #{prediction_module_forward.1} parent=39 // pred_fallthru
        _
    $region40: #{prediction_module_forward.1} parent=5 // pred_fallthru
      _
    %p6746 = scmp.le.s32.totalorder 2, %s11
    // Predicated region
    $region45: #{prediction_module_forward.1} parent=5 // pred_check
      %p6747 = pneg %p6746
    $region46: #{prediction_module_forward.1} parent=5 // pred_check_branch
      %6749 = sbr.rel (%p6747) target = $region48
    $region47: #{prediction_module_forward.1} parent=5 // pred_region
      %s6750 = ssub.s32 %s11, 2
      // Predicated region
      $region49: #{prediction_module_forward.1} parent=47 // pred_check
        %p6751 = pneg %p150
      $region50: #{prediction_module_forward.1} parent=47 // pred_check_branch
        %6753 = sbr.rel (%p6751) target = $region52
      $region51: #{prediction_module_forward.1} parent=47 // pred_region
        %p6754 = scmp.lt.s32.totalorder %s17, 1
        %s6755 = scalar_select %p6754, %s17, 1
        %s6756 = smul.addr %s6755, 32
        %s6757 = smul.addr %s6756, 8
        %s6758 = scalar_lea.vmem %s5, %s6757
      $region52: #{prediction_module_forward.1} parent=47 // pred_fallthru
        _
    $region48: #{prediction_module_forward.1} parent=5 // pred_fallthru
      _
  $region6: #{prediction_module_forward.1} parent=0 // loop_footer
    %s15 = sadd.s32 1, %s11
  $region7: #{prediction_module_forward.1} parent=0 // loop_footer_branch
    %10 = sbr.rel target = $region3
  $region8: #{prediction_module_forward.1} parent=0 // loop_exit
    _

</llo_original>
